<compile_context>
chip_gen: v5e
topology: v5e:2x2
jax: 0.10.0
libtpu: 0.0.40
codegen_flags: <defaults>
</compile_context>

<pallas_src>
import functools

import jax
import jax.numpy as jnp
import numpy as np
from jax.experimental import pallas as pl
from jax.experimental.pallas import tpu as pltpu


# ------------------------------------------------------------------
# Pallas kernel: ONE invocation per LSTM layer, both directions fused.
# ------------------------------------------------------------------
def _bilstm_recurrence_kernel(*refs, seq_len, batch, hidden_dim, num_dirs, fuse_head):
    """Fused (both-direction) LSTM recurrence over the whole sequence.

    State layout: h, c are (B, G) with G = num_dirs*4H; the "real" hidden/cell units
    of direction d live on lanes [d*4H, d*4H+H); the remaining lanes carry bounded
    garbage that is annihilated downstream by zero rows in the consuming weights.

    in refs (whole arrays resident in VMEM):
      xw_ref  : (T, B, 4G) f32  hoisted input projection, four column-rolled copies
                                (gate order per dir: [ifgo],[fgoi],[goif],[oifg]),
                                backward direction pre-flipped in time.
      wblk_ref: (G, 4G)  bf16   zero-row-padded block-diagonal recurrent weight with
                                the same four column-rolled copies.
      mask_ref: (T, B, G) f32   1.0 where the (direction-local) timestep is valid.
      wout_ref: (G, O)   f32    [fuse_head] zero-row-expanded head weight.
    out refs:
      y_ref   : (T, B, G) f32   [not fuse_head] time-aligned masked hidden sequence.
      out_ref : (B, O)    f32   [fuse_head] (sum_t masked_h) @ wout (bias by caller).
    """
    if fuse_head:
        xw_ref, wblk_ref, mask_ref, wout_ref, out_ref = refs
    else:
        xw_ref, wblk_ref, mask_ref, y_ref = refs

    T, B, H, bi = seq_len, batch, hidden_dim, num_dirs
    G = bi * 4 * H

    h = jnp.zeros((B, G), jnp.float32)
    c = jnp.zeros((B, G), jnp.float32)
    if fuse_head:
        acc = jnp.zeros((B, G), jnp.float32)

    # Static unroll: every time index below is a Python int, so all loads/stores are
    # statically addressed (forward reads step s, backward data was pre-flipped).
    # TODO(synk): for large T switch to lax.fori_loop(..., unroll=k) so vreg live
    #             ranges stay bounded; at T=8 the full unroll is optimal.
    for s in range(T):
        # One block-diagonal recurrent matmul for BOTH directions and all four gate
        # alignments (bf16 MXU operands, f32 accumulate).
        g4 = xw_ref[s] + jnp.dot(h.astype(jnp.bfloat16), wblk_ref[...],
                                 preferred_element_type=jnp.float32)      # (B, 4G)

        # vreg-aligned G-lane slabs; thanks to the column-rolled copies, i/f/g/o all
        # land on the cell's lanes -> no sub-128-lane slice / roll on the critical path.
        i_al = jax.nn.sigmoid(g4[:, 0 * G:1 * G])
        f_al = jax.nn.sigmoid(g4[:, 1 * G:2 * G])
        g_al = jnp.tanh(g4[:, 2 * G:3 * G])
        o_al = jax.nn.sigmoid(g4[:, 3 * G:4 * G])

        c_new = f_al * c + i_al * g_al
        h_new = o_al * jnp.tanh(c_new)

        # packed-sequence semantics: freeze state / zero output past each length.
        msk = mask_ref[s] > 0.0
        c = jnp.where(msk, c_new, c)
        h = jnp.where(msk, h_new, h)
        hm = jnp.where(msk, h_new, 0.0)

        if fuse_head:
            acc = acc + hm                        # sum over time
        else:
            # time-aligned, lane-dense (128-lane) half-row stores:
            # forward block at time s, backward block at original time T-1-s.
            y_ref[s, :, 0:4 * H] = hm[:, 0:4 * H]
            if bi == 2:
                y_ref[T - 1 - s, :, 4 * H:8 * H] = hm[:, 4 * H:8 * H]

    if fuse_head:
        out_ref[...] = jnp.dot(acc, wout_ref[...], preferred_element_type=jnp.float32)


def _vmem():
    return pl.BlockSpec(memory_space=pltpu.MemorySpace.VMEM)


def _run_layer(xw4_step, wblk4, mask_step, hidden_dim, num_dirs, w_out_pad=None):
    T, B, G4 = xw4_step.shape
    G = G4 // 4
    common = dict(seq_len=T, batch=B, hidden_dim=hidden_dim, num_dirs=num_dirs)
    # TODO(synk): for long sequences, tile time with a grid / emit_pipeline so xw4 is
    #             not fully VMEM-resident (matters first on v7x's 64 MiB VMEM); at
    #             these sizes (<1 MiB per layer) everything fits comfortably.
    if w_out_pad is None:
        kernel = functools.partial(_bilstm_recurrence_kernel, fuse_head=False, **common)
        return pl.pallas_call(
            kernel,
            out_shape=jax.ShapeDtypeStruct((T, B, G), jnp.float32),
            in_specs=[_vmem(), _vmem(), _vmem()],
            out_specs=_vmem(),
        )(xw4_step, wblk4, mask_step)

    out_dim = w_out_pad.shape[-1]
    kernel = functools.partial(_bilstm_recurrence_kernel, fuse_head=True, **common)
    return pl.pallas_call(
        kernel,
        out_shape=jax.ShapeDtypeStruct((B, out_dim), jnp.float32),
        in_specs=[_vmem(), _vmem(), _vmem(), _vmem()],
        out_specs=_vmem(),
    )(xw4_step, wblk4, mask_step, w_out_pad)


# ------------------------------------------------------------------
# Bilstm forward (hoisted input projection + glue in XLA, recurrence in Pallas)
# ------------------------------------------------------------------
def bilstm_forward(x_btd, lengths, lstm_params, out_params, hidden_dim):
    """x_btd: (B, T, input_dim) batch-first; lengths: (B,) int, sorted descending.
       Returns (out, lengths) with out: (B, output_dim)."""
    B, T, _ = x_btd.shape
    H = hidden_dim
    bi = len(lstm_params[0])
    G = bi * 4 * H
    n_layers = len(lstm_params)
    w_out, b_out = out_params
    f32, bf16 = jnp.float32, jnp.bfloat16

    # packed-sequence validity mask, "step-indexed" for the fused kernel:
    #   lanes [0,4H)  : validity of time t   (forward chain, step s = t)
    #   lanes [4H,8H) : validity of time T-1-t (backward chain at step t)
    t_idx = jnp.arange(T)
    valid = (t_idx[:, None] < lengths[None, :].astype(jnp.int32)).astype(f32)   # (T, B)
    m_blocks = [jnp.broadcast_to(valid[:, :, None], (T, B, 4 * H))]
    if bi == 2:
        m_blocks.append(
            jnp.broadcast_to(jnp.flip(valid, axis=0)[:, :, None], (T, B, 4 * H)))
    mask_step = jnp.concatenate(m_blocks, axis=-1)                               # (T, B, G)

    layer_in = jnp.transpose(x_btd, (1, 0, 2)).astype(f32)   # (T, B, Din), time-major
    in_is_fused = False    # True once the input is the previous kernel's (T,B,G) slab
    out = None
    for li, layer in enumerate(lstm_params):
        # per-direction input weights (zero-row-expanded once the input is the
        # previous layer's fused G-wide slab: only the real hidden lanes contribute).
        w_ih_list, b_list = [], []
        for d in range(bi):
            w_ih_d, _, b_d = layer[d]
            if in_is_fused:
                e = jnp.zeros((G, 4 * H), f32)
                e = e.at[0:H, :].set(w_ih_d[0:H, :])
                if bi == 2:
                    e = e.at[4 * H:5 * H, :].set(w_ih_d[H:2 * H, :])
                w_ih_list.append(e)
            else:
                w_ih_list.append(w_ih_d)
            b_list.append(b_d)
        w_ih_cat = jnp.concatenate(w_ih_list, axis=1)        # (F, bi*4H)
        b_cat = jnp.concatenate(b_list, axis=0)              # (bi*4H,)

        # hoisted input projection: ONE wide bf16 matmul over all timesteps and both
        # directions (only h @ W_hh stays inside the recurrence kernel).
        feat = layer_in.shape[-1]
        xw = jnp.dot(layer_in.reshape(T * B, feat).astype(bf16),
                     w_ih_cat.astype(bf16),
                     preferred_element_type=f32) + b_cat[None, :]
        xw = xw.reshape(T, B, bi * 4 * H)                    # time-aligned

        # step-index the backward block (pre-flip in time) and emit FOUR column-rolled
        # copies so the kernel needs no cross-lane gate alignment at all.
        dir_blocks = []
        for d in range(bi):
            blk = xw[:, :, d * 4 * H:(d + 1) * 4 * H]
            if d == 1:
                blk = jnp.flip(blk, axis=0)
            dir_blocks.append(blk)
        copies = []
        for k in range(4):
            copies.append(jnp.concatenate(
                [jnp.roll(blk, -k * H, axis=-1) for blk in dir_blocks], axis=-1))
        xw4_step = jnp.concatenate(copies, axis=-1)          # (T, B, 4G)

        # block-diagonal recurrent weight, zero-padded rows, same four column-rolled
        # copies, cast to bf16 for the MXU.
        wblk4 = jnp.zeros((G, 4 * G), f32)
        for k in range(4):
            for d in range(bi):
                w_hh_d = layer[d][1]                          # (H, 4H)
                w_rot = jnp.roll(w_hh_d, -k * H, axis=1)
                r0 = d * 4 * H
                c0 = k * G + d * 4 * H
                wblk4 = wblk4.at[r0:r0 + H, c0:c0 + 4 * H].set(w_rot)
        wblk4 = wblk4.astype(bf16)

        if li == n_layers - 1:
            # last layer: fuse sum-over-time + Linear head into the kernel.
            w_out_pad = jnp.zeros((G, w_out.shape[-1]), f32)
            for d in range(bi):
                r0 = d * 4 * H
                w_out_pad = w_out_pad.at[r0:r0 + H, :].set(w_out[d * H:(d + 1) * H, :])
            out = _run_layer(xw4_step, wblk4, mask_step, H, bi, w_out_pad=w_out_pad)
            out = out + b_out[None, :]
        else:
            layer_in = _run_layer(xw4_step, wblk4, mask_step, H, bi)    # (T, B, G)
            in_is_fused = True
        # TODO(synk): inter-layer dropout (training-mode only in PyTorch) is skipped.
    return out, lengths


# ------------------------------------------------------------------
# Pure-JAX reference (explicit valid-prefix reversal, for correctness check)
# ------------------------------------------------------------------
def _lstm_scan_ref(x_tbd, w_ih, w_hh, b, mask_tb1):
    T, B, _ = x_tbd.shape
    H = w_hh.shape[0]

    def step(carry, inp):
        h, c = carry
        x_t, m_t = inp
        gates = x_t @ w_ih + h @ w_hh + b
        i = jax.nn.sigmoid(gates[:, 0 * H:1 * H])
        f = jax.nn.sigmoid(gates[:, 1 * H:2 * H])
        g = jnp.tanh(gates[:, 2 * H:3 * H])
        o = jax.nn.sigmoid(gates[:, 3 * H:4 * H])
        c_new = f * c + i * g
        h_new = o * jnp.tanh(c_new)
        c2 = m_t * c_new + (1.0 - m_t) * c
        h2 = m_t * h_new + (1.0 - m_t) * h
        return (h2, c2), m_t * h_new

    init = (jnp.zeros((B, H), jnp.float32), jnp.zeros((B, H), jnp.float32))
    _, ys = jax.lax.scan(step, init, (x_tbd, mask_tb1))
    return ys


def bilstm_forward_ref(x_btd, lengths, lstm_params, out_params):
    B, T, _ = x_btd.shape
    t_idx = jnp.arange(T)
    valid = t_idx[None, :] < lengths[:, None]
    mask_tb1 = valid.astype(jnp.float32).T[:, :, None]
    rev_idx = jnp.where(valid, lengths[:, None] - 1 - t_idx[None, :], t_idx[None, :])
    inp = jnp.transpose(x_btd, (1, 0, 2)).astype(jnp.float32)
    for layer in lstm_params:
        outs = []
        w_ih, w_hh, b = layer[0]
        outs.append(_lstm_scan_ref(inp, w_ih, w_hh, b, mask_tb1))
        if len(layer) == 2:
            w_ih, w_hh, b = layer[1]
            inp_btd = jnp.transpose(inp, (1, 0, 2))
            inp_rev = jnp.take_along_axis(inp_btd, rev_idx[:, :, None], axis=1)
            y_rev = _lstm_scan_ref(jnp.transpose(inp_rev, (1, 0, 2)),
                                   w_ih, w_hh, b, mask_tb1)
            y_rev_btd = jnp.transpose(y_rev, (1, 0, 2))
            y_bwd = jnp.take_along_axis(y_rev_btd, rev_idx[:, :, None], axis=1)
            outs.append(jnp.transpose(y_bwd, (1, 0, 2)))
        inp = jnp.concatenate(outs, axis=-1)
    w_out, b_out = out_params
    out = jnp.sum(inp, axis=0) @ w_out + b_out[None, :]
    return out, lengths


# ------------------------------------------------------------------
# Deterministic parameter init (shapes from Bilstm.__init__)
# ------------------------------------------------------------------
def init_params(key, input_dim, hidden_dim, output_dim, num_layers, bi_num):
    lstm_params = []
    d_in = input_dim
    for _ in range(num_layers):
        layer = []
        for _d in range(bi_num):
            key, k1, k2, k3, k4 = jax.random.split(key, 5)
            w_ih = jax.random.normal(k1, (d_in, 4 * hidden_dim), jnp.float32) * 0.1
            w_hh = jax.random.normal(k2, (hidden_dim, 4 * hidden_dim), jnp.float32) * 0.1
            b_ih = jax.random.normal(k3, (4 * hidden_dim,), jnp.float32) * 0.1
            b_hh = jax.random.normal(k4, (4 * hidden_dim,), jnp.float32) * 0.1
            layer.append((w_ih, w_hh, b_ih + b_hh))   # combined bias, PyTorch order i,f,g,o
        lstm_params.append(layer)
        d_in = hidden_dim * bi_num
    key, k1, k2 = jax.random.split(key, 3)
    w_out = jax.random.normal(k1, (d_in, output_dim), jnp.float32) * 0.1
    b_out = jax.random.normal(k2, (output_dim,), jnp.float32) * 0.1
    return lstm_params, (w_out, b_out)


# ------------------------------------------------------------------
if __name__ == "__main__":
    # Bilstm(input_dim=16, hidden_dim=32, output_dim=8, num_layers=2, biFlag=True)
    input_dim, hidden_dim, output_dim = 16, 32, 8
    num_layers, bi_num = 2, 2
    B, T = 4, 8

    key = jax.random.PRNGKey(0)
    key, kx = jax.random.split(key)
    x = jax.random.normal(kx, (B, T, input_dim), jnp.float32)
    lengths = jnp.array([8, 6, 5, 3], dtype=jnp.int32)   # sorted descending

    lstm_params, out_params = init_params(key, input_dim, hidden_dim,
                                          output_dim, num_layers, bi_num)

    run = jax.jit(lambda xx, ll: bilstm_forward(xx, ll, lstm_params, out_params,
                                                hidden_dim))
    out, out_len = run(x, lengths)
    out = jax.block_until_ready(out)

    # correctness check against a gather-based pure-f32 JAX reference
    out_ref, _ = bilstm_forward_ref(x, lengths, lstm_params, out_params)
    out_ref = jax.block_until_ready(out_ref)
    np.testing.assert_allclose(np.asarray(out), np.asarray(out_ref),
                               rtol=3e-2, atol=3e-2)

    assert out.shape == (B, output_dim)
    print("KERNEL_OK")
</pallas_src>

<mosaic_0001>
module attributes {stable_mosaic.version = 11 : i64} {
  func.func @_bilstm_recurrence_kernel(%arg0: memref<8x4x1024xf32, #tpu.memory_space<vmem>>, %arg1: memref<256x1024xbf16, #tpu.memory_space<vmem>>, %arg2: memref<8x4x256xf32, #tpu.memory_space<vmem>>, %arg3: memref<8x4x256xf32, #tpu.memory_space<vmem>>) attributes {dimension_semantics = [], scalar_prefetch = 0 : i64, scratch_operands = 0 : i64, tpu.core_type = #tpu.core_type<tc>} {
    %cst = arith.constant 0.000000e+00 : f32
    %0 = vector.broadcast %cst : f32 to vector<4x256xf32>
    %cst_0 = arith.constant 0.000000e+00 : f32
    %1 = vector.broadcast %cst_0 : f32 to vector<4x256xf32>
    %c0 = arith.constant 0 : index
    %c0_1 = arith.constant 0 : index
    %c0_2 = arith.constant 0 : index
    %2 = vector.load %arg0[%c0, %c0_1, %c0_2] : memref<8x4x1024xf32, #tpu.memory_space<vmem>>, vector<1x4x1024xf32>
    %3 = vector.shape_cast %2 : vector<1x4x1024xf32> to vector<4x1024xf32>
    %4 = arith.truncf %0 : vector<4x256xf32> to vector<4x256xbf16>
    %c0_3 = arith.constant 0 : index
    %c0_4 = arith.constant 0 : index
    %5 = vector.load %arg1[%c0_3, %c0_4] : memref<256x1024xbf16, #tpu.memory_space<vmem>>, vector<256x1024xbf16>
    %cst_5 = arith.constant dense<0.000000e+00> : vector<4x1024xf32>
    %6 = tpu.matmul %4, %5, %cst_5 {dimension_numbers = #tpu.dot_dimension_numbers<[1], [0], [0], [1], [0, 0, 1, 1], [], []>} : vector<4x256xbf16>, vector<256x1024xbf16>, vector<4x1024xf32> -> vector<4x1024xf32>
    %7 = arith.addf %3, %6 : vector<4x1024xf32>
    %8 = vector.extract_strided_slice %7 {offsets = [0, 0], sizes = [4, 256], strides = [1, 1]} : vector<4x1024xf32> to vector<4x256xf32>
    %9 = arith.negf %8 : vector<4x256xf32>
    %10 = math.exp %9 : vector<4x256xf32>
    %cst_6 = arith.constant 1.000000e+00 : f32
    %11 = vector.broadcast %cst_6 : f32 to vector<4x256xf32>
    %12 = arith.addf %11, %10 : vector<4x256xf32>
    %13 = arith.divf %11, %12 : vector<4x256xf32>
    %14 = vector.extract_strided_slice %7 {offsets = [0, 256], sizes = [4, 256], strides = [1, 1]} : vector<4x1024xf32> to vector<4x256xf32>
    %15 = arith.negf %14 : vector<4x256xf32>
    %16 = math.exp %15 : vector<4x256xf32>
    %cst_7 = arith.constant 1.000000e+00 : f32
    %17 = vector.broadcast %cst_7 : f32 to vector<4x256xf32>
    %18 = arith.addf %17, %16 : vector<4x256xf32>
    %19 = arith.divf %17, %18 : vector<4x256xf32>
    %20 = vector.extract_strided_slice %7 {offsets = [0, 512], sizes = [4, 256], strides = [1, 1]} : vector<4x1024xf32> to vector<4x256xf32>
    %21 = math.tanh %20 : vector<4x256xf32>
    %22 = vector.extract_strided_slice %7 {offsets = [0, 768], sizes = [4, 256], strides = [1, 1]} : vector<4x1024xf32> to vector<4x256xf32>
    %23 = arith.negf %22 : vector<4x256xf32>
    %24 = math.exp %23 : vector<4x256xf32>
    %cst_8 = arith.constant 1.000000e+00 : f32
    %25 = vector.broadcast %cst_8 : f32 to vector<4x256xf32>
    %26 = arith.addf %25, %24 : vector<4x256xf32>
    %27 = arith.divf %25, %26 : vector<4x256xf32>
    %28 = arith.mulf %19, %1 : vector<4x256xf32>
    %29 = arith.mulf %13, %21 : vector<4x256xf32>
    %30 = arith.addf %28, %29 : vector<4x256xf32>
    %31 = math.tanh %30 : vector<4x256xf32>
    %32 = arith.mulf %27, %31 : vector<4x256xf32>
    %c0_9 = arith.constant 0 : index
    %c0_10 = arith.constant 0 : index
    %c0_11 = arith.constant 0 : index
    %33 = vector.load %arg2[%c0_9, %c0_10, %c0_11] : memref<8x4x256xf32, #tpu.memory_space<vmem>>, vector<1x4x256xf32>
    %34 = vector.shape_cast %33 : vector<1x4x256xf32> to vector<4x256xf32>
    %cst_12 = arith.constant 0.000000e+00 : f32
    %35 = vector.broadcast %cst_12 : f32 to vector<4x256xf32>
    %36 = arith.cmpf ogt, %34, %35 : vector<4x256xf32>
    %37 = arith.select %36, %30, %1 : vector<4x256xi1>, vector<4x256xf32>
    %38 = arith.select %36, %32, %0 : vector<4x256xi1>, vector<4x256xf32>
    %cst_13 = arith.constant 0.000000e+00 : f32
    %39 = vector.broadcast %cst_13 : f32 to vector<4x256xf32>
    %40 = arith.select %36, %32, %39 : vector<4x256xi1>, vector<4x256xf32>
    %41 = vector.extract_strided_slice %40 {offsets = [0, 0], sizes = [4, 128], strides = [1, 1]} : vector<4x256xf32> to vector<4x128xf32>
    %c0_14 = arith.constant 0 : index
    %c0_15 = arith.constant 0 : index
    %c0_16 = arith.constant 0 : index
    %42 = vector.load %arg3[%c0_14, %c0_15, %c0_16] : memref<8x4x256xf32, #tpu.memory_space<vmem>>, vector<1x4x128xf32>
    %43 = vector.shape_cast %42 : vector<1x4x128xf32> to vector<4x128xf32>
    %44 = vector.shape_cast %41 : vector<4x128xf32> to vector<1x4x128xf32>
    tpu.vector_store %arg3[%c0_14, %c0_15, %c0_16], %44 {strides = array<i32>} : memref<8x4x256xf32, #tpu.memory_space<vmem>>, vector<1x4x128xf32>,
    %45 = vector.extract_strided_slice %40 {offsets = [0, 128], sizes = [4, 128], strides = [1, 1]} : vector<4x256xf32> to vector<4x128xf32>
    %c7 = arith.constant 7 : index
    %c0_17 = arith.constant 0 : index
    %c128 = arith.constant 128 : index
    %46 = vector.load %arg3[%c7, %c0_17, %c128] : memref<8x4x256xf32, #tpu.memory_space<vmem>>, vector<1x4x128xf32>
    %47 = vector.shape_cast %46 : vector<1x4x128xf32> to vector<4x128xf32>
    %48 = vector.shape_cast %45 : vector<4x128xf32> to vector<1x4x128xf32>
    tpu.vector_store %arg3[%c7, %c0_17, %c128], %48 {strides = array<i32>} : memref<8x4x256xf32, #tpu.memory_space<vmem>>, vector<1x4x128xf32>,
    %c1 = arith.constant 1 : index
    %c0_18 = arith.constant 0 : index
    %c0_19 = arith.constant 0 : index
    %49 = vector.load %arg0[%c1, %c0_18, %c0_19] : memref<8x4x1024xf32, #tpu.memory_space<vmem>>, vector<1x4x1024xf32>
    %50 = vector.shape_cast %49 : vector<1x4x1024xf32> to vector<4x1024xf32>
    %51 = arith.truncf %38 : vector<4x256xf32> to vector<4x256xbf16>
    %c0_20 = arith.constant 0 : index
    %c0_21 = arith.constant 0 : index
    %52 = vector.load %arg1[%c0_20, %c0_21] : memref<256x1024xbf16, #tpu.memory_space<vmem>>, vector<256x1024xbf16>
    %cst_22 = arith.constant dense<0.000000e+00> : vector<4x1024xf32>
    %53 = tpu.matmul %51, %52, %cst_22 {dimension_numbers = #tpu.dot_dimension_numbers<[1], [0], [0], [1], [0, 0, 1, 1], [], []>} : vector<4x256xbf16>, vector<256x1024xbf16>, vector<4x1024xf32> -> vector<4x1024xf32>
    %54 = arith.addf %50, %53 : vector<4x1024xf32>
    %55 = vector.extract_strided_slice %54 {offsets = [0, 0], sizes = [4, 256], strides = [1, 1]} : vector<4x1024xf32> to vector<4x256xf32>
    %56 = arith.negf %55 : vector<4x256xf32>
    %57 = math.exp %56 : vector<4x256xf32>
    %cst_23 = arith.constant 1.000000e+00 : f32
    %58 = vector.broadcast %cst_23 : f32 to vector<4x256xf32>
    %59 = arith.addf %58, %57 : vector<4x256xf32>
    %60 = arith.divf %58, %59 : vector<4x256xf32>
    %61 = vector.extract_strided_slice %54 {offsets = [0, 256], sizes = [4, 256], strides = [1, 1]} : vector<4x1024xf32> to vector<4x256xf32>
    %62 = arith.negf %61 : vector<4x256xf32>
    %63 = math.exp %62 : vector<4x256xf32>
    %cst_24 = arith.constant 1.000000e+00 : f32
    %64 = vector.broadcast %cst_24 : f32 to vector<4x256xf32>
    %65 = arith.addf %64, %63 : vector<4x256xf32>
    %66 = arith.divf %64, %65 : vector<4x256xf32>
    %67 = vector.extract_strided_slice %54 {offsets = [0, 512], sizes = [4, 256], strides = [1, 1]} : vector<4x1024xf32> to vector<4x256xf32>
    %68 = math.tanh %67 : vector<4x256xf32>
    %69 = vector.extract_strided_slice %54 {offsets = [0, 768], sizes = [4, 256], strides = [1, 1]} : vector<4x1024xf32> to vector<4x256xf32>
    %70 = arith.negf %69 : vector<4x256xf32>
    %71 = math.exp %70 : vector<4x256xf32>
    %cst_25 = arith.constant 1.000000e+00 : f32
    %72 = vector.broadcast %cst_25 : f32 to vector<4x256xf32>
    %73 = arith.addf %72, %71 : vector<4x256xf32>
    %74 = arith.divf %72, %73 : vector<4x256xf32>
    %75 = arith.mulf %66, %37 : vector<4x256xf32>
    %76 = arith.mulf %60, %68 : vector<4x256xf32>
    %77 = arith.addf %75, %76 : vector<4x256xf32>
    %78 = math.tanh %77 : vector<4x256xf32>
    %79 = arith.mulf %74, %78 : vector<4x256xf32>
    %c1_26 = arith.constant 1 : index
    %c0_27 = arith.constant 0 : index
    %c0_28 = arith.constant 0 : index
    %80 = vector.load %arg2[%c1_26, %c0_27, %c0_28] : memref<8x4x256xf32, #tpu.memory_space<vmem>>, vector<1x4x256xf32>
    %81 = vector.shape_cast %80 : vector<1x4x256xf32> to vector<4x256xf32>
    %cst_29 = arith.constant 0.000000e+00 : f32
    %82 = vector.broadcast %cst_29 : f32 to vector<4x256xf32>
    %83 = arith.cmpf ogt, %81, %82 : vector<4x256xf32>
    %84 = arith.select %83, %77, %37 : vector<4x256xi1>, vector<4x256xf32>
    %85 = arith.select %83, %79, %38 : vector<4x256xi1>, vector<4x256xf32>
    %cst_30 = arith.constant 0.000000e+00 : f32
    %86 = vector.broadcast %cst_30 : f32 to vector<4x256xf32>
    %87 = arith.select %83, %79, %86 : vector<4x256xi1>, vector<4x256xf32>
    %88 = vector.extract_strided_slice %87 {offsets = [0, 0], sizes = [4, 128], strides = [1, 1]} : vector<4x256xf32> to vector<4x128xf32>
    %c1_31 = arith.constant 1 : index
    %c0_32 = arith.constant 0 : index
    %c0_33 = arith.constant 0 : index
    %89 = vector.load %arg3[%c1_31, %c0_32, %c0_33] : memref<8x4x256xf32, #tpu.memory_space<vmem>>, vector<1x4x128xf32>
    %90 = vector.shape_cast %89 : vector<1x4x128xf32> to vector<4x128xf32>
    %91 = vector.shape_cast %88 : vector<4x128xf32> to vector<1x4x128xf32>
    tpu.vector_store %arg3[%c1_31, %c0_32, %c0_33], %91 {strides = array<i32>} : memref<8x4x256xf32, #tpu.memory_space<vmem>>, vector<1x4x128xf32>,
    %92 = vector.extract_strided_slice %87 {offsets = [0, 128], sizes = [4, 128], strides = [1, 1]} : vector<4x256xf32> to vector<4x128xf32>
    %c6 = arith.constant 6 : index
    %c0_34 = arith.constant 0 : index
    %c128_35 = arith.constant 128 : index
    %93 = vector.load %arg3[%c6, %c0_34, %c128_35] : memref<8x4x256xf32, #tpu.memory_space<vmem>>, vector<1x4x128xf32>
    %94 = vector.shape_cast %93 : vector<1x4x128xf32> to vector<4x128xf32>
    %95 = vector.shape_cast %92 : vector<4x128xf32> to vector<1x4x128xf32>
    tpu.vector_store %arg3[%c6, %c0_34, %c128_35], %95 {strides = array<i32>} : memref<8x4x256xf32, #tpu.memory_space<vmem>>, vector<1x4x128xf32>,
    %c2 = arith.constant 2 : index
    %c0_36 = arith.constant 0 : index
    %c0_37 = arith.constant 0 : index
    %96 = vector.load %arg0[%c2, %c0_36, %c0_37] : memref<8x4x1024xf32, #tpu.memory_space<vmem>>, vector<1x4x1024xf32>
    %97 = vector.shape_cast %96 : vector<1x4x1024xf32> to vector<4x1024xf32>
    %98 = arith.truncf %85 : vector<4x256xf32> to vector<4x256xbf16>
    %c0_38 = arith.constant 0 : index
    %c0_39 = arith.constant 0 : index
    %99 = vector.load %arg1[%c0_38, %c0_39] : memref<256x1024xbf16, #tpu.memory_space<vmem>>, vector<256x1024xbf16>
    %cst_40 = arith.constant dense<0.000000e+00> : vector<4x1024xf32>
    %100 = tpu.matmul %98, %99, %cst_40 {dimension_numbers = #tpu.dot_dimension_numbers<[1], [0], [0], [1], [0, 0, 1, 1], [], []>} : vector<4x256xbf16>, vector<256x1024xbf16>, vector<4x1024xf32> -> vector<4x1024xf32>
    %101 = arith.addf %97, %100 : vector<4x1024xf32>
    %102 = vector.extract_strided_slice %101 {offsets = [0, 0], sizes = [4, 256], strides = [1, 1]} : vector<4x1024xf32> to vector<4x256xf32>
    %103 = arith.negf %102 : vector<4x256xf32>
    %104 = math.exp %103 : vector<4x256xf32>
    %cst_41 = arith.constant 1.000000e+00 : f32
    %105 = vector.broadcast %cst_41 : f32 to vector<4x256xf32>
    %106 = arith.addf %105, %104 : vector<4x256xf32>
    %107 = arith.divf %105, %106 : vector<4x256xf32>
    %108 = vector.extract_strided_slice %101 {offsets = [0, 256], sizes = [4, 256], strides = [1, 1]} : vector<4x1024xf32> to vector<4x256xf32>
    %109 = arith.negf %108 : vector<4x256xf32>
    %110 = math.exp %109 : vector<4x256xf32>
    %cst_42 = arith.constant 1.000000e+00 : f32
    %111 = vector.broadcast %cst_42 : f32 to vector<4x256xf32>
    %112 = arith.addf %111, %110 : vector<4x256xf32>
    %113 = arith.divf %111, %112 : vector<4x256xf32>
    %114 = vector.extract_strided_slice %101 {offsets = [0, 512], sizes = [4, 256], strides = [1, 1]} : vector<4x1024xf32> to vector<4x256xf32>
    %115 = math.tanh %114 : vector<4x256xf32>
    %116 = vector.extract_strided_slice %101 {offsets = [0, 768], sizes = [4, 256], strides = [1, 1]} : vector<4x1024xf32> to vector<4x256xf32>
    %117 = arith.negf %116 : vector<4x256xf32>
    %118 = math.exp %117 : vector<4x256xf32>
    %cst_43 = arith.constant 1.000000e+00 : f32
    %119 = vector.broadcast %cst_43 : f32 to vector<4x256xf32>
    %120 = arith.addf %119, %118 : vector<4x256xf32>
    %121 = arith.divf %119, %120 : vector<4x256xf32>
    %122 = arith.mulf %113, %84 : vector<4x256xf32>
    %123 = arith.mulf %107, %115 : vector<4x256xf32>
    %124 = arith.addf %122, %123 : vector<4x256xf32>
    %125 = math.tanh %124 : vector<4x256xf32>
    %126 = arith.mulf %121, %125 : vector<4x256xf32>
    %c2_44 = arith.constant 2 : index
    %c0_45 = arith.constant 0 : index
    %c0_46 = arith.constant 0 : index
    %127 = vector.load %arg2[%c2_44, %c0_45, %c0_46] : memref<8x4x256xf32, #tpu.memory_space<vmem>>, vector<1x4x256xf32>
    %128 = vector.shape_cast %127 : vector<1x4x256xf32> to vector<4x256xf32>
    %cst_47 = arith.constant 0.000000e+00 : f32
    %129 = vector.broadcast %cst_47 : f32 to vector<4x256xf32>
    %130 = arith.cmpf ogt, %128, %129 : vector<4x256xf32>
    %131 = arith.select %130, %124, %84 : vector<4x256xi1>, vector<4x256xf32>
    %132 = arith.select %130, %126, %85 : vector<4x256xi1>, vector<4x256xf32>
    %cst_48 = arith.constant 0.000000e+00 : f32
    %133 = vector.broadcast %cst_48 : f32 to vector<4x256xf32>
    %134 = arith.select %130, %126, %133 : vector<4x256xi1>, vector<4x256xf32>
    %135 = vector.extract_strided_slice %134 {offsets = [0, 0], sizes = [4, 128], strides = [1, 1]} : vector<4x256xf32> to vector<4x128xf32>
    %c2_49 = arith.constant 2 : index
    %c0_50 = arith.constant 0 : index
    %c0_51 = arith.constant 0 : index
    %136 = vector.load %arg3[%c2_49, %c0_50, %c0_51] : memref<8x4x256xf32, #tpu.memory_space<vmem>>, vector<1x4x128xf32>
    %137 = vector.shape_cast %136 : vector<1x4x128xf32> to vector<4x128xf32>
    %138 = vector.shape_cast %135 : vector<4x128xf32> to vector<1x4x128xf32>
    tpu.vector_store %arg3[%c2_49, %c0_50, %c0_51], %138 {strides = array<i32>} : memref<8x4x256xf32, #tpu.memory_space<vmem>>, vector<1x4x128xf32>,
    %139 = vector.extract_strided_slice %134 {offsets = [0, 128], sizes = [4, 128], strides = [1, 1]} : vector<4x256xf32> to vector<4x128xf32>
    %c5 = arith.constant 5 : index
    %c0_52 = arith.constant 0 : index
    %c128_53 = arith.constant 128 : index
    %140 = vector.load %arg3[%c5, %c0_52, %c128_53] : memref<8x4x256xf32, #tpu.memory_space<vmem>>, vector<1x4x128xf32>
    %141 = vector.shape_cast %140 : vector<1x4x128xf32> to vector<4x128xf32>
    %142 = vector.shape_cast %139 : vector<4x128xf32> to vector<1x4x128xf32>
    tpu.vector_store %arg3[%c5, %c0_52, %c128_53], %142 {strides = array<i32>} : memref<8x4x256xf32, #tpu.memory_space<vmem>>, vector<1x4x128xf32>,
    %c3 = arith.constant 3 : index
    %c0_54 = arith.constant 0 : index
    %c0_55 = arith.constant 0 : index
    %143 = vector.load %arg0[%c3, %c0_54, %c0_55] : memref<8x4x1024xf32, #tpu.memory_space<vmem>>, vector<1x4x1024xf32>
    %144 = vector.shape_cast %143 : vector<1x4x1024xf32> to vector<4x1024xf32>
    %145 = arith.truncf %132 : vector<4x256xf32> to vector<4x256xbf16>
    %c0_56 = arith.constant 0 : index
    %c0_57 = arith.constant 0 : index
    %146 = vector.load %arg1[%c0_56, %c0_57] : memref<256x1024xbf16, #tpu.memory_space<vmem>>, vector<256x1024xbf16>
    %cst_58 = arith.constant dense<0.000000e+00> : vector<4x1024xf32>
    %147 = tpu.matmul %145, %146, %cst_58 {dimension_numbers = #tpu.dot_dimension_numbers<[1], [0], [0], [1], [0, 0, 1, 1], [], []>} : vector<4x256xbf16>, vector<256x1024xbf16>, vector<4x1024xf32> -> vector<4x1024xf32>
    %148 = arith.addf %144, %147 : vector<4x1024xf32>
    %149 = vector.extract_strided_slice %148 {offsets = [0, 0], sizes = [4, 256], strides = [1, 1]} : vector<4x1024xf32> to vector<4x256xf32>
    %150 = arith.negf %149 : vector<4x256xf32>
    %151 = math.exp %150 : vector<4x256xf32>
    %cst_59 = arith.constant 1.000000e+00 : f32
    %152 = vector.broadcast %cst_59 : f32 to vector<4x256xf32>
    %153 = arith.addf %152, %151 : vector<4x256xf32>
    %154 = arith.divf %152, %153 : vector<4x256xf32>
    %155 = vector.extract_strided_slice %148 {offsets = [0, 256], sizes = [4, 256], strides = [1, 1]} : vector<4x1024xf32> to vector<4x256xf32>
    %156 = arith.negf %155 : vector<4x256xf32>
    %157 = math.exp %156 : vector<4x256xf32>
    %cst_60 = arith.constant 1.000000e+00 : f32
    %158 = vector.broadcast %cst_60 : f32 to vector<4x256xf32>
    %159 = arith.addf %158, %157 : vector<4x256xf32>
    %160 = arith.divf %158, %159 : vector<4x256xf32>
    %161 = vector.extract_strided_slice %148 {offsets = [0, 512], sizes = [4, 256], strides = [1, 1]} : vector<4x1024xf32> to vector<4x256xf32>
    %162 = math.tanh %161 : vector<4x256xf32>
    %163 = vector.extract_strided_slice %148 {offsets = [0, 768], sizes = [4, 256], strides = [1, 1]} : vector<4x1024xf32> to vector<4x256xf32>
    %164 = arith.negf %163 : vector<4x256xf32>
    %165 = math.exp %164 : vector<4x256xf32>
    %cst_61 = arith.constant 1.000000e+00 : f32
    %166 = vector.broadcast %cst_61 : f32 to vector<4x256xf32>
    %167 = arith.addf %166, %165 : vector<4x256xf32>
    %168 = arith.divf %166, %167 : vector<4x256xf32>
    %169 = arith.mulf %160, %131 : vector<4x256xf32>
    %170 = arith.mulf %154, %162 : vector<4x256xf32>
    %171 = arith.addf %169, %170 : vector<4x256xf32>
    %172 = math.tanh %171 : vector<4x256xf32>
    %173 = arith.mulf %168, %172 : vector<4x256xf32>
    %c3_62 = arith.constant 3 : index
    %c0_63 = arith.constant 0 : index
    %c0_64 = arith.constant 0 : index
    %174 = vector.load %arg2[%c3_62, %c0_63, %c0_64] : memref<8x4x256xf32, #tpu.memory_space<vmem>>, vector<1x4x256xf32>
    %175 = vector.shape_cast %174 : vector<1x4x256xf32> to vector<4x256xf32>
    %cst_65 = arith.constant 0.000000e+00 : f32
    %176 = vector.broadcast %cst_65 : f32 to vector<4x256xf32>
    %177 = arith.cmpf ogt, %175, %176 : vector<4x256xf32>
    %178 = arith.select %177, %171, %131 : vector<4x256xi1>, vector<4x256xf32>
    %179 = arith.select %177, %173, %132 : vector<4x256xi1>, vector<4x256xf32>
    %cst_66 = arith.constant 0.000000e+00 : f32
    %180 = vector.broadcast %cst_66 : f32 to vector<4x256xf32>
    %181 = arith.select %177, %173, %180 : vector<4x256xi1>, vector<4x256xf32>
    %182 = vector.extract_strided_slice %181 {offsets = [0, 0], sizes = [4, 128], strides = [1, 1]} : vector<4x256xf32> to vector<4x128xf32>
    %c3_67 = arith.constant 3 : index
    %c0_68 = arith.constant 0 : index
    %c0_69 = arith.constant 0 : index
    %183 = vector.load %arg3[%c3_67, %c0_68, %c0_69] : memref<8x4x256xf32, #tpu.memory_space<vmem>>, vector<1x4x128xf32>
    %184 = vector.shape_cast %183 : vector<1x4x128xf32> to vector<4x128xf32>
    %185 = vector.shape_cast %182 : vector<4x128xf32> to vector<1x4x128xf32>
    tpu.vector_store %arg3[%c3_67, %c0_68, %c0_69], %185 {strides = array<i32>} : memref<8x4x256xf32, #tpu.memory_space<vmem>>, vector<1x4x128xf32>,
    %186 = vector.extract_strided_slice %181 {offsets = [0, 128], sizes = [4, 128], strides = [1, 1]} : vector<4x256xf32> to vector<4x128xf32>
    %c4 = arith.constant 4 : index
    %c0_70 = arith.constant 0 : index
    %c128_71 = arith.constant 128 : index
    %187 = vector.load %arg3[%c4, %c0_70, %c128_71] : memref<8x4x256xf32, #tpu.memory_space<vmem>>, vector<1x4x128xf32>
    %188 = vector.shape_cast %187 : vector<1x4x128xf32> to vector<4x128xf32>
    %189 = vector.shape_cast %186 : vector<4x128xf32> to vector<1x4x128xf32>
    tpu.vector_store %arg3[%c4, %c0_70, %c128_71], %189 {strides = array<i32>} : memref<8x4x256xf32, #tpu.memory_space<vmem>>, vector<1x4x128xf32>,
    %c4_72 = arith.constant 4 : index
    %c0_73 = arith.constant 0 : index
    %c0_74 = arith.constant 0 : index
    %190 = vector.load %arg0[%c4_72, %c0_73, %c0_74] : memref<8x4x1024xf32, #tpu.memory_space<vmem>>, vector<1x4x1024xf32>
    %191 = vector.shape_cast %190 : vector<1x4x1024xf32> to vector<4x1024xf32>
    %192 = arith.truncf %179 : vector<4x256xf32> to vector<4x256xbf16>
    %c0_75 = arith.constant 0 : index
    %c0_76 = arith.constant 0 : index
    %193 = vector.load %arg1[%c0_75, %c0_76] : memref<256x1024xbf16, #tpu.memory_space<vmem>>, vector<256x1024xbf16>
    %cst_77 = arith.constant dense<0.000000e+00> : vector<4x1024xf32>
    %194 = tpu.matmul %192, %193, %cst_77 {dimension_numbers = #tpu.dot_dimension_numbers<[1], [0], [0], [1], [0, 0, 1, 1], [], []>} : vector<4x256xbf16>, vector<256x1024xbf16>, vector<4x1024xf32> -> vector<4x1024xf32>
    %195 = arith.addf %191, %194 : vector<4x1024xf32>
    %196 = vector.extract_strided_slice %195 {offsets = [0, 0], sizes = [4, 256], strides = [1, 1]} : vector<4x1024xf32> to vector<4x256xf32>
    %197 = arith.negf %196 : vector<4x256xf32>
    %198 = math.exp %197 : vector<4x256xf32>
    %cst_78 = arith.constant 1.000000e+00 : f32
    %199 = vector.broadcast %cst_78 : f32 to vector<4x256xf32>
    %200 = arith.addf %199, %198 : vector<4x256xf32>
    %201 = arith.divf %199, %200 : vector<4x256xf32>
    %202 = vector.extract_strided_slice %195 {offsets = [0, 256], sizes = [4, 256], strides = [1, 1]} : vector<4x1024xf32> to vector<4x256xf32>
    %203 = arith.negf %202 : vector<4x256xf32>
    %204 = math.exp %203 : vector<4x256xf32>
    %cst_79 = arith.constant 1.000000e+00 : f32
    %205 = vector.broadcast %cst_79 : f32 to vector<4x256xf32>
    %206 = arith.addf %205, %204 : vector<4x256xf32>
    %207 = arith.divf %205, %206 : vector<4x256xf32>
    %208 = vector.extract_strided_slice %195 {offsets = [0, 512], sizes = [4, 256], strides = [1, 1]} : vector<4x1024xf32> to vector<4x256xf32>
    %209 = math.tanh %208 : vector<4x256xf32>
    %210 = vector.extract_strided_slice %195 {offsets = [0, 768], sizes = [4, 256], strides = [1, 1]} : vector<4x1024xf32> to vector<4x256xf32>
    %211 = arith.negf %210 : vector<4x256xf32>
    %212 = math.exp %211 : vector<4x256xf32>
    %cst_80 = arith.constant 1.000000e+00 : f32
    %213 = vector.broadcast %cst_80 : f32 to vector<4x256xf32>
    %214 = arith.addf %213, %212 : vector<4x256xf32>
    %215 = arith.divf %213, %214 : vector<4x256xf32>
    %216 = arith.mulf %207, %178 : vector<4x256xf32>
    %217 = arith.mulf %201, %209 : vector<4x256xf32>
    %218 = arith.addf %216, %217 : vector<4x256xf32>
    %219 = math.tanh %218 : vector<4x256xf32>
    %220 = arith.mulf %215, %219 : vector<4x256xf32>
    %c4_81 = arith.constant 4 : index
    %c0_82 = arith.constant 0 : index
    %c0_83 = arith.constant 0 : index
    %221 = vector.load %arg2[%c4_81, %c0_82, %c0_83] : memref<8x4x256xf32, #tpu.memory_space<vmem>>, vector<1x4x256xf32>
    %222 = vector.shape_cast %221 : vector<1x4x256xf32> to vector<4x256xf32>
    %cst_84 = arith.constant 0.000000e+00 : f32
    %223 = vector.broadcast %cst_84 : f32 to vector<4x256xf32>
    %224 = arith.cmpf ogt, %222, %223 : vector<4x256xf32>
    %225 = arith.select %224, %218, %178 : vector<4x256xi1>, vector<4x256xf32>
    %226 = arith.select %224, %220, %179 : vector<4x256xi1>, vector<4x256xf32>
    %cst_85 = arith.constant 0.000000e+00 : f32
    %227 = vector.broadcast %cst_85 : f32 to vector<4x256xf32>
    %228 = arith.select %224, %220, %227 : vector<4x256xi1>, vector<4x256xf32>
    %229 = vector.extract_strided_slice %228 {offsets = [0, 0], sizes = [4, 128], strides = [1, 1]} : vector<4x256xf32> to vector<4x128xf32>
    %c4_86 = arith.constant 4 : index
    %c0_87 = arith.constant 0 : index
    %c0_88 = arith.constant 0 : index
    %230 = vector.load %arg3[%c4_86, %c0_87, %c0_88] : memref<8x4x256xf32, #tpu.memory_space<vmem>>, vector<1x4x128xf32>
    %231 = vector.shape_cast %230 : vector<1x4x128xf32> to vector<4x128xf32>
    %232 = vector.shape_cast %229 : vector<4x128xf32> to vector<1x4x128xf32>
    tpu.vector_store %arg3[%c4_86, %c0_87, %c0_88], %232 {strides = array<i32>} : memref<8x4x256xf32, #tpu.memory_space<vmem>>, vector<1x4x128xf32>,
    %233 = vector.extract_strided_slice %228 {offsets = [0, 128], sizes = [4, 128], strides = [1, 1]} : vector<4x256xf32> to vector<4x128xf32>
    %c3_89 = arith.constant 3 : index
    %c0_90 = arith.constant 0 : index
    %c128_91 = arith.constant 128 : index
    %234 = vector.load %arg3[%c3_89, %c0_90, %c128_91] : memref<8x4x256xf32, #tpu.memory_space<vmem>>, vector<1x4x128xf32>
    %235 = vector.shape_cast %234 : vector<1x4x128xf32> to vector<4x128xf32>
    %236 = vector.shape_cast %233 : vector<4x128xf32> to vector<1x4x128xf32>
    tpu.vector_store %arg3[%c3_89, %c0_90, %c128_91], %236 {strides = array<i32>} : memref<8x4x256xf32, #tpu.memory_space<vmem>>, vector<1x4x128xf32>,
    %c5_92 = arith.constant 5 : index
    %c0_93 = arith.constant 0 : index
    %c0_94 = arith.constant 0 : index
    %237 = vector.load %arg0[%c5_92, %c0_93, %c0_94] : memref<8x4x1024xf32, #tpu.memory_space<vmem>>, vector<1x4x1024xf32>
    %238 = vector.shape_cast %237 : vector<1x4x1024xf32> to vector<4x1024xf32>
    %239 = arith.truncf %226 : vector<4x256xf32> to vector<4x256xbf16>
    %c0_95 = arith.constant 0 : index
    %c0_96 = arith.constant 0 : index
    %240 = vector.load %arg1[%c0_95, %c0_96] : memref<256x1024xbf16, #tpu.memory_space<vmem>>, vector<256x1024xbf16>
    %cst_97 = arith.constant dense<0.000000e+00> : vector<4x1024xf32>
    %241 = tpu.matmul %239, %240, %cst_97 {dimension_numbers = #tpu.dot_dimension_numbers<[1], [0], [0], [1], [0, 0, 1, 1], [], []>} : vector<4x256xbf16>, vector<256x1024xbf16>, vector<4x1024xf32> -> vector<4x1024xf32>
    %242 = arith.addf %238, %241 : vector<4x1024xf32>
    %243 = vector.extract_strided_slice %242 {offsets = [0, 0], sizes = [4, 256], strides = [1, 1]} : vector<4x1024xf32> to vector<4x256xf32>
    %244 = arith.negf %243 : vector<4x256xf32>
    %245 = math.exp %244 : vector<4x256xf32>
    %cst_98 = arith.constant 1.000000e+00 : f32
    %246 = vector.broadcast %cst_98 : f32 to vector<4x256xf32>
    %247 = arith.addf %246, %245 : vector<4x256xf32>
    %248 = arith.divf %246, %247 : vector<4x256xf32>
    %249 = vector.extract_strided_slice %242 {offsets = [0, 256], sizes = [4, 256], strides = [1, 1]} : vector<4x1024xf32> to vector<4x256xf32>
    %250 = arith.negf %249 : vector<4x256xf32>
    %251 = math.exp %250 : vector<4x256xf32>
    %cst_99 = arith.constant 1.000000e+00 : f32
    %252 = vector.broadcast %cst_99 : f32 to vector<4x256xf32>
    %253 = arith.addf %252, %251 : vector<4x256xf32>
    %254 = arith.divf %252, %253 : vector<4x256xf32>
    %255 = vector.extract_strided_slice %242 {offsets = [0, 512], sizes = [4, 256], strides = [1, 1]} : vector<4x1024xf32> to vector<4x256xf32>
    %256 = math.tanh %255 : vector<4x256xf32>
    %257 = vector.extract_strided_slice %242 {offsets = [0, 768], sizes = [4, 256], strides = [1, 1]} : vector<4x1024xf32> to vector<4x256xf32>
    %258 = arith.negf %257 : vector<4x256xf32>
    %259 = math.exp %258 : vector<4x256xf32>
    %cst_100 = arith.constant 1.000000e+00 : f32
    %260 = vector.broadcast %cst_100 : f32 to vector<4x256xf32>
    %261 = arith.addf %260, %259 : vector<4x256xf32>
    %262 = arith.divf %260, %261 : vector<4x256xf32>
    %263 = arith.mulf %254, %225 : vector<4x256xf32>
    %264 = arith.mulf %248, %256 : vector<4x256xf32>
    %265 = arith.addf %263, %264 : vector<4x256xf32>
    %266 = math.tanh %265 : vector<4x256xf32>
    %267 = arith.mulf %262, %266 : vector<4x256xf32>
    %c5_101 = arith.constant 5 : index
    %c0_102 = arith.constant 0 : index
    %c0_103 = arith.constant 0 : index
    %268 = vector.load %arg2[%c5_101, %c0_102, %c0_103] : memref<8x4x256xf32, #tpu.memory_space<vmem>>, vector<1x4x256xf32>
    %269 = vector.shape_cast %268 : vector<1x4x256xf32> to vector<4x256xf32>
    %cst_104 = arith.constant 0.000000e+00 : f32
    %270 = vector.broadcast %cst_104 : f32 to vector<4x256xf32>
    %271 = arith.cmpf ogt, %269, %270 : vector<4x256xf32>
    %272 = arith.select %271, %265, %225 : vector<4x256xi1>, vector<4x256xf32>
    %273 = arith.select %271, %267, %226 : vector<4x256xi1>, vector<4x256xf32>
    %cst_105 = arith.constant 0.000000e+00 : f32
    %274 = vector.broadcast %cst_105 : f32 to vector<4x256xf32>
    %275 = arith.select %271, %267, %274 : vector<4x256xi1>, vector<4x256xf32>
    %276 = vector.extract_strided_slice %275 {offsets = [0, 0], sizes = [4, 128], strides = [1, 1]} : vector<4x256xf32> to vector<4x128xf32>
    %c5_106 = arith.constant 5 : index
    %c0_107 = arith.constant 0 : index
    %c0_108 = arith.constant 0 : index
    %277 = vector.load %arg3[%c5_106, %c0_107, %c0_108] : memref<8x4x256xf32, #tpu.memory_space<vmem>>, vector<1x4x128xf32>
    %278 = vector.shape_cast %277 : vector<1x4x128xf32> to vector<4x128xf32>
    %279 = vector.shape_cast %276 : vector<4x128xf32> to vector<1x4x128xf32>
    tpu.vector_store %arg3[%c5_106, %c0_107, %c0_108], %279 {strides = array<i32>} : memref<8x4x256xf32, #tpu.memory_space<vmem>>, vector<1x4x128xf32>,
    %280 = vector.extract_strided_slice %275 {offsets = [0, 128], sizes = [4, 128], strides = [1, 1]} : vector<4x256xf32> to vector<4x128xf32>
    %c2_109 = arith.constant 2 : index
    %c0_110 = arith.constant 0 : index
    %c128_111 = arith.constant 128 : index
    %281 = vector.load %arg3[%c2_109, %c0_110, %c128_111] : memref<8x4x256xf32, #tpu.memory_space<vmem>>, vector<1x4x128xf32>
    %282 = vector.shape_cast %281 : vector<1x4x128xf32> to vector<4x128xf32>
    %283 = vector.shape_cast %280 : vector<4x128xf32> to vector<1x4x128xf32>
    tpu.vector_store %arg3[%c2_109, %c0_110, %c128_111], %283 {strides = array<i32>} : memref<8x4x256xf32, #tpu.memory_space<vmem>>, vector<1x4x128xf32>,
    %c6_112 = arith.constant 6 : index
    %c0_113 = arith.constant 0 : index
    %c0_114 = arith.constant 0 : index
    %284 = vector.load %arg0[%c6_112, %c0_113, %c0_114] : memref<8x4x1024xf32, #tpu.memory_space<vmem>>, vector<1x4x1024xf32>
    %285 = vector.shape_cast %284 : vector<1x4x1024xf32> to vector<4x1024xf32>
    %286 = arith.truncf %273 : vector<4x256xf32> to vector<4x256xbf16>
    %c0_115 = arith.constant 0 : index
    %c0_116 = arith.constant 0 : index
    %287 = vector.load %arg1[%c0_115, %c0_116] : memref<256x1024xbf16, #tpu.memory_space<vmem>>, vector<256x1024xbf16>
    %cst_117 = arith.constant dense<0.000000e+00> : vector<4x1024xf32>
    %288 = tpu.matmul %286, %287, %cst_117 {dimension_numbers = #tpu.dot_dimension_numbers<[1], [0], [0], [1], [0, 0, 1, 1], [], []>} : vector<4x256xbf16>, vector<256x1024xbf16>, vector<4x1024xf32> -> vector<4x1024xf32>
    %289 = arith.addf %285, %288 : vector<4x1024xf32>
    %290 = vector.extract_strided_slice %289 {offsets = [0, 0], sizes = [4, 256], strides = [1, 1]} : vector<4x1024xf32> to vector<4x256xf32>
    %291 = arith.negf %290 : vector<4x256xf32>
    %292 = math.exp %291 : vector<4x256xf32>
    %cst_118 = arith.constant 1.000000e+00 : f32
    %293 = vector.broadcast %cst_118 : f32 to vector<4x256xf32>
    %294 = arith.addf %293, %292 : vector<4x256xf32>
    %295 = arith.divf %293, %294 : vector<4x256xf32>
    %296 = vector.extract_strided_slice %289 {offsets = [0, 256], sizes = [4, 256], strides = [1, 1]} : vector<4x1024xf32> to vector<4x256xf32>
    %297 = arith.negf %296 : vector<4x256xf32>
    %298 = math.exp %297 : vector<4x256xf32>
    %cst_119 = arith.constant 1.000000e+00 : f32
    %299 = vector.broadcast %cst_119 : f32 to vector<4x256xf32>
    %300 = arith.addf %299, %298 : vector<4x256xf32>
    %301 = arith.divf %299, %300 : vector<4x256xf32>
    %302 = vector.extract_strided_slice %289 {offsets = [0, 512], sizes = [4, 256], strides = [1, 1]} : vector<4x1024xf32> to vector<4x256xf32>
    %303 = math.tanh %302 : vector<4x256xf32>
    %304 = vector.extract_strided_slice %289 {offsets = [0, 768], sizes = [4, 256], strides = [1, 1]} : vector<4x1024xf32> to vector<4x256xf32>
    %305 = arith.negf %304 : vector<4x256xf32>
    %306 = math.exp %305 : vector<4x256xf32>
    %cst_120 = arith.constant 1.000000e+00 : f32
    %307 = vector.broadcast %cst_120 : f32 to vector<4x256xf32>
    %308 = arith.addf %307, %306 : vector<4x256xf32>
    %309 = arith.divf %307, %308 : vector<4x256xf32>
    %310 = arith.mulf %301, %272 : vector<4x256xf32>
    %311 = arith.mulf %295, %303 : vector<4x256xf32>
    %312 = arith.addf %310, %311 : vector<4x256xf32>
    %313 = math.tanh %312 : vector<4x256xf32>
    %314 = arith.mulf %309, %313 : vector<4x256xf32>
    %c6_121 = arith.constant 6 : index
    %c0_122 = arith.constant 0 : index
    %c0_123 = arith.constant 0 : index
    %315 = vector.load %arg2[%c6_121, %c0_122, %c0_123] : memref<8x4x256xf32, #tpu.memory_space<vmem>>, vector<1x4x256xf32>
    %316 = vector.shape_cast %315 : vector<1x4x256xf32> to vector<4x256xf32>
    %cst_124 = arith.constant 0.000000e+00 : f32
    %317 = vector.broadcast %cst_124 : f32 to vector<4x256xf32>
    %318 = arith.cmpf ogt, %316, %317 : vector<4x256xf32>
    %319 = arith.select %318, %312, %272 : vector<4x256xi1>, vector<4x256xf32>
    %320 = arith.select %318, %314, %273 : vector<4x256xi1>, vector<4x256xf32>
    %cst_125 = arith.constant 0.000000e+00 : f32
    %321 = vector.broadcast %cst_125 : f32 to vector<4x256xf32>
    %322 = arith.select %318, %314, %321 : vector<4x256xi1>, vector<4x256xf32>
    %323 = vector.extract_strided_slice %322 {offsets = [0, 0], sizes = [4, 128], strides = [1, 1]} : vector<4x256xf32> to vector<4x128xf32>
    %c6_126 = arith.constant 6 : index
    %c0_127 = arith.constant 0 : index
    %c0_128 = arith.constant 0 : index
    %324 = vector.load %arg3[%c6_126, %c0_127, %c0_128] : memref<8x4x256xf32, #tpu.memory_space<vmem>>, vector<1x4x128xf32>
    %325 = vector.shape_cast %324 : vector<1x4x128xf32> to vector<4x128xf32>
    %326 = vector.shape_cast %323 : vector<4x128xf32> to vector<1x4x128xf32>
    tpu.vector_store %arg3[%c6_126, %c0_127, %c0_128], %326 {strides = array<i32>} : memref<8x4x256xf32, #tpu.memory_space<vmem>>, vector<1x4x128xf32>,
    %327 = vector.extract_strided_slice %322 {offsets = [0, 128], sizes = [4, 128], strides = [1, 1]} : vector<4x256xf32> to vector<4x128xf32>
    %c1_129 = arith.constant 1 : index
    %c0_130 = arith.constant 0 : index
    %c128_131 = arith.constant 128 : index
    %328 = vector.load %arg3[%c1_129, %c0_130, %c128_131] : memref<8x4x256xf32, #tpu.memory_space<vmem>>, vector<1x4x128xf32>
    %329 = vector.shape_cast %328 : vector<1x4x128xf32> to vector<4x128xf32>
    %330 = vector.shape_cast %327 : vector<4x128xf32> to vector<1x4x128xf32>
    tpu.vector_store %arg3[%c1_129, %c0_130, %c128_131], %330 {strides = array<i32>} : memref<8x4x256xf32, #tpu.memory_space<vmem>>, vector<1x4x128xf32>,
    %c7_132 = arith.constant 7 : index
    %c0_133 = arith.constant 0 : index
    %c0_134 = arith.constant 0 : index
    %331 = vector.load %arg0[%c7_132, %c0_133, %c0_134] : memref<8x4x1024xf32, #tpu.memory_space<vmem>>, vector<1x4x1024xf32>
    %332 = vector.shape_cast %331 : vector<1x4x1024xf32> to vector<4x1024xf32>
    %333 = arith.truncf %320 : vector<4x256xf32> to vector<4x256xbf16>
    %c0_135 = arith.constant 0 : index
    %c0_136 = arith.constant 0 : index
    %334 = vector.load %arg1[%c0_135, %c0_136] : memref<256x1024xbf16, #tpu.memory_space<vmem>>, vector<256x1024xbf16>
    %cst_137 = arith.constant dense<0.000000e+00> : vector<4x1024xf32>
    %335 = tpu.matmul %333, %334, %cst_137 {dimension_numbers = #tpu.dot_dimension_numbers<[1], [0], [0], [1], [0, 0, 1, 1], [], []>} : vector<4x256xbf16>, vector<256x1024xbf16>, vector<4x1024xf32> -> vector<4x1024xf32>
    %336 = arith.addf %332, %335 : vector<4x1024xf32>
    %337 = vector.extract_strided_slice %336 {offsets = [0, 0], sizes = [4, 256], strides = [1, 1]} : vector<4x1024xf32> to vector<4x256xf32>
    %338 = arith.negf %337 : vector<4x256xf32>
    %339 = math.exp %338 : vector<4x256xf32>
    %cst_138 = arith.constant 1.000000e+00 : f32
    %340 = vector.broadcast %cst_138 : f32 to vector<4x256xf32>
    %341 = arith.addf %340, %339 : vector<4x256xf32>
    %342 = arith.divf %340, %341 : vector<4x256xf32>
    %343 = vector.extract_strided_slice %336 {offsets = [0, 256], sizes = [4, 256], strides = [1, 1]} : vector<4x1024xf32> to vector<4x256xf32>
    %344 = arith.negf %343 : vector<4x256xf32>
    %345 = math.exp %344 : vector<4x256xf32>
    %cst_139 = arith.constant 1.000000e+00 : f32
    %346 = vector.broadcast %cst_139 : f32 to vector<4x256xf32>
    %347 = arith.addf %346, %345 : vector<4x256xf32>
    %348 = arith.divf %346, %347 : vector<4x256xf32>
    %349 = vector.extract_strided_slice %336 {offsets = [0, 512], sizes = [4, 256], strides = [1, 1]} : vector<4x1024xf32> to vector<4x256xf32>
    %350 = math.tanh %349 : vector<4x256xf32>
    %351 = vector.extract_strided_slice %336 {offsets = [0, 768], sizes = [4, 256], strides = [1, 1]} : vector<4x1024xf32> to vector<4x256xf32>
    %352 = arith.negf %351 : vector<4x256xf32>
    %353 = math.exp %352 : vector<4x256xf32>
    %cst_140 = arith.constant 1.000000e+00 : f32
    %354 = vector.broadcast %cst_140 : f32 to vector<4x256xf32>
    %355 = arith.addf %354, %353 : vector<4x256xf32>
    %356 = arith.divf %354, %355 : vector<4x256xf32>
    %357 = arith.mulf %348, %319 : vector<4x256xf32>
    %358 = arith.mulf %342, %350 : vector<4x256xf32>
    %359 = arith.addf %357, %358 : vector<4x256xf32>
    %360 = math.tanh %359 : vector<4x256xf32>
    %361 = arith.mulf %356, %360 : vector<4x256xf32>
    %c7_141 = arith.constant 7 : index
    %c0_142 = arith.constant 0 : index
    %c0_143 = arith.constant 0 : index
    %362 = vector.load %arg2[%c7_141, %c0_142, %c0_143] : memref<8x4x256xf32, #tpu.memory_space<vmem>>, vector<1x4x256xf32>
    %363 = vector.shape_cast %362 : vector<1x4x256xf32> to vector<4x256xf32>
    %cst_144 = arith.constant 0.000000e+00 : f32
    %364 = vector.broadcast %cst_144 : f32 to vector<4x256xf32>
    %365 = arith.cmpf ogt, %363, %364 : vector<4x256xf32>
    %cst_145 = arith.constant 0.000000e+00 : f32
    %366 = vector.broadcast %cst_145 : f32 to vector<4x256xf32>
    %367 = arith.select %365, %361, %366 : vector<4x256xi1>, vector<4x256xf32>
    %368 = vector.extract_strided_slice %367 {offsets = [0, 0], sizes = [4, 128], strides = [1, 1]} : vector<4x256xf32> to vector<4x128xf32>
    %c7_146 = arith.constant 7 : index
    %c0_147 = arith.constant 0 : index
    %c0_148 = arith.constant 0 : index
    %369 = vector.load %arg3[%c7_146, %c0_147, %c0_148] : memref<8x4x256xf32, #tpu.memory_space<vmem>>, vector<1x4x128xf32>
    %370 = vector.shape_cast %369 : vector<1x4x128xf32> to vector<4x128xf32>
    %371 = vector.shape_cast %368 : vector<4x128xf32> to vector<1x4x128xf32>
    tpu.vector_store %arg3[%c7_146, %c0_147, %c0_148], %371 {strides = array<i32>} : memref<8x4x256xf32, #tpu.memory_space<vmem>>, vector<1x4x128xf32>,
    %372 = vector.extract_strided_slice %367 {offsets = [0, 128], sizes = [4, 128], strides = [1, 1]} : vector<4x256xf32> to vector<4x128xf32>
    %c0_149 = arith.constant 0 : index
    %c0_150 = arith.constant 0 : index
    %c128_151 = arith.constant 128 : index
    %373 = vector.load %arg3[%c0_149, %c0_150, %c128_151] : memref<8x4x256xf32, #tpu.memory_space<vmem>>, vector<1x4x128xf32>
    %374 = vector.shape_cast %373 : vector<1x4x128xf32> to vector<4x128xf32>
    %375 = vector.shape_cast %372 : vector<4x128xf32> to vector<1x4x128xf32>
    tpu.vector_store %arg3[%c0_149, %c0_150, %c128_151], %375 {strides = array<i32>} : memref<8x4x256xf32, #tpu.memory_space<vmem>>, vector<1x4x128xf32>,
    return
  }
}

module attributes {stable_mosaic.version = 11 : i64} {
  func.func @_bilstm_recurrence_kernel(%arg0: memref<8x4x1024xf32, #tpu.memory_space<vmem>>, %arg1: memref<256x1024xbf16, #tpu.memory_space<vmem>>, %arg2: memref<8x4x256xf32, #tpu.memory_space<vmem>>, %arg3: memref<256x8xf32, #tpu.memory_space<vmem>>, %arg4: memref<4x8xf32, #tpu.memory_space<vmem>>) attributes {dimension_semantics = [], scalar_prefetch = 0 : i64, scratch_operands = 0 : i64, tpu.core_type = #tpu.core_type<tc>} {
    %cst = arith.constant 0.000000e+00 : f32
    %0 = vector.broadcast %cst : f32 to vector<4x256xf32>
    %cst_0 = arith.constant 0.000000e+00 : f32
    %1 = vector.broadcast %cst_0 : f32 to vector<4x256xf32>
    %cst_1 = arith.constant 0.000000e+00 : f32
    %2 = vector.broadcast %cst_1 : f32 to vector<4x256xf32>
    %c0 = arith.constant 0 : index
    %c0_2 = arith.constant 0 : index
    %c0_3 = arith.constant 0 : index
    %3 = vector.load %arg0[%c0, %c0_2, %c0_3] : memref<8x4x1024xf32, #tpu.memory_space<vmem>>, vector<1x4x1024xf32>
    %4 = vector.shape_cast %3 : vector<1x4x1024xf32> to vector<4x1024xf32>
    %5 = arith.truncf %0 : vector<4x256xf32> to vector<4x256xbf16>
    %c0_4 = arith.constant 0 : index
    %c0_5 = arith.constant 0 : index
    %6 = vector.load %arg1[%c0_4, %c0_5] : memref<256x1024xbf16, #tpu.memory_space<vmem>>, vector<256x1024xbf16>
    %cst_6 = arith.constant dense<0.000000e+00> : vector<4x1024xf32>
    %7 = tpu.matmul %5, %6, %cst_6 {dimension_numbers = #tpu.dot_dimension_numbers<[1], [0], [0], [1], [0, 0, 1, 1], [], []>} : vector<4x256xbf16>, vector<256x1024xbf16>, vector<4x1024xf32> -> vector<4x1024xf32>
    %8 = arith.addf %4, %7 : vector<4x1024xf32>
    %9 = vector.extract_strided_slice %8 {offsets = [0, 0], sizes = [4, 256], strides = [1, 1]} : vector<4x1024xf32> to vector<4x256xf32>
    %10 = arith.negf %9 : vector<4x256xf32>
    %11 = math.exp %10 : vector<4x256xf32>
    %cst_7 = arith.constant 1.000000e+00 : f32
    %12 = vector.broadcast %cst_7 : f32 to vector<4x256xf32>
    %13 = arith.addf %12, %11 : vector<4x256xf32>
    %14 = arith.divf %12, %13 : vector<4x256xf32>
    %15 = vector.extract_strided_slice %8 {offsets = [0, 256], sizes = [4, 256], strides = [1, 1]} : vector<4x1024xf32> to vector<4x256xf32>
    %16 = arith.negf %15 : vector<4x256xf32>
    %17 = math.exp %16 : vector<4x256xf32>
    %cst_8 = arith.constant 1.000000e+00 : f32
    %18 = vector.broadcast %cst_8 : f32 to vector<4x256xf32>
    %19 = arith.addf %18, %17 : vector<4x256xf32>
    %20 = arith.divf %18, %19 : vector<4x256xf32>
    %21 = vector.extract_strided_slice %8 {offsets = [0, 512], sizes = [4, 256], strides = [1, 1]} : vector<4x1024xf32> to vector<4x256xf32>
    %22 = math.tanh %21 : vector<4x256xf32>
    %23 = vector.extract_strided_slice %8 {offsets = [0, 768], sizes = [4, 256], strides = [1, 1]} : vector<4x1024xf32> to vector<4x256xf32>
    %24 = arith.negf %23 : vector<4x256xf32>
    %25 = math.exp %24 : vector<4x256xf32>
    %cst_9 = arith.constant 1.000000e+00 : f32
    %26 = vector.broadcast %cst_9 : f32 to vector<4x256xf32>
    %27 = arith.addf %26, %25 : vector<4x256xf32>
    %28 = arith.divf %26, %27 : vector<4x256xf32>
    %29 = arith.mulf %20, %1 : vector<4x256xf32>
    %30 = arith.mulf %14, %22 : vector<4x256xf32>
    %31 = arith.addf %29, %30 : vector<4x256xf32>
    %32 = math.tanh %31 : vector<4x256xf32>
    %33 = arith.mulf %28, %32 : vector<4x256xf32>
    %c0_10 = arith.constant 0 : index
    %c0_11 = arith.constant 0 : index
    %c0_12 = arith.constant 0 : index
    %34 = vector.load %arg2[%c0_10, %c0_11, %c0_12] : memref<8x4x256xf32, #tpu.memory_space<vmem>>, vector<1x4x256xf32>
    %35 = vector.shape_cast %34 : vector<1x4x256xf32> to vector<4x256xf32>
    %cst_13 = arith.constant 0.000000e+00 : f32
    %36 = vector.broadcast %cst_13 : f32 to vector<4x256xf32>
    %37 = arith.cmpf ogt, %35, %36 : vector<4x256xf32>
    %38 = arith.select %37, %31, %1 : vector<4x256xi1>, vector<4x256xf32>
    %39 = arith.select %37, %33, %0 : vector<4x256xi1>, vector<4x256xf32>
    %cst_14 = arith.constant 0.000000e+00 : f32
    %40 = vector.broadcast %cst_14 : f32 to vector<4x256xf32>
    %41 = arith.select %37, %33, %40 : vector<4x256xi1>, vector<4x256xf32>
    %42 = arith.addf %2, %41 : vector<4x256xf32>
    %c1 = arith.constant 1 : index
    %c0_15 = arith.constant 0 : index
    %c0_16 = arith.constant 0 : index
    %43 = vector.load %arg0[%c1, %c0_15, %c0_16] : memref<8x4x1024xf32, #tpu.memory_space<vmem>>, vector<1x4x1024xf32>
    %44 = vector.shape_cast %43 : vector<1x4x1024xf32> to vector<4x1024xf32>
    %45 = arith.truncf %39 : vector<4x256xf32> to vector<4x256xbf16>
    %c0_17 = arith.constant 0 : index
    %c0_18 = arith.constant 0 : index
    %46 = vector.load %arg1[%c0_17, %c0_18] : memref<256x1024xbf16, #tpu.memory_space<vmem>>, vector<256x1024xbf16>
    %cst_19 = arith.constant dense<0.000000e+00> : vector<4x1024xf32>
    %47 = tpu.matmul %45, %46, %cst_19 {dimension_numbers = #tpu.dot_dimension_numbers<[1], [0], [0], [1], [0, 0, 1, 1], [], []>} : vector<4x256xbf16>, vector<256x1024xbf16>, vector<4x1024xf32> -> vector<4x1024xf32>
    %48 = arith.addf %44, %47 : vector<4x1024xf32>
    %49 = vector.extract_strided_slice %48 {offsets = [0, 0], sizes = [4, 256], strides = [1, 1]} : vector<4x1024xf32> to vector<4x256xf32>
    %50 = arith.negf %49 : vector<4x256xf32>
    %51 = math.exp %50 : vector<4x256xf32>
    %cst_20 = arith.constant 1.000000e+00 : f32
    %52 = vector.broadcast %cst_20 : f32 to vector<4x256xf32>
    %53 = arith.addf %52, %51 : vector<4x256xf32>
    %54 = arith.divf %52, %53 : vector<4x256xf32>
    %55 = vector.extract_strided_slice %48 {offsets = [0, 256], sizes = [4, 256], strides = [1, 1]} : vector<4x1024xf32> to vector<4x256xf32>
    %56 = arith.negf %55 : vector<4x256xf32>
    %57 = math.exp %56 : vector<4x256xf32>
    %cst_21 = arith.constant 1.000000e+00 : f32
    %58 = vector.broadcast %cst_21 : f32 to vector<4x256xf32>
    %59 = arith.addf %58, %57 : vector<4x256xf32>
    %60 = arith.divf %58, %59 : vector<4x256xf32>
    %61 = vector.extract_strided_slice %48 {offsets = [0, 512], sizes = [4, 256], strides = [1, 1]} : vector<4x1024xf32> to vector<4x256xf32>
    %62 = math.tanh %61 : vector<4x256xf32>
    %63 = vector.extract_strided_slice %48 {offsets = [0, 768], sizes = [4, 256], strides = [1, 1]} : vector<4x1024xf32> to vector<4x256xf32>
    %64 = arith.negf %63 : vector<4x256xf32>
    %65 = math.exp %64 : vector<4x256xf32>
    %cst_22 = arith.constant 1.000000e+00 : f32
    %66 = vector.broadcast %cst_22 : f32 to vector<4x256xf32>
    %67 = arith.addf %66, %65 : vector<4x256xf32>
    %68 = arith.divf %66, %67 : vector<4x256xf32>
    %69 = arith.mulf %60, %38 : vector<4x256xf32>
    %70 = arith.mulf %54, %62 : vector<4x256xf32>
    %71 = arith.addf %69, %70 : vector<4x256xf32>
    %72 = math.tanh %71 : vector<4x256xf32>
    %73 = arith.mulf %68, %72 : vector<4x256xf32>
    %c1_23 = arith.constant 1 : index
    %c0_24 = arith.constant 0 : index
    %c0_25 = arith.constant 0 : index
    %74 = vector.load %arg2[%c1_23, %c0_24, %c0_25] : memref<8x4x256xf32, #tpu.memory_space<vmem>>, vector<1x4x256xf32>
    %75 = vector.shape_cast %74 : vector<1x4x256xf32> to vector<4x256xf32>
    %cst_26 = arith.constant 0.000000e+00 : f32
    %76 = vector.broadcast %cst_26 : f32 to vector<4x256xf32>
    %77 = arith.cmpf ogt, %75, %76 : vector<4x256xf32>
    %78 = arith.select %77, %71, %38 : vector<4x256xi1>, vector<4x256xf32>
    %79 = arith.select %77, %73, %39 : vector<4x256xi1>, vector<4x256xf32>
    %cst_27 = arith.constant 0.000000e+00 : f32
    %80 = vector.broadcast %cst_27 : f32 to vector<4x256xf32>
    %81 = arith.select %77, %73, %80 : vector<4x256xi1>, vector<4x256xf32>
    %82 = arith.addf %42, %81 : vector<4x256xf32>
    %c2 = arith.constant 2 : index
    %c0_28 = arith.constant 0 : index
    %c0_29 = arith.constant 0 : index
    %83 = vector.load %arg0[%c2, %c0_28, %c0_29] : memref<8x4x1024xf32, #tpu.memory_space<vmem>>, vector<1x4x1024xf32>
    %84 = vector.shape_cast %83 : vector<1x4x1024xf32> to vector<4x1024xf32>
    %85 = arith.truncf %79 : vector<4x256xf32> to vector<4x256xbf16>
    %c0_30 = arith.constant 0 : index
    %c0_31 = arith.constant 0 : index
    %86 = vector.load %arg1[%c0_30, %c0_31] : memref<256x1024xbf16, #tpu.memory_space<vmem>>, vector<256x1024xbf16>
    %cst_32 = arith.constant dense<0.000000e+00> : vector<4x1024xf32>
    %87 = tpu.matmul %85, %86, %cst_32 {dimension_numbers = #tpu.dot_dimension_numbers<[1], [0], [0], [1], [0, 0, 1, 1], [], []>} : vector<4x256xbf16>, vector<256x1024xbf16>, vector<4x1024xf32> -> vector<4x1024xf32>
    %88 = arith.addf %84, %87 : vector<4x1024xf32>
    %89 = vector.extract_strided_slice %88 {offsets = [0, 0], sizes = [4, 256], strides = [1, 1]} : vector<4x1024xf32> to vector<4x256xf32>
    %90 = arith.negf %89 : vector<4x256xf32>
    %91 = math.exp %90 : vector<4x256xf32>
    %cst_33 = arith.constant 1.000000e+00 : f32
    %92 = vector.broadcast %cst_33 : f32 to vector<4x256xf32>
    %93 = arith.addf %92, %91 : vector<4x256xf32>
    %94 = arith.divf %92, %93 : vector<4x256xf32>
    %95 = vector.extract_strided_slice %88 {offsets = [0, 256], sizes = [4, 256], strides = [1, 1]} : vector<4x1024xf32> to vector<4x256xf32>
    %96 = arith.negf %95 : vector<4x256xf32>
    %97 = math.exp %96 : vector<4x256xf32>
    %cst_34 = arith.constant 1.000000e+00 : f32
    %98 = vector.broadcast %cst_34 : f32 to vector<4x256xf32>
    %99 = arith.addf %98, %97 : vector<4x256xf32>
    %100 = arith.divf %98, %99 : vector<4x256xf32>
    %101 = vector.extract_strided_slice %88 {offsets = [0, 512], sizes = [4, 256], strides = [1, 1]} : vector<4x1024xf32> to vector<4x256xf32>
    %102 = math.tanh %101 : vector<4x256xf32>
    %103 = vector.extract_strided_slice %88 {offsets = [0, 768], sizes = [4, 256], strides = [1, 1]} : vector<4x1024xf32> to vector<4x256xf32>
    %104 = arith.negf %103 : vector<4x256xf32>
    %105 = math.exp %104 : vector<4x256xf32>
    %cst_35 = arith.constant 1.000000e+00 : f32
    %106 = vector.broadcast %cst_35 : f32 to vector<4x256xf32>
    %107 = arith.addf %106, %105 : vector<4x256xf32>
    %108 = arith.divf %106, %107 : vector<4x256xf32>
    %109 = arith.mulf %100, %78 : vector<4x256xf32>
    %110 = arith.mulf %94, %102 : vector<4x256xf32>
    %111 = arith.addf %109, %110 : vector<4x256xf32>
    %112 = math.tanh %111 : vector<4x256xf32>
    %113 = arith.mulf %108, %112 : vector<4x256xf32>
    %c2_36 = arith.constant 2 : index
    %c0_37 = arith.constant 0 : index
    %c0_38 = arith.constant 0 : index
    %114 = vector.load %arg2[%c2_36, %c0_37, %c0_38] : memref<8x4x256xf32, #tpu.memory_space<vmem>>, vector<1x4x256xf32>
    %115 = vector.shape_cast %114 : vector<1x4x256xf32> to vector<4x256xf32>
    %cst_39 = arith.constant 0.000000e+00 : f32
    %116 = vector.broadcast %cst_39 : f32 to vector<4x256xf32>
    %117 = arith.cmpf ogt, %115, %116 : vector<4x256xf32>
    %118 = arith.select %117, %111, %78 : vector<4x256xi1>, vector<4x256xf32>
    %119 = arith.select %117, %113, %79 : vector<4x256xi1>, vector<4x256xf32>
    %cst_40 = arith.constant 0.000000e+00 : f32
    %120 = vector.broadcast %cst_40 : f32 to vector<4x256xf32>
    %121 = arith.select %117, %113, %120 : vector<4x256xi1>, vector<4x256xf32>
    %122 = arith.addf %82, %121 : vector<4x256xf32>
    %c3 = arith.constant 3 : index
    %c0_41 = arith.constant 0 : index
    %c0_42 = arith.constant 0 : index
    %123 = vector.load %arg0[%c3, %c0_41, %c0_42] : memref<8x4x1024xf32, #tpu.memory_space<vmem>>, vector<1x4x1024xf32>
    %124 = vector.shape_cast %123 : vector<1x4x1024xf32> to vector<4x1024xf32>
    %125 = arith.truncf %119 : vector<4x256xf32> to vector<4x256xbf16>
    %c0_43 = arith.constant 0 : index
    %c0_44 = arith.constant 0 : index
    %126 = vector.load %arg1[%c0_43, %c0_44] : memref<256x1024xbf16, #tpu.memory_space<vmem>>, vector<256x1024xbf16>
    %cst_45 = arith.constant dense<0.000000e+00> : vector<4x1024xf32>
    %127 = tpu.matmul %125, %126, %cst_45 {dimension_numbers = #tpu.dot_dimension_numbers<[1], [0], [0], [1], [0, 0, 1, 1], [], []>} : vector<4x256xbf16>, vector<256x1024xbf16>, vector<4x1024xf32> -> vector<4x1024xf32>
    %128 = arith.addf %124, %127 : vector<4x1024xf32>
    %129 = vector.extract_strided_slice %128 {offsets = [0, 0], sizes = [4, 256], strides = [1, 1]} : vector<4x1024xf32> to vector<4x256xf32>
    %130 = arith.negf %129 : vector<4x256xf32>
    %131 = math.exp %130 : vector<4x256xf32>
    %cst_46 = arith.constant 1.000000e+00 : f32
    %132 = vector.broadcast %cst_46 : f32 to vector<4x256xf32>
    %133 = arith.addf %132, %131 : vector<4x256xf32>
    %134 = arith.divf %132, %133 : vector<4x256xf32>
    %135 = vector.extract_strided_slice %128 {offsets = [0, 256], sizes = [4, 256], strides = [1, 1]} : vector<4x1024xf32> to vector<4x256xf32>
    %136 = arith.negf %135 : vector<4x256xf32>
    %137 = math.exp %136 : vector<4x256xf32>
    %cst_47 = arith.constant 1.000000e+00 : f32
    %138 = vector.broadcast %cst_47 : f32 to vector<4x256xf32>
    %139 = arith.addf %138, %137 : vector<4x256xf32>
    %140 = arith.divf %138, %139 : vector<4x256xf32>
    %141 = vector.extract_strided_slice %128 {offsets = [0, 512], sizes = [4, 256], strides = [1, 1]} : vector<4x1024xf32> to vector<4x256xf32>
    %142 = math.tanh %141 : vector<4x256xf32>
    %143 = vector.extract_strided_slice %128 {offsets = [0, 768], sizes = [4, 256], strides = [1, 1]} : vector<4x1024xf32> to vector<4x256xf32>
    %144 = arith.negf %143 : vector<4x256xf32>
    %145 = math.exp %144 : vector<4x256xf32>
    %cst_48 = arith.constant 1.000000e+00 : f32
    %146 = vector.broadcast %cst_48 : f32 to vector<4x256xf32>
    %147 = arith.addf %146, %145 : vector<4x256xf32>
    %148 = arith.divf %146, %147 : vector<4x256xf32>
    %149 = arith.mulf %140, %118 : vector<4x256xf32>
    %150 = arith.mulf %134, %142 : vector<4x256xf32>
    %151 = arith.addf %149, %150 : vector<4x256xf32>
    %152 = math.tanh %151 : vector<4x256xf32>
    %153 = arith.mulf %148, %152 : vector<4x256xf32>
    %c3_49 = arith.constant 3 : index
    %c0_50 = arith.constant 0 : index
    %c0_51 = arith.constant 0 : index
    %154 = vector.load %arg2[%c3_49, %c0_50, %c0_51] : memref<8x4x256xf32, #tpu.memory_space<vmem>>, vector<1x4x256xf32>
    %155 = vector.shape_cast %154 : vector<1x4x256xf32> to vector<4x256xf32>
    %cst_52 = arith.constant 0.000000e+00 : f32
    %156 = vector.broadcast %cst_52 : f32 to vector<4x256xf32>
    %157 = arith.cmpf ogt, %155, %156 : vector<4x256xf32>
    %158 = arith.select %157, %151, %118 : vector<4x256xi1>, vector<4x256xf32>
    %159 = arith.select %157, %153, %119 : vector<4x256xi1>, vector<4x256xf32>
    %cst_53 = arith.constant 0.000000e+00 : f32
    %160 = vector.broadcast %cst_53 : f32 to vector<4x256xf32>
    %161 = arith.select %157, %153, %160 : vector<4x256xi1>, vector<4x256xf32>
    %162 = arith.addf %122, %161 : vector<4x256xf32>
    %c4 = arith.constant 4 : index
    %c0_54 = arith.constant 0 : index
    %c0_55 = arith.constant 0 : index
    %163 = vector.load %arg0[%c4, %c0_54, %c0_55] : memref<8x4x1024xf32, #tpu.memory_space<vmem>>, vector<1x4x1024xf32>
    %164 = vector.shape_cast %163 : vector<1x4x1024xf32> to vector<4x1024xf32>
    %165 = arith.truncf %159 : vector<4x256xf32> to vector<4x256xbf16>
    %c0_56 = arith.constant 0 : index
    %c0_57 = arith.constant 0 : index
    %166 = vector.load %arg1[%c0_56, %c0_57] : memref<256x1024xbf16, #tpu.memory_space<vmem>>, vector<256x1024xbf16>
    %cst_58 = arith.constant dense<0.000000e+00> : vector<4x1024xf32>
    %167 = tpu.matmul %165, %166, %cst_58 {dimension_numbers = #tpu.dot_dimension_numbers<[1], [0], [0], [1], [0, 0, 1, 1], [], []>} : vector<4x256xbf16>, vector<256x1024xbf16>, vector<4x1024xf32> -> vector<4x1024xf32>
    %168 = arith.addf %164, %167 : vector<4x1024xf32>
    %169 = vector.extract_strided_slice %168 {offsets = [0, 0], sizes = [4, 256], strides = [1, 1]} : vector<4x1024xf32> to vector<4x256xf32>
    %170 = arith.negf %169 : vector<4x256xf32>
    %171 = math.exp %170 : vector<4x256xf32>
    %cst_59 = arith.constant 1.000000e+00 : f32
    %172 = vector.broadcast %cst_59 : f32 to vector<4x256xf32>
    %173 = arith.addf %172, %171 : vector<4x256xf32>
    %174 = arith.divf %172, %173 : vector<4x256xf32>
    %175 = vector.extract_strided_slice %168 {offsets = [0, 256], sizes = [4, 256], strides = [1, 1]} : vector<4x1024xf32> to vector<4x256xf32>
    %176 = arith.negf %175 : vector<4x256xf32>
    %177 = math.exp %176 : vector<4x256xf32>
    %cst_60 = arith.constant 1.000000e+00 : f32
    %178 = vector.broadcast %cst_60 : f32 to vector<4x256xf32>
    %179 = arith.addf %178, %177 : vector<4x256xf32>
    %180 = arith.divf %178, %179 : vector<4x256xf32>
    %181 = vector.extract_strided_slice %168 {offsets = [0, 512], sizes = [4, 256], strides = [1, 1]} : vector<4x1024xf32> to vector<4x256xf32>
    %182 = math.tanh %181 : vector<4x256xf32>
    %183 = vector.extract_strided_slice %168 {offsets = [0, 768], sizes = [4, 256], strides = [1, 1]} : vector<4x1024xf32> to vector<4x256xf32>
    %184 = arith.negf %183 : vector<4x256xf32>
    %185 = math.exp %184 : vector<4x256xf32>
    %cst_61 = arith.constant 1.000000e+00 : f32
    %186 = vector.broadcast %cst_61 : f32 to vector<4x256xf32>
    %187 = arith.addf %186, %185 : vector<4x256xf32>
    %188 = arith.divf %186, %187 : vector<4x256xf32>
    %189 = arith.mulf %180, %158 : vector<4x256xf32>
    %190 = arith.mulf %174, %182 : vector<4x256xf32>
    %191 = arith.addf %189, %190 : vector<4x256xf32>
    %192 = math.tanh %191 : vector<4x256xf32>
    %193 = arith.mulf %188, %192 : vector<4x256xf32>
    %c4_62 = arith.constant 4 : index
    %c0_63 = arith.constant 0 : index
    %c0_64 = arith.constant 0 : index
    %194 = vector.load %arg2[%c4_62, %c0_63, %c0_64] : memref<8x4x256xf32, #tpu.memory_space<vmem>>, vector<1x4x256xf32>
    %195 = vector.shape_cast %194 : vector<1x4x256xf32> to vector<4x256xf32>
    %cst_65 = arith.constant 0.000000e+00 : f32
    %196 = vector.broadcast %cst_65 : f32 to vector<4x256xf32>
    %197 = arith.cmpf ogt, %195, %196 : vector<4x256xf32>
    %198 = arith.select %197, %191, %158 : vector<4x256xi1>, vector<4x256xf32>
    %199 = arith.select %197, %193, %159 : vector<4x256xi1>, vector<4x256xf32>
    %cst_66 = arith.constant 0.000000e+00 : f32
    %200 = vector.broadcast %cst_66 : f32 to vector<4x256xf32>
    %201 = arith.select %197, %193, %200 : vector<4x256xi1>, vector<4x256xf32>
    %202 = arith.addf %162, %201 : vector<4x256xf32>
    %c5 = arith.constant 5 : index
    %c0_67 = arith.constant 0 : index
    %c0_68 = arith.constant 0 : index
    %203 = vector.load %arg0[%c5, %c0_67, %c0_68] : memref<8x4x1024xf32, #tpu.memory_space<vmem>>, vector<1x4x1024xf32>
    %204 = vector.shape_cast %203 : vector<1x4x1024xf32> to vector<4x1024xf32>
    %205 = arith.truncf %199 : vector<4x256xf32> to vector<4x256xbf16>
    %c0_69 = arith.constant 0 : index
    %c0_70 = arith.constant 0 : index
    %206 = vector.load %arg1[%c0_69, %c0_70] : memref<256x1024xbf16, #tpu.memory_space<vmem>>, vector<256x1024xbf16>
    %cst_71 = arith.constant dense<0.000000e+00> : vector<4x1024xf32>
    %207 = tpu.matmul %205, %206, %cst_71 {dimension_numbers = #tpu.dot_dimension_numbers<[1], [0], [0], [1], [0, 0, 1, 1], [], []>} : vector<4x256xbf16>, vector<256x1024xbf16>, vector<4x1024xf32> -> vector<4x1024xf32>
    %208 = arith.addf %204, %207 : vector<4x1024xf32>
    %209 = vector.extract_strided_slice %208 {offsets = [0, 0], sizes = [4, 256], strides = [1, 1]} : vector<4x1024xf32> to vector<4x256xf32>
    %210 = arith.negf %209 : vector<4x256xf32>
    %211 = math.exp %210 : vector<4x256xf32>
    %cst_72 = arith.constant 1.000000e+00 : f32
    %212 = vector.broadcast %cst_72 : f32 to vector<4x256xf32>
    %213 = arith.addf %212, %211 : vector<4x256xf32>
    %214 = arith.divf %212, %213 : vector<4x256xf32>
    %215 = vector.extract_strided_slice %208 {offsets = [0, 256], sizes = [4, 256], strides = [1, 1]} : vector<4x1024xf32> to vector<4x256xf32>
    %216 = arith.negf %215 : vector<4x256xf32>
    %217 = math.exp %216 : vector<4x256xf32>
    %cst_73 = arith.constant 1.000000e+00 : f32
    %218 = vector.broadcast %cst_73 : f32 to vector<4x256xf32>
    %219 = arith.addf %218, %217 : vector<4x256xf32>
    %220 = arith.divf %218, %219 : vector<4x256xf32>
    %221 = vector.extract_strided_slice %208 {offsets = [0, 512], sizes = [4, 256], strides = [1, 1]} : vector<4x1024xf32> to vector<4x256xf32>
    %222 = math.tanh %221 : vector<4x256xf32>
    %223 = vector.extract_strided_slice %208 {offsets = [0, 768], sizes = [4, 256], strides = [1, 1]} : vector<4x1024xf32> to vector<4x256xf32>
    %224 = arith.negf %223 : vector<4x256xf32>
    %225 = math.exp %224 : vector<4x256xf32>
    %cst_74 = arith.constant 1.000000e+00 : f32
    %226 = vector.broadcast %cst_74 : f32 to vector<4x256xf32>
    %227 = arith.addf %226, %225 : vector<4x256xf32>
    %228 = arith.divf %226, %227 : vector<4x256xf32>
    %229 = arith.mulf %220, %198 : vector<4x256xf32>
    %230 = arith.mulf %214, %222 : vector<4x256xf32>
    %231 = arith.addf %229, %230 : vector<4x256xf32>
    %232 = math.tanh %231 : vector<4x256xf32>
    %233 = arith.mulf %228, %232 : vector<4x256xf32>
    %c5_75 = arith.constant 5 : index
    %c0_76 = arith.constant 0 : index
    %c0_77 = arith.constant 0 : index
    %234 = vector.load %arg2[%c5_75, %c0_76, %c0_77] : memref<8x4x256xf32, #tpu.memory_space<vmem>>, vector<1x4x256xf32>
    %235 = vector.shape_cast %234 : vector<1x4x256xf32> to vector<4x256xf32>
    %cst_78 = arith.constant 0.000000e+00 : f32
    %236 = vector.broadcast %cst_78 : f32 to vector<4x256xf32>
    %237 = arith.cmpf ogt, %235, %236 : vector<4x256xf32>
    %238 = arith.select %237, %231, %198 : vector<4x256xi1>, vector<4x256xf32>
    %239 = arith.select %237, %233, %199 : vector<4x256xi1>, vector<4x256xf32>
    %cst_79 = arith.constant 0.000000e+00 : f32
    %240 = vector.broadcast %cst_79 : f32 to vector<4x256xf32>
    %241 = arith.select %237, %233, %240 : vector<4x256xi1>, vector<4x256xf32>
    %242 = arith.addf %202, %241 : vector<4x256xf32>
    %c6 = arith.constant 6 : index
    %c0_80 = arith.constant 0 : index
    %c0_81 = arith.constant 0 : index
    %243 = vector.load %arg0[%c6, %c0_80, %c0_81] : memref<8x4x1024xf32, #tpu.memory_space<vmem>>, vector<1x4x1024xf32>
    %244 = vector.shape_cast %243 : vector<1x4x1024xf32> to vector<4x1024xf32>
    %245 = arith.truncf %239 : vector<4x256xf32> to vector<4x256xbf16>
    %c0_82 = arith.constant 0 : index
    %c0_83 = arith.constant 0 : index
    %246 = vector.load %arg1[%c0_82, %c0_83] : memref<256x1024xbf16, #tpu.memory_space<vmem>>, vector<256x1024xbf16>
    %cst_84 = arith.constant dense<0.000000e+00> : vector<4x1024xf32>
    %247 = tpu.matmul %245, %246, %cst_84 {dimension_numbers = #tpu.dot_dimension_numbers<[1], [0], [0], [1], [0, 0, 1, 1], [], []>} : vector<4x256xbf16>, vector<256x1024xbf16>, vector<4x1024xf32> -> vector<4x1024xf32>
    %248 = arith.addf %244, %247 : vector<4x1024xf32>
    %249 = vector.extract_strided_slice %248 {offsets = [0, 0], sizes = [4, 256], strides = [1, 1]} : vector<4x1024xf32> to vector<4x256xf32>
    %250 = arith.negf %249 : vector<4x256xf32>
    %251 = math.exp %250 : vector<4x256xf32>
    %cst_85 = arith.constant 1.000000e+00 : f32
    %252 = vector.broadcast %cst_85 : f32 to vector<4x256xf32>
    %253 = arith.addf %252, %251 : vector<4x256xf32>
    %254 = arith.divf %252, %253 : vector<4x256xf32>
    %255 = vector.extract_strided_slice %248 {offsets = [0, 256], sizes = [4, 256], strides = [1, 1]} : vector<4x1024xf32> to vector<4x256xf32>
    %256 = arith.negf %255 : vector<4x256xf32>
    %257 = math.exp %256 : vector<4x256xf32>
    %cst_86 = arith.constant 1.000000e+00 : f32
    %258 = vector.broadcast %cst_86 : f32 to vector<4x256xf32>
    %259 = arith.addf %258, %257 : vector<4x256xf32>
    %260 = arith.divf %258, %259 : vector<4x256xf32>
    %261 = vector.extract_strided_slice %248 {offsets = [0, 512], sizes = [4, 256], strides = [1, 1]} : vector<4x1024xf32> to vector<4x256xf32>
    %262 = math.tanh %261 : vector<4x256xf32>
    %263 = vector.extract_strided_slice %248 {offsets = [0, 768], sizes = [4, 256], strides = [1, 1]} : vector<4x1024xf32> to vector<4x256xf32>
    %264 = arith.negf %263 : vector<4x256xf32>
    %265 = math.exp %264 : vector<4x256xf32>
    %cst_87 = arith.constant 1.000000e+00 : f32
    %266 = vector.broadcast %cst_87 : f32 to vector<4x256xf32>
    %267 = arith.addf %266, %265 : vector<4x256xf32>
    %268 = arith.divf %266, %267 : vector<4x256xf32>
    %269 = arith.mulf %260, %238 : vector<4x256xf32>
    %270 = arith.mulf %254, %262 : vector<4x256xf32>
    %271 = arith.addf %269, %270 : vector<4x256xf32>
    %272 = math.tanh %271 : vector<4x256xf32>
    %273 = arith.mulf %268, %272 : vector<4x256xf32>
    %c6_88 = arith.constant 6 : index
    %c0_89 = arith.constant 0 : index
    %c0_90 = arith.constant 0 : index
    %274 = vector.load %arg2[%c6_88, %c0_89, %c0_90] : memref<8x4x256xf32, #tpu.memory_space<vmem>>, vector<1x4x256xf32>
    %275 = vector.shape_cast %274 : vector<1x4x256xf32> to vector<4x256xf32>
    %cst_91 = arith.constant 0.000000e+00 : f32
    %276 = vector.broadcast %cst_91 : f32 to vector<4x256xf32>
    %277 = arith.cmpf ogt, %275, %276 : vector<4x256xf32>
    %278 = arith.select %277, %271, %238 : vector<4x256xi1>, vector<4x256xf32>
    %279 = arith.select %277, %273, %239 : vector<4x256xi1>, vector<4x256xf32>
    %cst_92 = arith.constant 0.000000e+00 : f32
    %280 = vector.broadcast %cst_92 : f32 to vector<4x256xf32>
    %281 = arith.select %277, %273, %280 : vector<4x256xi1>, vector<4x256xf32>
    %282 = arith.addf %242, %281 : vector<4x256xf32>
    %c7 = arith.constant 7 : index
    %c0_93 = arith.constant 0 : index
    %c0_94 = arith.constant 0 : index
    %283 = vector.load %arg0[%c7, %c0_93, %c0_94] : memref<8x4x1024xf32, #tpu.memory_space<vmem>>, vector<1x4x1024xf32>
    %284 = vector.shape_cast %283 : vector<1x4x1024xf32> to vector<4x1024xf32>
    %285 = arith.truncf %279 : vector<4x256xf32> to vector<4x256xbf16>
    %c0_95 = arith.constant 0 : index
    %c0_96 = arith.constant 0 : index
    %286 = vector.load %arg1[%c0_95, %c0_96] : memref<256x1024xbf16, #tpu.memory_space<vmem>>, vector<256x1024xbf16>
    %cst_97 = arith.constant dense<0.000000e+00> : vector<4x1024xf32>
    %287 = tpu.matmul %285, %286, %cst_97 {dimension_numbers = #tpu.dot_dimension_numbers<[1], [0], [0], [1], [0, 0, 1, 1], [], []>} : vector<4x256xbf16>, vector<256x1024xbf16>, vector<4x1024xf32> -> vector<4x1024xf32>
    %288 = arith.addf %284, %287 : vector<4x1024xf32>
    %289 = vector.extract_strided_slice %288 {offsets = [0, 0], sizes = [4, 256], strides = [1, 1]} : vector<4x1024xf32> to vector<4x256xf32>
    %290 = arith.negf %289 : vector<4x256xf32>
    %291 = math.exp %290 : vector<4x256xf32>
    %cst_98 = arith.constant 1.000000e+00 : f32
    %292 = vector.broadcast %cst_98 : f32 to vector<4x256xf32>
    %293 = arith.addf %292, %291 : vector<4x256xf32>
    %294 = arith.divf %292, %293 : vector<4x256xf32>
    %295 = vector.extract_strided_slice %288 {offsets = [0, 256], sizes = [4, 256], strides = [1, 1]} : vector<4x1024xf32> to vector<4x256xf32>
    %296 = arith.negf %295 : vector<4x256xf32>
    %297 = math.exp %296 : vector<4x256xf32>
    %cst_99 = arith.constant 1.000000e+00 : f32
    %298 = vector.broadcast %cst_99 : f32 to vector<4x256xf32>
    %299 = arith.addf %298, %297 : vector<4x256xf32>
    %300 = arith.divf %298, %299 : vector<4x256xf32>
    %301 = vector.extract_strided_slice %288 {offsets = [0, 512], sizes = [4, 256], strides = [1, 1]} : vector<4x1024xf32> to vector<4x256xf32>
    %302 = math.tanh %301 : vector<4x256xf32>
    %303 = vector.extract_strided_slice %288 {offsets = [0, 768], sizes = [4, 256], strides = [1, 1]} : vector<4x1024xf32> to vector<4x256xf32>
    %304 = arith.negf %303 : vector<4x256xf32>
    %305 = math.exp %304 : vector<4x256xf32>
    %cst_100 = arith.constant 1.000000e+00 : f32
    %306 = vector.broadcast %cst_100 : f32 to vector<4x256xf32>
    %307 = arith.addf %306, %305 : vector<4x256xf32>
    %308 = arith.divf %306, %307 : vector<4x256xf32>
    %309 = arith.mulf %300, %278 : vector<4x256xf32>
    %310 = arith.mulf %294, %302 : vector<4x256xf32>
    %311 = arith.addf %309, %310 : vector<4x256xf32>
    %312 = math.tanh %311 : vector<4x256xf32>
    %313 = arith.mulf %308, %312 : vector<4x256xf32>
    %c7_101 = arith.constant 7 : index
    %c0_102 = arith.constant 0 : index
    %c0_103 = arith.constant 0 : index
    %314 = vector.load %arg2[%c7_101, %c0_102, %c0_103] : memref<8x4x256xf32, #tpu.memory_space<vmem>>, vector<1x4x256xf32>
    %315 = vector.shape_cast %314 : vector<1x4x256xf32> to vector<4x256xf32>
    %cst_104 = arith.constant 0.000000e+00 : f32
    %316 = vector.broadcast %cst_104 : f32 to vector<4x256xf32>
    %317 = arith.cmpf ogt, %315, %316 : vector<4x256xf32>
    %cst_105 = arith.constant 0.000000e+00 : f32
    %318 = vector.broadcast %cst_105 : f32 to vector<4x256xf32>
    %319 = arith.select %317, %313, %318 : vector<4x256xi1>, vector<4x256xf32>
    %320 = arith.addf %282, %319 : vector<4x256xf32>
    %c0_106 = arith.constant 0 : index
    %c0_107 = arith.constant 0 : index
    %321 = vector.load %arg3[%c0_106, %c0_107] : memref<256x8xf32, #tpu.memory_space<vmem>>, vector<256x8xf32>
    %cst_108 = arith.constant dense<0.000000e+00> : vector<4x8xf32>
    %322 = tpu.matmul %320, %321, %cst_108 {dimension_numbers = #tpu.dot_dimension_numbers<[1], [0], [0], [1], [0, 0, 1, 1], [], []>} : vector<4x256xf32>, vector<256x8xf32>, vector<4x8xf32> -> vector<4x8xf32>
    %c0_109 = arith.constant 0 : index
    %c0_110 = arith.constant 0 : index
    %323 = vector.load %arg4[%c0_109, %c0_110] : memref<4x8xf32, #tpu.memory_space<vmem>>, vector<4x8xf32>
    tpu.vector_store %arg4[%c0_109, %c0_110], %322 {strides = array<i32>} : memref<4x8xf32, #tpu.memory_space<vmem>>, vector<4x8xf32>,
    return
  }
}

</mosaic_0001>

<llo_original>
// kernel: reverse
$region0: #{reverse}
  #allocation0 [shape = 's32[1]{0}', space=sflag, size = 0x4, scoped, tag = 'scoped memory for reverse']
  %s0 = inlined_call_operand.vmem [shape: f32[8,4,96], index: 0, kind: input, shape index: {}]
  %s1 = inlined_call_operand.vmem [shape: f32[8,4,96], index: 1, kind: output, shape index: {}]
  %s2 = scalar_lea.vmem %s0, 28
  %v3 = vld [vmem:[%s2] sm:$0xf]
  %4 = vst [vmem:[%s1] sm:$0xf] %v3
  %s5 = scalar_lea.vmem %s0, 24
  %v6 = vld [vmem:[%s5] sm:$0xf]
  %s7 = scalar_lea.vmem %s1, 4
  %8 = vst [vmem:[%s7] sm:$0xf] %v6
  %s9 = scalar_lea.vmem %s0, 20
  %v10 = vld [vmem:[%s9] sm:$0xf]
  %s11 = scalar_lea.vmem %s1, 8
  %12 = vst [vmem:[%s11] sm:$0xf] %v10
  %s13 = scalar_lea.vmem %s0, 16
  %v14 = vld [vmem:[%s13] sm:$0xf]
  %s15 = scalar_lea.vmem %s1, 12
  %16 = vst [vmem:[%s15] sm:$0xf] %v14
  %s17 = scalar_lea.vmem %s0, 12
  %v18 = vld [vmem:[%s17] sm:$0xf]
  %s19 = scalar_lea.vmem %s1, 16
  %20 = vst [vmem:[%s19] sm:$0xf] %v18
  %s21 = scalar_lea.vmem %s0, 8
  %v22 = vld [vmem:[%s21] sm:$0xf]
  %s23 = scalar_lea.vmem %s1, 20
  %24 = vst [vmem:[%s23] sm:$0xf] %v22
  %s25 = scalar_lea.vmem %s0, 4
  %v26 = vld [vmem:[%s25] sm:$0xf]
  %s27 = scalar_lea.vmem %s1, 24
  %28 = vst [vmem:[%s27] sm:$0xf] %v26
  %v29 = vld [vmem:[%s0] sm:$0xf]
  %s30 = scalar_lea.vmem %s1, 28
  %31 = vst [vmem:[%s30] sm:$0xf] %v29

// kernel: reverse.1
$region0: #{reverse.1}
  #allocation0 [shape = 's32[1]{0}', space=sflag, size = 0x4, scoped, tag = 'scoped memory for reverse.1']
  %s0 = inlined_call_operand.vmem [shape: f32[8,4,32], index: 0, kind: input, shape index: {}]
  %s1 = inlined_call_operand.vmem [shape: f32[8,4,32], index: 1, kind: output, shape index: {}]
  %s2 = scalar_lea.vmem %s0, 28
  %v3 = vld [vmem:[%s2] sm:$0xf]
  %4 = vst [vmem:[%s1] sm:$0xf] %v3
  %s5 = scalar_lea.vmem %s0, 24
  %v6 = vld [vmem:[%s5] sm:$0xf]
  %s7 = scalar_lea.vmem %s1, 4
  %8 = vst [vmem:[%s7] sm:$0xf] %v6
  %s9 = scalar_lea.vmem %s0, 20
  %v10 = vld [vmem:[%s9] sm:$0xf]
  %s11 = scalar_lea.vmem %s1, 8
  %12 = vst [vmem:[%s11] sm:$0xf] %v10
  %s13 = scalar_lea.vmem %s0, 16
  %v14 = vld [vmem:[%s13] sm:$0xf]
  %s15 = scalar_lea.vmem %s1, 12
  %16 = vst [vmem:[%s15] sm:$0xf] %v14
  %s17 = scalar_lea.vmem %s0, 12
  %v18 = vld [vmem:[%s17] sm:$0xf]
  %s19 = scalar_lea.vmem %s1, 16
  %20 = vst [vmem:[%s19] sm:$0xf] %v18
  %s21 = scalar_lea.vmem %s0, 8
  %v22 = vld [vmem:[%s21] sm:$0xf]
  %s23 = scalar_lea.vmem %s1, 20
  %24 = vst [vmem:[%s23] sm:$0xf] %v22
  %s25 = scalar_lea.vmem %s0, 4
  %v26 = vld [vmem:[%s25] sm:$0xf]
  %s27 = scalar_lea.vmem %s1, 24
  %28 = vst [vmem:[%s27] sm:$0xf] %v26
  %v29 = vld [vmem:[%s0] sm:$0xf]
  %s30 = scalar_lea.vmem %s1, 28
  %31 = vst [vmem:[%s30] sm:$0xf] %v29

// kernel: reverse.2
$region0: #{reverse.2}
  #allocation0 [shape = 's32[1]{0}', space=sflag, size = 0x4, scoped, tag = 'scoped memory for reverse.2']
  %s0 = inlined_call_operand.vmem [shape: f32[8,4,64], index: 0, kind: input, shape index: {}]
  %s1 = inlined_call_operand.vmem [shape: f32[8,4,64], index: 1, kind: output, shape index: {}]
  %s2 = scalar_lea.vmem %s0, 28
  %v3 = vld [vmem:[%s2] sm:$0xf]
  %4 = vst [vmem:[%s1] sm:$0xf] %v3
  %s5 = scalar_lea.vmem %s0, 24
  %v6 = vld [vmem:[%s5] sm:$0xf]
  %s7 = scalar_lea.vmem %s1, 4
  %8 = vst [vmem:[%s7] sm:$0xf] %v6
  %s9 = scalar_lea.vmem %s0, 20
  %v10 = vld [vmem:[%s9] sm:$0xf]
  %s11 = scalar_lea.vmem %s1, 8
  %12 = vst [vmem:[%s11] sm:$0xf] %v10
  %s13 = scalar_lea.vmem %s0, 16
  %v14 = vld [vmem:[%s13] sm:$0xf]
  %s15 = scalar_lea.vmem %s1, 12
  %16 = vst [vmem:[%s15] sm:$0xf] %v14
  %s17 = scalar_lea.vmem %s0, 12
  %v18 = vld [vmem:[%s17] sm:$0xf]
  %s19 = scalar_lea.vmem %s1, 16
  %20 = vst [vmem:[%s19] sm:$0xf] %v18
  %s21 = scalar_lea.vmem %s0, 8
  %v22 = vld [vmem:[%s21] sm:$0xf]
  %s23 = scalar_lea.vmem %s1, 20
  %24 = vst [vmem:[%s23] sm:$0xf] %v22
  %s25 = scalar_lea.vmem %s0, 4
  %v26 = vld [vmem:[%s25] sm:$0xf]
  %s27 = scalar_lea.vmem %s1, 24
  %28 = vst [vmem:[%s27] sm:$0xf] %v26
  %v29 = vld [vmem:[%s0] sm:$0xf]
  %s30 = scalar_lea.vmem %s1, 28
  %31 = vst [vmem:[%s30] sm:$0xf] %v29

// kernel: _lambda_.3
$region0: #{_lambda_.3}
  #allocation0 [shape = 'u32[]', space=smem, size = 0x4, offset = 0x4, fixed_abs, tag = 'smem constant byte address 0x4 - core index']
  #allocation1 [shape = 'u32[72,128]{1,0:T(1,128)}', space=vmem, size = 0x9000, scoped, tag = 'internal scratch']
  %s0 = inlined_call_operand.vmem [shape: f32[8,4,1024], index: 0, kind: input, shape index: {}]
  %s1 = inlined_call_operand.vmem [shape: bf16[256,1024], index: 1, kind: input, shape index: {}]
  %s2 = inlined_call_operand.vmem [shape: f32[8,4,256], index: 2, kind: input, shape index: {}]
  %s3 = inlined_call_operand.vmem [shape: f32[256,8], index: 3, kind: input, shape index: {}]
  %s4 = inlined_call_operand.vmem [shape: f32[4,8], index: 4, kind: output, shape index: {}]
  %s5 = sld [smem:[#allocation0]]
  $region26: #{_lambda_.3} parent=0
    _
  %s7 = ssub.s32 1, %s5
  %s8 = scalar_select 0, %s7, %s5
  // Predicated region
  $region2: #{_lambda_.3} parent=0 // pred_check
    _
  $region3: #{_lambda_.3} parent=0 // pred_check_branch
    %10 = sbr.rel (0) target = $region5
  $region4: #{_lambda_.3} parent=0 // pred_region
    _
  $region5: #{_lambda_.3} parent=0 // pred_fallthru
    _
  // Predicated region
  $region6: #{_lambda_.3} parent=0 // pred_check
    _
  $region7: #{_lambda_.3} parent=0 // pred_check_branch
    %12 = sbr.rel (0) target = $region9
  $region8: #{_lambda_.3} parent=0 // pred_region
    _
  $region9: #{_lambda_.3} parent=0 // pred_fallthru
    _
  // Predicated region
  $region10: #{_lambda_.3} parent=0 // pred_check
    _
  $region11: #{_lambda_.3} parent=0 // pred_check_branch
    %14 = sbr.rel (0) target = $region13
  $region12: #{_lambda_.3} parent=0 // pred_region
    _
  $region13: #{_lambda_.3} parent=0 // pred_fallthru
    _
  // Predicated region
  $region14: #{_lambda_.3} parent=0 // pred_check
    _
  $region15: #{_lambda_.3} parent=0 // pred_check_branch
    %16 = sbr.rel (0) target = $region17
  $region16: #{_lambda_.3} parent=0 // pred_region
    _
  $region17: #{_lambda_.3} parent=0 // pred_fallthru
    _
  %v18 = vld [vmem:[%s0] sm:$0xff]
  %v19 = vld [vmem:[%s0 + $0x8] sm:$0xff]
  %v20 = vld [vmem:[%s0 + $0x10] sm:$0xff]
  %v21 = vld [vmem:[%s0 + $0x18] sm:$0xff]
  %v22 = vld [vmem:[%s1] sm:$0xff]
  %v23 = vld [vmem:[%s1 + $0x8] sm:$0xff]
  %v24 = vld [vmem:[%s1 + $0x10] sm:$0xff]
  %v25 = vld [vmem:[%s1 + $0x18] sm:$0xff]
  %v26 = vld [vmem:[%s1 + $0x20] sm:$0xff]
  %v27 = vld [vmem:[%s1 + $0x28] sm:$0xff]
  %v28 = vld [vmem:[%s1 + $0x30] sm:$0xff]
  %v29 = vld [vmem:[%s1 + $0x38] sm:$0xff]
  %v30 = vld [vmem:[%s1 + $0x40] sm:$0xff]
  %v31 = vld [vmem:[%s1 + $0x48] sm:$0xff]
  %v32 = vld [vmem:[%s1 + $0x50] sm:$0xff]
  %v33 = vld [vmem:[%s1 + $0x58] sm:$0xff]
  %v34 = vld [vmem:[%s1 + $0x60] sm:$0xff]
  %v35 = vld [vmem:[%s1 + $0x68] sm:$0xff]
  %v36 = vld [vmem:[%s1 + $0x70] sm:$0xff]
  %v37 = vld [vmem:[%s1 + $0x78] sm:$0xff]
  %v38 = vld [vmem:[%s1 + $0x80] sm:$0xff]
  %v39 = vld [vmem:[%s1 + $0x88] sm:$0xff]
  %v40 = vld [vmem:[%s1 + $0x90] sm:$0xff]
  %v41 = vld [vmem:[%s1 + $0x98] sm:$0xff]
  %v42 = vld [vmem:[%s1 + $0xa0] sm:$0xff]
  %v43 = vld [vmem:[%s1 + $0xa8] sm:$0xff]
  %v44 = vld [vmem:[%s1 + $0xb0] sm:$0xff]
  %v45 = vld [vmem:[%s1 + $0xb8] sm:$0xff]
  %v46 = vld [vmem:[%s1 + $0xc0] sm:$0xff]
  %v47 = vld [vmem:[%s1 + $0xc8] sm:$0xff]
  %v48 = vld [vmem:[%s1 + $0xd0] sm:$0xff]
  %v49 = vld [vmem:[%s1 + $0xd8] sm:$0xff]
  %v50 = vld [vmem:[%s1 + $0xe0] sm:$0xff]
  %v51 = vld [vmem:[%s1 + $0xe8] sm:$0xff]
  %v52 = vld [vmem:[%s1 + $0xf0] sm:$0xff]
  %v53 = vld [vmem:[%s1 + $0xf8] sm:$0xff]
  %v54 = vld [vmem:[%s1 + $0x100] sm:$0xff]
  %v55 = vld [vmem:[%s1 + $0x108] sm:$0xff]
  %v56 = vld [vmem:[%s1 + $0x110] sm:$0xff]
  %v57 = vld [vmem:[%s1 + $0x118] sm:$0xff]
  %v58 = vld [vmem:[%s1 + $0x120] sm:$0xff]
  %v59 = vld [vmem:[%s1 + $0x128] sm:$0xff]
  %v60 = vld [vmem:[%s1 + $0x130] sm:$0xff]
  %v61 = vld [vmem:[%s1 + $0x138] sm:$0xff]
  %v62 = vld [vmem:[%s1 + $0x140] sm:$0xff]
  %v63 = vld [vmem:[%s1 + $0x148] sm:$0xff]
  %v64 = vld [vmem:[%s1 + $0x150] sm:$0xff]
  %v65 = vld [vmem:[%s1 + $0x158] sm:$0xff]
  %v66 = vld [vmem:[%s1 + $0x160] sm:$0xff]
  %v67 = vld [vmem:[%s1 + $0x168] sm:$0xff]
  %v68 = vld [vmem:[%s1 + $0x170] sm:$0xff]
  %v69 = vld [vmem:[%s1 + $0x178] sm:$0xff]
  %v70 = vld [vmem:[%s1 + $0x180] sm:$0xff]
  %v71 = vld [vmem:[%s1 + $0x188] sm:$0xff]
  %v72 = vld [vmem:[%s1 + $0x190] sm:$0xff]
  %v73 = vld [vmem:[%s1 + $0x198] sm:$0xff]
  %v74 = vld [vmem:[%s1 + $0x1a0] sm:$0xff]
  %v75 = vld [vmem:[%s1 + $0x1a8] sm:$0xff]
  %v76 = vld [vmem:[%s1 + $0x1b0] sm:$0xff]
  %v77 = vld [vmem:[%s1 + $0x1b8] sm:$0xff]
  %v78 = vld [vmem:[%s1 + $0x1c0] sm:$0xff]
  %v79 = vld [vmem:[%s1 + $0x1c8] sm:$0xff]
  %v80 = vld [vmem:[%s1 + $0x1d0] sm:$0xff]
  %v81 = vld [vmem:[%s1 + $0x1d8] sm:$0xff]
  %v82 = vld [vmem:[%s1 + $0x1e0] sm:$0xff]
  %v83 = vld [vmem:[%s1 + $0x1e8] sm:$0xff]
  %v84 = vld [vmem:[%s1 + $0x1f0] sm:$0xff]
  %v85 = vld [vmem:[%s1 + $0x1f8] sm:$0xff]
  %v86 = vld [vmem:[%s1 + $0x200] sm:$0xff]
  %v87 = vld [vmem:[%s1 + $0x208] sm:$0xff]
  %v88 = vld [vmem:[%s1 + $0x210] sm:$0xff]
  %v89 = vld [vmem:[%s1 + $0x218] sm:$0xff]
  %v90 = vld [vmem:[%s1 + $0x220] sm:$0xff]
  %v91 = vld [vmem:[%s1 + $0x228] sm:$0xff]
  %v92 = vld [vmem:[%s1 + $0x230] sm:$0xff]
  %v93 = vld [vmem:[%s1 + $0x238] sm:$0xff]
  %v94 = vld [vmem:[%s1 + $0x240] sm:$0xff]
  %v95 = vld [vmem:[%s1 + $0x248] sm:$0xff]
  %v96 = vld [vmem:[%s1 + $0x250] sm:$0xff]
  %v97 = vld [vmem:[%s1 + $0x258] sm:$0xff]
  %v98 = vld [vmem:[%s1 + $0x260] sm:$0xff]
  %v99 = vld [vmem:[%s1 + $0x268] sm:$0xff]
  %v100 = vld [vmem:[%s1 + $0x270] sm:$0xff]
  %v101 = vld [vmem:[%s1 + $0x278] sm:$0xff]
  %v102 = vld [vmem:[%s1 + $0x280] sm:$0xff]
  %v103 = vld [vmem:[%s1 + $0x288] sm:$0xff]
  %v104 = vld [vmem:[%s1 + $0x290] sm:$0xff]
  %v105 = vld [vmem:[%s1 + $0x298] sm:$0xff]
  %v106 = vld [vmem:[%s1 + $0x2a0] sm:$0xff]
  %v107 = vld [vmem:[%s1 + $0x2a8] sm:$0xff]
  %v108 = vld [vmem:[%s1 + $0x2b0] sm:$0xff]
  %v109 = vld [vmem:[%s1 + $0x2b8] sm:$0xff]
  %v110 = vld [vmem:[%s1 + $0x2c0] sm:$0xff]
  %v111 = vld [vmem:[%s1 + $0x2c8] sm:$0xff]
  %v112 = vld [vmem:[%s1 + $0x2d0] sm:$0xff]
  %v113 = vld [vmem:[%s1 + $0x2d8] sm:$0xff]
  %v114 = vld [vmem:[%s1 + $0x2e0] sm:$0xff]
  %v115 = vld [vmem:[%s1 + $0x2e8] sm:$0xff]
  %v116 = vld [vmem:[%s1 + $0x2f0] sm:$0xff]
  %v117 = vld [vmem:[%s1 + $0x2f8] sm:$0xff]
  %v118 = vld [vmem:[%s1 + $0x300] sm:$0xff]
  %v119 = vld [vmem:[%s1 + $0x308] sm:$0xff]
  %v120 = vld [vmem:[%s1 + $0x310] sm:$0xff]
  %v121 = vld [vmem:[%s1 + $0x318] sm:$0xff]
  %v122 = vld [vmem:[%s1 + $0x320] sm:$0xff]
  %v123 = vld [vmem:[%s1 + $0x328] sm:$0xff]
  %v124 = vld [vmem:[%s1 + $0x330] sm:$0xff]
  %v125 = vld [vmem:[%s1 + $0x338] sm:$0xff]
  %v126 = vld [vmem:[%s1 + $0x340] sm:$0xff]
  %v127 = vld [vmem:[%s1 + $0x348] sm:$0xff]
  %v128 = vld [vmem:[%s1 + $0x350] sm:$0xff]
  %v129 = vld [vmem:[%s1 + $0x358] sm:$0xff]
  %v130 = vld [vmem:[%s1 + $0x360] sm:$0xff]
  %v131 = vld [vmem:[%s1 + $0x368] sm:$0xff]
  %v132 = vld [vmem:[%s1 + $0x370] sm:$0xff]
  %v133 = vld [vmem:[%s1 + $0x378] sm:$0xff]
  %v134 = vld [vmem:[%s1 + $0x380] sm:$0xff]
  %v135 = vld [vmem:[%s1 + $0x388] sm:$0xff]
  %v136 = vld [vmem:[%s1 + $0x390] sm:$0xff]
  %v137 = vld [vmem:[%s1 + $0x398] sm:$0xff]
  %v138 = vld [vmem:[%s1 + $0x3a0] sm:$0xff]
  %v139 = vld [vmem:[%s1 + $0x3a8] sm:$0xff]
  %v140 = vld [vmem:[%s1 + $0x3b0] sm:$0xff]
  %v141 = vld [vmem:[%s1 + $0x3b8] sm:$0xff]
  %v142 = vld [vmem:[%s1 + $0x3c0] sm:$0xff]
  %v143 = vld [vmem:[%s1 + $0x3c8] sm:$0xff]
  %v144 = vld [vmem:[%s1 + $0x3d0] sm:$0xff]
  %v145 = vld [vmem:[%s1 + $0x3d8] sm:$0xff]
  %v146 = vld [vmem:[%s1 + $0x3e0] sm:$0xff]
  %v147 = vld [vmem:[%s1 + $0x3e8] sm:$0xff]
  %v148 = vld [vmem:[%s1 + $0x3f0] sm:$0xff]
  %v149 = vld [vmem:[%s1 + $0x3f8] sm:$0xff]
  %v278 = vunpack.c.l.b16 %v22
  %v279 = vunpack.c.h.b16 %v22
  %v280 = vunpack.c.l.b16 %v23
  %v281 = vunpack.c.h.b16 %v23
  %v282 = vunpack.c.l.b16 %v24
  %v283 = vunpack.c.h.b16 %v24
  %v284 = vunpack.c.l.b16 %v25
  %v285 = vunpack.c.h.b16 %v25
  %v286 = vunpack.c.l.b16 %v26
  %v287 = vunpack.c.h.b16 %v26
  %v288 = vunpack.c.l.b16 %v27
  %v289 = vunpack.c.h.b16 %v27
  %v290 = vunpack.c.l.b16 %v28
  %v291 = vunpack.c.h.b16 %v28
  %v292 = vunpack.c.l.b16 %v29
  %v293 = vunpack.c.h.b16 %v29
  %v294 = vunpack.c.l.b16 %v30
  %v295 = vunpack.c.h.b16 %v30
  %v296 = vunpack.c.l.b16 %v31
  %v297 = vunpack.c.h.b16 %v31
  %v298 = vunpack.c.l.b16 %v32
  %v299 = vunpack.c.h.b16 %v32
  %v300 = vunpack.c.l.b16 %v33
  %v301 = vunpack.c.h.b16 %v33
  %v302 = vunpack.c.l.b16 %v34
  %v303 = vunpack.c.h.b16 %v34
  %v304 = vunpack.c.l.b16 %v35
  %v305 = vunpack.c.h.b16 %v35
  %v306 = vunpack.c.l.b16 %v36
  %v307 = vunpack.c.h.b16 %v36
  %v308 = vunpack.c.l.b16 %v37
  %v309 = vunpack.c.h.b16 %v37
  %v310 = vunpack.c.l.b16 %v38
  %v311 = vunpack.c.h.b16 %v38
  %v312 = vunpack.c.l.b16 %v39
  %v313 = vunpack.c.h.b16 %v39
  %v314 = vunpack.c.l.b16 %v40
  %v315 = vunpack.c.h.b16 %v40
  %v316 = vunpack.c.l.b16 %v41
  %v317 = vunpack.c.h.b16 %v41
  %v318 = vunpack.c.l.b16 %v42
  %v319 = vunpack.c.h.b16 %v42
  %v320 = vunpack.c.l.b16 %v43
  %v321 = vunpack.c.h.b16 %v43
  %v322 = vunpack.c.l.b16 %v44
  %v323 = vunpack.c.h.b16 %v44
  %v324 = vunpack.c.l.b16 %v45
  %v325 = vunpack.c.h.b16 %v45
  %v326 = vunpack.c.l.b16 %v46
  %v327 = vunpack.c.h.b16 %v46
  %v328 = vunpack.c.l.b16 %v47
  %v329 = vunpack.c.h.b16 %v47
  %v330 = vunpack.c.l.b16 %v48
  %v331 = vunpack.c.h.b16 %v48
  %v332 = vunpack.c.l.b16 %v49
  %v333 = vunpack.c.h.b16 %v49
  %v334 = vunpack.c.l.b16 %v50
  %v335 = vunpack.c.h.b16 %v50
  %v336 = vunpack.c.l.b16 %v51
  %v337 = vunpack.c.h.b16 %v51
  %v338 = vunpack.c.l.b16 %v52
  %v339 = vunpack.c.h.b16 %v52
  %v340 = vunpack.c.l.b16 %v53
  %v341 = vunpack.c.h.b16 %v53
  %v342 = vunpack.c.l.b16 %v54
  %v343 = vunpack.c.h.b16 %v54
  %v344 = vunpack.c.l.b16 %v55
  %v345 = vunpack.c.h.b16 %v55
  %v346 = vunpack.c.l.b16 %v56
  %v347 = vunpack.c.h.b16 %v56
  %v348 = vunpack.c.l.b16 %v57
  %v349 = vunpack.c.h.b16 %v57
  %v350 = vunpack.c.l.b16 %v58
  %v351 = vunpack.c.h.b16 %v58
  %v352 = vunpack.c.l.b16 %v59
  %v353 = vunpack.c.h.b16 %v59
  %v354 = vunpack.c.l.b16 %v60
  %v355 = vunpack.c.h.b16 %v60
  %v356 = vunpack.c.l.b16 %v61
  %v357 = vunpack.c.h.b16 %v61
  %v358 = vunpack.c.l.b16 %v62
  %v359 = vunpack.c.h.b16 %v62
  %v360 = vunpack.c.l.b16 %v63
  %v361 = vunpack.c.h.b16 %v63
  %v362 = vunpack.c.l.b16 %v64
  %v363 = vunpack.c.h.b16 %v64
  %v364 = vunpack.c.l.b16 %v65
  %v365 = vunpack.c.h.b16 %v65
  %v366 = vunpack.c.l.b16 %v66
  %v367 = vunpack.c.h.b16 %v66
  %v368 = vunpack.c.l.b16 %v67
  %v369 = vunpack.c.h.b16 %v67
  %v370 = vunpack.c.l.b16 %v68
  %v371 = vunpack.c.h.b16 %v68
  %v372 = vunpack.c.l.b16 %v69
  %v373 = vunpack.c.h.b16 %v69
  %v374 = vunpack.c.l.b16 %v70
  %v375 = vunpack.c.h.b16 %v70
  %v376 = vunpack.c.l.b16 %v71
  %v377 = vunpack.c.h.b16 %v71
  %v378 = vunpack.c.l.b16 %v72
  %v379 = vunpack.c.h.b16 %v72
  %v380 = vunpack.c.l.b16 %v73
  %v381 = vunpack.c.h.b16 %v73
  %v382 = vunpack.c.l.b16 %v74
  %v383 = vunpack.c.h.b16 %v74
  %v384 = vunpack.c.l.b16 %v75
  %v385 = vunpack.c.h.b16 %v75
  %v386 = vunpack.c.l.b16 %v76
  %v387 = vunpack.c.h.b16 %v76
  %v388 = vunpack.c.l.b16 %v77
  %v389 = vunpack.c.h.b16 %v77
  %v390 = vunpack.c.l.b16 %v78
  %v391 = vunpack.c.h.b16 %v78
  %v392 = vunpack.c.l.b16 %v79
  %v393 = vunpack.c.h.b16 %v79
  %v394 = vunpack.c.l.b16 %v80
  %v395 = vunpack.c.h.b16 %v80
  %v396 = vunpack.c.l.b16 %v81
  %v397 = vunpack.c.h.b16 %v81
  %v398 = vunpack.c.l.b16 %v82
  %v399 = vunpack.c.h.b16 %v82
  %v400 = vunpack.c.l.b16 %v83
  %v401 = vunpack.c.h.b16 %v83
  %v402 = vunpack.c.l.b16 %v84
  %v403 = vunpack.c.h.b16 %v84
  %v404 = vunpack.c.l.b16 %v85
  %v405 = vunpack.c.h.b16 %v85
  %v406 = vunpack.c.l.b16 %v86
  %v407 = vunpack.c.h.b16 %v86
  %v408 = vunpack.c.l.b16 %v87
  %v409 = vunpack.c.h.b16 %v87
  %v410 = vunpack.c.l.b16 %v88
  %v411 = vunpack.c.h.b16 %v88
  %v412 = vunpack.c.l.b16 %v89
  %v413 = vunpack.c.h.b16 %v89
  %v414 = vunpack.c.l.b16 %v90
  %v415 = vunpack.c.h.b16 %v90
  %v416 = vunpack.c.l.b16 %v91
  %v417 = vunpack.c.h.b16 %v91
  %v418 = vunpack.c.l.b16 %v92
  %v419 = vunpack.c.h.b16 %v92
  %v420 = vunpack.c.l.b16 %v93
  %v421 = vunpack.c.h.b16 %v93
  %v422 = vunpack.c.l.b16 %v94
  %v423 = vunpack.c.h.b16 %v94
  %v424 = vunpack.c.l.b16 %v95
  %v425 = vunpack.c.h.b16 %v95
  %v426 = vunpack.c.l.b16 %v96
  %v427 = vunpack.c.h.b16 %v96
  %v428 = vunpack.c.l.b16 %v97
  %v429 = vunpack.c.h.b16 %v97
  %v430 = vunpack.c.l.b16 %v98
  %v431 = vunpack.c.h.b16 %v98
  %v432 = vunpack.c.l.b16 %v99
  %v433 = vunpack.c.h.b16 %v99
  %v434 = vunpack.c.l.b16 %v100
  %v435 = vunpack.c.h.b16 %v100
  %v436 = vunpack.c.l.b16 %v101
  %v437 = vunpack.c.h.b16 %v101
  %v438 = vunpack.c.l.b16 %v102
  %v439 = vunpack.c.h.b16 %v102
  %v440 = vunpack.c.l.b16 %v103
  %v441 = vunpack.c.h.b16 %v103
  %v442 = vunpack.c.l.b16 %v104
  %v443 = vunpack.c.h.b16 %v104
  %v444 = vunpack.c.l.b16 %v105
  %v445 = vunpack.c.h.b16 %v105
  %v446 = vunpack.c.l.b16 %v106
  %v447 = vunpack.c.h.b16 %v106
  %v448 = vunpack.c.l.b16 %v107
  %v449 = vunpack.c.h.b16 %v107
  %v450 = vunpack.c.l.b16 %v108
  %v451 = vunpack.c.h.b16 %v108
  %v452 = vunpack.c.l.b16 %v109
  %v453 = vunpack.c.h.b16 %v109
  %v454 = vunpack.c.l.b16 %v110
  %v455 = vunpack.c.h.b16 %v110
  %v456 = vunpack.c.l.b16 %v111
  %v457 = vunpack.c.h.b16 %v111
  %v458 = vunpack.c.l.b16 %v112
  %v459 = vunpack.c.h.b16 %v112
  %v460 = vunpack.c.l.b16 %v113
  %v461 = vunpack.c.h.b16 %v113
  %v462 = vunpack.c.l.b16 %v114
  %v463 = vunpack.c.h.b16 %v114
  %v464 = vunpack.c.l.b16 %v115
  %v465 = vunpack.c.h.b16 %v115
  %v466 = vunpack.c.l.b16 %v116
  %v467 = vunpack.c.h.b16 %v116
  %v468 = vunpack.c.l.b16 %v117
  %v469 = vunpack.c.h.b16 %v117
  %v470 = vunpack.c.l.b16 %v118
  %v471 = vunpack.c.h.b16 %v118
  %v472 = vunpack.c.l.b16 %v119
  %v473 = vunpack.c.h.b16 %v119
  %v474 = vunpack.c.l.b16 %v120
  %v475 = vunpack.c.h.b16 %v120
  %v476 = vunpack.c.l.b16 %v121
  %v477 = vunpack.c.h.b16 %v121
  %v478 = vunpack.c.l.b16 %v122
  %v479 = vunpack.c.h.b16 %v122
  %v480 = vunpack.c.l.b16 %v123
  %v481 = vunpack.c.h.b16 %v123
  %v482 = vunpack.c.l.b16 %v124
  %v483 = vunpack.c.h.b16 %v124
  %v484 = vunpack.c.l.b16 %v125
  %v485 = vunpack.c.h.b16 %v125
  %v486 = vunpack.c.l.b16 %v126
  %v487 = vunpack.c.h.b16 %v126
  %v488 = vunpack.c.l.b16 %v127
  %v489 = vunpack.c.h.b16 %v127
  %v490 = vunpack.c.l.b16 %v128
  %v491 = vunpack.c.h.b16 %v128
  %v492 = vunpack.c.l.b16 %v129
  %v493 = vunpack.c.h.b16 %v129
  %v494 = vunpack.c.l.b16 %v130
  %v495 = vunpack.c.h.b16 %v130
  %v496 = vunpack.c.l.b16 %v131
  %v497 = vunpack.c.h.b16 %v131
  %v498 = vunpack.c.l.b16 %v132
  %v499 = vunpack.c.h.b16 %v132
  %v500 = vunpack.c.l.b16 %v133
  %v501 = vunpack.c.h.b16 %v133
  %v502 = vunpack.c.l.b16 %v134
  %v503 = vunpack.c.h.b16 %v134
  %v504 = vunpack.c.l.b16 %v135
  %v505 = vunpack.c.h.b16 %v135
  %v506 = vunpack.c.l.b16 %v136
  %v507 = vunpack.c.h.b16 %v136
  %v508 = vunpack.c.l.b16 %v137
  %v509 = vunpack.c.h.b16 %v137
  %v510 = vunpack.c.l.b16 %v138
  %v511 = vunpack.c.h.b16 %v138
  %v512 = vunpack.c.l.b16 %v139
  %v513 = vunpack.c.h.b16 %v139
  %v514 = vunpack.c.l.b16 %v140
  %v515 = vunpack.c.h.b16 %v140
  %v516 = vunpack.c.l.b16 %v141
  %v517 = vunpack.c.h.b16 %v141
  %v518 = vunpack.c.l.b16 %v142
  %v519 = vunpack.c.h.b16 %v142
  %v520 = vunpack.c.l.b16 %v143
  %v521 = vunpack.c.h.b16 %v143
  %v522 = vunpack.c.l.b16 %v144
  %v523 = vunpack.c.h.b16 %v144
  %v524 = vunpack.c.l.b16 %v145
  %v525 = vunpack.c.h.b16 %v145
  %v526 = vunpack.c.l.b16 %v146
  %v527 = vunpack.c.h.b16 %v146
  %v528 = vunpack.c.l.b16 %v147
  %v529 = vunpack.c.h.b16 %v147
  %v530 = vunpack.c.l.b16 %v148
  %v531 = vunpack.c.h.b16 %v148
  %v532 = vunpack.c.l.b16 %v149
  %v533 = vunpack.c.h.b16 %v149
  %v534 = vpack.c.b16 %v286, %v278
  %v535 = vpack.c.b16 %v287, %v279
  %v536 = vpack.c.b16 %v288, %v280
  %v537 = vpack.c.b16 %v289, %v281
  %v538 = vpack.c.b16 %v290, %v282
  %v539 = vpack.c.b16 %v291, %v283
  %v540 = vpack.c.b16 %v292, %v284
  %v541 = vpack.c.b16 %v293, %v285
  %v542 = vpack.c.b16 %v302, %v294
  %v543 = vpack.c.b16 %v303, %v295
  %v544 = vpack.c.b16 %v304, %v296
  %v545 = vpack.c.b16 %v305, %v297
  %v546 = vpack.c.b16 %v306, %v298
  %v547 = vpack.c.b16 %v307, %v299
  %v548 = vpack.c.b16 %v308, %v300
  %v549 = vpack.c.b16 %v309, %v301
  %v550 = vpack.c.b16 %v318, %v310
  %v551 = vpack.c.b16 %v319, %v311
  %v552 = vpack.c.b16 %v320, %v312
  %v553 = vpack.c.b16 %v321, %v313
  %v554 = vpack.c.b16 %v322, %v314
  %v555 = vpack.c.b16 %v323, %v315
  %v556 = vpack.c.b16 %v324, %v316
  %v557 = vpack.c.b16 %v325, %v317
  %v558 = vpack.c.b16 %v334, %v326
  %v559 = vpack.c.b16 %v335, %v327
  %v560 = vpack.c.b16 %v336, %v328
  %v561 = vpack.c.b16 %v337, %v329
  %v562 = vpack.c.b16 %v338, %v330
  %v563 = vpack.c.b16 %v339, %v331
  %v564 = vpack.c.b16 %v340, %v332
  %v565 = vpack.c.b16 %v341, %v333
  %v566 = vpack.c.b16 %v350, %v342
  %v567 = vpack.c.b16 %v351, %v343
  %v568 = vpack.c.b16 %v352, %v344
  %v569 = vpack.c.b16 %v353, %v345
  %v570 = vpack.c.b16 %v354, %v346
  %v571 = vpack.c.b16 %v355, %v347
  %v572 = vpack.c.b16 %v356, %v348
  %v573 = vpack.c.b16 %v357, %v349
  %v574 = vpack.c.b16 %v366, %v358
  %v575 = vpack.c.b16 %v367, %v359
  %v576 = vpack.c.b16 %v368, %v360
  %v577 = vpack.c.b16 %v369, %v361
  %v578 = vpack.c.b16 %v370, %v362
  %v579 = vpack.c.b16 %v371, %v363
  %v580 = vpack.c.b16 %v372, %v364
  %v581 = vpack.c.b16 %v373, %v365
  %v582 = vpack.c.b16 %v382, %v374
  %v583 = vpack.c.b16 %v383, %v375
  %v584 = vpack.c.b16 %v384, %v376
  %v585 = vpack.c.b16 %v385, %v377
  %v586 = vpack.c.b16 %v386, %v378
  %v587 = vpack.c.b16 %v387, %v379
  %v588 = vpack.c.b16 %v388, %v380
  %v589 = vpack.c.b16 %v389, %v381
  %v590 = vpack.c.b16 %v398, %v390
  %v591 = vpack.c.b16 %v399, %v391
  %v592 = vpack.c.b16 %v400, %v392
  %v593 = vpack.c.b16 %v401, %v393
  %v594 = vpack.c.b16 %v402, %v394
  %v595 = vpack.c.b16 %v403, %v395
  %v596 = vpack.c.b16 %v404, %v396
  %v597 = vpack.c.b16 %v405, %v397
  %v598 = vpack.c.b16 %v414, %v406
  %v599 = vpack.c.b16 %v415, %v407
  %v600 = vpack.c.b16 %v416, %v408
  %v601 = vpack.c.b16 %v417, %v409
  %v602 = vpack.c.b16 %v418, %v410
  %v603 = vpack.c.b16 %v419, %v411
  %v604 = vpack.c.b16 %v420, %v412
  %v605 = vpack.c.b16 %v421, %v413
  %v606 = vpack.c.b16 %v430, %v422
  %v607 = vpack.c.b16 %v431, %v423
  %v608 = vpack.c.b16 %v432, %v424
  %v609 = vpack.c.b16 %v433, %v425
  %v610 = vpack.c.b16 %v434, %v426
  %v611 = vpack.c.b16 %v435, %v427
  %v612 = vpack.c.b16 %v436, %v428
  %v613 = vpack.c.b16 %v437, %v429
  %v614 = vpack.c.b16 %v446, %v438
  %v615 = vpack.c.b16 %v447, %v439
  %v616 = vpack.c.b16 %v448, %v440
  %v617 = vpack.c.b16 %v449, %v441
  %v618 = vpack.c.b16 %v450, %v442
  %v619 = vpack.c.b16 %v451, %v443
  %v620 = vpack.c.b16 %v452, %v444
  %v621 = vpack.c.b16 %v453, %v445
  %v622 = vpack.c.b16 %v462, %v454
  %v623 = vpack.c.b16 %v463, %v455
  %v624 = vpack.c.b16 %v464, %v456
  %v625 = vpack.c.b16 %v465, %v457
  %v626 = vpack.c.b16 %v466, %v458
  %v627 = vpack.c.b16 %v467, %v459
  %v628 = vpack.c.b16 %v468, %v460
  %v629 = vpack.c.b16 %v469, %v461
  %v630 = vpack.c.b16 %v478, %v470
  %v631 = vpack.c.b16 %v479, %v471
  %v632 = vpack.c.b16 %v480, %v472
  %v633 = vpack.c.b16 %v481, %v473
  %v634 = vpack.c.b16 %v482, %v474
  %v635 = vpack.c.b16 %v483, %v475
  %v636 = vpack.c.b16 %v484, %v476
  %v637 = vpack.c.b16 %v485, %v477
  %v638 = vpack.c.b16 %v494, %v486
  %v639 = vpack.c.b16 %v495, %v487
  %v640 = vpack.c.b16 %v496, %v488
  %v641 = vpack.c.b16 %v497, %v489
  %v642 = vpack.c.b16 %v498, %v490
  %v643 = vpack.c.b16 %v499, %v491
  %v644 = vpack.c.b16 %v500, %v492
  %v645 = vpack.c.b16 %v501, %v493
  %v646 = vpack.c.b16 %v510, %v502
  %v647 = vpack.c.b16 %v511, %v503
  %v648 = vpack.c.b16 %v512, %v504
  %v649 = vpack.c.b16 %v513, %v505
  %v650 = vpack.c.b16 %v514, %v506
  %v651 = vpack.c.b16 %v515, %v507
  %v652 = vpack.c.b16 %v516, %v508
  %v653 = vpack.c.b16 %v517, %v509
  %v654 = vpack.c.b16 %v526, %v518
  %v655 = vpack.c.b16 %v527, %v519
  %v656 = vpack.c.b16 %v528, %v520
  %v657 = vpack.c.b16 %v529, %v521
  %v658 = vpack.c.b16 %v530, %v522
  %v659 = vpack.c.b16 %v531, %v523
  %v660 = vpack.c.b16 %v532, %v524
  %v661 = vpack.c.b16 %v533, %v525
  %790 = vmatpush.bf16.msra.mxu0 %v590
  %791 = vmatpush.bf16.msra.mxu0 %v582
  %792 = vmatpush.bf16.msra.mxu0 %v574
  %793 = vmatpush.bf16.msra.mxu0 %v566
  %794 = vmatpush.bf16.msra.mxu0 %v558
  %795 = vmatpush.bf16.msra.mxu0 %v550
  %796 = vmatpush.bf16.msra.mxu0 %v542
  %797 = vmatpush.bf16.msra.mxu0 %v534
  %798 = vmatmul.bf16.gmra.mxu0 0
  %v799 = vpop.f32.mrf.mxu0
  %v800 = vadd.f32 0.0, %v799
  %v801 = vpop.f32.mrf.mxu0
  %802 = vdwg.mxu0
  %803 = vmatpush.bf16.msra.mxu0 %v654
  %804 = vmatpush.bf16.msra.mxu0 %v646
  %805 = vmatpush.bf16.msra.mxu0 %v638
  %806 = vmatpush.bf16.msra.mxu0 %v630
  %807 = vmatpush.bf16.msra.mxu0 %v622
  %808 = vmatpush.bf16.msra.mxu0 %v614
  %809 = vmatpush.bf16.msra.mxu0 %v606
  %810 = vmatpush.bf16.msra.mxu0 %v598
  %811 = vmatmul.bf16.gmra.mxu0 0
  %v812 = vpop.f32.mrf.mxu0
  %v813 = vadd.f32 %v800, %v812
  %v814 = vpop.f32.mrf.mxu0
  %815 = vdwg.mxu0
  %816 = vmatpush.bf16.msra.mxu0 %v591
  %817 = vmatpush.bf16.msra.mxu0 %v583
  %818 = vmatpush.bf16.msra.mxu0 %v575
  %819 = vmatpush.bf16.msra.mxu0 %v567
  %820 = vmatpush.bf16.msra.mxu0 %v559
  %821 = vmatpush.bf16.msra.mxu0 %v551
  %822 = vmatpush.bf16.msra.mxu0 %v543
  %823 = vmatpush.bf16.msra.mxu0 %v535
  %824 = vmatmul.bf16.gmra.mxu0 0
  %v825 = vpop.f32.mrf.mxu0
  %v826 = vadd.f32 0.0, %v825
  %v827 = vpop.f32.mrf.mxu0
  %828 = vdwg.mxu0
  %829 = vmatpush.bf16.msra.mxu0 %v655
  %830 = vmatpush.bf16.msra.mxu0 %v647
  %831 = vmatpush.bf16.msra.mxu0 %v639
  %832 = vmatpush.bf16.msra.mxu0 %v631
  %833 = vmatpush.bf16.msra.mxu0 %v623
  %834 = vmatpush.bf16.msra.mxu0 %v615
  %835 = vmatpush.bf16.msra.mxu0 %v607
  %836 = vmatpush.bf16.msra.mxu0 %v599
  %837 = vmatmul.bf16.gmra.mxu0 0
  %v838 = vpop.f32.mrf.mxu0
  %v839 = vadd.f32 %v826, %v838
  %v840 = vpop.f32.mrf.mxu0
  %841 = vdwg.mxu0
  %842 = vmatpush.bf16.msra.mxu0 %v592
  %843 = vmatpush.bf16.msra.mxu0 %v584
  %844 = vmatpush.bf16.msra.mxu0 %v576
  %845 = vmatpush.bf16.msra.mxu0 %v568
  %846 = vmatpush.bf16.msra.mxu0 %v560
  %847 = vmatpush.bf16.msra.mxu0 %v552
  %848 = vmatpush.bf16.msra.mxu0 %v544
  %849 = vmatpush.bf16.msra.mxu0 %v536
  %850 = vmatmul.bf16.gmra.mxu0 0
  %v851 = vpop.f32.mrf.mxu0
  %v852 = vadd.f32 0.0, %v851
  %v853 = vpop.f32.mrf.mxu0
  %854 = vdwg.mxu0
  %855 = vmatpush.bf16.msra.mxu0 %v656
  %856 = vmatpush.bf16.msra.mxu0 %v648
  %857 = vmatpush.bf16.msra.mxu0 %v640
  %858 = vmatpush.bf16.msra.mxu0 %v632
  %859 = vmatpush.bf16.msra.mxu0 %v624
  %860 = vmatpush.bf16.msra.mxu0 %v616
  %861 = vmatpush.bf16.msra.mxu0 %v608
  %862 = vmatpush.bf16.msra.mxu0 %v600
  %863 = vmatmul.bf16.gmra.mxu0 0
  %v864 = vpop.f32.mrf.mxu0
  %v865 = vadd.f32 %v852, %v864
  %v866 = vpop.f32.mrf.mxu0
  %867 = vdwg.mxu0
  %868 = vmatpush.bf16.msra.mxu0 %v593
  %869 = vmatpush.bf16.msra.mxu0 %v585
  %870 = vmatpush.bf16.msra.mxu0 %v577
  %871 = vmatpush.bf16.msra.mxu0 %v569
  %872 = vmatpush.bf16.msra.mxu0 %v561
  %873 = vmatpush.bf16.msra.mxu0 %v553
  %874 = vmatpush.bf16.msra.mxu0 %v545
  %875 = vmatpush.bf16.msra.mxu0 %v537
  %876 = vmatmul.bf16.gmra.mxu0 0
  %v877 = vpop.f32.mrf.mxu0
  %v878 = vadd.f32 0.0, %v877
  %v879 = vpop.f32.mrf.mxu0
  %880 = vdwg.mxu0
  %881 = vmatpush.bf16.msra.mxu0 %v657
  %882 = vmatpush.bf16.msra.mxu0 %v649
  %883 = vmatpush.bf16.msra.mxu0 %v641
  %884 = vmatpush.bf16.msra.mxu0 %v633
  %885 = vmatpush.bf16.msra.mxu0 %v625
  %886 = vmatpush.bf16.msra.mxu0 %v617
  %887 = vmatpush.bf16.msra.mxu0 %v609
  %888 = vmatpush.bf16.msra.mxu0 %v601
  %889 = vmatmul.bf16.gmra.mxu0 0
  %v890 = vpop.f32.mrf.mxu0
  %v891 = vadd.f32 %v878, %v890
  %v892 = vpop.f32.mrf.mxu0
  %893 = vdwg.mxu0
  %894 = vmatpush.bf16.msra.mxu0 %v594
  %895 = vmatpush.bf16.msra.mxu0 %v586
  %896 = vmatpush.bf16.msra.mxu0 %v578
  %897 = vmatpush.bf16.msra.mxu0 %v570
  %898 = vmatpush.bf16.msra.mxu0 %v562
  %899 = vmatpush.bf16.msra.mxu0 %v554
  %900 = vmatpush.bf16.msra.mxu0 %v546
  %901 = vmatpush.bf16.msra.mxu0 %v538
  %902 = vmatmul.bf16.gmra.mxu0 0
  %v903 = vpop.f32.mrf.mxu0
  %v904 = vadd.f32 0.0, %v903
  %v905 = vpop.f32.mrf.mxu0
  %906 = vdwg.mxu0
  %907 = vmatpush.bf16.msra.mxu0 %v658
  %908 = vmatpush.bf16.msra.mxu0 %v650
  %909 = vmatpush.bf16.msra.mxu0 %v642
  %910 = vmatpush.bf16.msra.mxu0 %v634
  %911 = vmatpush.bf16.msra.mxu0 %v626
  %912 = vmatpush.bf16.msra.mxu0 %v618
  %913 = vmatpush.bf16.msra.mxu0 %v610
  %914 = vmatpush.bf16.msra.mxu0 %v602
  %915 = vmatmul.bf16.gmra.mxu0 0
  %v916 = vpop.f32.mrf.mxu0
  %v917 = vadd.f32 %v904, %v916
  %v918 = vpop.f32.mrf.mxu0
  %919 = vdwg.mxu0
  %920 = vmatpush.bf16.msra.mxu0 %v595
  %921 = vmatpush.bf16.msra.mxu0 %v587
  %922 = vmatpush.bf16.msra.mxu0 %v579
  %923 = vmatpush.bf16.msra.mxu0 %v571
  %924 = vmatpush.bf16.msra.mxu0 %v563
  %925 = vmatpush.bf16.msra.mxu0 %v555
  %926 = vmatpush.bf16.msra.mxu0 %v547
  %927 = vmatpush.bf16.msra.mxu0 %v539
  %928 = vmatmul.bf16.gmra.mxu0 0
  %v929 = vpop.f32.mrf.mxu0
  %v930 = vadd.f32 0.0, %v929
  %v931 = vpop.f32.mrf.mxu0
  %932 = vdwg.mxu0
  %933 = vmatpush.bf16.msra.mxu0 %v659
  %934 = vmatpush.bf16.msra.mxu0 %v651
  %935 = vmatpush.bf16.msra.mxu0 %v643
  %936 = vmatpush.bf16.msra.mxu0 %v635
  %937 = vmatpush.bf16.msra.mxu0 %v627
  %938 = vmatpush.bf16.msra.mxu0 %v619
  %939 = vmatpush.bf16.msra.mxu0 %v611
  %940 = vmatpush.bf16.msra.mxu0 %v603
  %941 = vmatmul.bf16.gmra.mxu0 0
  %v942 = vpop.f32.mrf.mxu0
  %v943 = vadd.f32 %v930, %v942
  %v944 = vpop.f32.mrf.mxu0
  %945 = vdwg.mxu0
  %946 = vmatpush.bf16.msra.mxu0 %v596
  %947 = vmatpush.bf16.msra.mxu0 %v588
  %948 = vmatpush.bf16.msra.mxu0 %v580
  %949 = vmatpush.bf16.msra.mxu0 %v572
  %950 = vmatpush.bf16.msra.mxu0 %v564
  %951 = vmatpush.bf16.msra.mxu0 %v556
  %952 = vmatpush.bf16.msra.mxu0 %v548
  %953 = vmatpush.bf16.msra.mxu0 %v540
  %954 = vmatmul.bf16.gmra.mxu0 0
  %v955 = vpop.f32.mrf.mxu0
  %v956 = vadd.f32 0.0, %v955
  %v957 = vpop.f32.mrf.mxu0
  %958 = vdwg.mxu0
  %959 = vmatpush.bf16.msra.mxu0 %v660
  %960 = vmatpush.bf16.msra.mxu0 %v652
  %961 = vmatpush.bf16.msra.mxu0 %v644
  %962 = vmatpush.bf16.msra.mxu0 %v636
  %963 = vmatpush.bf16.msra.mxu0 %v628
  %964 = vmatpush.bf16.msra.mxu0 %v620
  %965 = vmatpush.bf16.msra.mxu0 %v612
  %966 = vmatpush.bf16.msra.mxu0 %v604
  %967 = vmatmul.bf16.gmra.mxu0 0
  %v968 = vpop.f32.mrf.mxu0
  %v969 = vadd.f32 %v956, %v968
  %v970 = vpop.f32.mrf.mxu0
  %971 = vdwg.mxu0
  %972 = vmatpush.bf16.msra.mxu0 %v597
  %973 = vmatpush.bf16.msra.mxu0 %v589
  %974 = vmatpush.bf16.msra.mxu0 %v581
  %975 = vmatpush.bf16.msra.mxu0 %v573
  %976 = vmatpush.bf16.msra.mxu0 %v565
  %977 = vmatpush.bf16.msra.mxu0 %v557
  %978 = vmatpush.bf16.msra.mxu0 %v549
  %979 = vmatpush.bf16.msra.mxu0 %v541
  %980 = vmatmul.bf16.gmra.mxu0 0
  %v981 = vpop.f32.mrf.mxu0
  %v982 = vadd.f32 0.0, %v981
  %v983 = vpop.f32.mrf.mxu0
  %984 = vdwg.mxu0
  %985 = vmatpush.bf16.msra.mxu0 %v661
  %986 = vmatpush.bf16.msra.mxu0 %v653
  %987 = vmatpush.bf16.msra.mxu0 %v645
  %988 = vmatpush.bf16.msra.mxu0 %v637
  %989 = vmatpush.bf16.msra.mxu0 %v629
  %990 = vmatpush.bf16.msra.mxu0 %v621
  %991 = vmatpush.bf16.msra.mxu0 %v613
  %992 = vmatpush.bf16.msra.mxu0 %v605
  %993 = vmatmul.bf16.gmra.mxu0 0
  %v994 = vpop.f32.mrf.mxu0
  %v995 = vadd.f32 %v982, %v994
  %v996 = vpop.f32.mrf.mxu0
  %997 = vdwg.mxu0
  %v1006 = vrot.slane %v839, 4
  %v1007 = vrot.slane %v891, 4
  %v1008 = vrot.slane %v943, 4
  %v1009 = vrot.slane %v995, 4
  %vm1010 = vcmask 1043456
  %v1011 = vsel %vm1010, %v813, %v1006
  %v1012 = vsel %vm1010, %v865, %v1007
  %v1013 = vsel %vm1010, %v917, %v1008
  %v1014 = vsel %vm1010, %v969, %v1009
  %v1019 = vadd.f32 %v18, %v1011
  %v1020 = vadd.f32 %v19, %v1012
  %v1021 = vadd.f32 %v20, %v1013
  %v1022 = vadd.f32 %v21, %v1014
  %v1023 = vxor.u32 %v1019, 2147483648
  %v1024 = vmul.f32 %v1023, 1.442695
  %v1025 = vpow.pop %v1024
  %v1026 = vadd.f32 %v1025, 1.0
  %v1027 = vrcp.pop %v1026
  %v1028 = vmul.f32 %v1026, %v1027
  %v1029 = vsub.f32 1.0, %v1028
  %v1030 = vmul.f32 %v1027, %v1029
  %v1031 = vadd.f32 %v1027, %v1030
  %vm1032 = vweird.f32 %v1026
  %vm1033 = vweird.f32 %v1027
  %vm1034 = vmor %vm1032, %vm1033
  %v1035 = vsel %vm1034, %v1027, %v1031
  %v1036 = vand.u32 2147483647, %v1026
  %vm1037 = vcmp.eq.f32.partialorder %v1036, 8.507059e+37
  %v1038 = vand.u32 %v1026, 2147483648
  %v1039 = vor.u32 1.1754944e-38, %v1038
  %v1040 = vsel %vm1037, %v1039, %v1035
  %v1041 = vmul.f32 1.0, %v1040
  %v1042 = vxor.u32 %v1020, 2147483648
  %v1043 = vmul.f32 %v1042, 1.442695
  %v1044 = vpow.pop %v1043
  %v1045 = vadd.f32 %v1044, 1.0
  %v1046 = vrcp.pop %v1045
  %v1047 = vmul.f32 %v1045, %v1046
  %v1048 = vsub.f32 1.0, %v1047
  %v1049 = vmul.f32 %v1046, %v1048
  %v1050 = vadd.f32 %v1046, %v1049
  %vm1051 = vweird.f32 %v1045
  %vm1052 = vweird.f32 %v1046
  %vm1053 = vmor %vm1051, %vm1052
  %v1054 = vsel %vm1053, %v1046, %v1050
  %v1055 = vand.u32 2147483647, %v1045
  %vm1056 = vcmp.eq.f32.partialorder %v1055, 8.507059e+37
  %v1057 = vand.u32 %v1045, 2147483648
  %v1058 = vor.u32 1.1754944e-38, %v1057
  %v1059 = vsel %vm1056, %v1058, %v1054
  %v1060 = vmul.f32 1.0, %v1059
  %v1061 = vtanh.pop %v1021
  %v1062 = vxor.u32 %v1022, 2147483648
  %v1063 = vmul.f32 %v1062, 1.442695
  %v1064 = vpow.pop %v1063
  %v1065 = vadd.f32 %v1064, 1.0
  %v1066 = vrcp.pop %v1065
  %v1067 = vmul.f32 %v1065, %v1066
  %v1068 = vsub.f32 1.0, %v1067
  %v1069 = vmul.f32 %v1066, %v1068
  %v1070 = vadd.f32 %v1066, %v1069
  %vm1071 = vweird.f32 %v1065
  %vm1072 = vweird.f32 %v1066
  %vm1073 = vmor %vm1071, %vm1072
  %v1074 = vsel %vm1073, %v1066, %v1070
  %v1075 = vand.u32 2147483647, %v1065
  %vm1076 = vcmp.eq.f32.partialorder %v1075, 8.507059e+37
  %v1077 = vand.u32 %v1065, 2147483648
  %v1078 = vor.u32 1.1754944e-38, %v1077
  %v1079 = vsel %vm1076, %v1078, %v1074
  %v1080 = vmul.f32 1.0, %v1079
  %v1081 = vmul.f32 %v1060, 0.0
  %v1082 = vmul.f32 %v1041, %v1061
  %v1083 = vadd.f32 %v1081, %v1082
  %v1084 = vtanh.pop %v1083
  %v1085 = vmul.f32 %v1080, %v1084
  %v1086 = vld [vmem:[%s2] sm:$0xff]
  %vm1087 = vcmp.gt.f32.partialorder %v1086, 0.0
  %v1088 = vsel %vm1087, %v1083, 0.0
  %v1089 = vsel %vm1087, %v1085, 0.0
  %v1090 = vadd.f32 %v1089, 0.0
  %s1091 = scalar_lea.vmem %s0, 32
  %v1092 = vld [vmem:[%s1091] sm:$0xff]
  %v1093 = vld [vmem:[%s1091 + $0x8] sm:$0xff]
  %v1094 = vld [vmem:[%s1091 + $0x10] sm:$0xff]
  %v1095 = vld [vmem:[%s1091 + $0x18] sm:$0xff]
  %1097 = vst [vmem:[#allocation1] ss:$2 sm:$0xff] %v1089
  %v1098 = vld.sshfl [vmem:[#allocation1] sm:$0xff pattern:$0x75316420]
  %v1099 = vld.sshfl [vmem:[#allocation1 + $0x8] sm:$0xff pattern:$0x75316420]
  %v1102 = vpack.c.bf16 %v1098, %v1098
  %v1103 = vpack.c.bf16 %v1099, %v1099
  %1104 = vmatpush.bf16.msra.mxu0 %v590
  %1105 = vmatpush.bf16.msra.mxu0 %v582
  %1106 = vmatpush.bf16.msra.mxu0 %v574
  %1107 = vmatpush.bf16.msra.mxu0 %v566
  %1108 = vmatpush.bf16.msra.mxu0 %v558
  %1109 = vmatpush.bf16.msra.mxu0 %v550
  %1110 = vmatpush.bf16.msra.mxu0 %v542
  %1111 = vmatpush.bf16.msra.mxu0 %v534
  %1112 = vmatmul.bf16.gmra.mxu0 %v1102
  %v1113 = vpop.f32.mrf.mxu0
  %v1114 = vadd.f32 0.0, %v1113
  %v1115 = vpop.f32.mrf.mxu0
  %1116 = vdwg.mxu0
  %1117 = vmatpush.bf16.msra.mxu0 %v654
  %1118 = vmatpush.bf16.msra.mxu0 %v646
  %1119 = vmatpush.bf16.msra.mxu0 %v638
  %1120 = vmatpush.bf16.msra.mxu0 %v630
  %1121 = vmatpush.bf16.msra.mxu0 %v622
  %1122 = vmatpush.bf16.msra.mxu0 %v614
  %1123 = vmatpush.bf16.msra.mxu0 %v606
  %1124 = vmatpush.bf16.msra.mxu0 %v598
  %1125 = vmatmul.bf16.gmra.mxu0 %v1103
  %v1126 = vpop.f32.mrf.mxu0
  %v1127 = vadd.f32 %v1114, %v1126
  %v1128 = vpop.f32.mrf.mxu0
  %1129 = vdwg.mxu0
  %1130 = vmatpush.bf16.msra.mxu0 %v591
  %1131 = vmatpush.bf16.msra.mxu0 %v583
  %1132 = vmatpush.bf16.msra.mxu0 %v575
  %1133 = vmatpush.bf16.msra.mxu0 %v567
  %1134 = vmatpush.bf16.msra.mxu0 %v559
  %1135 = vmatpush.bf16.msra.mxu0 %v551
  %1136 = vmatpush.bf16.msra.mxu0 %v543
  %1137 = vmatpush.bf16.msra.mxu0 %v535
  %1138 = vmatmul.bf16.gmra.mxu0 %v1102
  %v1139 = vpop.f32.mrf.mxu0
  %v1140 = vadd.f32 0.0, %v1139
  %v1141 = vpop.f32.mrf.mxu0
  %1142 = vdwg.mxu0
  %1143 = vmatpush.bf16.msra.mxu0 %v655
  %1144 = vmatpush.bf16.msra.mxu0 %v647
  %1145 = vmatpush.bf16.msra.mxu0 %v639
  %1146 = vmatpush.bf16.msra.mxu0 %v631
  %1147 = vmatpush.bf16.msra.mxu0 %v623
  %1148 = vmatpush.bf16.msra.mxu0 %v615
  %1149 = vmatpush.bf16.msra.mxu0 %v607
  %1150 = vmatpush.bf16.msra.mxu0 %v599
  %1151 = vmatmul.bf16.gmra.mxu0 %v1103
  %v1152 = vpop.f32.mrf.mxu0
  %v1153 = vadd.f32 %v1140, %v1152
  %v1154 = vpop.f32.mrf.mxu0
  %1155 = vdwg.mxu0
  %1156 = vmatpush.bf16.msra.mxu0 %v592
  %1157 = vmatpush.bf16.msra.mxu0 %v584
  %1158 = vmatpush.bf16.msra.mxu0 %v576
  %1159 = vmatpush.bf16.msra.mxu0 %v568
  %1160 = vmatpush.bf16.msra.mxu0 %v560
  %1161 = vmatpush.bf16.msra.mxu0 %v552
  %1162 = vmatpush.bf16.msra.mxu0 %v544
  %1163 = vmatpush.bf16.msra.mxu0 %v536
  %1164 = vmatmul.bf16.gmra.mxu0 %v1102
  %v1165 = vpop.f32.mrf.mxu0
  %v1166 = vadd.f32 0.0, %v1165
  %v1167 = vpop.f32.mrf.mxu0
  %1168 = vdwg.mxu0
  %1169 = vmatpush.bf16.msra.mxu0 %v656
  %1170 = vmatpush.bf16.msra.mxu0 %v648
  %1171 = vmatpush.bf16.msra.mxu0 %v640
  %1172 = vmatpush.bf16.msra.mxu0 %v632
  %1173 = vmatpush.bf16.msra.mxu0 %v624
  %1174 = vmatpush.bf16.msra.mxu0 %v616
  %1175 = vmatpush.bf16.msra.mxu0 %v608
  %1176 = vmatpush.bf16.msra.mxu0 %v600
  %1177 = vmatmul.bf16.gmra.mxu0 %v1103
  %v1178 = vpop.f32.mrf.mxu0
  %v1179 = vadd.f32 %v1166, %v1178
  %v1180 = vpop.f32.mrf.mxu0
  %1181 = vdwg.mxu0
  %1182 = vmatpush.bf16.msra.mxu0 %v593
  %1183 = vmatpush.bf16.msra.mxu0 %v585
  %1184 = vmatpush.bf16.msra.mxu0 %v577
  %1185 = vmatpush.bf16.msra.mxu0 %v569
  %1186 = vmatpush.bf16.msra.mxu0 %v561
  %1187 = vmatpush.bf16.msra.mxu0 %v553
  %1188 = vmatpush.bf16.msra.mxu0 %v545
  %1189 = vmatpush.bf16.msra.mxu0 %v537
  %1190 = vmatmul.bf16.gmra.mxu0 %v1102
  %v1191 = vpop.f32.mrf.mxu0
  %v1192 = vadd.f32 0.0, %v1191
  %v1193 = vpop.f32.mrf.mxu0
  %1194 = vdwg.mxu0
  %1195 = vmatpush.bf16.msra.mxu0 %v657
  %1196 = vmatpush.bf16.msra.mxu0 %v649
  %1197 = vmatpush.bf16.msra.mxu0 %v641
  %1198 = vmatpush.bf16.msra.mxu0 %v633
  %1199 = vmatpush.bf16.msra.mxu0 %v625
  %1200 = vmatpush.bf16.msra.mxu0 %v617
  %1201 = vmatpush.bf16.msra.mxu0 %v609
  %1202 = vmatpush.bf16.msra.mxu0 %v601
  %1203 = vmatmul.bf16.gmra.mxu0 %v1103
  %v1204 = vpop.f32.mrf.mxu0
  %v1205 = vadd.f32 %v1192, %v1204
  %v1206 = vpop.f32.mrf.mxu0
  %1207 = vdwg.mxu0
  %1208 = vmatpush.bf16.msra.mxu0 %v594
  %1209 = vmatpush.bf16.msra.mxu0 %v586
  %1210 = vmatpush.bf16.msra.mxu0 %v578
  %1211 = vmatpush.bf16.msra.mxu0 %v570
  %1212 = vmatpush.bf16.msra.mxu0 %v562
  %1213 = vmatpush.bf16.msra.mxu0 %v554
  %1214 = vmatpush.bf16.msra.mxu0 %v546
  %1215 = vmatpush.bf16.msra.mxu0 %v538
  %1216 = vmatmul.bf16.gmra.mxu0 %v1102
  %v1217 = vpop.f32.mrf.mxu0
  %v1218 = vadd.f32 0.0, %v1217
  %v1219 = vpop.f32.mrf.mxu0
  %1220 = vdwg.mxu0
  %1221 = vmatpush.bf16.msra.mxu0 %v658
  %1222 = vmatpush.bf16.msra.mxu0 %v650
  %1223 = vmatpush.bf16.msra.mxu0 %v642
  %1224 = vmatpush.bf16.msra.mxu0 %v634
  %1225 = vmatpush.bf16.msra.mxu0 %v626
  %1226 = vmatpush.bf16.msra.mxu0 %v618
  %1227 = vmatpush.bf16.msra.mxu0 %v610
  %1228 = vmatpush.bf16.msra.mxu0 %v602
  %1229 = vmatmul.bf16.gmra.mxu0 %v1103
  %v1230 = vpop.f32.mrf.mxu0
  %v1231 = vadd.f32 %v1218, %v1230
  %v1232 = vpop.f32.mrf.mxu0
  %1233 = vdwg.mxu0
  %1234 = vmatpush.bf16.msra.mxu0 %v595
  %1235 = vmatpush.bf16.msra.mxu0 %v587
  %1236 = vmatpush.bf16.msra.mxu0 %v579
  %1237 = vmatpush.bf16.msra.mxu0 %v571
  %1238 = vmatpush.bf16.msra.mxu0 %v563
  %1239 = vmatpush.bf16.msra.mxu0 %v555
  %1240 = vmatpush.bf16.msra.mxu0 %v547
  %1241 = vmatpush.bf16.msra.mxu0 %v539
  %1242 = vmatmul.bf16.gmra.mxu0 %v1102
  %v1243 = vpop.f32.mrf.mxu0
  %v1244 = vadd.f32 0.0, %v1243
  %v1245 = vpop.f32.mrf.mxu0
  %1246 = vdwg.mxu0
  %1247 = vmatpush.bf16.msra.mxu0 %v659
  %1248 = vmatpush.bf16.msra.mxu0 %v651
  %1249 = vmatpush.bf16.msra.mxu0 %v643
  %1250 = vmatpush.bf16.msra.mxu0 %v635
  %1251 = vmatpush.bf16.msra.mxu0 %v627
  %1252 = vmatpush.bf16.msra.mxu0 %v619
  %1253 = vmatpush.bf16.msra.mxu0 %v611
  %1254 = vmatpush.bf16.msra.mxu0 %v603
  %1255 = vmatmul.bf16.gmra.mxu0 %v1103
  %v1256 = vpop.f32.mrf.mxu0
  %v1257 = vadd.f32 %v1244, %v1256
  %v1258 = vpop.f32.mrf.mxu0
  %1259 = vdwg.mxu0
  %1260 = vmatpush.bf16.msra.mxu0 %v596
  %1261 = vmatpush.bf16.msra.mxu0 %v588
  %1262 = vmatpush.bf16.msra.mxu0 %v580
  %1263 = vmatpush.bf16.msra.mxu0 %v572
  %1264 = vmatpush.bf16.msra.mxu0 %v564
  %1265 = vmatpush.bf16.msra.mxu0 %v556
  %1266 = vmatpush.bf16.msra.mxu0 %v548
  %1267 = vmatpush.bf16.msra.mxu0 %v540
  %1268 = vmatmul.bf16.gmra.mxu0 %v1102
  %v1269 = vpop.f32.mrf.mxu0
  %v1270 = vadd.f32 0.0, %v1269
  %v1271 = vpop.f32.mrf.mxu0
  %1272 = vdwg.mxu0
  %1273 = vmatpush.bf16.msra.mxu0 %v660
  %1274 = vmatpush.bf16.msra.mxu0 %v652
  %1275 = vmatpush.bf16.msra.mxu0 %v644
  %1276 = vmatpush.bf16.msra.mxu0 %v636
  %1277 = vmatpush.bf16.msra.mxu0 %v628
  %1278 = vmatpush.bf16.msra.mxu0 %v620
  %1279 = vmatpush.bf16.msra.mxu0 %v612
  %1280 = vmatpush.bf16.msra.mxu0 %v604
  %1281 = vmatmul.bf16.gmra.mxu0 %v1103
  %v1282 = vpop.f32.mrf.mxu0
  %v1283 = vadd.f32 %v1270, %v1282
  %v1284 = vpop.f32.mrf.mxu0
  %1285 = vdwg.mxu0
  %1286 = vmatpush.bf16.msra.mxu0 %v597
  %1287 = vmatpush.bf16.msra.mxu0 %v589
  %1288 = vmatpush.bf16.msra.mxu0 %v581
  %1289 = vmatpush.bf16.msra.mxu0 %v573
  %1290 = vmatpush.bf16.msra.mxu0 %v565
  %1291 = vmatpush.bf16.msra.mxu0 %v557
  %1292 = vmatpush.bf16.msra.mxu0 %v549
  %1293 = vmatpush.bf16.msra.mxu0 %v541
  %1294 = vmatmul.bf16.gmra.mxu0 %v1102
  %v1295 = vpop.f32.mrf.mxu0
  %v1296 = vadd.f32 0.0, %v1295
  %v1297 = vpop.f32.mrf.mxu0
  %1298 = vdwg.mxu0
  %1299 = vmatpush.bf16.msra.mxu0 %v661
  %1300 = vmatpush.bf16.msra.mxu0 %v653
  %1301 = vmatpush.bf16.msra.mxu0 %v645
  %1302 = vmatpush.bf16.msra.mxu0 %v637
  %1303 = vmatpush.bf16.msra.mxu0 %v629
  %1304 = vmatpush.bf16.msra.mxu0 %v621
  %1305 = vmatpush.bf16.msra.mxu0 %v613
  %1306 = vmatpush.bf16.msra.mxu0 %v605
  %1307 = vmatmul.bf16.gmra.mxu0 %v1103
  %v1308 = vpop.f32.mrf.mxu0
  %v1309 = vadd.f32 %v1296, %v1308
  %v1310 = vpop.f32.mrf.mxu0
  %1311 = vdwg.mxu0
  %v1320 = vrot.slane %v1153, 4
  %v1321 = vrot.slane %v1205, 4
  %v1322 = vrot.slane %v1257, 4
  %v1323 = vrot.slane %v1309, 4
  %v1324 = vsel %vm1010, %v1127, %v1320
  %v1325 = vsel %vm1010, %v1179, %v1321
  %v1326 = vsel %vm1010, %v1231, %v1322
  %v1327 = vsel %vm1010, %v1283, %v1323
  %v1332 = vadd.f32 %v1092, %v1324
  %v1333 = vadd.f32 %v1093, %v1325
  %v1334 = vadd.f32 %v1094, %v1326
  %v1335 = vadd.f32 %v1095, %v1327
  %v1336 = vxor.u32 %v1332, 2147483648
  %v1337 = vmul.f32 %v1336, 1.442695
  %v1338 = vpow.pop %v1337
  %v1339 = vadd.f32 %v1338, 1.0
  %v1340 = vrcp.pop %v1339
  %v1341 = vmul.f32 %v1339, %v1340
  %v1342 = vsub.f32 1.0, %v1341
  %v1343 = vmul.f32 %v1340, %v1342
  %v1344 = vadd.f32 %v1340, %v1343
  %vm1345 = vweird.f32 %v1339
  %vm1346 = vweird.f32 %v1340
  %vm1347 = vmor %vm1345, %vm1346
  %v1348 = vsel %vm1347, %v1340, %v1344
  %v1349 = vand.u32 2147483647, %v1339
  %vm1350 = vcmp.eq.f32.partialorder %v1349, 8.507059e+37
  %v1351 = vand.u32 %v1339, 2147483648
  %v1352 = vor.u32 1.1754944e-38, %v1351
  %v1353 = vsel %vm1350, %v1352, %v1348
  %v1354 = vmul.f32 1.0, %v1353
  %v1355 = vxor.u32 %v1333, 2147483648
  %v1356 = vmul.f32 %v1355, 1.442695
  %v1357 = vpow.pop %v1356
  %v1358 = vadd.f32 %v1357, 1.0
  %v1359 = vrcp.pop %v1358
  %v1360 = vmul.f32 %v1358, %v1359
  %v1361 = vsub.f32 1.0, %v1360
  %v1362 = vmul.f32 %v1359, %v1361
  %v1363 = vadd.f32 %v1359, %v1362
  %vm1364 = vweird.f32 %v1358
  %vm1365 = vweird.f32 %v1359
  %vm1366 = vmor %vm1364, %vm1365
  %v1367 = vsel %vm1366, %v1359, %v1363
  %v1368 = vand.u32 2147483647, %v1358
  %vm1369 = vcmp.eq.f32.partialorder %v1368, 8.507059e+37
  %v1370 = vand.u32 %v1358, 2147483648
  %v1371 = vor.u32 1.1754944e-38, %v1370
  %v1372 = vsel %vm1369, %v1371, %v1367
  %v1373 = vmul.f32 1.0, %v1372
  %v1374 = vtanh.pop %v1334
  %v1375 = vxor.u32 %v1335, 2147483648
  %v1376 = vmul.f32 %v1375, 1.442695
  %v1377 = vpow.pop %v1376
  %v1378 = vadd.f32 %v1377, 1.0
  %v1379 = vrcp.pop %v1378
  %v1380 = vmul.f32 %v1378, %v1379
  %v1381 = vsub.f32 1.0, %v1380
  %v1382 = vmul.f32 %v1379, %v1381
  %v1383 = vadd.f32 %v1379, %v1382
  %vm1384 = vweird.f32 %v1378
  %vm1385 = vweird.f32 %v1379
  %vm1386 = vmor %vm1384, %vm1385
  %v1387 = vsel %vm1386, %v1379, %v1383
  %v1388 = vand.u32 2147483647, %v1378
  %vm1389 = vcmp.eq.f32.partialorder %v1388, 8.507059e+37
  %v1390 = vand.u32 %v1378, 2147483648
  %v1391 = vor.u32 1.1754944e-38, %v1390
  %v1392 = vsel %vm1389, %v1391, %v1387
  %v1393 = vmul.f32 1.0, %v1392
  %v1394 = vmul.f32 %v1373, %v1088
  %v1395 = vmul.f32 %v1354, %v1374
  %v1396 = vadd.f32 %v1394, %v1395
  %v1397 = vtanh.pop %v1396
  %v1398 = vmul.f32 %v1393, %v1397
  %s1399 = scalar_lea.vmem %s2, 8
  %v1400 = vld [vmem:[%s1399] sm:$0xff]
  %vm1401 = vcmp.gt.f32.partialorder %v1400, 0.0
  %v1402 = vsel %vm1401, %v1396, %v1088
  %v1403 = vsel %vm1401, %v1398, %v1089
  %v1404 = vsel %vm1401, %v1398, 0.0
  %v1405 = vadd.f32 %v1090, %v1404
  %s1406 = scalar_lea.vmem %s0, 64
  %v1407 = vld [vmem:[%s1406] sm:$0xff]
  %v1408 = vld [vmem:[%s1406 + $0x8] sm:$0xff]
  %v1409 = vld [vmem:[%s1406 + $0x10] sm:$0xff]
  %v1410 = vld [vmem:[%s1406 + $0x18] sm:$0xff]
  %1412 = vst [vmem:[#allocation1] ss:$2 sm:$0xff] %v1403
  %v1413 = vld.sshfl [vmem:[#allocation1] sm:$0xff pattern:$0x75316420]
  %v1414 = vld.sshfl [vmem:[#allocation1 + $0x8] sm:$0xff pattern:$0x75316420]
  %v1417 = vpack.c.bf16 %v1413, %v1413
  %v1418 = vpack.c.bf16 %v1414, %v1414
  %1419 = vmatpush.bf16.msra.mxu0 %v590
  %1420 = vmatpush.bf16.msra.mxu0 %v582
  %1421 = vmatpush.bf16.msra.mxu0 %v574
  %1422 = vmatpush.bf16.msra.mxu0 %v566
  %1423 = vmatpush.bf16.msra.mxu0 %v558
  %1424 = vmatpush.bf16.msra.mxu0 %v550
  %1425 = vmatpush.bf16.msra.mxu0 %v542
  %1426 = vmatpush.bf16.msra.mxu0 %v534
  %1427 = vmatmul.bf16.gmra.mxu0 %v1417
  %v1428 = vpop.f32.mrf.mxu0
  %v1429 = vadd.f32 0.0, %v1428
  %v1430 = vpop.f32.mrf.mxu0
  %1431 = vdwg.mxu0
  %1432 = vmatpush.bf16.msra.mxu0 %v654
  %1433 = vmatpush.bf16.msra.mxu0 %v646
  %1434 = vmatpush.bf16.msra.mxu0 %v638
  %1435 = vmatpush.bf16.msra.mxu0 %v630
  %1436 = vmatpush.bf16.msra.mxu0 %v622
  %1437 = vmatpush.bf16.msra.mxu0 %v614
  %1438 = vmatpush.bf16.msra.mxu0 %v606
  %1439 = vmatpush.bf16.msra.mxu0 %v598
  %1440 = vmatmul.bf16.gmra.mxu0 %v1418
  %v1441 = vpop.f32.mrf.mxu0
  %v1442 = vadd.f32 %v1429, %v1441
  %v1443 = vpop.f32.mrf.mxu0
  %1444 = vdwg.mxu0
  %1445 = vmatpush.bf16.msra.mxu0 %v591
  %1446 = vmatpush.bf16.msra.mxu0 %v583
  %1447 = vmatpush.bf16.msra.mxu0 %v575
  %1448 = vmatpush.bf16.msra.mxu0 %v567
  %1449 = vmatpush.bf16.msra.mxu0 %v559
  %1450 = vmatpush.bf16.msra.mxu0 %v551
  %1451 = vmatpush.bf16.msra.mxu0 %v543
  %1452 = vmatpush.bf16.msra.mxu0 %v535
  %1453 = vmatmul.bf16.gmra.mxu0 %v1417
  %v1454 = vpop.f32.mrf.mxu0
  %v1455 = vadd.f32 0.0, %v1454
  %v1456 = vpop.f32.mrf.mxu0
  %1457 = vdwg.mxu0
  %1458 = vmatpush.bf16.msra.mxu0 %v655
  %1459 = vmatpush.bf16.msra.mxu0 %v647
  %1460 = vmatpush.bf16.msra.mxu0 %v639
  %1461 = vmatpush.bf16.msra.mxu0 %v631
  %1462 = vmatpush.bf16.msra.mxu0 %v623
  %1463 = vmatpush.bf16.msra.mxu0 %v615
  %1464 = vmatpush.bf16.msra.mxu0 %v607
  %1465 = vmatpush.bf16.msra.mxu0 %v599
  %1466 = vmatmul.bf16.gmra.mxu0 %v1418
  %v1467 = vpop.f32.mrf.mxu0
  %v1468 = vadd.f32 %v1455, %v1467
  %v1469 = vpop.f32.mrf.mxu0
  %1470 = vdwg.mxu0
  %1471 = vmatpush.bf16.msra.mxu0 %v592
  %1472 = vmatpush.bf16.msra.mxu0 %v584
  %1473 = vmatpush.bf16.msra.mxu0 %v576
  %1474 = vmatpush.bf16.msra.mxu0 %v568
  %1475 = vmatpush.bf16.msra.mxu0 %v560
  %1476 = vmatpush.bf16.msra.mxu0 %v552
  %1477 = vmatpush.bf16.msra.mxu0 %v544
  %1478 = vmatpush.bf16.msra.mxu0 %v536
  %1479 = vmatmul.bf16.gmra.mxu0 %v1417
  %v1480 = vpop.f32.mrf.mxu0
  %v1481 = vadd.f32 0.0, %v1480
  %v1482 = vpop.f32.mrf.mxu0
  %1483 = vdwg.mxu0
  %1484 = vmatpush.bf16.msra.mxu0 %v656
  %1485 = vmatpush.bf16.msra.mxu0 %v648
  %1486 = vmatpush.bf16.msra.mxu0 %v640
  %1487 = vmatpush.bf16.msra.mxu0 %v632
  %1488 = vmatpush.bf16.msra.mxu0 %v624
  %1489 = vmatpush.bf16.msra.mxu0 %v616
  %1490 = vmatpush.bf16.msra.mxu0 %v608
  %1491 = vmatpush.bf16.msra.mxu0 %v600
  %1492 = vmatmul.bf16.gmra.mxu0 %v1418
  %v1493 = vpop.f32.mrf.mxu0
  %v1494 = vadd.f32 %v1481, %v1493
  %v1495 = vpop.f32.mrf.mxu0
  %1496 = vdwg.mxu0
  %1497 = vmatpush.bf16.msra.mxu0 %v593
  %1498 = vmatpush.bf16.msra.mxu0 %v585
  %1499 = vmatpush.bf16.msra.mxu0 %v577
  %1500 = vmatpush.bf16.msra.mxu0 %v569
  %1501 = vmatpush.bf16.msra.mxu0 %v561
  %1502 = vmatpush.bf16.msra.mxu0 %v553
  %1503 = vmatpush.bf16.msra.mxu0 %v545
  %1504 = vmatpush.bf16.msra.mxu0 %v537
  %1505 = vmatmul.bf16.gmra.mxu0 %v1417
  %v1506 = vpop.f32.mrf.mxu0
  %v1507 = vadd.f32 0.0, %v1506
  %v1508 = vpop.f32.mrf.mxu0
  %1509 = vdwg.mxu0
  %1510 = vmatpush.bf16.msra.mxu0 %v657
  %1511 = vmatpush.bf16.msra.mxu0 %v649
  %1512 = vmatpush.bf16.msra.mxu0 %v641
  %1513 = vmatpush.bf16.msra.mxu0 %v633
  %1514 = vmatpush.bf16.msra.mxu0 %v625
  %1515 = vmatpush.bf16.msra.mxu0 %v617
  %1516 = vmatpush.bf16.msra.mxu0 %v609
  %1517 = vmatpush.bf16.msra.mxu0 %v601
  %1518 = vmatmul.bf16.gmra.mxu0 %v1418
  %v1519 = vpop.f32.mrf.mxu0
  %v1520 = vadd.f32 %v1507, %v1519
  %v1521 = vpop.f32.mrf.mxu0
  %1522 = vdwg.mxu0
  %1523 = vmatpush.bf16.msra.mxu0 %v594
  %1524 = vmatpush.bf16.msra.mxu0 %v586
  %1525 = vmatpush.bf16.msra.mxu0 %v578
  %1526 = vmatpush.bf16.msra.mxu0 %v570
  %1527 = vmatpush.bf16.msra.mxu0 %v562
  %1528 = vmatpush.bf16.msra.mxu0 %v554
  %1529 = vmatpush.bf16.msra.mxu0 %v546
  %1530 = vmatpush.bf16.msra.mxu0 %v538
  %1531 = vmatmul.bf16.gmra.mxu0 %v1417
  %v1532 = vpop.f32.mrf.mxu0
  %v1533 = vadd.f32 0.0, %v1532
  %v1534 = vpop.f32.mrf.mxu0
  %1535 = vdwg.mxu0
  %1536 = vmatpush.bf16.msra.mxu0 %v658
  %1537 = vmatpush.bf16.msra.mxu0 %v650
  %1538 = vmatpush.bf16.msra.mxu0 %v642
  %1539 = vmatpush.bf16.msra.mxu0 %v634
  %1540 = vmatpush.bf16.msra.mxu0 %v626
  %1541 = vmatpush.bf16.msra.mxu0 %v618
  %1542 = vmatpush.bf16.msra.mxu0 %v610
  %1543 = vmatpush.bf16.msra.mxu0 %v602
  %1544 = vmatmul.bf16.gmra.mxu0 %v1418
  %v1545 = vpop.f32.mrf.mxu0
  %v1546 = vadd.f32 %v1533, %v1545
  %v1547 = vpop.f32.mrf.mxu0
  %1548 = vdwg.mxu0
  %1549 = vmatpush.bf16.msra.mxu0 %v595
  %1550 = vmatpush.bf16.msra.mxu0 %v587
  %1551 = vmatpush.bf16.msra.mxu0 %v579
  %1552 = vmatpush.bf16.msra.mxu0 %v571
  %1553 = vmatpush.bf16.msra.mxu0 %v563
  %1554 = vmatpush.bf16.msra.mxu0 %v555
  %1555 = vmatpush.bf16.msra.mxu0 %v547
  %1556 = vmatpush.bf16.msra.mxu0 %v539
  %1557 = vmatmul.bf16.gmra.mxu0 %v1417
  %v1558 = vpop.f32.mrf.mxu0
  %v1559 = vadd.f32 0.0, %v1558
  %v1560 = vpop.f32.mrf.mxu0
  %1561 = vdwg.mxu0
  %1562 = vmatpush.bf16.msra.mxu0 %v659
  %1563 = vmatpush.bf16.msra.mxu0 %v651
  %1564 = vmatpush.bf16.msra.mxu0 %v643
  %1565 = vmatpush.bf16.msra.mxu0 %v635
  %1566 = vmatpush.bf16.msra.mxu0 %v627
  %1567 = vmatpush.bf16.msra.mxu0 %v619
  %1568 = vmatpush.bf16.msra.mxu0 %v611
  %1569 = vmatpush.bf16.msra.mxu0 %v603
  %1570 = vmatmul.bf16.gmra.mxu0 %v1418
  %v1571 = vpop.f32.mrf.mxu0
  %v1572 = vadd.f32 %v1559, %v1571
  %v1573 = vpop.f32.mrf.mxu0
  %1574 = vdwg.mxu0
  %1575 = vmatpush.bf16.msra.mxu0 %v596
  %1576 = vmatpush.bf16.msra.mxu0 %v588
  %1577 = vmatpush.bf16.msra.mxu0 %v580
  %1578 = vmatpush.bf16.msra.mxu0 %v572
  %1579 = vmatpush.bf16.msra.mxu0 %v564
  %1580 = vmatpush.bf16.msra.mxu0 %v556
  %1581 = vmatpush.bf16.msra.mxu0 %v548
  %1582 = vmatpush.bf16.msra.mxu0 %v540
  %1583 = vmatmul.bf16.gmra.mxu0 %v1417
  %v1584 = vpop.f32.mrf.mxu0
  %v1585 = vadd.f32 0.0, %v1584
  %v1586 = vpop.f32.mrf.mxu0
  %1587 = vdwg.mxu0
  %1588 = vmatpush.bf16.msra.mxu0 %v660
  %1589 = vmatpush.bf16.msra.mxu0 %v652
  %1590 = vmatpush.bf16.msra.mxu0 %v644
  %1591 = vmatpush.bf16.msra.mxu0 %v636
  %1592 = vmatpush.bf16.msra.mxu0 %v628
  %1593 = vmatpush.bf16.msra.mxu0 %v620
  %1594 = vmatpush.bf16.msra.mxu0 %v612
  %1595 = vmatpush.bf16.msra.mxu0 %v604
  %1596 = vmatmul.bf16.gmra.mxu0 %v1418
  %v1597 = vpop.f32.mrf.mxu0
  %v1598 = vadd.f32 %v1585, %v1597
  %v1599 = vpop.f32.mrf.mxu0
  %1600 = vdwg.mxu0
  %1601 = vmatpush.bf16.msra.mxu0 %v597
  %1602 = vmatpush.bf16.msra.mxu0 %v589
  %1603 = vmatpush.bf16.msra.mxu0 %v581
  %1604 = vmatpush.bf16.msra.mxu0 %v573
  %1605 = vmatpush.bf16.msra.mxu0 %v565
  %1606 = vmatpush.bf16.msra.mxu0 %v557
  %1607 = vmatpush.bf16.msra.mxu0 %v549
  %1608 = vmatpush.bf16.msra.mxu0 %v541
  %1609 = vmatmul.bf16.gmra.mxu0 %v1417
  %v1610 = vpop.f32.mrf.mxu0
  %v1611 = vadd.f32 0.0, %v1610
  %v1612 = vpop.f32.mrf.mxu0
  %1613 = vdwg.mxu0
  %1614 = vmatpush.bf16.msra.mxu0 %v661
  %1615 = vmatpush.bf16.msra.mxu0 %v653
  %1616 = vmatpush.bf16.msra.mxu0 %v645
  %1617 = vmatpush.bf16.msra.mxu0 %v637
  %1618 = vmatpush.bf16.msra.mxu0 %v629
  %1619 = vmatpush.bf16.msra.mxu0 %v621
  %1620 = vmatpush.bf16.msra.mxu0 %v613
  %1621 = vmatpush.bf16.msra.mxu0 %v605
  %1622 = vmatmul.bf16.gmra.mxu0 %v1418
  %v1623 = vpop.f32.mrf.mxu0
  %v1624 = vadd.f32 %v1611, %v1623
  %v1625 = vpop.f32.mrf.mxu0
  %1626 = vdwg.mxu0
  %v1635 = vrot.slane %v1468, 4
  %v1636 = vrot.slane %v1520, 4
  %v1637 = vrot.slane %v1572, 4
  %v1638 = vrot.slane %v1624, 4
  %v1639 = vsel %vm1010, %v1442, %v1635
  %v1640 = vsel %vm1010, %v1494, %v1636
  %v1641 = vsel %vm1010, %v1546, %v1637
  %v1642 = vsel %vm1010, %v1598, %v1638
  %v1647 = vadd.f32 %v1407, %v1639
  %v1648 = vadd.f32 %v1408, %v1640
  %v1649 = vadd.f32 %v1409, %v1641
  %v1650 = vadd.f32 %v1410, %v1642
  %v1651 = vxor.u32 %v1647, 2147483648
  %v1652 = vmul.f32 %v1651, 1.442695
  %v1653 = vpow.pop %v1652
  %v1654 = vadd.f32 %v1653, 1.0
  %v1655 = vrcp.pop %v1654
  %v1656 = vmul.f32 %v1654, %v1655
  %v1657 = vsub.f32 1.0, %v1656
  %v1658 = vmul.f32 %v1655, %v1657
  %v1659 = vadd.f32 %v1655, %v1658
  %vm1660 = vweird.f32 %v1654
  %vm1661 = vweird.f32 %v1655
  %vm1662 = vmor %vm1660, %vm1661
  %v1663 = vsel %vm1662, %v1655, %v1659
  %v1664 = vand.u32 2147483647, %v1654
  %vm1665 = vcmp.eq.f32.partialorder %v1664, 8.507059e+37
  %v1666 = vand.u32 %v1654, 2147483648
  %v1667 = vor.u32 1.1754944e-38, %v1666
  %v1668 = vsel %vm1665, %v1667, %v1663
  %v1669 = vmul.f32 1.0, %v1668
  %v1670 = vxor.u32 %v1648, 2147483648
  %v1671 = vmul.f32 %v1670, 1.442695
  %v1672 = vpow.pop %v1671
  %v1673 = vadd.f32 %v1672, 1.0
  %v1674 = vrcp.pop %v1673
  %v1675 = vmul.f32 %v1673, %v1674
  %v1676 = vsub.f32 1.0, %v1675
  %v1677 = vmul.f32 %v1674, %v1676
  %v1678 = vadd.f32 %v1674, %v1677
  %vm1679 = vweird.f32 %v1673
  %vm1680 = vweird.f32 %v1674
  %vm1681 = vmor %vm1679, %vm1680
  %v1682 = vsel %vm1681, %v1674, %v1678
  %v1683 = vand.u32 2147483647, %v1673
  %vm1684 = vcmp.eq.f32.partialorder %v1683, 8.507059e+37
  %v1685 = vand.u32 %v1673, 2147483648
  %v1686 = vor.u32 1.1754944e-38, %v1685
  %v1687 = vsel %vm1684, %v1686, %v1682
  %v1688 = vmul.f32 1.0, %v1687
  %v1689 = vtanh.pop %v1649
  %v1690 = vxor.u32 %v1650, 2147483648
  %v1691 = vmul.f32 %v1690, 1.442695
  %v1692 = vpow.pop %v1691
  %v1693 = vadd.f32 %v1692, 1.0
  %v1694 = vrcp.pop %v1693
  %v1695 = vmul.f32 %v1693, %v1694
  %v1696 = vsub.f32 1.0, %v1695
  %v1697 = vmul.f32 %v1694, %v1696
  %v1698 = vadd.f32 %v1694, %v1697
  %vm1699 = vweird.f32 %v1693
  %vm1700 = vweird.f32 %v1694
  %vm1701 = vmor %vm1699, %vm1700
  %v1702 = vsel %vm1701, %v1694, %v1698
  %v1703 = vand.u32 2147483647, %v1693
  %vm1704 = vcmp.eq.f32.partialorder %v1703, 8.507059e+37
  %v1705 = vand.u32 %v1693, 2147483648
  %v1706 = vor.u32 1.1754944e-38, %v1705
  %v1707 = vsel %vm1704, %v1706, %v1702
  %v1708 = vmul.f32 1.0, %v1707
  %v1709 = vmul.f32 %v1688, %v1402
  %v1710 = vmul.f32 %v1669, %v1689
  %v1711 = vadd.f32 %v1709, %v1710
  %v1712 = vtanh.pop %v1711
  %v1713 = vmul.f32 %v1708, %v1712
  %s1714 = scalar_lea.vmem %s2, 16
  %v1715 = vld [vmem:[%s1714] sm:$0xff]
  %vm1716 = vcmp.gt.f32.partialorder %v1715, 0.0
  %v1717 = vsel %vm1716, %v1711, %v1402
  %v1718 = vsel %vm1716, %v1713, %v1403
  %v1719 = vsel %vm1716, %v1713, 0.0
  %v1720 = vadd.f32 %v1405, %v1719
  %s1721 = scalar_lea.vmem %s0, 96
  %v1722 = vld [vmem:[%s1721] sm:$0xff]
  %v1723 = vld [vmem:[%s1721 + $0x8] sm:$0xff]
  %v1724 = vld [vmem:[%s1721 + $0x10] sm:$0xff]
  %v1725 = vld [vmem:[%s1721 + $0x18] sm:$0xff]
  %1727 = vst [vmem:[#allocation1] ss:$2 sm:$0xff] %v1718
  %v1728 = vld.sshfl [vmem:[#allocation1] sm:$0xff pattern:$0x75316420]
  %v1729 = vld.sshfl [vmem:[#allocation1 + $0x8] sm:$0xff pattern:$0x75316420]
  %v1732 = vpack.c.bf16 %v1728, %v1728
  %v1733 = vpack.c.bf16 %v1729, %v1729
  %1734 = vmatpush.bf16.msra.mxu0 %v590
  %1735 = vmatpush.bf16.msra.mxu0 %v582
  %1736 = vmatpush.bf16.msra.mxu0 %v574
  %1737 = vmatpush.bf16.msra.mxu0 %v566
  %1738 = vmatpush.bf16.msra.mxu0 %v558
  %1739 = vmatpush.bf16.msra.mxu0 %v550
  %1740 = vmatpush.bf16.msra.mxu0 %v542
  %1741 = vmatpush.bf16.msra.mxu0 %v534
  %1742 = vmatmul.bf16.gmra.mxu0 %v1732
  %v1743 = vpop.f32.mrf.mxu0
  %v1744 = vadd.f32 0.0, %v1743
  %v1745 = vpop.f32.mrf.mxu0
  %1746 = vdwg.mxu0
  %1747 = vmatpush.bf16.msra.mxu0 %v654
  %1748 = vmatpush.bf16.msra.mxu0 %v646
  %1749 = vmatpush.bf16.msra.mxu0 %v638
  %1750 = vmatpush.bf16.msra.mxu0 %v630
  %1751 = vmatpush.bf16.msra.mxu0 %v622
  %1752 = vmatpush.bf16.msra.mxu0 %v614
  %1753 = vmatpush.bf16.msra.mxu0 %v606
  %1754 = vmatpush.bf16.msra.mxu0 %v598
  %1755 = vmatmul.bf16.gmra.mxu0 %v1733
  %v1756 = vpop.f32.mrf.mxu0
  %v1757 = vadd.f32 %v1744, %v1756
  %v1758 = vpop.f32.mrf.mxu0
  %1759 = vdwg.mxu0
  %1760 = vmatpush.bf16.msra.mxu0 %v591
  %1761 = vmatpush.bf16.msra.mxu0 %v583
  %1762 = vmatpush.bf16.msra.mxu0 %v575
  %1763 = vmatpush.bf16.msra.mxu0 %v567
  %1764 = vmatpush.bf16.msra.mxu0 %v559
  %1765 = vmatpush.bf16.msra.mxu0 %v551
  %1766 = vmatpush.bf16.msra.mxu0 %v543
  %1767 = vmatpush.bf16.msra.mxu0 %v535
  %1768 = vmatmul.bf16.gmra.mxu0 %v1732
  %v1769 = vpop.f32.mrf.mxu0
  %v1770 = vadd.f32 0.0, %v1769
  %v1771 = vpop.f32.mrf.mxu0
  %1772 = vdwg.mxu0
  %1773 = vmatpush.bf16.msra.mxu0 %v655
  %1774 = vmatpush.bf16.msra.mxu0 %v647
  %1775 = vmatpush.bf16.msra.mxu0 %v639
  %1776 = vmatpush.bf16.msra.mxu0 %v631
  %1777 = vmatpush.bf16.msra.mxu0 %v623
  %1778 = vmatpush.bf16.msra.mxu0 %v615
  %1779 = vmatpush.bf16.msra.mxu0 %v607
  %1780 = vmatpush.bf16.msra.mxu0 %v599
  %1781 = vmatmul.bf16.gmra.mxu0 %v1733
  %v1782 = vpop.f32.mrf.mxu0
  %v1783 = vadd.f32 %v1770, %v1782
  %v1784 = vpop.f32.mrf.mxu0
  %1785 = vdwg.mxu0
  %1786 = vmatpush.bf16.msra.mxu0 %v592
  %1787 = vmatpush.bf16.msra.mxu0 %v584
  %1788 = vmatpush.bf16.msra.mxu0 %v576
  %1789 = vmatpush.bf16.msra.mxu0 %v568
  %1790 = vmatpush.bf16.msra.mxu0 %v560
  %1791 = vmatpush.bf16.msra.mxu0 %v552
  %1792 = vmatpush.bf16.msra.mxu0 %v544
  %1793 = vmatpush.bf16.msra.mxu0 %v536
  %1794 = vmatmul.bf16.gmra.mxu0 %v1732
  %v1795 = vpop.f32.mrf.mxu0
  %v1796 = vadd.f32 0.0, %v1795
  %v1797 = vpop.f32.mrf.mxu0
  %1798 = vdwg.mxu0
  %1799 = vmatpush.bf16.msra.mxu0 %v656
  %1800 = vmatpush.bf16.msra.mxu0 %v648
  %1801 = vmatpush.bf16.msra.mxu0 %v640
  %1802 = vmatpush.bf16.msra.mxu0 %v632
  %1803 = vmatpush.bf16.msra.mxu0 %v624
  %1804 = vmatpush.bf16.msra.mxu0 %v616
  %1805 = vmatpush.bf16.msra.mxu0 %v608
  %1806 = vmatpush.bf16.msra.mxu0 %v600
  %1807 = vmatmul.bf16.gmra.mxu0 %v1733
  %v1808 = vpop.f32.mrf.mxu0
  %v1809 = vadd.f32 %v1796, %v1808
  %v1810 = vpop.f32.mrf.mxu0
  %1811 = vdwg.mxu0
  %1812 = vmatpush.bf16.msra.mxu0 %v593
  %1813 = vmatpush.bf16.msra.mxu0 %v585
  %1814 = vmatpush.bf16.msra.mxu0 %v577
  %1815 = vmatpush.bf16.msra.mxu0 %v569
  %1816 = vmatpush.bf16.msra.mxu0 %v561
  %1817 = vmatpush.bf16.msra.mxu0 %v553
  %1818 = vmatpush.bf16.msra.mxu0 %v545
  %1819 = vmatpush.bf16.msra.mxu0 %v537
  %1820 = vmatmul.bf16.gmra.mxu0 %v1732
  %v1821 = vpop.f32.mrf.mxu0
  %v1822 = vadd.f32 0.0, %v1821
  %v1823 = vpop.f32.mrf.mxu0
  %1824 = vdwg.mxu0
  %1825 = vmatpush.bf16.msra.mxu0 %v657
  %1826 = vmatpush.bf16.msra.mxu0 %v649
  %1827 = vmatpush.bf16.msra.mxu0 %v641
  %1828 = vmatpush.bf16.msra.mxu0 %v633
  %1829 = vmatpush.bf16.msra.mxu0 %v625
  %1830 = vmatpush.bf16.msra.mxu0 %v617
  %1831 = vmatpush.bf16.msra.mxu0 %v609
  %1832 = vmatpush.bf16.msra.mxu0 %v601
  %1833 = vmatmul.bf16.gmra.mxu0 %v1733
  %v1834 = vpop.f32.mrf.mxu0
  %v1835 = vadd.f32 %v1822, %v1834
  %v1836 = vpop.f32.mrf.mxu0
  %1837 = vdwg.mxu0
  %1838 = vmatpush.bf16.msra.mxu0 %v594
  %1839 = vmatpush.bf16.msra.mxu0 %v586
  %1840 = vmatpush.bf16.msra.mxu0 %v578
  %1841 = vmatpush.bf16.msra.mxu0 %v570
  %1842 = vmatpush.bf16.msra.mxu0 %v562
  %1843 = vmatpush.bf16.msra.mxu0 %v554
  %1844 = vmatpush.bf16.msra.mxu0 %v546
  %1845 = vmatpush.bf16.msra.mxu0 %v538
  %1846 = vmatmul.bf16.gmra.mxu0 %v1732
  %v1847 = vpop.f32.mrf.mxu0
  %v1848 = vadd.f32 0.0, %v1847
  %v1849 = vpop.f32.mrf.mxu0
  %1850 = vdwg.mxu0
  %1851 = vmatpush.bf16.msra.mxu0 %v658
  %1852 = vmatpush.bf16.msra.mxu0 %v650
  %1853 = vmatpush.bf16.msra.mxu0 %v642
  %1854 = vmatpush.bf16.msra.mxu0 %v634
  %1855 = vmatpush.bf16.msra.mxu0 %v626
  %1856 = vmatpush.bf16.msra.mxu0 %v618
  %1857 = vmatpush.bf16.msra.mxu0 %v610
  %1858 = vmatpush.bf16.msra.mxu0 %v602
  %1859 = vmatmul.bf16.gmra.mxu0 %v1733
  %v1860 = vpop.f32.mrf.mxu0
  %v1861 = vadd.f32 %v1848, %v1860
  %v1862 = vpop.f32.mrf.mxu0
  %1863 = vdwg.mxu0
  %1864 = vmatpush.bf16.msra.mxu0 %v595
  %1865 = vmatpush.bf16.msra.mxu0 %v587
  %1866 = vmatpush.bf16.msra.mxu0 %v579
  %1867 = vmatpush.bf16.msra.mxu0 %v571
  %1868 = vmatpush.bf16.msra.mxu0 %v563
  %1869 = vmatpush.bf16.msra.mxu0 %v555
  %1870 = vmatpush.bf16.msra.mxu0 %v547
  %1871 = vmatpush.bf16.msra.mxu0 %v539
  %1872 = vmatmul.bf16.gmra.mxu0 %v1732
  %v1873 = vpop.f32.mrf.mxu0
  %v1874 = vadd.f32 0.0, %v1873
  %v1875 = vpop.f32.mrf.mxu0
  %1876 = vdwg.mxu0
  %1877 = vmatpush.bf16.msra.mxu0 %v659
  %1878 = vmatpush.bf16.msra.mxu0 %v651
  %1879 = vmatpush.bf16.msra.mxu0 %v643
  %1880 = vmatpush.bf16.msra.mxu0 %v635
  %1881 = vmatpush.bf16.msra.mxu0 %v627
  %1882 = vmatpush.bf16.msra.mxu0 %v619
  %1883 = vmatpush.bf16.msra.mxu0 %v611
  %1884 = vmatpush.bf16.msra.mxu0 %v603
  %1885 = vmatmul.bf16.gmra.mxu0 %v1733
  %v1886 = vpop.f32.mrf.mxu0
  %v1887 = vadd.f32 %v1874, %v1886
  %v1888 = vpop.f32.mrf.mxu0
  %1889 = vdwg.mxu0
  %1890 = vmatpush.bf16.msra.mxu0 %v596
  %1891 = vmatpush.bf16.msra.mxu0 %v588
  %1892 = vmatpush.bf16.msra.mxu0 %v580
  %1893 = vmatpush.bf16.msra.mxu0 %v572
  %1894 = vmatpush.bf16.msra.mxu0 %v564
  %1895 = vmatpush.bf16.msra.mxu0 %v556
  %1896 = vmatpush.bf16.msra.mxu0 %v548
  %1897 = vmatpush.bf16.msra.mxu0 %v540
  %1898 = vmatmul.bf16.gmra.mxu0 %v1732
  %v1899 = vpop.f32.mrf.mxu0
  %v1900 = vadd.f32 0.0, %v1899
  %v1901 = vpop.f32.mrf.mxu0
  %1902 = vdwg.mxu0
  %1903 = vmatpush.bf16.msra.mxu0 %v660
  %1904 = vmatpush.bf16.msra.mxu0 %v652
  %1905 = vmatpush.bf16.msra.mxu0 %v644
  %1906 = vmatpush.bf16.msra.mxu0 %v636
  %1907 = vmatpush.bf16.msra.mxu0 %v628
  %1908 = vmatpush.bf16.msra.mxu0 %v620
  %1909 = vmatpush.bf16.msra.mxu0 %v612
  %1910 = vmatpush.bf16.msra.mxu0 %v604
  %1911 = vmatmul.bf16.gmra.mxu0 %v1733
  %v1912 = vpop.f32.mrf.mxu0
  %v1913 = vadd.f32 %v1900, %v1912
  %v1914 = vpop.f32.mrf.mxu0
  %1915 = vdwg.mxu0
  %1916 = vmatpush.bf16.msra.mxu0 %v597
  %1917 = vmatpush.bf16.msra.mxu0 %v589
  %1918 = vmatpush.bf16.msra.mxu0 %v581
  %1919 = vmatpush.bf16.msra.mxu0 %v573
  %1920 = vmatpush.bf16.msra.mxu0 %v565
  %1921 = vmatpush.bf16.msra.mxu0 %v557
  %1922 = vmatpush.bf16.msra.mxu0 %v549
  %1923 = vmatpush.bf16.msra.mxu0 %v541
  %1924 = vmatmul.bf16.gmra.mxu0 %v1732
  %v1925 = vpop.f32.mrf.mxu0
  %v1926 = vadd.f32 0.0, %v1925
  %v1927 = vpop.f32.mrf.mxu0
  %1928 = vdwg.mxu0
  %1929 = vmatpush.bf16.msra.mxu0 %v661
  %1930 = vmatpush.bf16.msra.mxu0 %v653
  %1931 = vmatpush.bf16.msra.mxu0 %v645
  %1932 = vmatpush.bf16.msra.mxu0 %v637
  %1933 = vmatpush.bf16.msra.mxu0 %v629
  %1934 = vmatpush.bf16.msra.mxu0 %v621
  %1935 = vmatpush.bf16.msra.mxu0 %v613
  %1936 = vmatpush.bf16.msra.mxu0 %v605
  %1937 = vmatmul.bf16.gmra.mxu0 %v1733
  %v1938 = vpop.f32.mrf.mxu0
  %v1939 = vadd.f32 %v1926, %v1938
  %v1940 = vpop.f32.mrf.mxu0
  %1941 = vdwg.mxu0
  %v1950 = vrot.slane %v1783, 4
  %v1951 = vrot.slane %v1835, 4
  %v1952 = vrot.slane %v1887, 4
  %v1953 = vrot.slane %v1939, 4
  %v1954 = vsel %vm1010, %v1757, %v1950
  %v1955 = vsel %vm1010, %v1809, %v1951
  %v1956 = vsel %vm1010, %v1861, %v1952
  %v1957 = vsel %vm1010, %v1913, %v1953
  %v1962 = vadd.f32 %v1722, %v1954
  %v1963 = vadd.f32 %v1723, %v1955
  %v1964 = vadd.f32 %v1724, %v1956
  %v1965 = vadd.f32 %v1725, %v1957
  %v1966 = vxor.u32 %v1962, 2147483648
  %v1967 = vmul.f32 %v1966, 1.442695
  %v1968 = vpow.pop %v1967
  %v1969 = vadd.f32 %v1968, 1.0
  %v1970 = vrcp.pop %v1969
  %v1971 = vmul.f32 %v1969, %v1970
  %v1972 = vsub.f32 1.0, %v1971
  %v1973 = vmul.f32 %v1970, %v1972
  %v1974 = vadd.f32 %v1970, %v1973
  %vm1975 = vweird.f32 %v1969
  %vm1976 = vweird.f32 %v1970
  %vm1977 = vmor %vm1975, %vm1976
  %v1978 = vsel %vm1977, %v1970, %v1974
  %v1979 = vand.u32 2147483647, %v1969
  %vm1980 = vcmp.eq.f32.partialorder %v1979, 8.507059e+37
  %v1981 = vand.u32 %v1969, 2147483648
  %v1982 = vor.u32 1.1754944e-38, %v1981
  %v1983 = vsel %vm1980, %v1982, %v1978
  %v1984 = vmul.f32 1.0, %v1983
  %v1985 = vxor.u32 %v1963, 2147483648
  %v1986 = vmul.f32 %v1985, 1.442695
  %v1987 = vpow.pop %v1986
  %v1988 = vadd.f32 %v1987, 1.0
  %v1989 = vrcp.pop %v1988
  %v1990 = vmul.f32 %v1988, %v1989
  %v1991 = vsub.f32 1.0, %v1990
  %v1992 = vmul.f32 %v1989, %v1991
  %v1993 = vadd.f32 %v1989, %v1992
  %vm1994 = vweird.f32 %v1988
  %vm1995 = vweird.f32 %v1989
  %vm1996 = vmor %vm1994, %vm1995
  %v1997 = vsel %vm1996, %v1989, %v1993
  %v1998 = vand.u32 2147483647, %v1988
  %vm1999 = vcmp.eq.f32.partialorder %v1998, 8.507059e+37
  %v2000 = vand.u32 %v1988, 2147483648
  %v2001 = vor.u32 1.1754944e-38, %v2000
  %v2002 = vsel %vm1999, %v2001, %v1997
  %v2003 = vmul.f32 1.0, %v2002
  %v2004 = vtanh.pop %v1964
  %v2005 = vxor.u32 %v1965, 2147483648
  %v2006 = vmul.f32 %v2005, 1.442695
  %v2007 = vpow.pop %v2006
  %v2008 = vadd.f32 %v2007, 1.0
  %v2009 = vrcp.pop %v2008
  %v2010 = vmul.f32 %v2008, %v2009
  %v2011 = vsub.f32 1.0, %v2010
  %v2012 = vmul.f32 %v2009, %v2011
  %v2013 = vadd.f32 %v2009, %v2012
  %vm2014 = vweird.f32 %v2008
  %vm2015 = vweird.f32 %v2009
  %vm2016 = vmor %vm2014, %vm2015
  %v2017 = vsel %vm2016, %v2009, %v2013
  %v2018 = vand.u32 2147483647, %v2008
  %vm2019 = vcmp.eq.f32.partialorder %v2018, 8.507059e+37
  %v2020 = vand.u32 %v2008, 2147483648
  %v2021 = vor.u32 1.1754944e-38, %v2020
  %v2022 = vsel %vm2019, %v2021, %v2017
  %v2023 = vmul.f32 1.0, %v2022
  %v2024 = vmul.f32 %v2003, %v1717
  %v2025 = vmul.f32 %v1984, %v2004
  %v2026 = vadd.f32 %v2024, %v2025
  %v2027 = vtanh.pop %v2026
  %v2028 = vmul.f32 %v2023, %v2027
  %s2029 = scalar_lea.vmem %s2, 24
  %v2030 = vld [vmem:[%s2029] sm:$0xff]
  %vm2031 = vcmp.gt.f32.partialorder %v2030, 0.0
  %v2032 = vsel %vm2031, %v2026, %v1717
  %v2033 = vsel %vm2031, %v2028, %v1718
  %v2034 = vsel %vm2031, %v2028, 0.0
  %v2035 = vadd.f32 %v1720, %v2034
  %s2036 = scalar_lea.vmem %s0, 128
  %v2037 = vld [vmem:[%s2036] sm:$0xff]
  %v2038 = vld [vmem:[%s2036 + $0x8] sm:$0xff]
  %v2039 = vld [vmem:[%s2036 + $0x10] sm:$0xff]
  %v2040 = vld [vmem:[%s2036 + $0x18] sm:$0xff]
  %2042 = vst [vmem:[#allocation1] ss:$2 sm:$0xff] %v2033
  %v2043 = vld.sshfl [vmem:[#allocation1] sm:$0xff pattern:$0x75316420]
  %v2044 = vld.sshfl [vmem:[#allocation1 + $0x8] sm:$0xff pattern:$0x75316420]
  %v2047 = vpack.c.bf16 %v2043, %v2043
  %v2048 = vpack.c.bf16 %v2044, %v2044
  %2049 = vmatpush.bf16.msra.mxu0 %v590
  %2050 = vmatpush.bf16.msra.mxu0 %v582
  %2051 = vmatpush.bf16.msra.mxu0 %v574
  %2052 = vmatpush.bf16.msra.mxu0 %v566
  %2053 = vmatpush.bf16.msra.mxu0 %v558
  %2054 = vmatpush.bf16.msra.mxu0 %v550
  %2055 = vmatpush.bf16.msra.mxu0 %v542
  %2056 = vmatpush.bf16.msra.mxu0 %v534
  %2057 = vmatmul.bf16.gmra.mxu0 %v2047
  %v2058 = vpop.f32.mrf.mxu0
  %v2059 = vadd.f32 0.0, %v2058
  %v2060 = vpop.f32.mrf.mxu0
  %2061 = vdwg.mxu0
  %2062 = vmatpush.bf16.msra.mxu0 %v654
  %2063 = vmatpush.bf16.msra.mxu0 %v646
  %2064 = vmatpush.bf16.msra.mxu0 %v638
  %2065 = vmatpush.bf16.msra.mxu0 %v630
  %2066 = vmatpush.bf16.msra.mxu0 %v622
  %2067 = vmatpush.bf16.msra.mxu0 %v614
  %2068 = vmatpush.bf16.msra.mxu0 %v606
  %2069 = vmatpush.bf16.msra.mxu0 %v598
  %2070 = vmatmul.bf16.gmra.mxu0 %v2048
  %v2071 = vpop.f32.mrf.mxu0
  %v2072 = vadd.f32 %v2059, %v2071
  %v2073 = vpop.f32.mrf.mxu0
  %2074 = vdwg.mxu0
  %2075 = vmatpush.bf16.msra.mxu0 %v591
  %2076 = vmatpush.bf16.msra.mxu0 %v583
  %2077 = vmatpush.bf16.msra.mxu0 %v575
  %2078 = vmatpush.bf16.msra.mxu0 %v567
  %2079 = vmatpush.bf16.msra.mxu0 %v559
  %2080 = vmatpush.bf16.msra.mxu0 %v551
  %2081 = vmatpush.bf16.msra.mxu0 %v543
  %2082 = vmatpush.bf16.msra.mxu0 %v535
  %2083 = vmatmul.bf16.gmra.mxu0 %v2047
  %v2084 = vpop.f32.mrf.mxu0
  %v2085 = vadd.f32 0.0, %v2084
  %v2086 = vpop.f32.mrf.mxu0
  %2087 = vdwg.mxu0
  %2088 = vmatpush.bf16.msra.mxu0 %v655
  %2089 = vmatpush.bf16.msra.mxu0 %v647
  %2090 = vmatpush.bf16.msra.mxu0 %v639
  %2091 = vmatpush.bf16.msra.mxu0 %v631
  %2092 = vmatpush.bf16.msra.mxu0 %v623
  %2093 = vmatpush.bf16.msra.mxu0 %v615
  %2094 = vmatpush.bf16.msra.mxu0 %v607
  %2095 = vmatpush.bf16.msra.mxu0 %v599
  %2096 = vmatmul.bf16.gmra.mxu0 %v2048
  %v2097 = vpop.f32.mrf.mxu0
  %v2098 = vadd.f32 %v2085, %v2097
  %v2099 = vpop.f32.mrf.mxu0
  %2100 = vdwg.mxu0
  %2101 = vmatpush.bf16.msra.mxu0 %v592
  %2102 = vmatpush.bf16.msra.mxu0 %v584
  %2103 = vmatpush.bf16.msra.mxu0 %v576
  %2104 = vmatpush.bf16.msra.mxu0 %v568
  %2105 = vmatpush.bf16.msra.mxu0 %v560
  %2106 = vmatpush.bf16.msra.mxu0 %v552
  %2107 = vmatpush.bf16.msra.mxu0 %v544
  %2108 = vmatpush.bf16.msra.mxu0 %v536
  %2109 = vmatmul.bf16.gmra.mxu0 %v2047
  %v2110 = vpop.f32.mrf.mxu0
  %v2111 = vadd.f32 0.0, %v2110
  %v2112 = vpop.f32.mrf.mxu0
  %2113 = vdwg.mxu0
  %2114 = vmatpush.bf16.msra.mxu0 %v656
  %2115 = vmatpush.bf16.msra.mxu0 %v648
  %2116 = vmatpush.bf16.msra.mxu0 %v640
  %2117 = vmatpush.bf16.msra.mxu0 %v632
  %2118 = vmatpush.bf16.msra.mxu0 %v624
  %2119 = vmatpush.bf16.msra.mxu0 %v616
  %2120 = vmatpush.bf16.msra.mxu0 %v608
  %2121 = vmatpush.bf16.msra.mxu0 %v600
  %2122 = vmatmul.bf16.gmra.mxu0 %v2048
  %v2123 = vpop.f32.mrf.mxu0
  %v2124 = vadd.f32 %v2111, %v2123
  %v2125 = vpop.f32.mrf.mxu0
  %2126 = vdwg.mxu0
  %2127 = vmatpush.bf16.msra.mxu0 %v593
  %2128 = vmatpush.bf16.msra.mxu0 %v585
  %2129 = vmatpush.bf16.msra.mxu0 %v577
  %2130 = vmatpush.bf16.msra.mxu0 %v569
  %2131 = vmatpush.bf16.msra.mxu0 %v561
  %2132 = vmatpush.bf16.msra.mxu0 %v553
  %2133 = vmatpush.bf16.msra.mxu0 %v545
  %2134 = vmatpush.bf16.msra.mxu0 %v537
  %2135 = vmatmul.bf16.gmra.mxu0 %v2047
  %v2136 = vpop.f32.mrf.mxu0
  %v2137 = vadd.f32 0.0, %v2136
  %v2138 = vpop.f32.mrf.mxu0
  %2139 = vdwg.mxu0
  %2140 = vmatpush.bf16.msra.mxu0 %v657
  %2141 = vmatpush.bf16.msra.mxu0 %v649
  %2142 = vmatpush.bf16.msra.mxu0 %v641
  %2143 = vmatpush.bf16.msra.mxu0 %v633
  %2144 = vmatpush.bf16.msra.mxu0 %v625
  %2145 = vmatpush.bf16.msra.mxu0 %v617
  %2146 = vmatpush.bf16.msra.mxu0 %v609
  %2147 = vmatpush.bf16.msra.mxu0 %v601
  %2148 = vmatmul.bf16.gmra.mxu0 %v2048
  %v2149 = vpop.f32.mrf.mxu0
  %v2150 = vadd.f32 %v2137, %v2149
  %v2151 = vpop.f32.mrf.mxu0
  %2152 = vdwg.mxu0
  %2153 = vmatpush.bf16.msra.mxu0 %v594
  %2154 = vmatpush.bf16.msra.mxu0 %v586
  %2155 = vmatpush.bf16.msra.mxu0 %v578
  %2156 = vmatpush.bf16.msra.mxu0 %v570
  %2157 = vmatpush.bf16.msra.mxu0 %v562
  %2158 = vmatpush.bf16.msra.mxu0 %v554
  %2159 = vmatpush.bf16.msra.mxu0 %v546
  %2160 = vmatpush.bf16.msra.mxu0 %v538
  %2161 = vmatmul.bf16.gmra.mxu0 %v2047
  %v2162 = vpop.f32.mrf.mxu0
  %v2163 = vadd.f32 0.0, %v2162
  %v2164 = vpop.f32.mrf.mxu0
  %2165 = vdwg.mxu0
  %2166 = vmatpush.bf16.msra.mxu0 %v658
  %2167 = vmatpush.bf16.msra.mxu0 %v650
  %2168 = vmatpush.bf16.msra.mxu0 %v642
  %2169 = vmatpush.bf16.msra.mxu0 %v634
  %2170 = vmatpush.bf16.msra.mxu0 %v626
  %2171 = vmatpush.bf16.msra.mxu0 %v618
  %2172 = vmatpush.bf16.msra.mxu0 %v610
  %2173 = vmatpush.bf16.msra.mxu0 %v602
  %2174 = vmatmul.bf16.gmra.mxu0 %v2048
  %v2175 = vpop.f32.mrf.mxu0
  %v2176 = vadd.f32 %v2163, %v2175
  %v2177 = vpop.f32.mrf.mxu0
  %2178 = vdwg.mxu0
  %2179 = vmatpush.bf16.msra.mxu0 %v595
  %2180 = vmatpush.bf16.msra.mxu0 %v587
  %2181 = vmatpush.bf16.msra.mxu0 %v579
  %2182 = vmatpush.bf16.msra.mxu0 %v571
  %2183 = vmatpush.bf16.msra.mxu0 %v563
  %2184 = vmatpush.bf16.msra.mxu0 %v555
  %2185 = vmatpush.bf16.msra.mxu0 %v547
  %2186 = vmatpush.bf16.msra.mxu0 %v539
  %2187 = vmatmul.bf16.gmra.mxu0 %v2047
  %v2188 = vpop.f32.mrf.mxu0
  %v2189 = vadd.f32 0.0, %v2188
  %v2190 = vpop.f32.mrf.mxu0
  %2191 = vdwg.mxu0
  %2192 = vmatpush.bf16.msra.mxu0 %v659
  %2193 = vmatpush.bf16.msra.mxu0 %v651
  %2194 = vmatpush.bf16.msra.mxu0 %v643
  %2195 = vmatpush.bf16.msra.mxu0 %v635
  %2196 = vmatpush.bf16.msra.mxu0 %v627
  %2197 = vmatpush.bf16.msra.mxu0 %v619
  %2198 = vmatpush.bf16.msra.mxu0 %v611
  %2199 = vmatpush.bf16.msra.mxu0 %v603
  %2200 = vmatmul.bf16.gmra.mxu0 %v2048
  %v2201 = vpop.f32.mrf.mxu0
  %v2202 = vadd.f32 %v2189, %v2201
  %v2203 = vpop.f32.mrf.mxu0
  %2204 = vdwg.mxu0
  %2205 = vmatpush.bf16.msra.mxu0 %v596
  %2206 = vmatpush.bf16.msra.mxu0 %v588
  %2207 = vmatpush.bf16.msra.mxu0 %v580
  %2208 = vmatpush.bf16.msra.mxu0 %v572
  %2209 = vmatpush.bf16.msra.mxu0 %v564
  %2210 = vmatpush.bf16.msra.mxu0 %v556
  %2211 = vmatpush.bf16.msra.mxu0 %v548
  %2212 = vmatpush.bf16.msra.mxu0 %v540
  %2213 = vmatmul.bf16.gmra.mxu0 %v2047
  %v2214 = vpop.f32.mrf.mxu0
  %v2215 = vadd.f32 0.0, %v2214
  %v2216 = vpop.f32.mrf.mxu0
  %2217 = vdwg.mxu0
  %2218 = vmatpush.bf16.msra.mxu0 %v660
  %2219 = vmatpush.bf16.msra.mxu0 %v652
  %2220 = vmatpush.bf16.msra.mxu0 %v644
  %2221 = vmatpush.bf16.msra.mxu0 %v636
  %2222 = vmatpush.bf16.msra.mxu0 %v628
  %2223 = vmatpush.bf16.msra.mxu0 %v620
  %2224 = vmatpush.bf16.msra.mxu0 %v612
  %2225 = vmatpush.bf16.msra.mxu0 %v604
  %2226 = vmatmul.bf16.gmra.mxu0 %v2048
  %v2227 = vpop.f32.mrf.mxu0
  %v2228 = vadd.f32 %v2215, %v2227
  %v2229 = vpop.f32.mrf.mxu0
  %2230 = vdwg.mxu0
  %2231 = vmatpush.bf16.msra.mxu0 %v597
  %2232 = vmatpush.bf16.msra.mxu0 %v589
  %2233 = vmatpush.bf16.msra.mxu0 %v581
  %2234 = vmatpush.bf16.msra.mxu0 %v573
  %2235 = vmatpush.bf16.msra.mxu0 %v565
  %2236 = vmatpush.bf16.msra.mxu0 %v557
  %2237 = vmatpush.bf16.msra.mxu0 %v549
  %2238 = vmatpush.bf16.msra.mxu0 %v541
  %2239 = vmatmul.bf16.gmra.mxu0 %v2047
  %v2240 = vpop.f32.mrf.mxu0
  %v2241 = vadd.f32 0.0, %v2240
  %v2242 = vpop.f32.mrf.mxu0
  %2243 = vdwg.mxu0
  %2244 = vmatpush.bf16.msra.mxu0 %v661
  %2245 = vmatpush.bf16.msra.mxu0 %v653
  %2246 = vmatpush.bf16.msra.mxu0 %v645
  %2247 = vmatpush.bf16.msra.mxu0 %v637
  %2248 = vmatpush.bf16.msra.mxu0 %v629
  %2249 = vmatpush.bf16.msra.mxu0 %v621
  %2250 = vmatpush.bf16.msra.mxu0 %v613
  %2251 = vmatpush.bf16.msra.mxu0 %v605
  %2252 = vmatmul.bf16.gmra.mxu0 %v2048
  %v2253 = vpop.f32.mrf.mxu0
  %v2254 = vadd.f32 %v2241, %v2253
  %v2255 = vpop.f32.mrf.mxu0
  %2256 = vdwg.mxu0
  %v2265 = vrot.slane %v2098, 4
  %v2266 = vrot.slane %v2150, 4
  %v2267 = vrot.slane %v2202, 4
  %v2268 = vrot.slane %v2254, 4
  %v2269 = vsel %vm1010, %v2072, %v2265
  %v2270 = vsel %vm1010, %v2124, %v2266
  %v2271 = vsel %vm1010, %v2176, %v2267
  %v2272 = vsel %vm1010, %v2228, %v2268
  %v2277 = vadd.f32 %v2037, %v2269
  %v2278 = vadd.f32 %v2038, %v2270
  %v2279 = vadd.f32 %v2039, %v2271
  %v2280 = vadd.f32 %v2040, %v2272
  %v2281 = vxor.u32 %v2277, 2147483648
  %v2282 = vmul.f32 %v2281, 1.442695
  %v2283 = vpow.pop %v2282
  %v2284 = vadd.f32 %v2283, 1.0
  %v2285 = vrcp.pop %v2284
  %v2286 = vmul.f32 %v2284, %v2285
  %v2287 = vsub.f32 1.0, %v2286
  %v2288 = vmul.f32 %v2285, %v2287
  %v2289 = vadd.f32 %v2285, %v2288
  %vm2290 = vweird.f32 %v2284
  %vm2291 = vweird.f32 %v2285
  %vm2292 = vmor %vm2290, %vm2291
  %v2293 = vsel %vm2292, %v2285, %v2289
  %v2294 = vand.u32 2147483647, %v2284
  %vm2295 = vcmp.eq.f32.partialorder %v2294, 8.507059e+37
  %v2296 = vand.u32 %v2284, 2147483648
  %v2297 = vor.u32 1.1754944e-38, %v2296
  %v2298 = vsel %vm2295, %v2297, %v2293
  %v2299 = vmul.f32 1.0, %v2298
  %v2300 = vxor.u32 %v2278, 2147483648
  %v2301 = vmul.f32 %v2300, 1.442695
  %v2302 = vpow.pop %v2301
  %v2303 = vadd.f32 %v2302, 1.0
  %v2304 = vrcp.pop %v2303
  %v2305 = vmul.f32 %v2303, %v2304
  %v2306 = vsub.f32 1.0, %v2305
  %v2307 = vmul.f32 %v2304, %v2306
  %v2308 = vadd.f32 %v2304, %v2307
  %vm2309 = vweird.f32 %v2303
  %vm2310 = vweird.f32 %v2304
  %vm2311 = vmor %vm2309, %vm2310
  %v2312 = vsel %vm2311, %v2304, %v2308
  %v2313 = vand.u32 2147483647, %v2303
  %vm2314 = vcmp.eq.f32.partialorder %v2313, 8.507059e+37
  %v2315 = vand.u32 %v2303, 2147483648
  %v2316 = vor.u32 1.1754944e-38, %v2315
  %v2317 = vsel %vm2314, %v2316, %v2312
  %v2318 = vmul.f32 1.0, %v2317
  %v2319 = vtanh.pop %v2279
  %v2320 = vxor.u32 %v2280, 2147483648
  %v2321 = vmul.f32 %v2320, 1.442695
  %v2322 = vpow.pop %v2321
  %v2323 = vadd.f32 %v2322, 1.0
  %v2324 = vrcp.pop %v2323
  %v2325 = vmul.f32 %v2323, %v2324
  %v2326 = vsub.f32 1.0, %v2325
  %v2327 = vmul.f32 %v2324, %v2326
  %v2328 = vadd.f32 %v2324, %v2327
  %vm2329 = vweird.f32 %v2323
  %vm2330 = vweird.f32 %v2324
  %vm2331 = vmor %vm2329, %vm2330
  %v2332 = vsel %vm2331, %v2324, %v2328
  %v2333 = vand.u32 2147483647, %v2323
  %vm2334 = vcmp.eq.f32.partialorder %v2333, 8.507059e+37
  %v2335 = vand.u32 %v2323, 2147483648
  %v2336 = vor.u32 1.1754944e-38, %v2335
  %v2337 = vsel %vm2334, %v2336, %v2332
  %v2338 = vmul.f32 1.0, %v2337
  %v2339 = vmul.f32 %v2318, %v2032
  %v2340 = vmul.f32 %v2299, %v2319
  %v2341 = vadd.f32 %v2339, %v2340
  %v2342 = vtanh.pop %v2341
  %v2343 = vmul.f32 %v2338, %v2342
  %s2344 = scalar_lea.vmem %s2, 32
  %v2345 = vld [vmem:[%s2344] sm:$0xff]
  %vm2346 = vcmp.gt.f32.partialorder %v2345, 0.0
  %v2347 = vsel %vm2346, %v2341, %v2032
  %v2348 = vsel %vm2346, %v2343, %v2033
  %v2349 = vsel %vm2346, %v2343, 0.0
  %v2350 = vadd.f32 %v2035, %v2349
  %s2351 = scalar_lea.vmem %s0, 160
  %v2352 = vld [vmem:[%s2351] sm:$0xff]
  %v2353 = vld [vmem:[%s2351 + $0x8] sm:$0xff]
  %v2354 = vld [vmem:[%s2351 + $0x10] sm:$0xff]
  %v2355 = vld [vmem:[%s2351 + $0x18] sm:$0xff]
  %2357 = vst [vmem:[#allocation1] ss:$2 sm:$0xff] %v2348
  %v2358 = vld.sshfl [vmem:[#allocation1] sm:$0xff pattern:$0x75316420]
  %v2359 = vld.sshfl [vmem:[#allocation1 + $0x8] sm:$0xff pattern:$0x75316420]
  %v2362 = vpack.c.bf16 %v2358, %v2358
  %v2363 = vpack.c.bf16 %v2359, %v2359
  %2364 = vmatpush.bf16.msra.mxu0 %v590
  %2365 = vmatpush.bf16.msra.mxu0 %v582
  %2366 = vmatpush.bf16.msra.mxu0 %v574
  %2367 = vmatpush.bf16.msra.mxu0 %v566
  %2368 = vmatpush.bf16.msra.mxu0 %v558
  %2369 = vmatpush.bf16.msra.mxu0 %v550
  %2370 = vmatpush.bf16.msra.mxu0 %v542
  %2371 = vmatpush.bf16.msra.mxu0 %v534
  %2372 = vmatmul.bf16.gmra.mxu0 %v2362
  %v2373 = vpop.f32.mrf.mxu0
  %v2374 = vadd.f32 0.0, %v2373
  %v2375 = vpop.f32.mrf.mxu0
  %2376 = vdwg.mxu0
  %2377 = vmatpush.bf16.msra.mxu0 %v654
  %2378 = vmatpush.bf16.msra.mxu0 %v646
  %2379 = vmatpush.bf16.msra.mxu0 %v638
  %2380 = vmatpush.bf16.msra.mxu0 %v630
  %2381 = vmatpush.bf16.msra.mxu0 %v622
  %2382 = vmatpush.bf16.msra.mxu0 %v614
  %2383 = vmatpush.bf16.msra.mxu0 %v606
  %2384 = vmatpush.bf16.msra.mxu0 %v598
  %2385 = vmatmul.bf16.gmra.mxu0 %v2363
  %v2386 = vpop.f32.mrf.mxu0
  %v2387 = vadd.f32 %v2374, %v2386
  %v2388 = vpop.f32.mrf.mxu0
  %2389 = vdwg.mxu0
  %2390 = vmatpush.bf16.msra.mxu0 %v591
  %2391 = vmatpush.bf16.msra.mxu0 %v583
  %2392 = vmatpush.bf16.msra.mxu0 %v575
  %2393 = vmatpush.bf16.msra.mxu0 %v567
  %2394 = vmatpush.bf16.msra.mxu0 %v559
  %2395 = vmatpush.bf16.msra.mxu0 %v551
  %2396 = vmatpush.bf16.msra.mxu0 %v543
  %2397 = vmatpush.bf16.msra.mxu0 %v535
  %2398 = vmatmul.bf16.gmra.mxu0 %v2362
  %v2399 = vpop.f32.mrf.mxu0
  %v2400 = vadd.f32 0.0, %v2399
  %v2401 = vpop.f32.mrf.mxu0
  %2402 = vdwg.mxu0
  %2403 = vmatpush.bf16.msra.mxu0 %v655
  %2404 = vmatpush.bf16.msra.mxu0 %v647
  %2405 = vmatpush.bf16.msra.mxu0 %v639
  %2406 = vmatpush.bf16.msra.mxu0 %v631
  %2407 = vmatpush.bf16.msra.mxu0 %v623
  %2408 = vmatpush.bf16.msra.mxu0 %v615
  %2409 = vmatpush.bf16.msra.mxu0 %v607
  %2410 = vmatpush.bf16.msra.mxu0 %v599
  %2411 = vmatmul.bf16.gmra.mxu0 %v2363
  %v2412 = vpop.f32.mrf.mxu0
  %v2413 = vadd.f32 %v2400, %v2412
  %v2414 = vpop.f32.mrf.mxu0
  %2415 = vdwg.mxu0
  %2416 = vmatpush.bf16.msra.mxu0 %v592
  %2417 = vmatpush.bf16.msra.mxu0 %v584
  %2418 = vmatpush.bf16.msra.mxu0 %v576
  %2419 = vmatpush.bf16.msra.mxu0 %v568
  %2420 = vmatpush.bf16.msra.mxu0 %v560
  %2421 = vmatpush.bf16.msra.mxu0 %v552
  %2422 = vmatpush.bf16.msra.mxu0 %v544
  %2423 = vmatpush.bf16.msra.mxu0 %v536
  %2424 = vmatmul.bf16.gmra.mxu0 %v2362
  %v2425 = vpop.f32.mrf.mxu0
  %v2426 = vadd.f32 0.0, %v2425
  %v2427 = vpop.f32.mrf.mxu0
  %2428 = vdwg.mxu0
  %2429 = vmatpush.bf16.msra.mxu0 %v656
  %2430 = vmatpush.bf16.msra.mxu0 %v648
  %2431 = vmatpush.bf16.msra.mxu0 %v640
  %2432 = vmatpush.bf16.msra.mxu0 %v632
  %2433 = vmatpush.bf16.msra.mxu0 %v624
  %2434 = vmatpush.bf16.msra.mxu0 %v616
  %2435 = vmatpush.bf16.msra.mxu0 %v608
  %2436 = vmatpush.bf16.msra.mxu0 %v600
  %2437 = vmatmul.bf16.gmra.mxu0 %v2363
  %v2438 = vpop.f32.mrf.mxu0
  %v2439 = vadd.f32 %v2426, %v2438
  %v2440 = vpop.f32.mrf.mxu0
  %2441 = vdwg.mxu0
  %2442 = vmatpush.bf16.msra.mxu0 %v593
  %2443 = vmatpush.bf16.msra.mxu0 %v585
  %2444 = vmatpush.bf16.msra.mxu0 %v577
  %2445 = vmatpush.bf16.msra.mxu0 %v569
  %2446 = vmatpush.bf16.msra.mxu0 %v561
  %2447 = vmatpush.bf16.msra.mxu0 %v553
  %2448 = vmatpush.bf16.msra.mxu0 %v545
  %2449 = vmatpush.bf16.msra.mxu0 %v537
  %2450 = vmatmul.bf16.gmra.mxu0 %v2362
  %v2451 = vpop.f32.mrf.mxu0
  %v2452 = vadd.f32 0.0, %v2451
  %v2453 = vpop.f32.mrf.mxu0
  %2454 = vdwg.mxu0
  %2455 = vmatpush.bf16.msra.mxu0 %v657
  %2456 = vmatpush.bf16.msra.mxu0 %v649
  %2457 = vmatpush.bf16.msra.mxu0 %v641
  %2458 = vmatpush.bf16.msra.mxu0 %v633
  %2459 = vmatpush.bf16.msra.mxu0 %v625
  %2460 = vmatpush.bf16.msra.mxu0 %v617
  %2461 = vmatpush.bf16.msra.mxu0 %v609
  %2462 = vmatpush.bf16.msra.mxu0 %v601
  %2463 = vmatmul.bf16.gmra.mxu0 %v2363
  %v2464 = vpop.f32.mrf.mxu0
  %v2465 = vadd.f32 %v2452, %v2464
  %v2466 = vpop.f32.mrf.mxu0
  %2467 = vdwg.mxu0
  %2468 = vmatpush.bf16.msra.mxu0 %v594
  %2469 = vmatpush.bf16.msra.mxu0 %v586
  %2470 = vmatpush.bf16.msra.mxu0 %v578
  %2471 = vmatpush.bf16.msra.mxu0 %v570
  %2472 = vmatpush.bf16.msra.mxu0 %v562
  %2473 = vmatpush.bf16.msra.mxu0 %v554
  %2474 = vmatpush.bf16.msra.mxu0 %v546
  %2475 = vmatpush.bf16.msra.mxu0 %v538
  %2476 = vmatmul.bf16.gmra.mxu0 %v2362
  %v2477 = vpop.f32.mrf.mxu0
  %v2478 = vadd.f32 0.0, %v2477
  %v2479 = vpop.f32.mrf.mxu0
  %2480 = vdwg.mxu0
  %2481 = vmatpush.bf16.msra.mxu0 %v658
  %2482 = vmatpush.bf16.msra.mxu0 %v650
  %2483 = vmatpush.bf16.msra.mxu0 %v642
  %2484 = vmatpush.bf16.msra.mxu0 %v634
  %2485 = vmatpush.bf16.msra.mxu0 %v626
  %2486 = vmatpush.bf16.msra.mxu0 %v618
  %2487 = vmatpush.bf16.msra.mxu0 %v610
  %2488 = vmatpush.bf16.msra.mxu0 %v602
  %2489 = vmatmul.bf16.gmra.mxu0 %v2363
  %v2490 = vpop.f32.mrf.mxu0
  %v2491 = vadd.f32 %v2478, %v2490
  %v2492 = vpop.f32.mrf.mxu0
  %2493 = vdwg.mxu0
  %2494 = vmatpush.bf16.msra.mxu0 %v595
  %2495 = vmatpush.bf16.msra.mxu0 %v587
  %2496 = vmatpush.bf16.msra.mxu0 %v579
  %2497 = vmatpush.bf16.msra.mxu0 %v571
  %2498 = vmatpush.bf16.msra.mxu0 %v563
  %2499 = vmatpush.bf16.msra.mxu0 %v555
  %2500 = vmatpush.bf16.msra.mxu0 %v547
  %2501 = vmatpush.bf16.msra.mxu0 %v539
  %2502 = vmatmul.bf16.gmra.mxu0 %v2362
  %v2503 = vpop.f32.mrf.mxu0
  %v2504 = vadd.f32 0.0, %v2503
  %v2505 = vpop.f32.mrf.mxu0
  %2506 = vdwg.mxu0
  %2507 = vmatpush.bf16.msra.mxu0 %v659
  %2508 = vmatpush.bf16.msra.mxu0 %v651
  %2509 = vmatpush.bf16.msra.mxu0 %v643
  %2510 = vmatpush.bf16.msra.mxu0 %v635
  %2511 = vmatpush.bf16.msra.mxu0 %v627
  %2512 = vmatpush.bf16.msra.mxu0 %v619
  %2513 = vmatpush.bf16.msra.mxu0 %v611
  %2514 = vmatpush.bf16.msra.mxu0 %v603
  %2515 = vmatmul.bf16.gmra.mxu0 %v2363
  %v2516 = vpop.f32.mrf.mxu0
  %v2517 = vadd.f32 %v2504, %v2516
  %v2518 = vpop.f32.mrf.mxu0
  %2519 = vdwg.mxu0
  %2520 = vmatpush.bf16.msra.mxu0 %v596
  %2521 = vmatpush.bf16.msra.mxu0 %v588
  %2522 = vmatpush.bf16.msra.mxu0 %v580
  %2523 = vmatpush.bf16.msra.mxu0 %v572
  %2524 = vmatpush.bf16.msra.mxu0 %v564
  %2525 = vmatpush.bf16.msra.mxu0 %v556
  %2526 = vmatpush.bf16.msra.mxu0 %v548
  %2527 = vmatpush.bf16.msra.mxu0 %v540
  %2528 = vmatmul.bf16.gmra.mxu0 %v2362
  %v2529 = vpop.f32.mrf.mxu0
  %v2530 = vadd.f32 0.0, %v2529
  %v2531 = vpop.f32.mrf.mxu0
  %2532 = vdwg.mxu0
  %2533 = vmatpush.bf16.msra.mxu0 %v660
  %2534 = vmatpush.bf16.msra.mxu0 %v652
  %2535 = vmatpush.bf16.msra.mxu0 %v644
  %2536 = vmatpush.bf16.msra.mxu0 %v636
  %2537 = vmatpush.bf16.msra.mxu0 %v628
  %2538 = vmatpush.bf16.msra.mxu0 %v620
  %2539 = vmatpush.bf16.msra.mxu0 %v612
  %2540 = vmatpush.bf16.msra.mxu0 %v604
  %2541 = vmatmul.bf16.gmra.mxu0 %v2363
  %v2542 = vpop.f32.mrf.mxu0
  %v2543 = vadd.f32 %v2530, %v2542
  %v2544 = vpop.f32.mrf.mxu0
  %2545 = vdwg.mxu0
  %2546 = vmatpush.bf16.msra.mxu0 %v597
  %2547 = vmatpush.bf16.msra.mxu0 %v589
  %2548 = vmatpush.bf16.msra.mxu0 %v581
  %2549 = vmatpush.bf16.msra.mxu0 %v573
  %2550 = vmatpush.bf16.msra.mxu0 %v565
  %2551 = vmatpush.bf16.msra.mxu0 %v557
  %2552 = vmatpush.bf16.msra.mxu0 %v549
  %2553 = vmatpush.bf16.msra.mxu0 %v541
  %2554 = vmatmul.bf16.gmra.mxu0 %v2362
  %v2555 = vpop.f32.mrf.mxu0
  %v2556 = vadd.f32 0.0, %v2555
  %v2557 = vpop.f32.mrf.mxu0
  %2558 = vdwg.mxu0
  %2559 = vmatpush.bf16.msra.mxu0 %v661
  %2560 = vmatpush.bf16.msra.mxu0 %v653
  %2561 = vmatpush.bf16.msra.mxu0 %v645
  %2562 = vmatpush.bf16.msra.mxu0 %v637
  %2563 = vmatpush.bf16.msra.mxu0 %v629
  %2564 = vmatpush.bf16.msra.mxu0 %v621
  %2565 = vmatpush.bf16.msra.mxu0 %v613
  %2566 = vmatpush.bf16.msra.mxu0 %v605
  %2567 = vmatmul.bf16.gmra.mxu0 %v2363
  %v2568 = vpop.f32.mrf.mxu0
  %v2569 = vadd.f32 %v2556, %v2568
  %v2570 = vpop.f32.mrf.mxu0
  %2571 = vdwg.mxu0
  %v2580 = vrot.slane %v2413, 4
  %v2581 = vrot.slane %v2465, 4
  %v2582 = vrot.slane %v2517, 4
  %v2583 = vrot.slane %v2569, 4
  %v2584 = vsel %vm1010, %v2387, %v2580
  %v2585 = vsel %vm1010, %v2439, %v2581
  %v2586 = vsel %vm1010, %v2491, %v2582
  %v2587 = vsel %vm1010, %v2543, %v2583
  %v2592 = vadd.f32 %v2352, %v2584
  %v2593 = vadd.f32 %v2353, %v2585
  %v2594 = vadd.f32 %v2354, %v2586
  %v2595 = vadd.f32 %v2355, %v2587
  %v2596 = vxor.u32 %v2592, 2147483648
  %v2597 = vmul.f32 %v2596, 1.442695
  %v2598 = vpow.pop %v2597
  %v2599 = vadd.f32 %v2598, 1.0
  %v2600 = vrcp.pop %v2599
  %v2601 = vmul.f32 %v2599, %v2600
  %v2602 = vsub.f32 1.0, %v2601
  %v2603 = vmul.f32 %v2600, %v2602
  %v2604 = vadd.f32 %v2600, %v2603
  %vm2605 = vweird.f32 %v2599
  %vm2606 = vweird.f32 %v2600
  %vm2607 = vmor %vm2605, %vm2606
  %v2608 = vsel %vm2607, %v2600, %v2604
  %v2609 = vand.u32 2147483647, %v2599
  %vm2610 = vcmp.eq.f32.partialorder %v2609, 8.507059e+37
  %v2611 = vand.u32 %v2599, 2147483648
  %v2612 = vor.u32 1.1754944e-38, %v2611
  %v2613 = vsel %vm2610, %v2612, %v2608
  %v2614 = vmul.f32 1.0, %v2613
  %v2615 = vxor.u32 %v2593, 2147483648
  %v2616 = vmul.f32 %v2615, 1.442695
  %v2617 = vpow.pop %v2616
  %v2618 = vadd.f32 %v2617, 1.0
  %v2619 = vrcp.pop %v2618
  %v2620 = vmul.f32 %v2618, %v2619
  %v2621 = vsub.f32 1.0, %v2620
  %v2622 = vmul.f32 %v2619, %v2621
  %v2623 = vadd.f32 %v2619, %v2622
  %vm2624 = vweird.f32 %v2618
  %vm2625 = vweird.f32 %v2619
  %vm2626 = vmor %vm2624, %vm2625
  %v2627 = vsel %vm2626, %v2619, %v2623
  %v2628 = vand.u32 2147483647, %v2618
  %vm2629 = vcmp.eq.f32.partialorder %v2628, 8.507059e+37
  %v2630 = vand.u32 %v2618, 2147483648
  %v2631 = vor.u32 1.1754944e-38, %v2630
  %v2632 = vsel %vm2629, %v2631, %v2627
  %v2633 = vmul.f32 1.0, %v2632
  %v2634 = vtanh.pop %v2594
  %v2635 = vxor.u32 %v2595, 2147483648
  %v2636 = vmul.f32 %v2635, 1.442695
  %v2637 = vpow.pop %v2636
  %v2638 = vadd.f32 %v2637, 1.0
  %v2639 = vrcp.pop %v2638
  %v2640 = vmul.f32 %v2638, %v2639
  %v2641 = vsub.f32 1.0, %v2640
  %v2642 = vmul.f32 %v2639, %v2641
  %v2643 = vadd.f32 %v2639, %v2642
  %vm2644 = vweird.f32 %v2638
  %vm2645 = vweird.f32 %v2639
  %vm2646 = vmor %vm2644, %vm2645
  %v2647 = vsel %vm2646, %v2639, %v2643
  %v2648 = vand.u32 2147483647, %v2638
  %vm2649 = vcmp.eq.f32.partialorder %v2648, 8.507059e+37
  %v2650 = vand.u32 %v2638, 2147483648
  %v2651 = vor.u32 1.1754944e-38, %v2650
  %v2652 = vsel %vm2649, %v2651, %v2647
  %v2653 = vmul.f32 1.0, %v2652
  %v2654 = vmul.f32 %v2633, %v2347
  %v2655 = vmul.f32 %v2614, %v2634
  %v2656 = vadd.f32 %v2654, %v2655
  %v2657 = vtanh.pop %v2656
  %v2658 = vmul.f32 %v2653, %v2657
  %s2659 = scalar_lea.vmem %s2, 40
  %v2660 = vld [vmem:[%s2659] sm:$0xff]
  %vm2661 = vcmp.gt.f32.partialorder %v2660, 0.0
  %v2662 = vsel %vm2661, %v2656, %v2347
  %v2663 = vsel %vm2661, %v2658, %v2348
  %v2664 = vsel %vm2661, %v2658, 0.0
  %v2665 = vadd.f32 %v2350, %v2664
  %s2666 = scalar_lea.vmem %s0, 192
  %v2667 = vld [vmem:[%s2666] sm:$0xff]
  %v2668 = vld [vmem:[%s2666 + $0x8] sm:$0xff]
  %v2669 = vld [vmem:[%s2666 + $0x10] sm:$0xff]
  %v2670 = vld [vmem:[%s2666 + $0x18] sm:$0xff]
  %2672 = vst [vmem:[#allocation1] ss:$2 sm:$0xff] %v2663
  %v2673 = vld.sshfl [vmem:[#allocation1] sm:$0xff pattern:$0x75316420]
  %v2674 = vld.sshfl [vmem:[#allocation1 + $0x8] sm:$0xff pattern:$0x75316420]
  %v2677 = vpack.c.bf16 %v2673, %v2673
  %v2678 = vpack.c.bf16 %v2674, %v2674
  %2679 = vmatpush.bf16.msra.mxu0 %v590
  %2680 = vmatpush.bf16.msra.mxu0 %v582
  %2681 = vmatpush.bf16.msra.mxu0 %v574
  %2682 = vmatpush.bf16.msra.mxu0 %v566
  %2683 = vmatpush.bf16.msra.mxu0 %v558
  %2684 = vmatpush.bf16.msra.mxu0 %v550
  %2685 = vmatpush.bf16.msra.mxu0 %v542
  %2686 = vmatpush.bf16.msra.mxu0 %v534
  %2687 = vmatmul.bf16.gmra.mxu0 %v2677
  %v2688 = vpop.f32.mrf.mxu0
  %v2689 = vadd.f32 0.0, %v2688
  %v2690 = vpop.f32.mrf.mxu0
  %2691 = vdwg.mxu0
  %2692 = vmatpush.bf16.msra.mxu0 %v654
  %2693 = vmatpush.bf16.msra.mxu0 %v646
  %2694 = vmatpush.bf16.msra.mxu0 %v638
  %2695 = vmatpush.bf16.msra.mxu0 %v630
  %2696 = vmatpush.bf16.msra.mxu0 %v622
  %2697 = vmatpush.bf16.msra.mxu0 %v614
  %2698 = vmatpush.bf16.msra.mxu0 %v606
  %2699 = vmatpush.bf16.msra.mxu0 %v598
  %2700 = vmatmul.bf16.gmra.mxu0 %v2678
  %v2701 = vpop.f32.mrf.mxu0
  %v2702 = vadd.f32 %v2689, %v2701
  %v2703 = vpop.f32.mrf.mxu0
  %2704 = vdwg.mxu0
  %2705 = vmatpush.bf16.msra.mxu0 %v591
  %2706 = vmatpush.bf16.msra.mxu0 %v583
  %2707 = vmatpush.bf16.msra.mxu0 %v575
  %2708 = vmatpush.bf16.msra.mxu0 %v567
  %2709 = vmatpush.bf16.msra.mxu0 %v559
  %2710 = vmatpush.bf16.msra.mxu0 %v551
  %2711 = vmatpush.bf16.msra.mxu0 %v543
  %2712 = vmatpush.bf16.msra.mxu0 %v535
  %2713 = vmatmul.bf16.gmra.mxu0 %v2677
  %v2714 = vpop.f32.mrf.mxu0
  %v2715 = vadd.f32 0.0, %v2714
  %v2716 = vpop.f32.mrf.mxu0
  %2717 = vdwg.mxu0
  %2718 = vmatpush.bf16.msra.mxu0 %v655
  %2719 = vmatpush.bf16.msra.mxu0 %v647
  %2720 = vmatpush.bf16.msra.mxu0 %v639
  %2721 = vmatpush.bf16.msra.mxu0 %v631
  %2722 = vmatpush.bf16.msra.mxu0 %v623
  %2723 = vmatpush.bf16.msra.mxu0 %v615
  %2724 = vmatpush.bf16.msra.mxu0 %v607
  %2725 = vmatpush.bf16.msra.mxu0 %v599
  %2726 = vmatmul.bf16.gmra.mxu0 %v2678
  %v2727 = vpop.f32.mrf.mxu0
  %v2728 = vadd.f32 %v2715, %v2727
  %v2729 = vpop.f32.mrf.mxu0
  %2730 = vdwg.mxu0
  %2731 = vmatpush.bf16.msra.mxu0 %v592
  %2732 = vmatpush.bf16.msra.mxu0 %v584
  %2733 = vmatpush.bf16.msra.mxu0 %v576
  %2734 = vmatpush.bf16.msra.mxu0 %v568
  %2735 = vmatpush.bf16.msra.mxu0 %v560
  %2736 = vmatpush.bf16.msra.mxu0 %v552
  %2737 = vmatpush.bf16.msra.mxu0 %v544
  %2738 = vmatpush.bf16.msra.mxu0 %v536
  %2739 = vmatmul.bf16.gmra.mxu0 %v2677
  %v2740 = vpop.f32.mrf.mxu0
  %v2741 = vadd.f32 0.0, %v2740
  %v2742 = vpop.f32.mrf.mxu0
  %2743 = vdwg.mxu0
  %2744 = vmatpush.bf16.msra.mxu0 %v656
  %2745 = vmatpush.bf16.msra.mxu0 %v648
  %2746 = vmatpush.bf16.msra.mxu0 %v640
  %2747 = vmatpush.bf16.msra.mxu0 %v632
  %2748 = vmatpush.bf16.msra.mxu0 %v624
  %2749 = vmatpush.bf16.msra.mxu0 %v616
  %2750 = vmatpush.bf16.msra.mxu0 %v608
  %2751 = vmatpush.bf16.msra.mxu0 %v600
  %2752 = vmatmul.bf16.gmra.mxu0 %v2678
  %v2753 = vpop.f32.mrf.mxu0
  %v2754 = vadd.f32 %v2741, %v2753
  %v2755 = vpop.f32.mrf.mxu0
  %2756 = vdwg.mxu0
  %2757 = vmatpush.bf16.msra.mxu0 %v593
  %2758 = vmatpush.bf16.msra.mxu0 %v585
  %2759 = vmatpush.bf16.msra.mxu0 %v577
  %2760 = vmatpush.bf16.msra.mxu0 %v569
  %2761 = vmatpush.bf16.msra.mxu0 %v561
  %2762 = vmatpush.bf16.msra.mxu0 %v553
  %2763 = vmatpush.bf16.msra.mxu0 %v545
  %2764 = vmatpush.bf16.msra.mxu0 %v537
  %2765 = vmatmul.bf16.gmra.mxu0 %v2677
  %v2766 = vpop.f32.mrf.mxu0
  %v2767 = vadd.f32 0.0, %v2766
  %v2768 = vpop.f32.mrf.mxu0
  %2769 = vdwg.mxu0
  %2770 = vmatpush.bf16.msra.mxu0 %v657
  %2771 = vmatpush.bf16.msra.mxu0 %v649
  %2772 = vmatpush.bf16.msra.mxu0 %v641
  %2773 = vmatpush.bf16.msra.mxu0 %v633
  %2774 = vmatpush.bf16.msra.mxu0 %v625
  %2775 = vmatpush.bf16.msra.mxu0 %v617
  %2776 = vmatpush.bf16.msra.mxu0 %v609
  %2777 = vmatpush.bf16.msra.mxu0 %v601
  %2778 = vmatmul.bf16.gmra.mxu0 %v2678
  %v2779 = vpop.f32.mrf.mxu0
  %v2780 = vadd.f32 %v2767, %v2779
  %v2781 = vpop.f32.mrf.mxu0
  %2782 = vdwg.mxu0
  %2783 = vmatpush.bf16.msra.mxu0 %v594
  %2784 = vmatpush.bf16.msra.mxu0 %v586
  %2785 = vmatpush.bf16.msra.mxu0 %v578
  %2786 = vmatpush.bf16.msra.mxu0 %v570
  %2787 = vmatpush.bf16.msra.mxu0 %v562
  %2788 = vmatpush.bf16.msra.mxu0 %v554
  %2789 = vmatpush.bf16.msra.mxu0 %v546
  %2790 = vmatpush.bf16.msra.mxu0 %v538
  %2791 = vmatmul.bf16.gmra.mxu0 %v2677
  %v2792 = vpop.f32.mrf.mxu0
  %v2793 = vadd.f32 0.0, %v2792
  %v2794 = vpop.f32.mrf.mxu0
  %2795 = vdwg.mxu0
  %2796 = vmatpush.bf16.msra.mxu0 %v658
  %2797 = vmatpush.bf16.msra.mxu0 %v650
  %2798 = vmatpush.bf16.msra.mxu0 %v642
  %2799 = vmatpush.bf16.msra.mxu0 %v634
  %2800 = vmatpush.bf16.msra.mxu0 %v626
  %2801 = vmatpush.bf16.msra.mxu0 %v618
  %2802 = vmatpush.bf16.msra.mxu0 %v610
  %2803 = vmatpush.bf16.msra.mxu0 %v602
  %2804 = vmatmul.bf16.gmra.mxu0 %v2678
  %v2805 = vpop.f32.mrf.mxu0
  %v2806 = vadd.f32 %v2793, %v2805
  %v2807 = vpop.f32.mrf.mxu0
  %2808 = vdwg.mxu0
  %2809 = vmatpush.bf16.msra.mxu0 %v595
  %2810 = vmatpush.bf16.msra.mxu0 %v587
  %2811 = vmatpush.bf16.msra.mxu0 %v579
  %2812 = vmatpush.bf16.msra.mxu0 %v571
  %2813 = vmatpush.bf16.msra.mxu0 %v563
  %2814 = vmatpush.bf16.msra.mxu0 %v555
  %2815 = vmatpush.bf16.msra.mxu0 %v547
  %2816 = vmatpush.bf16.msra.mxu0 %v539
  %2817 = vmatmul.bf16.gmra.mxu0 %v2677
  %v2818 = vpop.f32.mrf.mxu0
  %v2819 = vadd.f32 0.0, %v2818
  %v2820 = vpop.f32.mrf.mxu0
  %2821 = vdwg.mxu0
  %2822 = vmatpush.bf16.msra.mxu0 %v659
  %2823 = vmatpush.bf16.msra.mxu0 %v651
  %2824 = vmatpush.bf16.msra.mxu0 %v643
  %2825 = vmatpush.bf16.msra.mxu0 %v635
  %2826 = vmatpush.bf16.msra.mxu0 %v627
  %2827 = vmatpush.bf16.msra.mxu0 %v619
  %2828 = vmatpush.bf16.msra.mxu0 %v611
  %2829 = vmatpush.bf16.msra.mxu0 %v603
  %2830 = vmatmul.bf16.gmra.mxu0 %v2678
  %v2831 = vpop.f32.mrf.mxu0
  %v2832 = vadd.f32 %v2819, %v2831
  %v2833 = vpop.f32.mrf.mxu0
  %2834 = vdwg.mxu0
  %2835 = vmatpush.bf16.msra.mxu0 %v596
  %2836 = vmatpush.bf16.msra.mxu0 %v588
  %2837 = vmatpush.bf16.msra.mxu0 %v580
  %2838 = vmatpush.bf16.msra.mxu0 %v572
  %2839 = vmatpush.bf16.msra.mxu0 %v564
  %2840 = vmatpush.bf16.msra.mxu0 %v556
  %2841 = vmatpush.bf16.msra.mxu0 %v548
  %2842 = vmatpush.bf16.msra.mxu0 %v540
  %2843 = vmatmul.bf16.gmra.mxu0 %v2677
  %v2844 = vpop.f32.mrf.mxu0
  %v2845 = vadd.f32 0.0, %v2844
  %v2846 = vpop.f32.mrf.mxu0
  %2847 = vdwg.mxu0
  %2848 = vmatpush.bf16.msra.mxu0 %v660
  %2849 = vmatpush.bf16.msra.mxu0 %v652
  %2850 = vmatpush.bf16.msra.mxu0 %v644
  %2851 = vmatpush.bf16.msra.mxu0 %v636
  %2852 = vmatpush.bf16.msra.mxu0 %v628
  %2853 = vmatpush.bf16.msra.mxu0 %v620
  %2854 = vmatpush.bf16.msra.mxu0 %v612
  %2855 = vmatpush.bf16.msra.mxu0 %v604
  %2856 = vmatmul.bf16.gmra.mxu0 %v2678
  %v2857 = vpop.f32.mrf.mxu0
  %v2858 = vadd.f32 %v2845, %v2857
  %v2859 = vpop.f32.mrf.mxu0
  %2860 = vdwg.mxu0
  %2861 = vmatpush.bf16.msra.mxu0 %v597
  %2862 = vmatpush.bf16.msra.mxu0 %v589
  %2863 = vmatpush.bf16.msra.mxu0 %v581
  %2864 = vmatpush.bf16.msra.mxu0 %v573
  %2865 = vmatpush.bf16.msra.mxu0 %v565
  %2866 = vmatpush.bf16.msra.mxu0 %v557
  %2867 = vmatpush.bf16.msra.mxu0 %v549
  %2868 = vmatpush.bf16.msra.mxu0 %v541
  %2869 = vmatmul.bf16.gmra.mxu0 %v2677
  %v2870 = vpop.f32.mrf.mxu0
  %v2871 = vadd.f32 0.0, %v2870
  %v2872 = vpop.f32.mrf.mxu0
  %2873 = vdwg.mxu0
  %2874 = vmatpush.bf16.msra.mxu0 %v661
  %2875 = vmatpush.bf16.msra.mxu0 %v653
  %2876 = vmatpush.bf16.msra.mxu0 %v645
  %2877 = vmatpush.bf16.msra.mxu0 %v637
  %2878 = vmatpush.bf16.msra.mxu0 %v629
  %2879 = vmatpush.bf16.msra.mxu0 %v621
  %2880 = vmatpush.bf16.msra.mxu0 %v613
  %2881 = vmatpush.bf16.msra.mxu0 %v605
  %2882 = vmatmul.bf16.gmra.mxu0 %v2678
  %v2883 = vpop.f32.mrf.mxu0
  %v2884 = vadd.f32 %v2871, %v2883
  %v2885 = vpop.f32.mrf.mxu0
  %2886 = vdwg.mxu0
  %v2895 = vrot.slane %v2728, 4
  %v2896 = vrot.slane %v2780, 4
  %v2897 = vrot.slane %v2832, 4
  %v2898 = vrot.slane %v2884, 4
  %v2899 = vsel %vm1010, %v2702, %v2895
  %v2900 = vsel %vm1010, %v2754, %v2896
  %v2901 = vsel %vm1010, %v2806, %v2897
  %v2902 = vsel %vm1010, %v2858, %v2898
  %v2907 = vadd.f32 %v2667, %v2899
  %v2908 = vadd.f32 %v2668, %v2900
  %v2909 = vadd.f32 %v2669, %v2901
  %v2910 = vadd.f32 %v2670, %v2902
  %v2911 = vxor.u32 %v2907, 2147483648
  %v2912 = vmul.f32 %v2911, 1.442695
  %v2913 = vpow.pop %v2912
  %v2914 = vadd.f32 %v2913, 1.0
  %v2915 = vrcp.pop %v2914
  %v2916 = vmul.f32 %v2914, %v2915
  %v2917 = vsub.f32 1.0, %v2916
  %v2918 = vmul.f32 %v2915, %v2917
  %v2919 = vadd.f32 %v2915, %v2918
  %vm2920 = vweird.f32 %v2914
  %vm2921 = vweird.f32 %v2915
  %vm2922 = vmor %vm2920, %vm2921
  %v2923 = vsel %vm2922, %v2915, %v2919
  %v2924 = vand.u32 2147483647, %v2914
  %vm2925 = vcmp.eq.f32.partialorder %v2924, 8.507059e+37
  %v2926 = vand.u32 %v2914, 2147483648
  %v2927 = vor.u32 1.1754944e-38, %v2926
  %v2928 = vsel %vm2925, %v2927, %v2923
  %v2929 = vmul.f32 1.0, %v2928
  %v2930 = vxor.u32 %v2908, 2147483648
  %v2931 = vmul.f32 %v2930, 1.442695
  %v2932 = vpow.pop %v2931
  %v2933 = vadd.f32 %v2932, 1.0
  %v2934 = vrcp.pop %v2933
  %v2935 = vmul.f32 %v2933, %v2934
  %v2936 = vsub.f32 1.0, %v2935
  %v2937 = vmul.f32 %v2934, %v2936
  %v2938 = vadd.f32 %v2934, %v2937
  %vm2939 = vweird.f32 %v2933
  %vm2940 = vweird.f32 %v2934
  %vm2941 = vmor %vm2939, %vm2940
  %v2942 = vsel %vm2941, %v2934, %v2938
  %v2943 = vand.u32 2147483647, %v2933
  %vm2944 = vcmp.eq.f32.partialorder %v2943, 8.507059e+37
  %v2945 = vand.u32 %v2933, 2147483648
  %v2946 = vor.u32 1.1754944e-38, %v2945
  %v2947 = vsel %vm2944, %v2946, %v2942
  %v2948 = vmul.f32 1.0, %v2947
  %v2949 = vtanh.pop %v2909
  %v2950 = vxor.u32 %v2910, 2147483648
  %v2951 = vmul.f32 %v2950, 1.442695
  %v2952 = vpow.pop %v2951
  %v2953 = vadd.f32 %v2952, 1.0
  %v2954 = vrcp.pop %v2953
  %v2955 = vmul.f32 %v2953, %v2954
  %v2956 = vsub.f32 1.0, %v2955
  %v2957 = vmul.f32 %v2954, %v2956
  %v2958 = vadd.f32 %v2954, %v2957
  %vm2959 = vweird.f32 %v2953
  %vm2960 = vweird.f32 %v2954
  %vm2961 = vmor %vm2959, %vm2960
  %v2962 = vsel %vm2961, %v2954, %v2958
  %v2963 = vand.u32 2147483647, %v2953
  %vm2964 = vcmp.eq.f32.partialorder %v2963, 8.507059e+37
  %v2965 = vand.u32 %v2953, 2147483648
  %v2966 = vor.u32 1.1754944e-38, %v2965
  %v2967 = vsel %vm2964, %v2966, %v2962
  %v2968 = vmul.f32 1.0, %v2967
  %v2969 = vmul.f32 %v2948, %v2662
  %v2970 = vmul.f32 %v2929, %v2949
  %v2971 = vadd.f32 %v2969, %v2970
  %v2972 = vtanh.pop %v2971
  %v2973 = vmul.f32 %v2968, %v2972
  %s2974 = scalar_lea.vmem %s2, 48
  %v2975 = vld [vmem:[%s2974] sm:$0xff]
  %vm2976 = vcmp.gt.f32.partialorder %v2975, 0.0
  %v2977 = vsel %vm2976, %v2971, %v2662
  %v2978 = vsel %vm2976, %v2973, %v2663
  %v2979 = vsel %vm2976, %v2973, 0.0
  %v2980 = vadd.f32 %v2665, %v2979
  %s2981 = scalar_lea.vmem %s0, 224
  %v2982 = vld [vmem:[%s2981] sm:$0xff]
  %v2983 = vld [vmem:[%s2981 + $0x8] sm:$0xff]
  %v2984 = vld [vmem:[%s2981 + $0x10] sm:$0xff]
  %v2985 = vld [vmem:[%s2981 + $0x18] sm:$0xff]
  %2987 = vst [vmem:[#allocation1] ss:$2 sm:$0xff] %v2978
  %v2988 = vld.sshfl [vmem:[#allocation1] sm:$0xff pattern:$0x75316420]
  %v2989 = vld.sshfl [vmem:[#allocation1 + $0x8] sm:$0xff pattern:$0x75316420]
  %v2992 = vpack.c.bf16 %v2988, %v2988
  %v2993 = vpack.c.bf16 %v2989, %v2989
  %2994 = vmatpush.bf16.msra.mxu0 %v590
  %2995 = vmatpush.bf16.msra.mxu0 %v582
  %2996 = vmatpush.bf16.msra.mxu0 %v574
  %2997 = vmatpush.bf16.msra.mxu0 %v566
  %2998 = vmatpush.bf16.msra.mxu0 %v558
  %2999 = vmatpush.bf16.msra.mxu0 %v550
  %3000 = vmatpush.bf16.msra.mxu0 %v542
  %3001 = vmatpush.bf16.msra.mxu0 %v534
  %3002 = vmatmul.bf16.gmra.mxu0 %v2992
  %v3003 = vpop.f32.mrf.mxu0
  %v3004 = vadd.f32 0.0, %v3003
  %v3005 = vpop.f32.mrf.mxu0
  %3006 = vdwg.mxu0
  %3007 = vmatpush.bf16.msra.mxu0 %v654
  %3008 = vmatpush.bf16.msra.mxu0 %v646
  %3009 = vmatpush.bf16.msra.mxu0 %v638
  %3010 = vmatpush.bf16.msra.mxu0 %v630
  %3011 = vmatpush.bf16.msra.mxu0 %v622
  %3012 = vmatpush.bf16.msra.mxu0 %v614
  %3013 = vmatpush.bf16.msra.mxu0 %v606
  %3014 = vmatpush.bf16.msra.mxu0 %v598
  %3015 = vmatmul.bf16.gmra.mxu0 %v2993
  %v3016 = vpop.f32.mrf.mxu0
  %v3017 = vadd.f32 %v3004, %v3016
  %v3018 = vpop.f32.mrf.mxu0
  %3019 = vdwg.mxu0
  %3020 = vmatpush.bf16.msra.mxu0 %v591
  %3021 = vmatpush.bf16.msra.mxu0 %v583
  %3022 = vmatpush.bf16.msra.mxu0 %v575
  %3023 = vmatpush.bf16.msra.mxu0 %v567
  %3024 = vmatpush.bf16.msra.mxu0 %v559
  %3025 = vmatpush.bf16.msra.mxu0 %v551
  %3026 = vmatpush.bf16.msra.mxu0 %v543
  %3027 = vmatpush.bf16.msra.mxu0 %v535
  %3028 = vmatmul.bf16.gmra.mxu0 %v2992
  %v3029 = vpop.f32.mrf.mxu0
  %v3030 = vadd.f32 0.0, %v3029
  %v3031 = vpop.f32.mrf.mxu0
  %3032 = vdwg.mxu0
  %3033 = vmatpush.bf16.msra.mxu0 %v655
  %3034 = vmatpush.bf16.msra.mxu0 %v647
  %3035 = vmatpush.bf16.msra.mxu0 %v639
  %3036 = vmatpush.bf16.msra.mxu0 %v631
  %3037 = vmatpush.bf16.msra.mxu0 %v623
  %3038 = vmatpush.bf16.msra.mxu0 %v615
  %3039 = vmatpush.bf16.msra.mxu0 %v607
  %3040 = vmatpush.bf16.msra.mxu0 %v599
  %3041 = vmatmul.bf16.gmra.mxu0 %v2993
  %v3042 = vpop.f32.mrf.mxu0
  %v3043 = vadd.f32 %v3030, %v3042
  %v3044 = vpop.f32.mrf.mxu0
  %3045 = vdwg.mxu0
  %3046 = vmatpush.bf16.msra.mxu0 %v592
  %3047 = vmatpush.bf16.msra.mxu0 %v584
  %3048 = vmatpush.bf16.msra.mxu0 %v576
  %3049 = vmatpush.bf16.msra.mxu0 %v568
  %3050 = vmatpush.bf16.msra.mxu0 %v560
  %3051 = vmatpush.bf16.msra.mxu0 %v552
  %3052 = vmatpush.bf16.msra.mxu0 %v544
  %3053 = vmatpush.bf16.msra.mxu0 %v536
  %3054 = vmatmul.bf16.gmra.mxu0 %v2992
  %v3055 = vpop.f32.mrf.mxu0
  %v3056 = vadd.f32 0.0, %v3055
  %v3057 = vpop.f32.mrf.mxu0
  %3058 = vdwg.mxu0
  %3059 = vmatpush.bf16.msra.mxu0 %v656
  %3060 = vmatpush.bf16.msra.mxu0 %v648
  %3061 = vmatpush.bf16.msra.mxu0 %v640
  %3062 = vmatpush.bf16.msra.mxu0 %v632
  %3063 = vmatpush.bf16.msra.mxu0 %v624
  %3064 = vmatpush.bf16.msra.mxu0 %v616
  %3065 = vmatpush.bf16.msra.mxu0 %v608
  %3066 = vmatpush.bf16.msra.mxu0 %v600
  %3067 = vmatmul.bf16.gmra.mxu0 %v2993
  %v3068 = vpop.f32.mrf.mxu0
  %v3069 = vadd.f32 %v3056, %v3068
  %v3070 = vpop.f32.mrf.mxu0
  %3071 = vdwg.mxu0
  %3072 = vmatpush.bf16.msra.mxu0 %v593
  %3073 = vmatpush.bf16.msra.mxu0 %v585
  %3074 = vmatpush.bf16.msra.mxu0 %v577
  %3075 = vmatpush.bf16.msra.mxu0 %v569
  %3076 = vmatpush.bf16.msra.mxu0 %v561
  %3077 = vmatpush.bf16.msra.mxu0 %v553
  %3078 = vmatpush.bf16.msra.mxu0 %v545
  %3079 = vmatpush.bf16.msra.mxu0 %v537
  %3080 = vmatmul.bf16.gmra.mxu0 %v2992
  %v3081 = vpop.f32.mrf.mxu0
  %v3082 = vadd.f32 0.0, %v3081
  %v3083 = vpop.f32.mrf.mxu0
  %3084 = vdwg.mxu0
  %3085 = vmatpush.bf16.msra.mxu0 %v657
  %3086 = vmatpush.bf16.msra.mxu0 %v649
  %3087 = vmatpush.bf16.msra.mxu0 %v641
  %3088 = vmatpush.bf16.msra.mxu0 %v633
  %3089 = vmatpush.bf16.msra.mxu0 %v625
  %3090 = vmatpush.bf16.msra.mxu0 %v617
  %3091 = vmatpush.bf16.msra.mxu0 %v609
  %3092 = vmatpush.bf16.msra.mxu0 %v601
  %3093 = vmatmul.bf16.gmra.mxu0 %v2993
  %v3094 = vpop.f32.mrf.mxu0
  %v3095 = vadd.f32 %v3082, %v3094
  %v3096 = vpop.f32.mrf.mxu0
  %3097 = vdwg.mxu0
  %3098 = vmatpush.bf16.msra.mxu0 %v594
  %3099 = vmatpush.bf16.msra.mxu0 %v586
  %3100 = vmatpush.bf16.msra.mxu0 %v578
  %3101 = vmatpush.bf16.msra.mxu0 %v570
  %3102 = vmatpush.bf16.msra.mxu0 %v562
  %3103 = vmatpush.bf16.msra.mxu0 %v554
  %3104 = vmatpush.bf16.msra.mxu0 %v546
  %3105 = vmatpush.bf16.msra.mxu0 %v538
  %3106 = vmatmul.bf16.gmra.mxu0 %v2992
  %v3107 = vpop.f32.mrf.mxu0
  %v3108 = vadd.f32 0.0, %v3107
  %v3109 = vpop.f32.mrf.mxu0
  %3110 = vdwg.mxu0
  %3111 = vmatpush.bf16.msra.mxu0 %v658
  %3112 = vmatpush.bf16.msra.mxu0 %v650
  %3113 = vmatpush.bf16.msra.mxu0 %v642
  %3114 = vmatpush.bf16.msra.mxu0 %v634
  %3115 = vmatpush.bf16.msra.mxu0 %v626
  %3116 = vmatpush.bf16.msra.mxu0 %v618
  %3117 = vmatpush.bf16.msra.mxu0 %v610
  %3118 = vmatpush.bf16.msra.mxu0 %v602
  %3119 = vmatmul.bf16.gmra.mxu0 %v2993
  %v3120 = vpop.f32.mrf.mxu0
  %v3121 = vadd.f32 %v3108, %v3120
  %v3122 = vpop.f32.mrf.mxu0
  %3123 = vdwg.mxu0
  %3124 = vmatpush.bf16.msra.mxu0 %v595
  %3125 = vmatpush.bf16.msra.mxu0 %v587
  %3126 = vmatpush.bf16.msra.mxu0 %v579
  %3127 = vmatpush.bf16.msra.mxu0 %v571
  %3128 = vmatpush.bf16.msra.mxu0 %v563
  %3129 = vmatpush.bf16.msra.mxu0 %v555
  %3130 = vmatpush.bf16.msra.mxu0 %v547
  %3131 = vmatpush.bf16.msra.mxu0 %v539
  %3132 = vmatmul.bf16.gmra.mxu0 %v2992
  %v3133 = vpop.f32.mrf.mxu0
  %v3134 = vadd.f32 0.0, %v3133
  %v3135 = vpop.f32.mrf.mxu0
  %3136 = vdwg.mxu0
  %3137 = vmatpush.bf16.msra.mxu0 %v659
  %3138 = vmatpush.bf16.msra.mxu0 %v651
  %3139 = vmatpush.bf16.msra.mxu0 %v643
  %3140 = vmatpush.bf16.msra.mxu0 %v635
  %3141 = vmatpush.bf16.msra.mxu0 %v627
  %3142 = vmatpush.bf16.msra.mxu0 %v619
  %3143 = vmatpush.bf16.msra.mxu0 %v611
  %3144 = vmatpush.bf16.msra.mxu0 %v603
  %3145 = vmatmul.bf16.gmra.mxu0 %v2993
  %v3146 = vpop.f32.mrf.mxu0
  %v3147 = vadd.f32 %v3134, %v3146
  %v3148 = vpop.f32.mrf.mxu0
  %3149 = vdwg.mxu0
  %3150 = vmatpush.bf16.msra.mxu0 %v596
  %3151 = vmatpush.bf16.msra.mxu0 %v588
  %3152 = vmatpush.bf16.msra.mxu0 %v580
  %3153 = vmatpush.bf16.msra.mxu0 %v572
  %3154 = vmatpush.bf16.msra.mxu0 %v564
  %3155 = vmatpush.bf16.msra.mxu0 %v556
  %3156 = vmatpush.bf16.msra.mxu0 %v548
  %3157 = vmatpush.bf16.msra.mxu0 %v540
  %3158 = vmatmul.bf16.gmra.mxu0 %v2992
  %v3159 = vpop.f32.mrf.mxu0
  %v3160 = vadd.f32 0.0, %v3159
  %v3161 = vpop.f32.mrf.mxu0
  %3162 = vdwg.mxu0
  %3163 = vmatpush.bf16.msra.mxu0 %v660
  %3164 = vmatpush.bf16.msra.mxu0 %v652
  %3165 = vmatpush.bf16.msra.mxu0 %v644
  %3166 = vmatpush.bf16.msra.mxu0 %v636
  %3167 = vmatpush.bf16.msra.mxu0 %v628
  %3168 = vmatpush.bf16.msra.mxu0 %v620
  %3169 = vmatpush.bf16.msra.mxu0 %v612
  %3170 = vmatpush.bf16.msra.mxu0 %v604
  %3171 = vmatmul.bf16.gmra.mxu0 %v2993
  %v3172 = vpop.f32.mrf.mxu0
  %v3173 = vadd.f32 %v3160, %v3172
  %v3174 = vpop.f32.mrf.mxu0
  %3175 = vdwg.mxu0
  %3176 = vmatpush.bf16.msra.mxu0 %v597
  %3177 = vmatpush.bf16.msra.mxu0 %v589
  %3178 = vmatpush.bf16.msra.mxu0 %v581
  %3179 = vmatpush.bf16.msra.mxu0 %v573
  %3180 = vmatpush.bf16.msra.mxu0 %v565
  %3181 = vmatpush.bf16.msra.mxu0 %v557
  %3182 = vmatpush.bf16.msra.mxu0 %v549
  %3183 = vmatpush.bf16.msra.mxu0 %v541
  %3184 = vmatmul.bf16.gmra.mxu0 %v2992
  %v3185 = vpop.f32.mrf.mxu0
  %v3186 = vadd.f32 0.0, %v3185
  %v3187 = vpop.f32.mrf.mxu0
  %3188 = vdwg.mxu0
  %3189 = vmatpush.bf16.msra.mxu0 %v661
  %3190 = vmatpush.bf16.msra.mxu0 %v653
  %3191 = vmatpush.bf16.msra.mxu0 %v645
  %3192 = vmatpush.bf16.msra.mxu0 %v637
  %3193 = vmatpush.bf16.msra.mxu0 %v629
  %3194 = vmatpush.bf16.msra.mxu0 %v621
  %3195 = vmatpush.bf16.msra.mxu0 %v613
  %3196 = vmatpush.bf16.msra.mxu0 %v605
  %3197 = vmatmul.bf16.gmra.mxu0 %v2993
  %v3198 = vpop.f32.mrf.mxu0
  %v3199 = vadd.f32 %v3186, %v3198
  %v3200 = vpop.f32.mrf.mxu0
  %3201 = vdwg.mxu0
  %v3210 = vrot.slane %v3043, 4
  %v3211 = vrot.slane %v3095, 4
  %v3212 = vrot.slane %v3147, 4
  %v3213 = vrot.slane %v3199, 4
  %v3214 = vsel %vm1010, %v3017, %v3210
  %v3215 = vsel %vm1010, %v3069, %v3211
  %v3216 = vsel %vm1010, %v3121, %v3212
  %v3217 = vsel %vm1010, %v3173, %v3213
  %v3222 = vadd.f32 %v2982, %v3214
  %v3223 = vadd.f32 %v2983, %v3215
  %v3224 = vadd.f32 %v2984, %v3216
  %v3225 = vadd.f32 %v2985, %v3217
  %v3226 = vxor.u32 %v3222, 2147483648
  %v3227 = vmul.f32 %v3226, 1.442695
  %v3228 = vpow.pop %v3227
  %v3229 = vadd.f32 %v3228, 1.0
  %v3230 = vrcp.pop %v3229
  %v3231 = vmul.f32 %v3229, %v3230
  %v3232 = vsub.f32 1.0, %v3231
  %v3233 = vmul.f32 %v3230, %v3232
  %v3234 = vadd.f32 %v3230, %v3233
  %vm3235 = vweird.f32 %v3229
  %vm3236 = vweird.f32 %v3230
  %vm3237 = vmor %vm3235, %vm3236
  %v3238 = vsel %vm3237, %v3230, %v3234
  %v3239 = vand.u32 2147483647, %v3229
  %vm3240 = vcmp.eq.f32.partialorder %v3239, 8.507059e+37
  %v3241 = vand.u32 %v3229, 2147483648
  %v3242 = vor.u32 1.1754944e-38, %v3241
  %v3243 = vsel %vm3240, %v3242, %v3238
  %v3244 = vmul.f32 1.0, %v3243
  %v3245 = vxor.u32 %v3223, 2147483648
  %v3246 = vmul.f32 %v3245, 1.442695
  %v3247 = vpow.pop %v3246
  %v3248 = vadd.f32 %v3247, 1.0
  %v3249 = vrcp.pop %v3248
  %v3250 = vmul.f32 %v3248, %v3249
  %v3251 = vsub.f32 1.0, %v3250
  %v3252 = vmul.f32 %v3249, %v3251
  %v3253 = vadd.f32 %v3249, %v3252
  %vm3254 = vweird.f32 %v3248
  %vm3255 = vweird.f32 %v3249
  %vm3256 = vmor %vm3254, %vm3255
  %v3257 = vsel %vm3256, %v3249, %v3253
  %v3258 = vand.u32 2147483647, %v3248
  %vm3259 = vcmp.eq.f32.partialorder %v3258, 8.507059e+37
  %v3260 = vand.u32 %v3248, 2147483648
  %v3261 = vor.u32 1.1754944e-38, %v3260
  %v3262 = vsel %vm3259, %v3261, %v3257
  %v3263 = vmul.f32 1.0, %v3262
  %v3264 = vtanh.pop %v3224
  %v3265 = vxor.u32 %v3225, 2147483648
  %v3266 = vmul.f32 %v3265, 1.442695
  %v3267 = vpow.pop %v3266
  %v3268 = vadd.f32 %v3267, 1.0
  %v3269 = vrcp.pop %v3268
  %v3270 = vmul.f32 %v3268, %v3269
  %v3271 = vsub.f32 1.0, %v3270
  %v3272 = vmul.f32 %v3269, %v3271
  %v3273 = vadd.f32 %v3269, %v3272
  %vm3274 = vweird.f32 %v3268
  %vm3275 = vweird.f32 %v3269
  %vm3276 = vmor %vm3274, %vm3275
  %v3277 = vsel %vm3276, %v3269, %v3273
  %v3278 = vand.u32 2147483647, %v3268
  %vm3279 = vcmp.eq.f32.partialorder %v3278, 8.507059e+37
  %v3280 = vand.u32 %v3268, 2147483648
  %v3281 = vor.u32 1.1754944e-38, %v3280
  %v3282 = vsel %vm3279, %v3281, %v3277
  %v3283 = vmul.f32 1.0, %v3282
  %v3284 = vmul.f32 %v3263, %v2977
  %v3285 = vmul.f32 %v3244, %v3264
  %v3286 = vadd.f32 %v3284, %v3285
  %v3287 = vtanh.pop %v3286
  %v3288 = vmul.f32 %v3283, %v3287
  %s3289 = scalar_lea.vmem %s2, 56
  %v3290 = vld [vmem:[%s3289] sm:$0xff]
  %vm3291 = vcmp.gt.f32.partialorder %v3290, 0.0
  %v3292 = vsel %vm3291, %v3288, 0.0
  %v3293 = vadd.f32 %v2980, %v3292
  %v3294 = vld [vmem:[%s3] sm:$0xff]
  %v3295 = vld [vmem:[%s3 + $0x8] sm:$0xff]
  %v3296 = vld [vmem:[%s3 + $0x10] sm:$0xff]
  %v3297 = vld [vmem:[%s3 + $0x18] sm:$0xff]
  %v3298 = vld [vmem:[%s3 + $0x20] sm:$0xff]
  %v3299 = vld [vmem:[%s3 + $0x28] sm:$0xff]
  %v3300 = vld [vmem:[%s3 + $0x30] sm:$0xff]
  %v3301 = vld [vmem:[%s3 + $0x38] sm:$0xff]
  %v3302 = vld [vmem:[%s3 + $0x40] sm:$0xff]
  %v3303 = vld [vmem:[%s3 + $0x48] sm:$0xff]
  %v3304 = vld [vmem:[%s3 + $0x50] sm:$0xff]
  %v3305 = vld [vmem:[%s3 + $0x58] sm:$0xff]
  %v3306 = vld [vmem:[%s3 + $0x60] sm:$0xff]
  %v3307 = vld [vmem:[%s3 + $0x68] sm:$0xff]
  %v3308 = vld [vmem:[%s3 + $0x70] sm:$0xff]
  %v3309 = vld [vmem:[%s3 + $0x78] sm:$0xff]
  %v3310 = vld [vmem:[%s3 + $0x80] sm:$0xff]
  %v3311 = vld [vmem:[%s3 + $0x88] sm:$0xff]
  %v3312 = vld [vmem:[%s3 + $0x90] sm:$0xff]
  %v3313 = vld [vmem:[%s3 + $0x98] sm:$0xff]
  %v3314 = vld [vmem:[%s3 + $0xa0] sm:$0xff]
  %v3315 = vld [vmem:[%s3 + $0xa8] sm:$0xff]
  %v3316 = vld [vmem:[%s3 + $0xb0] sm:$0xff]
  %v3317 = vld [vmem:[%s3 + $0xb8] sm:$0xff]
  %v3318 = vld [vmem:[%s3 + $0xc0] sm:$0xff]
  %v3319 = vld [vmem:[%s3 + $0xc8] sm:$0xff]
  %v3320 = vld [vmem:[%s3 + $0xd0] sm:$0xff]
  %v3321 = vld [vmem:[%s3 + $0xd8] sm:$0xff]
  %v3322 = vld [vmem:[%s3 + $0xe0] sm:$0xff]
  %v3323 = vld [vmem:[%s3 + $0xe8] sm:$0xff]
  %v3324 = vld [vmem:[%s3 + $0xf0] sm:$0xff]
  %v3325 = vld [vmem:[%s3 + $0xf8] sm:$0xff]
  %3327 = vst [vmem:[#allocation1] ss:$2 sm:$0xff] %v3293
  %v3328 = vld.sshfl [vmem:[#allocation1] sm:$0xff pattern:$0x75316420]
  %v3329 = vld.sshfl [vmem:[#allocation1 + $0x8] sm:$0xff pattern:$0x75316420]
  %3332 = vmatpush.msra.mxu0 %v3309
  %3333 = vmatpush.msra.mxu0 %v3308
  %3334 = vmatpush.msra.mxu0 %v3307
  %3335 = vmatpush.msra.mxu0 %v3306
  %3336 = vmatpush.msra.mxu0 %v3305
  %3337 = vmatpush.msra.mxu0 %v3304
  %3338 = vmatpush.msra.mxu0 %v3303
  %3339 = vmatpush.msra.mxu0 %v3302
  %3340 = vmatpush.msra.mxu0 %v3301
  %3341 = vmatpush.msra.mxu0 %v3300
  %3342 = vmatpush.msra.mxu0 %v3299
  %3343 = vmatpush.msra.mxu0 %v3298
  %3344 = vmatpush.msra.mxu0 %v3297
  %3345 = vmatpush.msra.mxu0 %v3296
  %3346 = vmatpush.msra.mxu0 %v3295
  %3347 = vmatpush.msra.mxu0 %v3294
  %3348 = vmatmul.f32.gmra.mxu0 %v3328
  %v3349 = vpop.f32.mrf.mxu0
  %v3350 = vadd.f32 0.0, %v3349
  %3351 = vdwg.mxu0
  %3352 = vmatpush.msra.mxu0 %v3325
  %3353 = vmatpush.msra.mxu0 %v3324
  %3354 = vmatpush.msra.mxu0 %v3323
  %3355 = vmatpush.msra.mxu0 %v3322
  %3356 = vmatpush.msra.mxu0 %v3321
  %3357 = vmatpush.msra.mxu0 %v3320
  %3358 = vmatpush.msra.mxu0 %v3319
  %3359 = vmatpush.msra.mxu0 %v3318
  %3360 = vmatpush.msra.mxu0 %v3317
  %3361 = vmatpush.msra.mxu0 %v3316
  %3362 = vmatpush.msra.mxu0 %v3315
  %3363 = vmatpush.msra.mxu0 %v3314
  %3364 = vmatpush.msra.mxu0 %v3313
  %3365 = vmatpush.msra.mxu0 %v3312
  %3366 = vmatpush.msra.mxu0 %v3311
  %3367 = vmatpush.msra.mxu0 %v3310
  %3368 = vmatmul.f32.gmra.mxu0 %v3329
  %v3369 = vpop.f32.mrf.mxu0
  %v3370 = vadd.f32 %v3350, %v3369
  %3371 = vdwg.mxu0
  %vm3372 = vcmask 60416
  %3373 = vst.msk [vmem:[%s4] sm:$0xf] %vm3372, %v3370
  // Predicated region
  $region18: #{_lambda_.3} parent=0 // pred_check
    _
  $region19: #{_lambda_.3} parent=0 // pred_check_branch
    %3375 = sbr.rel (0) target = $region21
  $region20: #{_lambda_.3} parent=0 // pred_region
    _
  $region21: #{_lambda_.3} parent=0 // pred_fallthru
    _
  // Predicated region
  $region22: #{_lambda_.3} parent=0 // pred_check
    _
  $region23: #{_lambda_.3} parent=0 // pred_check_branch
    %3377 = sbr.rel (0) target = $region25
  $region24: #{_lambda_.3} parent=0 // pred_region
    _
  $region25: #{_lambda_.3} parent=0 // pred_fallthru
    _

// kernel: _lambda_.2
$region0: #{_lambda_.2}
  #allocation0 [shape = 'u32[]', space=smem, size = 0x4, offset = 0x4, fixed_abs, tag = 'smem constant byte address 0x4 - core index']
  #allocation1 [shape = 'u32[72,128]{1,0:T(1,128)}', space=vmem, size = 0x9000, scoped, tag = 'internal scratch']
  %s0 = inlined_call_operand.vmem [shape: f32[8,4,1024], index: 0, kind: input, shape index: {}]
  %s1 = inlined_call_operand.vmem [shape: bf16[256,1024], index: 1, kind: input, shape index: {}]
  %s2 = inlined_call_operand.vmem [shape: f32[8,4,256], index: 2, kind: input, shape index: {}]
  %s3 = inlined_call_operand.vmem [shape: f32[8,4,256], index: 3, kind: output, shape index: {}]
  %s4 = sld [smem:[#allocation0]]
  $region22: #{_lambda_.2} parent=0
    _
  %s6 = ssub.s32 1, %s4
  %s7 = scalar_select 0, %s6, %s4
  // Predicated region
  $region2: #{_lambda_.2} parent=0 // pred_check
    _
  $region3: #{_lambda_.2} parent=0 // pred_check_branch
    %9 = sbr.rel (0) target = $region5
  $region4: #{_lambda_.2} parent=0 // pred_region
    _
  $region5: #{_lambda_.2} parent=0 // pred_fallthru
    _
  // Predicated region
  $region6: #{_lambda_.2} parent=0 // pred_check
    _
  $region7: #{_lambda_.2} parent=0 // pred_check_branch
    %11 = sbr.rel (0) target = $region9
  $region8: #{_lambda_.2} parent=0 // pred_region
    _
  $region9: #{_lambda_.2} parent=0 // pred_fallthru
    _
  // Predicated region
  $region10: #{_lambda_.2} parent=0 // pred_check
    _
  $region11: #{_lambda_.2} parent=0 // pred_check_branch
    %13 = sbr.rel (0) target = $region13
  $region12: #{_lambda_.2} parent=0 // pred_region
    _
  $region13: #{_lambda_.2} parent=0 // pred_fallthru
    _
  %v15 = vld [vmem:[%s0] sm:$0xff]
  %v16 = vld [vmem:[%s0 + $0x8] sm:$0xff]
  %v17 = vld [vmem:[%s0 + $0x10] sm:$0xff]
  %v18 = vld [vmem:[%s0 + $0x18] sm:$0xff]
  %v19 = vld [vmem:[%s1] sm:$0xff]
  %v20 = vld [vmem:[%s1 + $0x8] sm:$0xff]
  %v21 = vld [vmem:[%s1 + $0x10] sm:$0xff]
  %v22 = vld [vmem:[%s1 + $0x18] sm:$0xff]
  %v23 = vld [vmem:[%s1 + $0x20] sm:$0xff]
  %v24 = vld [vmem:[%s1 + $0x28] sm:$0xff]
  %v25 = vld [vmem:[%s1 + $0x30] sm:$0xff]
  %v26 = vld [vmem:[%s1 + $0x38] sm:$0xff]
  %v27 = vld [vmem:[%s1 + $0x40] sm:$0xff]
  %v28 = vld [vmem:[%s1 + $0x48] sm:$0xff]
  %v29 = vld [vmem:[%s1 + $0x50] sm:$0xff]
  %v30 = vld [vmem:[%s1 + $0x58] sm:$0xff]
  %v31 = vld [vmem:[%s1 + $0x60] sm:$0xff]
  %v32 = vld [vmem:[%s1 + $0x68] sm:$0xff]
  %v33 = vld [vmem:[%s1 + $0x70] sm:$0xff]
  %v34 = vld [vmem:[%s1 + $0x78] sm:$0xff]
  %v35 = vld [vmem:[%s1 + $0x80] sm:$0xff]
  %v36 = vld [vmem:[%s1 + $0x88] sm:$0xff]
  %v37 = vld [vmem:[%s1 + $0x90] sm:$0xff]
  %v38 = vld [vmem:[%s1 + $0x98] sm:$0xff]
  %v39 = vld [vmem:[%s1 + $0xa0] sm:$0xff]
  %v40 = vld [vmem:[%s1 + $0xa8] sm:$0xff]
  %v41 = vld [vmem:[%s1 + $0xb0] sm:$0xff]
  %v42 = vld [vmem:[%s1 + $0xb8] sm:$0xff]
  %v43 = vld [vmem:[%s1 + $0xc0] sm:$0xff]
  %v44 = vld [vmem:[%s1 + $0xc8] sm:$0xff]
  %v45 = vld [vmem:[%s1 + $0xd0] sm:$0xff]
  %v46 = vld [vmem:[%s1 + $0xd8] sm:$0xff]
  %v47 = vld [vmem:[%s1 + $0xe0] sm:$0xff]
  %v48 = vld [vmem:[%s1 + $0xe8] sm:$0xff]
  %v49 = vld [vmem:[%s1 + $0xf0] sm:$0xff]
  %v50 = vld [vmem:[%s1 + $0xf8] sm:$0xff]
  %v51 = vld [vmem:[%s1 + $0x100] sm:$0xff]
  %v52 = vld [vmem:[%s1 + $0x108] sm:$0xff]
  %v53 = vld [vmem:[%s1 + $0x110] sm:$0xff]
  %v54 = vld [vmem:[%s1 + $0x118] sm:$0xff]
  %v55 = vld [vmem:[%s1 + $0x120] sm:$0xff]
  %v56 = vld [vmem:[%s1 + $0x128] sm:$0xff]
  %v57 = vld [vmem:[%s1 + $0x130] sm:$0xff]
  %v58 = vld [vmem:[%s1 + $0x138] sm:$0xff]
  %v59 = vld [vmem:[%s1 + $0x140] sm:$0xff]
  %v60 = vld [vmem:[%s1 + $0x148] sm:$0xff]
  %v61 = vld [vmem:[%s1 + $0x150] sm:$0xff]
  %v62 = vld [vmem:[%s1 + $0x158] sm:$0xff]
  %v63 = vld [vmem:[%s1 + $0x160] sm:$0xff]
  %v64 = vld [vmem:[%s1 + $0x168] sm:$0xff]
  %v65 = vld [vmem:[%s1 + $0x170] sm:$0xff]
  %v66 = vld [vmem:[%s1 + $0x178] sm:$0xff]
  %v67 = vld [vmem:[%s1 + $0x180] sm:$0xff]
  %v68 = vld [vmem:[%s1 + $0x188] sm:$0xff]
  %v69 = vld [vmem:[%s1 + $0x190] sm:$0xff]
  %v70 = vld [vmem:[%s1 + $0x198] sm:$0xff]
  %v71 = vld [vmem:[%s1 + $0x1a0] sm:$0xff]
  %v72 = vld [vmem:[%s1 + $0x1a8] sm:$0xff]
  %v73 = vld [vmem:[%s1 + $0x1b0] sm:$0xff]
  %v74 = vld [vmem:[%s1 + $0x1b8] sm:$0xff]
  %v75 = vld [vmem:[%s1 + $0x1c0] sm:$0xff]
  %v76 = vld [vmem:[%s1 + $0x1c8] sm:$0xff]
  %v77 = vld [vmem:[%s1 + $0x1d0] sm:$0xff]
  %v78 = vld [vmem:[%s1 + $0x1d8] sm:$0xff]
  %v79 = vld [vmem:[%s1 + $0x1e0] sm:$0xff]
  %v80 = vld [vmem:[%s1 + $0x1e8] sm:$0xff]
  %v81 = vld [vmem:[%s1 + $0x1f0] sm:$0xff]
  %v82 = vld [vmem:[%s1 + $0x1f8] sm:$0xff]
  %v83 = vld [vmem:[%s1 + $0x200] sm:$0xff]
  %v84 = vld [vmem:[%s1 + $0x208] sm:$0xff]
  %v85 = vld [vmem:[%s1 + $0x210] sm:$0xff]
  %v86 = vld [vmem:[%s1 + $0x218] sm:$0xff]
  %v87 = vld [vmem:[%s1 + $0x220] sm:$0xff]
  %v88 = vld [vmem:[%s1 + $0x228] sm:$0xff]
  %v89 = vld [vmem:[%s1 + $0x230] sm:$0xff]
  %v90 = vld [vmem:[%s1 + $0x238] sm:$0xff]
  %v91 = vld [vmem:[%s1 + $0x240] sm:$0xff]
  %v92 = vld [vmem:[%s1 + $0x248] sm:$0xff]
  %v93 = vld [vmem:[%s1 + $0x250] sm:$0xff]
  %v94 = vld [vmem:[%s1 + $0x258] sm:$0xff]
  %v95 = vld [vmem:[%s1 + $0x260] sm:$0xff]
  %v96 = vld [vmem:[%s1 + $0x268] sm:$0xff]
  %v97 = vld [vmem:[%s1 + $0x270] sm:$0xff]
  %v98 = vld [vmem:[%s1 + $0x278] sm:$0xff]
  %v99 = vld [vmem:[%s1 + $0x280] sm:$0xff]
  %v100 = vld [vmem:[%s1 + $0x288] sm:$0xff]
  %v101 = vld [vmem:[%s1 + $0x290] sm:$0xff]
  %v102 = vld [vmem:[%s1 + $0x298] sm:$0xff]
  %v103 = vld [vmem:[%s1 + $0x2a0] sm:$0xff]
  %v104 = vld [vmem:[%s1 + $0x2a8] sm:$0xff]
  %v105 = vld [vmem:[%s1 + $0x2b0] sm:$0xff]
  %v106 = vld [vmem:[%s1 + $0x2b8] sm:$0xff]
  %v107 = vld [vmem:[%s1 + $0x2c0] sm:$0xff]
  %v108 = vld [vmem:[%s1 + $0x2c8] sm:$0xff]
  %v109 = vld [vmem:[%s1 + $0x2d0] sm:$0xff]
  %v110 = vld [vmem:[%s1 + $0x2d8] sm:$0xff]
  %v111 = vld [vmem:[%s1 + $0x2e0] sm:$0xff]
  %v112 = vld [vmem:[%s1 + $0x2e8] sm:$0xff]
  %v113 = vld [vmem:[%s1 + $0x2f0] sm:$0xff]
  %v114 = vld [vmem:[%s1 + $0x2f8] sm:$0xff]
  %v115 = vld [vmem:[%s1 + $0x300] sm:$0xff]
  %v116 = vld [vmem:[%s1 + $0x308] sm:$0xff]
  %v117 = vld [vmem:[%s1 + $0x310] sm:$0xff]
  %v118 = vld [vmem:[%s1 + $0x318] sm:$0xff]
  %v119 = vld [vmem:[%s1 + $0x320] sm:$0xff]
  %v120 = vld [vmem:[%s1 + $0x328] sm:$0xff]
  %v121 = vld [vmem:[%s1 + $0x330] sm:$0xff]
  %v122 = vld [vmem:[%s1 + $0x338] sm:$0xff]
  %v123 = vld [vmem:[%s1 + $0x340] sm:$0xff]
  %v124 = vld [vmem:[%s1 + $0x348] sm:$0xff]
  %v125 = vld [vmem:[%s1 + $0x350] sm:$0xff]
  %v126 = vld [vmem:[%s1 + $0x358] sm:$0xff]
  %v127 = vld [vmem:[%s1 + $0x360] sm:$0xff]
  %v128 = vld [vmem:[%s1 + $0x368] sm:$0xff]
  %v129 = vld [vmem:[%s1 + $0x370] sm:$0xff]
  %v130 = vld [vmem:[%s1 + $0x378] sm:$0xff]
  %v131 = vld [vmem:[%s1 + $0x380] sm:$0xff]
  %v132 = vld [vmem:[%s1 + $0x388] sm:$0xff]
  %v133 = vld [vmem:[%s1 + $0x390] sm:$0xff]
  %v134 = vld [vmem:[%s1 + $0x398] sm:$0xff]
  %v135 = vld [vmem:[%s1 + $0x3a0] sm:$0xff]
  %v136 = vld [vmem:[%s1 + $0x3a8] sm:$0xff]
  %v137 = vld [vmem:[%s1 + $0x3b0] sm:$0xff]
  %v138 = vld [vmem:[%s1 + $0x3b8] sm:$0xff]
  %v139 = vld [vmem:[%s1 + $0x3c0] sm:$0xff]
  %v140 = vld [vmem:[%s1 + $0x3c8] sm:$0xff]
  %v141 = vld [vmem:[%s1 + $0x3d0] sm:$0xff]
  %v142 = vld [vmem:[%s1 + $0x3d8] sm:$0xff]
  %v143 = vld [vmem:[%s1 + $0x3e0] sm:$0xff]
  %v144 = vld [vmem:[%s1 + $0x3e8] sm:$0xff]
  %v145 = vld [vmem:[%s1 + $0x3f0] sm:$0xff]
  %v146 = vld [vmem:[%s1 + $0x3f8] sm:$0xff]
  %v275 = vunpack.c.l.b16 %v19
  %v276 = vunpack.c.h.b16 %v19
  %v277 = vunpack.c.l.b16 %v20
  %v278 = vunpack.c.h.b16 %v20
  %v279 = vunpack.c.l.b16 %v21
  %v280 = vunpack.c.h.b16 %v21
  %v281 = vunpack.c.l.b16 %v22
  %v282 = vunpack.c.h.b16 %v22
  %v283 = vunpack.c.l.b16 %v23
  %v284 = vunpack.c.h.b16 %v23
  %v285 = vunpack.c.l.b16 %v24
  %v286 = vunpack.c.h.b16 %v24
  %v287 = vunpack.c.l.b16 %v25
  %v288 = vunpack.c.h.b16 %v25
  %v289 = vunpack.c.l.b16 %v26
  %v290 = vunpack.c.h.b16 %v26
  %v291 = vunpack.c.l.b16 %v27
  %v292 = vunpack.c.h.b16 %v27
  %v293 = vunpack.c.l.b16 %v28
  %v294 = vunpack.c.h.b16 %v28
  %v295 = vunpack.c.l.b16 %v29
  %v296 = vunpack.c.h.b16 %v29
  %v297 = vunpack.c.l.b16 %v30
  %v298 = vunpack.c.h.b16 %v30
  %v299 = vunpack.c.l.b16 %v31
  %v300 = vunpack.c.h.b16 %v31
  %v301 = vunpack.c.l.b16 %v32
  %v302 = vunpack.c.h.b16 %v32
  %v303 = vunpack.c.l.b16 %v33
  %v304 = vunpack.c.h.b16 %v33
  %v305 = vunpack.c.l.b16 %v34
  %v306 = vunpack.c.h.b16 %v34
  %v307 = vunpack.c.l.b16 %v35
  %v308 = vunpack.c.h.b16 %v35
  %v309 = vunpack.c.l.b16 %v36
  %v310 = vunpack.c.h.b16 %v36
  %v311 = vunpack.c.l.b16 %v37
  %v312 = vunpack.c.h.b16 %v37
  %v313 = vunpack.c.l.b16 %v38
  %v314 = vunpack.c.h.b16 %v38
  %v315 = vunpack.c.l.b16 %v39
  %v316 = vunpack.c.h.b16 %v39
  %v317 = vunpack.c.l.b16 %v40
  %v318 = vunpack.c.h.b16 %v40
  %v319 = vunpack.c.l.b16 %v41
  %v320 = vunpack.c.h.b16 %v41
  %v321 = vunpack.c.l.b16 %v42
  %v322 = vunpack.c.h.b16 %v42
  %v323 = vunpack.c.l.b16 %v43
  %v324 = vunpack.c.h.b16 %v43
  %v325 = vunpack.c.l.b16 %v44
  %v326 = vunpack.c.h.b16 %v44
  %v327 = vunpack.c.l.b16 %v45
  %v328 = vunpack.c.h.b16 %v45
  %v329 = vunpack.c.l.b16 %v46
  %v330 = vunpack.c.h.b16 %v46
  %v331 = vunpack.c.l.b16 %v47
  %v332 = vunpack.c.h.b16 %v47
  %v333 = vunpack.c.l.b16 %v48
  %v334 = vunpack.c.h.b16 %v48
  %v335 = vunpack.c.l.b16 %v49
  %v336 = vunpack.c.h.b16 %v49
  %v337 = vunpack.c.l.b16 %v50
  %v338 = vunpack.c.h.b16 %v50
  %v339 = vunpack.c.l.b16 %v51
  %v340 = vunpack.c.h.b16 %v51
  %v341 = vunpack.c.l.b16 %v52
  %v342 = vunpack.c.h.b16 %v52
  %v343 = vunpack.c.l.b16 %v53
  %v344 = vunpack.c.h.b16 %v53
  %v345 = vunpack.c.l.b16 %v54
  %v346 = vunpack.c.h.b16 %v54
  %v347 = vunpack.c.l.b16 %v55
  %v348 = vunpack.c.h.b16 %v55
  %v349 = vunpack.c.l.b16 %v56
  %v350 = vunpack.c.h.b16 %v56
  %v351 = vunpack.c.l.b16 %v57
  %v352 = vunpack.c.h.b16 %v57
  %v353 = vunpack.c.l.b16 %v58
  %v354 = vunpack.c.h.b16 %v58
  %v355 = vunpack.c.l.b16 %v59
  %v356 = vunpack.c.h.b16 %v59
  %v357 = vunpack.c.l.b16 %v60
  %v358 = vunpack.c.h.b16 %v60
  %v359 = vunpack.c.l.b16 %v61
  %v360 = vunpack.c.h.b16 %v61
  %v361 = vunpack.c.l.b16 %v62
  %v362 = vunpack.c.h.b16 %v62
  %v363 = vunpack.c.l.b16 %v63
  %v364 = vunpack.c.h.b16 %v63
  %v365 = vunpack.c.l.b16 %v64
  %v366 = vunpack.c.h.b16 %v64
  %v367 = vunpack.c.l.b16 %v65
  %v368 = vunpack.c.h.b16 %v65
  %v369 = vunpack.c.l.b16 %v66
  %v370 = vunpack.c.h.b16 %v66
  %v371 = vunpack.c.l.b16 %v67
  %v372 = vunpack.c.h.b16 %v67
  %v373 = vunpack.c.l.b16 %v68
  %v374 = vunpack.c.h.b16 %v68
  %v375 = vunpack.c.l.b16 %v69
  %v376 = vunpack.c.h.b16 %v69
  %v377 = vunpack.c.l.b16 %v70
  %v378 = vunpack.c.h.b16 %v70
  %v379 = vunpack.c.l.b16 %v71
  %v380 = vunpack.c.h.b16 %v71
  %v381 = vunpack.c.l.b16 %v72
  %v382 = vunpack.c.h.b16 %v72
  %v383 = vunpack.c.l.b16 %v73
  %v384 = vunpack.c.h.b16 %v73
  %v385 = vunpack.c.l.b16 %v74
  %v386 = vunpack.c.h.b16 %v74
  %v387 = vunpack.c.l.b16 %v75
  %v388 = vunpack.c.h.b16 %v75
  %v389 = vunpack.c.l.b16 %v76
  %v390 = vunpack.c.h.b16 %v76
  %v391 = vunpack.c.l.b16 %v77
  %v392 = vunpack.c.h.b16 %v77
  %v393 = vunpack.c.l.b16 %v78
  %v394 = vunpack.c.h.b16 %v78
  %v395 = vunpack.c.l.b16 %v79
  %v396 = vunpack.c.h.b16 %v79
  %v397 = vunpack.c.l.b16 %v80
  %v398 = vunpack.c.h.b16 %v80
  %v399 = vunpack.c.l.b16 %v81
  %v400 = vunpack.c.h.b16 %v81
  %v401 = vunpack.c.l.b16 %v82
  %v402 = vunpack.c.h.b16 %v82
  %v403 = vunpack.c.l.b16 %v83
  %v404 = vunpack.c.h.b16 %v83
  %v405 = vunpack.c.l.b16 %v84
  %v406 = vunpack.c.h.b16 %v84
  %v407 = vunpack.c.l.b16 %v85
  %v408 = vunpack.c.h.b16 %v85
  %v409 = vunpack.c.l.b16 %v86
  %v410 = vunpack.c.h.b16 %v86
  %v411 = vunpack.c.l.b16 %v87
  %v412 = vunpack.c.h.b16 %v87
  %v413 = vunpack.c.l.b16 %v88
  %v414 = vunpack.c.h.b16 %v88
  %v415 = vunpack.c.l.b16 %v89
  %v416 = vunpack.c.h.b16 %v89
  %v417 = vunpack.c.l.b16 %v90
  %v418 = vunpack.c.h.b16 %v90
  %v419 = vunpack.c.l.b16 %v91
  %v420 = vunpack.c.h.b16 %v91
  %v421 = vunpack.c.l.b16 %v92
  %v422 = vunpack.c.h.b16 %v92
  %v423 = vunpack.c.l.b16 %v93
  %v424 = vunpack.c.h.b16 %v93
  %v425 = vunpack.c.l.b16 %v94
  %v426 = vunpack.c.h.b16 %v94
  %v427 = vunpack.c.l.b16 %v95
  %v428 = vunpack.c.h.b16 %v95
  %v429 = vunpack.c.l.b16 %v96
  %v430 = vunpack.c.h.b16 %v96
  %v431 = vunpack.c.l.b16 %v97
  %v432 = vunpack.c.h.b16 %v97
  %v433 = vunpack.c.l.b16 %v98
  %v434 = vunpack.c.h.b16 %v98
  %v435 = vunpack.c.l.b16 %v99
  %v436 = vunpack.c.h.b16 %v99
  %v437 = vunpack.c.l.b16 %v100
  %v438 = vunpack.c.h.b16 %v100
  %v439 = vunpack.c.l.b16 %v101
  %v440 = vunpack.c.h.b16 %v101
  %v441 = vunpack.c.l.b16 %v102
  %v442 = vunpack.c.h.b16 %v102
  %v443 = vunpack.c.l.b16 %v103
  %v444 = vunpack.c.h.b16 %v103
  %v445 = vunpack.c.l.b16 %v104
  %v446 = vunpack.c.h.b16 %v104
  %v447 = vunpack.c.l.b16 %v105
  %v448 = vunpack.c.h.b16 %v105
  %v449 = vunpack.c.l.b16 %v106
  %v450 = vunpack.c.h.b16 %v106
  %v451 = vunpack.c.l.b16 %v107
  %v452 = vunpack.c.h.b16 %v107
  %v453 = vunpack.c.l.b16 %v108
  %v454 = vunpack.c.h.b16 %v108
  %v455 = vunpack.c.l.b16 %v109
  %v456 = vunpack.c.h.b16 %v109
  %v457 = vunpack.c.l.b16 %v110
  %v458 = vunpack.c.h.b16 %v110
  %v459 = vunpack.c.l.b16 %v111
  %v460 = vunpack.c.h.b16 %v111
  %v461 = vunpack.c.l.b16 %v112
  %v462 = vunpack.c.h.b16 %v112
  %v463 = vunpack.c.l.b16 %v113
  %v464 = vunpack.c.h.b16 %v113
  %v465 = vunpack.c.l.b16 %v114
  %v466 = vunpack.c.h.b16 %v114
  %v467 = vunpack.c.l.b16 %v115
  %v468 = vunpack.c.h.b16 %v115
  %v469 = vunpack.c.l.b16 %v116
  %v470 = vunpack.c.h.b16 %v116
  %v471 = vunpack.c.l.b16 %v117
  %v472 = vunpack.c.h.b16 %v117
  %v473 = vunpack.c.l.b16 %v118
  %v474 = vunpack.c.h.b16 %v118
  %v475 = vunpack.c.l.b16 %v119
  %v476 = vunpack.c.h.b16 %v119
  %v477 = vunpack.c.l.b16 %v120
  %v478 = vunpack.c.h.b16 %v120
  %v479 = vunpack.c.l.b16 %v121
  %v480 = vunpack.c.h.b16 %v121
  %v481 = vunpack.c.l.b16 %v122
  %v482 = vunpack.c.h.b16 %v122
  %v483 = vunpack.c.l.b16 %v123
  %v484 = vunpack.c.h.b16 %v123
  %v485 = vunpack.c.l.b16 %v124
  %v486 = vunpack.c.h.b16 %v124
  %v487 = vunpack.c.l.b16 %v125
  %v488 = vunpack.c.h.b16 %v125
  %v489 = vunpack.c.l.b16 %v126
  %v490 = vunpack.c.h.b16 %v126
  %v491 = vunpack.c.l.b16 %v127
  %v492 = vunpack.c.h.b16 %v127
  %v493 = vunpack.c.l.b16 %v128
  %v494 = vunpack.c.h.b16 %v128
  %v495 = vunpack.c.l.b16 %v129
  %v496 = vunpack.c.h.b16 %v129
  %v497 = vunpack.c.l.b16 %v130
  %v498 = vunpack.c.h.b16 %v130
  %v499 = vunpack.c.l.b16 %v131
  %v500 = vunpack.c.h.b16 %v131
  %v501 = vunpack.c.l.b16 %v132
  %v502 = vunpack.c.h.b16 %v132
  %v503 = vunpack.c.l.b16 %v133
  %v504 = vunpack.c.h.b16 %v133
  %v505 = vunpack.c.l.b16 %v134
  %v506 = vunpack.c.h.b16 %v134
  %v507 = vunpack.c.l.b16 %v135
  %v508 = vunpack.c.h.b16 %v135
  %v509 = vunpack.c.l.b16 %v136
  %v510 = vunpack.c.h.b16 %v136
  %v511 = vunpack.c.l.b16 %v137
  %v512 = vunpack.c.h.b16 %v137
  %v513 = vunpack.c.l.b16 %v138
  %v514 = vunpack.c.h.b16 %v138
  %v515 = vunpack.c.l.b16 %v139
  %v516 = vunpack.c.h.b16 %v139
  %v517 = vunpack.c.l.b16 %v140
  %v518 = vunpack.c.h.b16 %v140
  %v519 = vunpack.c.l.b16 %v141
  %v520 = vunpack.c.h.b16 %v141
  %v521 = vunpack.c.l.b16 %v142
  %v522 = vunpack.c.h.b16 %v142
  %v523 = vunpack.c.l.b16 %v143
  %v524 = vunpack.c.h.b16 %v143
  %v525 = vunpack.c.l.b16 %v144
  %v526 = vunpack.c.h.b16 %v144
  %v527 = vunpack.c.l.b16 %v145
  %v528 = vunpack.c.h.b16 %v145
  %v529 = vunpack.c.l.b16 %v146
  %v530 = vunpack.c.h.b16 %v146
  %v531 = vpack.c.b16 %v283, %v275
  %v532 = vpack.c.b16 %v284, %v276
  %v533 = vpack.c.b16 %v285, %v277
  %v534 = vpack.c.b16 %v286, %v278
  %v535 = vpack.c.b16 %v287, %v279
  %v536 = vpack.c.b16 %v288, %v280
  %v537 = vpack.c.b16 %v289, %v281
  %v538 = vpack.c.b16 %v290, %v282
  %v539 = vpack.c.b16 %v299, %v291
  %v540 = vpack.c.b16 %v300, %v292
  %v541 = vpack.c.b16 %v301, %v293
  %v542 = vpack.c.b16 %v302, %v294
  %v543 = vpack.c.b16 %v303, %v295
  %v544 = vpack.c.b16 %v304, %v296
  %v545 = vpack.c.b16 %v305, %v297
  %v546 = vpack.c.b16 %v306, %v298
  %v547 = vpack.c.b16 %v315, %v307
  %v548 = vpack.c.b16 %v316, %v308
  %v549 = vpack.c.b16 %v317, %v309
  %v550 = vpack.c.b16 %v318, %v310
  %v551 = vpack.c.b16 %v319, %v311
  %v552 = vpack.c.b16 %v320, %v312
  %v553 = vpack.c.b16 %v321, %v313
  %v554 = vpack.c.b16 %v322, %v314
  %v555 = vpack.c.b16 %v331, %v323
  %v556 = vpack.c.b16 %v332, %v324
  %v557 = vpack.c.b16 %v333, %v325
  %v558 = vpack.c.b16 %v334, %v326
  %v559 = vpack.c.b16 %v335, %v327
  %v560 = vpack.c.b16 %v336, %v328
  %v561 = vpack.c.b16 %v337, %v329
  %v562 = vpack.c.b16 %v338, %v330
  %v563 = vpack.c.b16 %v347, %v339
  %v564 = vpack.c.b16 %v348, %v340
  %v565 = vpack.c.b16 %v349, %v341
  %v566 = vpack.c.b16 %v350, %v342
  %v567 = vpack.c.b16 %v351, %v343
  %v568 = vpack.c.b16 %v352, %v344
  %v569 = vpack.c.b16 %v353, %v345
  %v570 = vpack.c.b16 %v354, %v346
  %v571 = vpack.c.b16 %v363, %v355
  %v572 = vpack.c.b16 %v364, %v356
  %v573 = vpack.c.b16 %v365, %v357
  %v574 = vpack.c.b16 %v366, %v358
  %v575 = vpack.c.b16 %v367, %v359
  %v576 = vpack.c.b16 %v368, %v360
  %v577 = vpack.c.b16 %v369, %v361
  %v578 = vpack.c.b16 %v370, %v362
  %v579 = vpack.c.b16 %v379, %v371
  %v580 = vpack.c.b16 %v380, %v372
  %v581 = vpack.c.b16 %v381, %v373
  %v582 = vpack.c.b16 %v382, %v374
  %v583 = vpack.c.b16 %v383, %v375
  %v584 = vpack.c.b16 %v384, %v376
  %v585 = vpack.c.b16 %v385, %v377
  %v586 = vpack.c.b16 %v386, %v378
  %v587 = vpack.c.b16 %v395, %v387
  %v588 = vpack.c.b16 %v396, %v388
  %v589 = vpack.c.b16 %v397, %v389
  %v590 = vpack.c.b16 %v398, %v390
  %v591 = vpack.c.b16 %v399, %v391
  %v592 = vpack.c.b16 %v400, %v392
  %v593 = vpack.c.b16 %v401, %v393
  %v594 = vpack.c.b16 %v402, %v394
  %v595 = vpack.c.b16 %v411, %v403
  %v596 = vpack.c.b16 %v412, %v404
  %v597 = vpack.c.b16 %v413, %v405
  %v598 = vpack.c.b16 %v414, %v406
  %v599 = vpack.c.b16 %v415, %v407
  %v600 = vpack.c.b16 %v416, %v408
  %v601 = vpack.c.b16 %v417, %v409
  %v602 = vpack.c.b16 %v418, %v410
  %v603 = vpack.c.b16 %v427, %v419
  %v604 = vpack.c.b16 %v428, %v420
  %v605 = vpack.c.b16 %v429, %v421
  %v606 = vpack.c.b16 %v430, %v422
  %v607 = vpack.c.b16 %v431, %v423
  %v608 = vpack.c.b16 %v432, %v424
  %v609 = vpack.c.b16 %v433, %v425
  %v610 = vpack.c.b16 %v434, %v426
  %v611 = vpack.c.b16 %v443, %v435
  %v612 = vpack.c.b16 %v444, %v436
  %v613 = vpack.c.b16 %v445, %v437
  %v614 = vpack.c.b16 %v446, %v438
  %v615 = vpack.c.b16 %v447, %v439
  %v616 = vpack.c.b16 %v448, %v440
  %v617 = vpack.c.b16 %v449, %v441
  %v618 = vpack.c.b16 %v450, %v442
  %v619 = vpack.c.b16 %v459, %v451
  %v620 = vpack.c.b16 %v460, %v452
  %v621 = vpack.c.b16 %v461, %v453
  %v622 = vpack.c.b16 %v462, %v454
  %v623 = vpack.c.b16 %v463, %v455
  %v624 = vpack.c.b16 %v464, %v456
  %v625 = vpack.c.b16 %v465, %v457
  %v626 = vpack.c.b16 %v466, %v458
  %v627 = vpack.c.b16 %v475, %v467
  %v628 = vpack.c.b16 %v476, %v468
  %v629 = vpack.c.b16 %v477, %v469
  %v630 = vpack.c.b16 %v478, %v470
  %v631 = vpack.c.b16 %v479, %v471
  %v632 = vpack.c.b16 %v480, %v472
  %v633 = vpack.c.b16 %v481, %v473
  %v634 = vpack.c.b16 %v482, %v474
  %v635 = vpack.c.b16 %v491, %v483
  %v636 = vpack.c.b16 %v492, %v484
  %v637 = vpack.c.b16 %v493, %v485
  %v638 = vpack.c.b16 %v494, %v486
  %v639 = vpack.c.b16 %v495, %v487
  %v640 = vpack.c.b16 %v496, %v488
  %v641 = vpack.c.b16 %v497, %v489
  %v642 = vpack.c.b16 %v498, %v490
  %v643 = vpack.c.b16 %v507, %v499
  %v644 = vpack.c.b16 %v508, %v500
  %v645 = vpack.c.b16 %v509, %v501
  %v646 = vpack.c.b16 %v510, %v502
  %v647 = vpack.c.b16 %v511, %v503
  %v648 = vpack.c.b16 %v512, %v504
  %v649 = vpack.c.b16 %v513, %v505
  %v650 = vpack.c.b16 %v514, %v506
  %v651 = vpack.c.b16 %v523, %v515
  %v652 = vpack.c.b16 %v524, %v516
  %v653 = vpack.c.b16 %v525, %v517
  %v654 = vpack.c.b16 %v526, %v518
  %v655 = vpack.c.b16 %v527, %v519
  %v656 = vpack.c.b16 %v528, %v520
  %v657 = vpack.c.b16 %v529, %v521
  %v658 = vpack.c.b16 %v530, %v522
  %787 = vmatpush.bf16.msra.mxu0 %v587
  %788 = vmatpush.bf16.msra.mxu0 %v579
  %789 = vmatpush.bf16.msra.mxu0 %v571
  %790 = vmatpush.bf16.msra.mxu0 %v563
  %791 = vmatpush.bf16.msra.mxu0 %v555
  %792 = vmatpush.bf16.msra.mxu0 %v547
  %793 = vmatpush.bf16.msra.mxu0 %v539
  %794 = vmatpush.bf16.msra.mxu0 %v531
  %795 = vmatmul.bf16.gmra.mxu0 0
  %v796 = vpop.f32.mrf.mxu0
  %v797 = vadd.f32 0.0, %v796
  %v798 = vpop.f32.mrf.mxu0
  %799 = vdwg.mxu0
  %800 = vmatpush.bf16.msra.mxu0 %v651
  %801 = vmatpush.bf16.msra.mxu0 %v643
  %802 = vmatpush.bf16.msra.mxu0 %v635
  %803 = vmatpush.bf16.msra.mxu0 %v627
  %804 = vmatpush.bf16.msra.mxu0 %v619
  %805 = vmatpush.bf16.msra.mxu0 %v611
  %806 = vmatpush.bf16.msra.mxu0 %v603
  %807 = vmatpush.bf16.msra.mxu0 %v595
  %808 = vmatmul.bf16.gmra.mxu0 0
  %v809 = vpop.f32.mrf.mxu0
  %v810 = vadd.f32 %v797, %v809
  %v811 = vpop.f32.mrf.mxu0
  %812 = vdwg.mxu0
  %813 = vmatpush.bf16.msra.mxu0 %v588
  %814 = vmatpush.bf16.msra.mxu0 %v580
  %815 = vmatpush.bf16.msra.mxu0 %v572
  %816 = vmatpush.bf16.msra.mxu0 %v564
  %817 = vmatpush.bf16.msra.mxu0 %v556
  %818 = vmatpush.bf16.msra.mxu0 %v548
  %819 = vmatpush.bf16.msra.mxu0 %v540
  %820 = vmatpush.bf16.msra.mxu0 %v532
  %821 = vmatmul.bf16.gmra.mxu0 0
  %v822 = vpop.f32.mrf.mxu0
  %v823 = vadd.f32 0.0, %v822
  %v824 = vpop.f32.mrf.mxu0
  %825 = vdwg.mxu0
  %826 = vmatpush.bf16.msra.mxu0 %v652
  %827 = vmatpush.bf16.msra.mxu0 %v644
  %828 = vmatpush.bf16.msra.mxu0 %v636
  %829 = vmatpush.bf16.msra.mxu0 %v628
  %830 = vmatpush.bf16.msra.mxu0 %v620
  %831 = vmatpush.bf16.msra.mxu0 %v612
  %832 = vmatpush.bf16.msra.mxu0 %v604
  %833 = vmatpush.bf16.msra.mxu0 %v596
  %834 = vmatmul.bf16.gmra.mxu0 0
  %v835 = vpop.f32.mrf.mxu0
  %v836 = vadd.f32 %v823, %v835
  %v837 = vpop.f32.mrf.mxu0
  %838 = vdwg.mxu0
  %839 = vmatpush.bf16.msra.mxu0 %v589
  %840 = vmatpush.bf16.msra.mxu0 %v581
  %841 = vmatpush.bf16.msra.mxu0 %v573
  %842 = vmatpush.bf16.msra.mxu0 %v565
  %843 = vmatpush.bf16.msra.mxu0 %v557
  %844 = vmatpush.bf16.msra.mxu0 %v549
  %845 = vmatpush.bf16.msra.mxu0 %v541
  %846 = vmatpush.bf16.msra.mxu0 %v533
  %847 = vmatmul.bf16.gmra.mxu0 0
  %v848 = vpop.f32.mrf.mxu0
  %v849 = vadd.f32 0.0, %v848
  %v850 = vpop.f32.mrf.mxu0
  %851 = vdwg.mxu0
  %852 = vmatpush.bf16.msra.mxu0 %v653
  %853 = vmatpush.bf16.msra.mxu0 %v645
  %854 = vmatpush.bf16.msra.mxu0 %v637
  %855 = vmatpush.bf16.msra.mxu0 %v629
  %856 = vmatpush.bf16.msra.mxu0 %v621
  %857 = vmatpush.bf16.msra.mxu0 %v613
  %858 = vmatpush.bf16.msra.mxu0 %v605
  %859 = vmatpush.bf16.msra.mxu0 %v597
  %860 = vmatmul.bf16.gmra.mxu0 0
  %v861 = vpop.f32.mrf.mxu0
  %v862 = vadd.f32 %v849, %v861
  %v863 = vpop.f32.mrf.mxu0
  %864 = vdwg.mxu0
  %865 = vmatpush.bf16.msra.mxu0 %v590
  %866 = vmatpush.bf16.msra.mxu0 %v582
  %867 = vmatpush.bf16.msra.mxu0 %v574
  %868 = vmatpush.bf16.msra.mxu0 %v566
  %869 = vmatpush.bf16.msra.mxu0 %v558
  %870 = vmatpush.bf16.msra.mxu0 %v550
  %871 = vmatpush.bf16.msra.mxu0 %v542
  %872 = vmatpush.bf16.msra.mxu0 %v534
  %873 = vmatmul.bf16.gmra.mxu0 0
  %v874 = vpop.f32.mrf.mxu0
  %v875 = vadd.f32 0.0, %v874
  %v876 = vpop.f32.mrf.mxu0
  %877 = vdwg.mxu0
  %878 = vmatpush.bf16.msra.mxu0 %v654
  %879 = vmatpush.bf16.msra.mxu0 %v646
  %880 = vmatpush.bf16.msra.mxu0 %v638
  %881 = vmatpush.bf16.msra.mxu0 %v630
  %882 = vmatpush.bf16.msra.mxu0 %v622
  %883 = vmatpush.bf16.msra.mxu0 %v614
  %884 = vmatpush.bf16.msra.mxu0 %v606
  %885 = vmatpush.bf16.msra.mxu0 %v598
  %886 = vmatmul.bf16.gmra.mxu0 0
  %v887 = vpop.f32.mrf.mxu0
  %v888 = vadd.f32 %v875, %v887
  %v889 = vpop.f32.mrf.mxu0
  %890 = vdwg.mxu0
  %891 = vmatpush.bf16.msra.mxu0 %v591
  %892 = vmatpush.bf16.msra.mxu0 %v583
  %893 = vmatpush.bf16.msra.mxu0 %v575
  %894 = vmatpush.bf16.msra.mxu0 %v567
  %895 = vmatpush.bf16.msra.mxu0 %v559
  %896 = vmatpush.bf16.msra.mxu0 %v551
  %897 = vmatpush.bf16.msra.mxu0 %v543
  %898 = vmatpush.bf16.msra.mxu0 %v535
  %899 = vmatmul.bf16.gmra.mxu0 0
  %v900 = vpop.f32.mrf.mxu0
  %v901 = vadd.f32 0.0, %v900
  %v902 = vpop.f32.mrf.mxu0
  %903 = vdwg.mxu0
  %904 = vmatpush.bf16.msra.mxu0 %v655
  %905 = vmatpush.bf16.msra.mxu0 %v647
  %906 = vmatpush.bf16.msra.mxu0 %v639
  %907 = vmatpush.bf16.msra.mxu0 %v631
  %908 = vmatpush.bf16.msra.mxu0 %v623
  %909 = vmatpush.bf16.msra.mxu0 %v615
  %910 = vmatpush.bf16.msra.mxu0 %v607
  %911 = vmatpush.bf16.msra.mxu0 %v599
  %912 = vmatmul.bf16.gmra.mxu0 0
  %v913 = vpop.f32.mrf.mxu0
  %v914 = vadd.f32 %v901, %v913
  %v915 = vpop.f32.mrf.mxu0
  %916 = vdwg.mxu0
  %917 = vmatpush.bf16.msra.mxu0 %v592
  %918 = vmatpush.bf16.msra.mxu0 %v584
  %919 = vmatpush.bf16.msra.mxu0 %v576
  %920 = vmatpush.bf16.msra.mxu0 %v568
  %921 = vmatpush.bf16.msra.mxu0 %v560
  %922 = vmatpush.bf16.msra.mxu0 %v552
  %923 = vmatpush.bf16.msra.mxu0 %v544
  %924 = vmatpush.bf16.msra.mxu0 %v536
  %925 = vmatmul.bf16.gmra.mxu0 0
  %v926 = vpop.f32.mrf.mxu0
  %v927 = vadd.f32 0.0, %v926
  %v928 = vpop.f32.mrf.mxu0
  %929 = vdwg.mxu0
  %930 = vmatpush.bf16.msra.mxu0 %v656
  %931 = vmatpush.bf16.msra.mxu0 %v648
  %932 = vmatpush.bf16.msra.mxu0 %v640
  %933 = vmatpush.bf16.msra.mxu0 %v632
  %934 = vmatpush.bf16.msra.mxu0 %v624
  %935 = vmatpush.bf16.msra.mxu0 %v616
  %936 = vmatpush.bf16.msra.mxu0 %v608
  %937 = vmatpush.bf16.msra.mxu0 %v600
  %938 = vmatmul.bf16.gmra.mxu0 0
  %v939 = vpop.f32.mrf.mxu0
  %v940 = vadd.f32 %v927, %v939
  %v941 = vpop.f32.mrf.mxu0
  %942 = vdwg.mxu0
  %943 = vmatpush.bf16.msra.mxu0 %v593
  %944 = vmatpush.bf16.msra.mxu0 %v585
  %945 = vmatpush.bf16.msra.mxu0 %v577
  %946 = vmatpush.bf16.msra.mxu0 %v569
  %947 = vmatpush.bf16.msra.mxu0 %v561
  %948 = vmatpush.bf16.msra.mxu0 %v553
  %949 = vmatpush.bf16.msra.mxu0 %v545
  %950 = vmatpush.bf16.msra.mxu0 %v537
  %951 = vmatmul.bf16.gmra.mxu0 0
  %v952 = vpop.f32.mrf.mxu0
  %v953 = vadd.f32 0.0, %v952
  %v954 = vpop.f32.mrf.mxu0
  %955 = vdwg.mxu0
  %956 = vmatpush.bf16.msra.mxu0 %v657
  %957 = vmatpush.bf16.msra.mxu0 %v649
  %958 = vmatpush.bf16.msra.mxu0 %v641
  %959 = vmatpush.bf16.msra.mxu0 %v633
  %960 = vmatpush.bf16.msra.mxu0 %v625
  %961 = vmatpush.bf16.msra.mxu0 %v617
  %962 = vmatpush.bf16.msra.mxu0 %v609
  %963 = vmatpush.bf16.msra.mxu0 %v601
  %964 = vmatmul.bf16.gmra.mxu0 0
  %v965 = vpop.f32.mrf.mxu0
  %v966 = vadd.f32 %v953, %v965
  %v967 = vpop.f32.mrf.mxu0
  %968 = vdwg.mxu0
  %969 = vmatpush.bf16.msra.mxu0 %v594
  %970 = vmatpush.bf16.msra.mxu0 %v586
  %971 = vmatpush.bf16.msra.mxu0 %v578
  %972 = vmatpush.bf16.msra.mxu0 %v570
  %973 = vmatpush.bf16.msra.mxu0 %v562
  %974 = vmatpush.bf16.msra.mxu0 %v554
  %975 = vmatpush.bf16.msra.mxu0 %v546
  %976 = vmatpush.bf16.msra.mxu0 %v538
  %977 = vmatmul.bf16.gmra.mxu0 0
  %v978 = vpop.f32.mrf.mxu0
  %v979 = vadd.f32 0.0, %v978
  %v980 = vpop.f32.mrf.mxu0
  %981 = vdwg.mxu0
  %982 = vmatpush.bf16.msra.mxu0 %v658
  %983 = vmatpush.bf16.msra.mxu0 %v650
  %984 = vmatpush.bf16.msra.mxu0 %v642
  %985 = vmatpush.bf16.msra.mxu0 %v634
  %986 = vmatpush.bf16.msra.mxu0 %v626
  %987 = vmatpush.bf16.msra.mxu0 %v618
  %988 = vmatpush.bf16.msra.mxu0 %v610
  %989 = vmatpush.bf16.msra.mxu0 %v602
  %990 = vmatmul.bf16.gmra.mxu0 0
  %v991 = vpop.f32.mrf.mxu0
  %v992 = vadd.f32 %v979, %v991
  %v993 = vpop.f32.mrf.mxu0
  %994 = vdwg.mxu0
  %v1003 = vrot.slane %v836, 4
  %v1004 = vrot.slane %v888, 4
  %v1005 = vrot.slane %v940, 4
  %v1006 = vrot.slane %v992, 4
  %vm1007 = vcmask 1043456
  %v1008 = vsel %vm1007, %v810, %v1003
  %v1009 = vsel %vm1007, %v862, %v1004
  %v1010 = vsel %vm1007, %v914, %v1005
  %v1011 = vsel %vm1007, %v966, %v1006
  %v1016 = vadd.f32 %v15, %v1008
  %v1017 = vadd.f32 %v16, %v1009
  %v1018 = vadd.f32 %v17, %v1010
  %v1019 = vadd.f32 %v18, %v1011
  %v1020 = vxor.u32 %v1016, 2147483648
  %v1021 = vmul.f32 %v1020, 1.442695
  %v1022 = vpow.pop %v1021
  %v1023 = vadd.f32 %v1022, 1.0
  %v1024 = vrcp.pop %v1023
  %v1025 = vmul.f32 %v1023, %v1024
  %v1026 = vsub.f32 1.0, %v1025
  %v1027 = vmul.f32 %v1024, %v1026
  %v1028 = vadd.f32 %v1024, %v1027
  %vm1029 = vweird.f32 %v1023
  %vm1030 = vweird.f32 %v1024
  %vm1031 = vmor %vm1029, %vm1030
  %v1032 = vsel %vm1031, %v1024, %v1028
  %v1033 = vand.u32 2147483647, %v1023
  %vm1034 = vcmp.eq.f32.partialorder %v1033, 8.507059e+37
  %v1035 = vand.u32 %v1023, 2147483648
  %v1036 = vor.u32 1.1754944e-38, %v1035
  %v1037 = vsel %vm1034, %v1036, %v1032
  %v1038 = vmul.f32 1.0, %v1037
  %v1039 = vxor.u32 %v1017, 2147483648
  %v1040 = vmul.f32 %v1039, 1.442695
  %v1041 = vpow.pop %v1040
  %v1042 = vadd.f32 %v1041, 1.0
  %v1043 = vrcp.pop %v1042
  %v1044 = vmul.f32 %v1042, %v1043
  %v1045 = vsub.f32 1.0, %v1044
  %v1046 = vmul.f32 %v1043, %v1045
  %v1047 = vadd.f32 %v1043, %v1046
  %vm1048 = vweird.f32 %v1042
  %vm1049 = vweird.f32 %v1043
  %vm1050 = vmor %vm1048, %vm1049
  %v1051 = vsel %vm1050, %v1043, %v1047
  %v1052 = vand.u32 2147483647, %v1042
  %vm1053 = vcmp.eq.f32.partialorder %v1052, 8.507059e+37
  %v1054 = vand.u32 %v1042, 2147483648
  %v1055 = vor.u32 1.1754944e-38, %v1054
  %v1056 = vsel %vm1053, %v1055, %v1051
  %v1057 = vmul.f32 1.0, %v1056
  %v1058 = vtanh.pop %v1018
  %v1059 = vxor.u32 %v1019, 2147483648
  %v1060 = vmul.f32 %v1059, 1.442695
  %v1061 = vpow.pop %v1060
  %v1062 = vadd.f32 %v1061, 1.0
  %v1063 = vrcp.pop %v1062
  %v1064 = vmul.f32 %v1062, %v1063
  %v1065 = vsub.f32 1.0, %v1064
  %v1066 = vmul.f32 %v1063, %v1065
  %v1067 = vadd.f32 %v1063, %v1066
  %vm1068 = vweird.f32 %v1062
  %vm1069 = vweird.f32 %v1063
  %vm1070 = vmor %vm1068, %vm1069
  %v1071 = vsel %vm1070, %v1063, %v1067
  %v1072 = vand.u32 2147483647, %v1062
  %vm1073 = vcmp.eq.f32.partialorder %v1072, 8.507059e+37
  %v1074 = vand.u32 %v1062, 2147483648
  %v1075 = vor.u32 1.1754944e-38, %v1074
  %v1076 = vsel %vm1073, %v1075, %v1071
  %v1077 = vmul.f32 1.0, %v1076
  %v1078 = vmul.f32 %v1057, 0.0
  %v1079 = vmul.f32 %v1038, %v1058
  %v1080 = vadd.f32 %v1078, %v1079
  %v1081 = vtanh.pop %v1080
  %v1082 = vmul.f32 %v1077, %v1081
  %v1083 = vld [vmem:[%s2] sm:$0xff]
  %vm1084 = vcmp.gt.f32.partialorder %v1083, 0.0
  %v1085 = vsel %vm1084, %v1080, 0.0
  %v1086 = vsel %vm1084, %v1082, 0.0
  %1087 = vst [vmem:[%s3] sm:$0xf] %v1086
  %v1089 = vrot.slane %v1086, 4
  %s1091 = scalar_lea.vmem %s3, 56
  %1092 = vst [vmem:[%s1091 + $0x4] sm:$0xf] %v1089
  %s1093 = scalar_lea.vmem %s0, 32
  %v1094 = vld [vmem:[%s1093] sm:$0xff]
  %v1095 = vld [vmem:[%s1093 + $0x8] sm:$0xff]
  %v1096 = vld [vmem:[%s1093 + $0x10] sm:$0xff]
  %v1097 = vld [vmem:[%s1093 + $0x18] sm:$0xff]
  %1098 = vst [vmem:[#allocation1] ss:$2 sm:$0xff] %v1086
  %v1099 = vld.sshfl [vmem:[#allocation1] sm:$0xff pattern:$0x75316420]
  %v1100 = vld.sshfl [vmem:[#allocation1 + $0x8] sm:$0xff pattern:$0x75316420]
  %v1103 = vpack.c.bf16 %v1099, %v1099
  %v1104 = vpack.c.bf16 %v1100, %v1100
  %v1105 = vld [vmem:[%s1] sm:$0xff]
  %v1106 = vld [vmem:[%s1 + $0x8] sm:$0xff]
  %v1107 = vld [vmem:[%s1 + $0x10] sm:$0xff]
  %v1108 = vld [vmem:[%s1 + $0x18] sm:$0xff]
  %v1109 = vld [vmem:[%s1 + $0x20] sm:$0xff]
  %v1110 = vld [vmem:[%s1 + $0x28] sm:$0xff]
  %v1111 = vld [vmem:[%s1 + $0x30] sm:$0xff]
  %v1112 = vld [vmem:[%s1 + $0x38] sm:$0xff]
  %v1113 = vld [vmem:[%s1 + $0x40] sm:$0xff]
  %v1114 = vld [vmem:[%s1 + $0x48] sm:$0xff]
  %v1115 = vld [vmem:[%s1 + $0x50] sm:$0xff]
  %v1116 = vld [vmem:[%s1 + $0x58] sm:$0xff]
  %v1117 = vld [vmem:[%s1 + $0x60] sm:$0xff]
  %v1118 = vld [vmem:[%s1 + $0x68] sm:$0xff]
  %v1119 = vld [vmem:[%s1 + $0x70] sm:$0xff]
  %v1120 = vld [vmem:[%s1 + $0x78] sm:$0xff]
  %v1121 = vld [vmem:[%s1 + $0x80] sm:$0xff]
  %v1122 = vld [vmem:[%s1 + $0x88] sm:$0xff]
  %v1123 = vld [vmem:[%s1 + $0x90] sm:$0xff]
  %v1124 = vld [vmem:[%s1 + $0x98] sm:$0xff]
  %v1125 = vld [vmem:[%s1 + $0xa0] sm:$0xff]
  %v1126 = vld [vmem:[%s1 + $0xa8] sm:$0xff]
  %v1127 = vld [vmem:[%s1 + $0xb0] sm:$0xff]
  %v1128 = vld [vmem:[%s1 + $0xb8] sm:$0xff]
  %v1129 = vld [vmem:[%s1 + $0xc0] sm:$0xff]
  %v1130 = vld [vmem:[%s1 + $0xc8] sm:$0xff]
  %v1131 = vld [vmem:[%s1 + $0xd0] sm:$0xff]
  %v1132 = vld [vmem:[%s1 + $0xd8] sm:$0xff]
  %v1133 = vld [vmem:[%s1 + $0xe0] sm:$0xff]
  %v1134 = vld [vmem:[%s1 + $0xe8] sm:$0xff]
  %v1135 = vld [vmem:[%s1 + $0xf0] sm:$0xff]
  %v1136 = vld [vmem:[%s1 + $0xf8] sm:$0xff]
  %v1137 = vld [vmem:[%s1 + $0x100] sm:$0xff]
  %v1138 = vld [vmem:[%s1 + $0x108] sm:$0xff]
  %v1139 = vld [vmem:[%s1 + $0x110] sm:$0xff]
  %v1140 = vld [vmem:[%s1 + $0x118] sm:$0xff]
  %v1141 = vld [vmem:[%s1 + $0x120] sm:$0xff]
  %v1142 = vld [vmem:[%s1 + $0x128] sm:$0xff]
  %v1143 = vld [vmem:[%s1 + $0x130] sm:$0xff]
  %v1144 = vld [vmem:[%s1 + $0x138] sm:$0xff]
  %v1145 = vld [vmem:[%s1 + $0x140] sm:$0xff]
  %v1146 = vld [vmem:[%s1 + $0x148] sm:$0xff]
  %v1147 = vld [vmem:[%s1 + $0x150] sm:$0xff]
  %v1148 = vld [vmem:[%s1 + $0x158] sm:$0xff]
  %v1149 = vld [vmem:[%s1 + $0x160] sm:$0xff]
  %v1150 = vld [vmem:[%s1 + $0x168] sm:$0xff]
  %v1151 = vld [vmem:[%s1 + $0x170] sm:$0xff]
  %v1152 = vld [vmem:[%s1 + $0x178] sm:$0xff]
  %v1153 = vld [vmem:[%s1 + $0x180] sm:$0xff]
  %v1154 = vld [vmem:[%s1 + $0x188] sm:$0xff]
  %v1155 = vld [vmem:[%s1 + $0x190] sm:$0xff]
  %v1156 = vld [vmem:[%s1 + $0x198] sm:$0xff]
  %v1157 = vld [vmem:[%s1 + $0x1a0] sm:$0xff]
  %v1158 = vld [vmem:[%s1 + $0x1a8] sm:$0xff]
  %v1159 = vld [vmem:[%s1 + $0x1b0] sm:$0xff]
  %v1160 = vld [vmem:[%s1 + $0x1b8] sm:$0xff]
  %v1161 = vld [vmem:[%s1 + $0x1c0] sm:$0xff]
  %v1162 = vld [vmem:[%s1 + $0x1c8] sm:$0xff]
  %v1163 = vld [vmem:[%s1 + $0x1d0] sm:$0xff]
  %v1164 = vld [vmem:[%s1 + $0x1d8] sm:$0xff]
  %v1165 = vld [vmem:[%s1 + $0x1e0] sm:$0xff]
  %v1166 = vld [vmem:[%s1 + $0x1e8] sm:$0xff]
  %v1167 = vld [vmem:[%s1 + $0x1f0] sm:$0xff]
  %v1168 = vld [vmem:[%s1 + $0x1f8] sm:$0xff]
  %v1169 = vld [vmem:[%s1 + $0x200] sm:$0xff]
  %v1170 = vld [vmem:[%s1 + $0x208] sm:$0xff]
  %v1171 = vld [vmem:[%s1 + $0x210] sm:$0xff]
  %v1172 = vld [vmem:[%s1 + $0x218] sm:$0xff]
  %v1173 = vld [vmem:[%s1 + $0x220] sm:$0xff]
  %v1174 = vld [vmem:[%s1 + $0x228] sm:$0xff]
  %v1175 = vld [vmem:[%s1 + $0x230] sm:$0xff]
  %v1176 = vld [vmem:[%s1 + $0x238] sm:$0xff]
  %v1177 = vld [vmem:[%s1 + $0x240] sm:$0xff]
  %v1178 = vld [vmem:[%s1 + $0x248] sm:$0xff]
  %v1179 = vld [vmem:[%s1 + $0x250] sm:$0xff]
  %v1180 = vld [vmem:[%s1 + $0x258] sm:$0xff]
  %v1181 = vld [vmem:[%s1 + $0x260] sm:$0xff]
  %v1182 = vld [vmem:[%s1 + $0x268] sm:$0xff]
  %v1183 = vld [vmem:[%s1 + $0x270] sm:$0xff]
  %v1184 = vld [vmem:[%s1 + $0x278] sm:$0xff]
  %v1185 = vld [vmem:[%s1 + $0x280] sm:$0xff]
  %v1186 = vld [vmem:[%s1 + $0x288] sm:$0xff]
  %v1187 = vld [vmem:[%s1 + $0x290] sm:$0xff]
  %v1188 = vld [vmem:[%s1 + $0x298] sm:$0xff]
  %v1189 = vld [vmem:[%s1 + $0x2a0] sm:$0xff]
  %v1190 = vld [vmem:[%s1 + $0x2a8] sm:$0xff]
  %v1191 = vld [vmem:[%s1 + $0x2b0] sm:$0xff]
  %v1192 = vld [vmem:[%s1 + $0x2b8] sm:$0xff]
  %v1193 = vld [vmem:[%s1 + $0x2c0] sm:$0xff]
  %v1194 = vld [vmem:[%s1 + $0x2c8] sm:$0xff]
  %v1195 = vld [vmem:[%s1 + $0x2d0] sm:$0xff]
  %v1196 = vld [vmem:[%s1 + $0x2d8] sm:$0xff]
  %v1197 = vld [vmem:[%s1 + $0x2e0] sm:$0xff]
  %v1198 = vld [vmem:[%s1 + $0x2e8] sm:$0xff]
  %v1199 = vld [vmem:[%s1 + $0x2f0] sm:$0xff]
  %v1200 = vld [vmem:[%s1 + $0x2f8] sm:$0xff]
  %v1201 = vld [vmem:[%s1 + $0x300] sm:$0xff]
  %v1202 = vld [vmem:[%s1 + $0x308] sm:$0xff]
  %v1203 = vld [vmem:[%s1 + $0x310] sm:$0xff]
  %v1204 = vld [vmem:[%s1 + $0x318] sm:$0xff]
  %v1205 = vld [vmem:[%s1 + $0x320] sm:$0xff]
  %v1206 = vld [vmem:[%s1 + $0x328] sm:$0xff]
  %v1207 = vld [vmem:[%s1 + $0x330] sm:$0xff]
  %v1208 = vld [vmem:[%s1 + $0x338] sm:$0xff]
  %v1209 = vld [vmem:[%s1 + $0x340] sm:$0xff]
  %v1210 = vld [vmem:[%s1 + $0x348] sm:$0xff]
  %v1211 = vld [vmem:[%s1 + $0x350] sm:$0xff]
  %v1212 = vld [vmem:[%s1 + $0x358] sm:$0xff]
  %v1213 = vld [vmem:[%s1 + $0x360] sm:$0xff]
  %v1214 = vld [vmem:[%s1 + $0x368] sm:$0xff]
  %v1215 = vld [vmem:[%s1 + $0x370] sm:$0xff]
  %v1216 = vld [vmem:[%s1 + $0x378] sm:$0xff]
  %v1217 = vld [vmem:[%s1 + $0x380] sm:$0xff]
  %v1218 = vld [vmem:[%s1 + $0x388] sm:$0xff]
  %v1219 = vld [vmem:[%s1 + $0x390] sm:$0xff]
  %v1220 = vld [vmem:[%s1 + $0x398] sm:$0xff]
  %v1221 = vld [vmem:[%s1 + $0x3a0] sm:$0xff]
  %v1222 = vld [vmem:[%s1 + $0x3a8] sm:$0xff]
  %v1223 = vld [vmem:[%s1 + $0x3b0] sm:$0xff]
  %v1224 = vld [vmem:[%s1 + $0x3b8] sm:$0xff]
  %v1225 = vld [vmem:[%s1 + $0x3c0] sm:$0xff]
  %v1226 = vld [vmem:[%s1 + $0x3c8] sm:$0xff]
  %v1227 = vld [vmem:[%s1 + $0x3d0] sm:$0xff]
  %v1228 = vld [vmem:[%s1 + $0x3d8] sm:$0xff]
  %v1229 = vld [vmem:[%s1 + $0x3e0] sm:$0xff]
  %v1230 = vld [vmem:[%s1 + $0x3e8] sm:$0xff]
  %v1231 = vld [vmem:[%s1 + $0x3f0] sm:$0xff]
  %v1232 = vld [vmem:[%s1 + $0x3f8] sm:$0xff]
  %v1361 = vunpack.c.l.b16 %v1105
  %v1362 = vunpack.c.h.b16 %v1105
  %v1363 = vunpack.c.l.b16 %v1106
  %v1364 = vunpack.c.h.b16 %v1106
  %v1365 = vunpack.c.l.b16 %v1107
  %v1366 = vunpack.c.h.b16 %v1107
  %v1367 = vunpack.c.l.b16 %v1108
  %v1368 = vunpack.c.h.b16 %v1108
  %v1369 = vunpack.c.l.b16 %v1109
  %v1370 = vunpack.c.h.b16 %v1109
  %v1371 = vunpack.c.l.b16 %v1110
  %v1372 = vunpack.c.h.b16 %v1110
  %v1373 = vunpack.c.l.b16 %v1111
  %v1374 = vunpack.c.h.b16 %v1111
  %v1375 = vunpack.c.l.b16 %v1112
  %v1376 = vunpack.c.h.b16 %v1112
  %v1377 = vunpack.c.l.b16 %v1113
  %v1378 = vunpack.c.h.b16 %v1113
  %v1379 = vunpack.c.l.b16 %v1114
  %v1380 = vunpack.c.h.b16 %v1114
  %v1381 = vunpack.c.l.b16 %v1115
  %v1382 = vunpack.c.h.b16 %v1115
  %v1383 = vunpack.c.l.b16 %v1116
  %v1384 = vunpack.c.h.b16 %v1116
  %v1385 = vunpack.c.l.b16 %v1117
  %v1386 = vunpack.c.h.b16 %v1117
  %v1387 = vunpack.c.l.b16 %v1118
  %v1388 = vunpack.c.h.b16 %v1118
  %v1389 = vunpack.c.l.b16 %v1119
  %v1390 = vunpack.c.h.b16 %v1119
  %v1391 = vunpack.c.l.b16 %v1120
  %v1392 = vunpack.c.h.b16 %v1120
  %v1393 = vunpack.c.l.b16 %v1121
  %v1394 = vunpack.c.h.b16 %v1121
  %v1395 = vunpack.c.l.b16 %v1122
  %v1396 = vunpack.c.h.b16 %v1122
  %v1397 = vunpack.c.l.b16 %v1123
  %v1398 = vunpack.c.h.b16 %v1123
  %v1399 = vunpack.c.l.b16 %v1124
  %v1400 = vunpack.c.h.b16 %v1124
  %v1401 = vunpack.c.l.b16 %v1125
  %v1402 = vunpack.c.h.b16 %v1125
  %v1403 = vunpack.c.l.b16 %v1126
  %v1404 = vunpack.c.h.b16 %v1126
  %v1405 = vunpack.c.l.b16 %v1127
  %v1406 = vunpack.c.h.b16 %v1127
  %v1407 = vunpack.c.l.b16 %v1128
  %v1408 = vunpack.c.h.b16 %v1128
  %v1409 = vunpack.c.l.b16 %v1129
  %v1410 = vunpack.c.h.b16 %v1129
  %v1411 = vunpack.c.l.b16 %v1130
  %v1412 = vunpack.c.h.b16 %v1130
  %v1413 = vunpack.c.l.b16 %v1131
  %v1414 = vunpack.c.h.b16 %v1131
  %v1415 = vunpack.c.l.b16 %v1132
  %v1416 = vunpack.c.h.b16 %v1132
  %v1417 = vunpack.c.l.b16 %v1133
  %v1418 = vunpack.c.h.b16 %v1133
  %v1419 = vunpack.c.l.b16 %v1134
  %v1420 = vunpack.c.h.b16 %v1134
  %v1421 = vunpack.c.l.b16 %v1135
  %v1422 = vunpack.c.h.b16 %v1135
  %v1423 = vunpack.c.l.b16 %v1136
  %v1424 = vunpack.c.h.b16 %v1136
  %v1425 = vunpack.c.l.b16 %v1137
  %v1426 = vunpack.c.h.b16 %v1137
  %v1427 = vunpack.c.l.b16 %v1138
  %v1428 = vunpack.c.h.b16 %v1138
  %v1429 = vunpack.c.l.b16 %v1139
  %v1430 = vunpack.c.h.b16 %v1139
  %v1431 = vunpack.c.l.b16 %v1140
  %v1432 = vunpack.c.h.b16 %v1140
  %v1433 = vunpack.c.l.b16 %v1141
  %v1434 = vunpack.c.h.b16 %v1141
  %v1435 = vunpack.c.l.b16 %v1142
  %v1436 = vunpack.c.h.b16 %v1142
  %v1437 = vunpack.c.l.b16 %v1143
  %v1438 = vunpack.c.h.b16 %v1143
  %v1439 = vunpack.c.l.b16 %v1144
  %v1440 = vunpack.c.h.b16 %v1144
  %v1441 = vunpack.c.l.b16 %v1145
  %v1442 = vunpack.c.h.b16 %v1145
  %v1443 = vunpack.c.l.b16 %v1146
  %v1444 = vunpack.c.h.b16 %v1146
  %v1445 = vunpack.c.l.b16 %v1147
  %v1446 = vunpack.c.h.b16 %v1147
  %v1447 = vunpack.c.l.b16 %v1148
  %v1448 = vunpack.c.h.b16 %v1148
  %v1449 = vunpack.c.l.b16 %v1149
  %v1450 = vunpack.c.h.b16 %v1149
  %v1451 = vunpack.c.l.b16 %v1150
  %v1452 = vunpack.c.h.b16 %v1150
  %v1453 = vunpack.c.l.b16 %v1151
  %v1454 = vunpack.c.h.b16 %v1151
  %v1455 = vunpack.c.l.b16 %v1152
  %v1456 = vunpack.c.h.b16 %v1152
  %v1457 = vunpack.c.l.b16 %v1153
  %v1458 = vunpack.c.h.b16 %v1153
  %v1459 = vunpack.c.l.b16 %v1154
  %v1460 = vunpack.c.h.b16 %v1154
  %v1461 = vunpack.c.l.b16 %v1155
  %v1462 = vunpack.c.h.b16 %v1155
  %v1463 = vunpack.c.l.b16 %v1156
  %v1464 = vunpack.c.h.b16 %v1156
  %v1465 = vunpack.c.l.b16 %v1157
  %v1466 = vunpack.c.h.b16 %v1157
  %v1467 = vunpack.c.l.b16 %v1158
  %v1468 = vunpack.c.h.b16 %v1158
  %v1469 = vunpack.c.l.b16 %v1159
  %v1470 = vunpack.c.h.b16 %v1159
  %v1471 = vunpack.c.l.b16 %v1160
  %v1472 = vunpack.c.h.b16 %v1160
  %v1473 = vunpack.c.l.b16 %v1161
  %v1474 = vunpack.c.h.b16 %v1161
  %v1475 = vunpack.c.l.b16 %v1162
  %v1476 = vunpack.c.h.b16 %v1162
  %v1477 = vunpack.c.l.b16 %v1163
  %v1478 = vunpack.c.h.b16 %v1163
  %v1479 = vunpack.c.l.b16 %v1164
  %v1480 = vunpack.c.h.b16 %v1164
  %v1481 = vunpack.c.l.b16 %v1165
  %v1482 = vunpack.c.h.b16 %v1165
  %v1483 = vunpack.c.l.b16 %v1166
  %v1484 = vunpack.c.h.b16 %v1166
  %v1485 = vunpack.c.l.b16 %v1167
  %v1486 = vunpack.c.h.b16 %v1167
  %v1487 = vunpack.c.l.b16 %v1168
  %v1488 = vunpack.c.h.b16 %v1168
  %v1489 = vunpack.c.l.b16 %v1169
  %v1490 = vunpack.c.h.b16 %v1169
  %v1491 = vunpack.c.l.b16 %v1170
  %v1492 = vunpack.c.h.b16 %v1170
  %v1493 = vunpack.c.l.b16 %v1171
  %v1494 = vunpack.c.h.b16 %v1171
  %v1495 = vunpack.c.l.b16 %v1172
  %v1496 = vunpack.c.h.b16 %v1172
  %v1497 = vunpack.c.l.b16 %v1173
  %v1498 = vunpack.c.h.b16 %v1173
  %v1499 = vunpack.c.l.b16 %v1174
  %v1500 = vunpack.c.h.b16 %v1174
  %v1501 = vunpack.c.l.b16 %v1175
  %v1502 = vunpack.c.h.b16 %v1175
  %v1503 = vunpack.c.l.b16 %v1176
  %v1504 = vunpack.c.h.b16 %v1176
  %v1505 = vunpack.c.l.b16 %v1177
  %v1506 = vunpack.c.h.b16 %v1177
  %v1507 = vunpack.c.l.b16 %v1178
  %v1508 = vunpack.c.h.b16 %v1178
  %v1509 = vunpack.c.l.b16 %v1179
  %v1510 = vunpack.c.h.b16 %v1179
  %v1511 = vunpack.c.l.b16 %v1180
  %v1512 = vunpack.c.h.b16 %v1180
  %v1513 = vunpack.c.l.b16 %v1181
  %v1514 = vunpack.c.h.b16 %v1181
  %v1515 = vunpack.c.l.b16 %v1182
  %v1516 = vunpack.c.h.b16 %v1182
  %v1517 = vunpack.c.l.b16 %v1183
  %v1518 = vunpack.c.h.b16 %v1183
  %v1519 = vunpack.c.l.b16 %v1184
  %v1520 = vunpack.c.h.b16 %v1184
  %v1521 = vunpack.c.l.b16 %v1185
  %v1522 = vunpack.c.h.b16 %v1185
  %v1523 = vunpack.c.l.b16 %v1186
  %v1524 = vunpack.c.h.b16 %v1186
  %v1525 = vunpack.c.l.b16 %v1187
  %v1526 = vunpack.c.h.b16 %v1187
  %v1527 = vunpack.c.l.b16 %v1188
  %v1528 = vunpack.c.h.b16 %v1188
  %v1529 = vunpack.c.l.b16 %v1189
  %v1530 = vunpack.c.h.b16 %v1189
  %v1531 = vunpack.c.l.b16 %v1190
  %v1532 = vunpack.c.h.b16 %v1190
  %v1533 = vunpack.c.l.b16 %v1191
  %v1534 = vunpack.c.h.b16 %v1191
  %v1535 = vunpack.c.l.b16 %v1192
  %v1536 = vunpack.c.h.b16 %v1192
  %v1537 = vunpack.c.l.b16 %v1193
  %v1538 = vunpack.c.h.b16 %v1193
  %v1539 = vunpack.c.l.b16 %v1194
  %v1540 = vunpack.c.h.b16 %v1194
  %v1541 = vunpack.c.l.b16 %v1195
  %v1542 = vunpack.c.h.b16 %v1195
  %v1543 = vunpack.c.l.b16 %v1196
  %v1544 = vunpack.c.h.b16 %v1196
  %v1545 = vunpack.c.l.b16 %v1197
  %v1546 = vunpack.c.h.b16 %v1197
  %v1547 = vunpack.c.l.b16 %v1198
  %v1548 = vunpack.c.h.b16 %v1198
  %v1549 = vunpack.c.l.b16 %v1199
  %v1550 = vunpack.c.h.b16 %v1199
  %v1551 = vunpack.c.l.b16 %v1200
  %v1552 = vunpack.c.h.b16 %v1200
  %v1553 = vunpack.c.l.b16 %v1201
  %v1554 = vunpack.c.h.b16 %v1201
  %v1555 = vunpack.c.l.b16 %v1202
  %v1556 = vunpack.c.h.b16 %v1202
  %v1557 = vunpack.c.l.b16 %v1203
  %v1558 = vunpack.c.h.b16 %v1203
  %v1559 = vunpack.c.l.b16 %v1204
  %v1560 = vunpack.c.h.b16 %v1204
  %v1561 = vunpack.c.l.b16 %v1205
  %v1562 = vunpack.c.h.b16 %v1205
  %v1563 = vunpack.c.l.b16 %v1206
  %v1564 = vunpack.c.h.b16 %v1206
  %v1565 = vunpack.c.l.b16 %v1207
  %v1566 = vunpack.c.h.b16 %v1207
  %v1567 = vunpack.c.l.b16 %v1208
  %v1568 = vunpack.c.h.b16 %v1208
  %v1569 = vunpack.c.l.b16 %v1209
  %v1570 = vunpack.c.h.b16 %v1209
  %v1571 = vunpack.c.l.b16 %v1210
  %v1572 = vunpack.c.h.b16 %v1210
  %v1573 = vunpack.c.l.b16 %v1211
  %v1574 = vunpack.c.h.b16 %v1211
  %v1575 = vunpack.c.l.b16 %v1212
  %v1576 = vunpack.c.h.b16 %v1212
  %v1577 = vunpack.c.l.b16 %v1213
  %v1578 = vunpack.c.h.b16 %v1213
  %v1579 = vunpack.c.l.b16 %v1214
  %v1580 = vunpack.c.h.b16 %v1214
  %v1581 = vunpack.c.l.b16 %v1215
  %v1582 = vunpack.c.h.b16 %v1215
  %v1583 = vunpack.c.l.b16 %v1216
  %v1584 = vunpack.c.h.b16 %v1216
  %v1585 = vunpack.c.l.b16 %v1217
  %v1586 = vunpack.c.h.b16 %v1217
  %v1587 = vunpack.c.l.b16 %v1218
  %v1588 = vunpack.c.h.b16 %v1218
  %v1589 = vunpack.c.l.b16 %v1219
  %v1590 = vunpack.c.h.b16 %v1219
  %v1591 = vunpack.c.l.b16 %v1220
  %v1592 = vunpack.c.h.b16 %v1220
  %v1593 = vunpack.c.l.b16 %v1221
  %v1594 = vunpack.c.h.b16 %v1221
  %v1595 = vunpack.c.l.b16 %v1222
  %v1596 = vunpack.c.h.b16 %v1222
  %v1597 = vunpack.c.l.b16 %v1223
  %v1598 = vunpack.c.h.b16 %v1223
  %v1599 = vunpack.c.l.b16 %v1224
  %v1600 = vunpack.c.h.b16 %v1224
  %v1601 = vunpack.c.l.b16 %v1225
  %v1602 = vunpack.c.h.b16 %v1225
  %v1603 = vunpack.c.l.b16 %v1226
  %v1604 = vunpack.c.h.b16 %v1226
  %v1605 = vunpack.c.l.b16 %v1227
  %v1606 = vunpack.c.h.b16 %v1227
  %v1607 = vunpack.c.l.b16 %v1228
  %v1608 = vunpack.c.h.b16 %v1228
  %v1609 = vunpack.c.l.b16 %v1229
  %v1610 = vunpack.c.h.b16 %v1229
  %v1611 = vunpack.c.l.b16 %v1230
  %v1612 = vunpack.c.h.b16 %v1230
  %v1613 = vunpack.c.l.b16 %v1231
  %v1614 = vunpack.c.h.b16 %v1231
  %v1615 = vunpack.c.l.b16 %v1232
  %v1616 = vunpack.c.h.b16 %v1232
  %v1617 = vpack.c.b16 %v1369, %v1361
  %v1618 = vpack.c.b16 %v1370, %v1362
  %v1619 = vpack.c.b16 %v1371, %v1363
  %v1620 = vpack.c.b16 %v1372, %v1364
  %v1621 = vpack.c.b16 %v1373, %v1365
  %v1622 = vpack.c.b16 %v1374, %v1366
  %v1623 = vpack.c.b16 %v1375, %v1367
  %v1624 = vpack.c.b16 %v1376, %v1368
  %v1625 = vpack.c.b16 %v1385, %v1377
  %v1626 = vpack.c.b16 %v1386, %v1378
  %v1627 = vpack.c.b16 %v1387, %v1379
  %v1628 = vpack.c.b16 %v1388, %v1380
  %v1629 = vpack.c.b16 %v1389, %v1381
  %v1630 = vpack.c.b16 %v1390, %v1382
  %v1631 = vpack.c.b16 %v1391, %v1383
  %v1632 = vpack.c.b16 %v1392, %v1384
  %v1633 = vpack.c.b16 %v1401, %v1393
  %v1634 = vpack.c.b16 %v1402, %v1394
  %v1635 = vpack.c.b16 %v1403, %v1395
  %v1636 = vpack.c.b16 %v1404, %v1396
  %v1637 = vpack.c.b16 %v1405, %v1397
  %v1638 = vpack.c.b16 %v1406, %v1398
  %v1639 = vpack.c.b16 %v1407, %v1399
  %v1640 = vpack.c.b16 %v1408, %v1400
  %v1641 = vpack.c.b16 %v1417, %v1409
  %v1642 = vpack.c.b16 %v1418, %v1410
  %v1643 = vpack.c.b16 %v1419, %v1411
  %v1644 = vpack.c.b16 %v1420, %v1412
  %v1645 = vpack.c.b16 %v1421, %v1413
  %v1646 = vpack.c.b16 %v1422, %v1414
  %v1647 = vpack.c.b16 %v1423, %v1415
  %v1648 = vpack.c.b16 %v1424, %v1416
  %v1649 = vpack.c.b16 %v1433, %v1425
  %v1650 = vpack.c.b16 %v1434, %v1426
  %v1651 = vpack.c.b16 %v1435, %v1427
  %v1652 = vpack.c.b16 %v1436, %v1428
  %v1653 = vpack.c.b16 %v1437, %v1429
  %v1654 = vpack.c.b16 %v1438, %v1430
  %v1655 = vpack.c.b16 %v1439, %v1431
  %v1656 = vpack.c.b16 %v1440, %v1432
  %v1657 = vpack.c.b16 %v1449, %v1441
  %v1658 = vpack.c.b16 %v1450, %v1442
  %v1659 = vpack.c.b16 %v1451, %v1443
  %v1660 = vpack.c.b16 %v1452, %v1444
  %v1661 = vpack.c.b16 %v1453, %v1445
  %v1662 = vpack.c.b16 %v1454, %v1446
  %v1663 = vpack.c.b16 %v1455, %v1447
  %v1664 = vpack.c.b16 %v1456, %v1448
  %v1665 = vpack.c.b16 %v1465, %v1457
  %v1666 = vpack.c.b16 %v1466, %v1458
  %v1667 = vpack.c.b16 %v1467, %v1459
  %v1668 = vpack.c.b16 %v1468, %v1460
  %v1669 = vpack.c.b16 %v1469, %v1461
  %v1670 = vpack.c.b16 %v1470, %v1462
  %v1671 = vpack.c.b16 %v1471, %v1463
  %v1672 = vpack.c.b16 %v1472, %v1464
  %v1673 = vpack.c.b16 %v1481, %v1473
  %v1674 = vpack.c.b16 %v1482, %v1474
  %v1675 = vpack.c.b16 %v1483, %v1475
  %v1676 = vpack.c.b16 %v1484, %v1476
  %v1677 = vpack.c.b16 %v1485, %v1477
  %v1678 = vpack.c.b16 %v1486, %v1478
  %v1679 = vpack.c.b16 %v1487, %v1479
  %v1680 = vpack.c.b16 %v1488, %v1480
  %v1681 = vpack.c.b16 %v1497, %v1489
  %v1682 = vpack.c.b16 %v1498, %v1490
  %v1683 = vpack.c.b16 %v1499, %v1491
  %v1684 = vpack.c.b16 %v1500, %v1492
  %v1685 = vpack.c.b16 %v1501, %v1493
  %v1686 = vpack.c.b16 %v1502, %v1494
  %v1687 = vpack.c.b16 %v1503, %v1495
  %v1688 = vpack.c.b16 %v1504, %v1496
  %v1689 = vpack.c.b16 %v1513, %v1505
  %v1690 = vpack.c.b16 %v1514, %v1506
  %v1691 = vpack.c.b16 %v1515, %v1507
  %v1692 = vpack.c.b16 %v1516, %v1508
  %v1693 = vpack.c.b16 %v1517, %v1509
  %v1694 = vpack.c.b16 %v1518, %v1510
  %v1695 = vpack.c.b16 %v1519, %v1511
  %v1696 = vpack.c.b16 %v1520, %v1512
  %v1697 = vpack.c.b16 %v1529, %v1521
  %v1698 = vpack.c.b16 %v1530, %v1522
  %v1699 = vpack.c.b16 %v1531, %v1523
  %v1700 = vpack.c.b16 %v1532, %v1524
  %v1701 = vpack.c.b16 %v1533, %v1525
  %v1702 = vpack.c.b16 %v1534, %v1526
  %v1703 = vpack.c.b16 %v1535, %v1527
  %v1704 = vpack.c.b16 %v1536, %v1528
  %v1705 = vpack.c.b16 %v1545, %v1537
  %v1706 = vpack.c.b16 %v1546, %v1538
  %v1707 = vpack.c.b16 %v1547, %v1539
  %v1708 = vpack.c.b16 %v1548, %v1540
  %v1709 = vpack.c.b16 %v1549, %v1541
  %v1710 = vpack.c.b16 %v1550, %v1542
  %v1711 = vpack.c.b16 %v1551, %v1543
  %v1712 = vpack.c.b16 %v1552, %v1544
  %v1713 = vpack.c.b16 %v1561, %v1553
  %v1714 = vpack.c.b16 %v1562, %v1554
  %v1715 = vpack.c.b16 %v1563, %v1555
  %v1716 = vpack.c.b16 %v1564, %v1556
  %v1717 = vpack.c.b16 %v1565, %v1557
  %v1718 = vpack.c.b16 %v1566, %v1558
  %v1719 = vpack.c.b16 %v1567, %v1559
  %v1720 = vpack.c.b16 %v1568, %v1560
  %v1721 = vpack.c.b16 %v1577, %v1569
  %v1722 = vpack.c.b16 %v1578, %v1570
  %v1723 = vpack.c.b16 %v1579, %v1571
  %v1724 = vpack.c.b16 %v1580, %v1572
  %v1725 = vpack.c.b16 %v1581, %v1573
  %v1726 = vpack.c.b16 %v1582, %v1574
  %v1727 = vpack.c.b16 %v1583, %v1575
  %v1728 = vpack.c.b16 %v1584, %v1576
  %v1729 = vpack.c.b16 %v1593, %v1585
  %v1730 = vpack.c.b16 %v1594, %v1586
  %v1731 = vpack.c.b16 %v1595, %v1587
  %v1732 = vpack.c.b16 %v1596, %v1588
  %v1733 = vpack.c.b16 %v1597, %v1589
  %v1734 = vpack.c.b16 %v1598, %v1590
  %v1735 = vpack.c.b16 %v1599, %v1591
  %v1736 = vpack.c.b16 %v1600, %v1592
  %v1737 = vpack.c.b16 %v1609, %v1601
  %v1738 = vpack.c.b16 %v1610, %v1602
  %v1739 = vpack.c.b16 %v1611, %v1603
  %v1740 = vpack.c.b16 %v1612, %v1604
  %v1741 = vpack.c.b16 %v1613, %v1605
  %v1742 = vpack.c.b16 %v1614, %v1606
  %v1743 = vpack.c.b16 %v1615, %v1607
  %v1744 = vpack.c.b16 %v1616, %v1608
  %1873 = vmatpush.bf16.msra.mxu0 %v1673
  %1874 = vmatpush.bf16.msra.mxu0 %v1665
  %1875 = vmatpush.bf16.msra.mxu0 %v1657
  %1876 = vmatpush.bf16.msra.mxu0 %v1649
  %1877 = vmatpush.bf16.msra.mxu0 %v1641
  %1878 = vmatpush.bf16.msra.mxu0 %v1633
  %1879 = vmatpush.bf16.msra.mxu0 %v1625
  %1880 = vmatpush.bf16.msra.mxu0 %v1617
  %1881 = vmatmul.bf16.gmra.mxu0 %v1103
  %v1882 = vpop.f32.mrf.mxu0
  %v1883 = vadd.f32 0.0, %v1882
  %v1884 = vpop.f32.mrf.mxu0
  %1885 = vdwg.mxu0
  %1886 = vmatpush.bf16.msra.mxu0 %v1737
  %1887 = vmatpush.bf16.msra.mxu0 %v1729
  %1888 = vmatpush.bf16.msra.mxu0 %v1721
  %1889 = vmatpush.bf16.msra.mxu0 %v1713
  %1890 = vmatpush.bf16.msra.mxu0 %v1705
  %1891 = vmatpush.bf16.msra.mxu0 %v1697
  %1892 = vmatpush.bf16.msra.mxu0 %v1689
  %1893 = vmatpush.bf16.msra.mxu0 %v1681
  %1894 = vmatmul.bf16.gmra.mxu0 %v1104
  %v1895 = vpop.f32.mrf.mxu0
  %v1896 = vadd.f32 %v1883, %v1895
  %v1897 = vpop.f32.mrf.mxu0
  %1898 = vdwg.mxu0
  %1899 = vmatpush.bf16.msra.mxu0 %v1674
  %1900 = vmatpush.bf16.msra.mxu0 %v1666
  %1901 = vmatpush.bf16.msra.mxu0 %v1658
  %1902 = vmatpush.bf16.msra.mxu0 %v1650
  %1903 = vmatpush.bf16.msra.mxu0 %v1642
  %1904 = vmatpush.bf16.msra.mxu0 %v1634
  %1905 = vmatpush.bf16.msra.mxu0 %v1626
  %1906 = vmatpush.bf16.msra.mxu0 %v1618
  %1907 = vmatmul.bf16.gmra.mxu0 %v1103
  %v1908 = vpop.f32.mrf.mxu0
  %v1909 = vadd.f32 0.0, %v1908
  %v1910 = vpop.f32.mrf.mxu0
  %1911 = vdwg.mxu0
  %1912 = vmatpush.bf16.msra.mxu0 %v1738
  %1913 = vmatpush.bf16.msra.mxu0 %v1730
  %1914 = vmatpush.bf16.msra.mxu0 %v1722
  %1915 = vmatpush.bf16.msra.mxu0 %v1714
  %1916 = vmatpush.bf16.msra.mxu0 %v1706
  %1917 = vmatpush.bf16.msra.mxu0 %v1698
  %1918 = vmatpush.bf16.msra.mxu0 %v1690
  %1919 = vmatpush.bf16.msra.mxu0 %v1682
  %1920 = vmatmul.bf16.gmra.mxu0 %v1104
  %v1921 = vpop.f32.mrf.mxu0
  %v1922 = vadd.f32 %v1909, %v1921
  %v1923 = vpop.f32.mrf.mxu0
  %1924 = vdwg.mxu0
  %1925 = vmatpush.bf16.msra.mxu0 %v1675
  %1926 = vmatpush.bf16.msra.mxu0 %v1667
  %1927 = vmatpush.bf16.msra.mxu0 %v1659
  %1928 = vmatpush.bf16.msra.mxu0 %v1651
  %1929 = vmatpush.bf16.msra.mxu0 %v1643
  %1930 = vmatpush.bf16.msra.mxu0 %v1635
  %1931 = vmatpush.bf16.msra.mxu0 %v1627
  %1932 = vmatpush.bf16.msra.mxu0 %v1619
  %1933 = vmatmul.bf16.gmra.mxu0 %v1103
  %v1934 = vpop.f32.mrf.mxu0
  %v1935 = vadd.f32 0.0, %v1934
  %v1936 = vpop.f32.mrf.mxu0
  %1937 = vdwg.mxu0
  %1938 = vmatpush.bf16.msra.mxu0 %v1739
  %1939 = vmatpush.bf16.msra.mxu0 %v1731
  %1940 = vmatpush.bf16.msra.mxu0 %v1723
  %1941 = vmatpush.bf16.msra.mxu0 %v1715
  %1942 = vmatpush.bf16.msra.mxu0 %v1707
  %1943 = vmatpush.bf16.msra.mxu0 %v1699
  %1944 = vmatpush.bf16.msra.mxu0 %v1691
  %1945 = vmatpush.bf16.msra.mxu0 %v1683
  %1946 = vmatmul.bf16.gmra.mxu0 %v1104
  %v1947 = vpop.f32.mrf.mxu0
  %v1948 = vadd.f32 %v1935, %v1947
  %v1949 = vpop.f32.mrf.mxu0
  %1950 = vdwg.mxu0
  %1951 = vmatpush.bf16.msra.mxu0 %v1676
  %1952 = vmatpush.bf16.msra.mxu0 %v1668
  %1953 = vmatpush.bf16.msra.mxu0 %v1660
  %1954 = vmatpush.bf16.msra.mxu0 %v1652
  %1955 = vmatpush.bf16.msra.mxu0 %v1644
  %1956 = vmatpush.bf16.msra.mxu0 %v1636
  %1957 = vmatpush.bf16.msra.mxu0 %v1628
  %1958 = vmatpush.bf16.msra.mxu0 %v1620
  %1959 = vmatmul.bf16.gmra.mxu0 %v1103
  %v1960 = vpop.f32.mrf.mxu0
  %v1961 = vadd.f32 0.0, %v1960
  %v1962 = vpop.f32.mrf.mxu0
  %1963 = vdwg.mxu0
  %1964 = vmatpush.bf16.msra.mxu0 %v1740
  %1965 = vmatpush.bf16.msra.mxu0 %v1732
  %1966 = vmatpush.bf16.msra.mxu0 %v1724
  %1967 = vmatpush.bf16.msra.mxu0 %v1716
  %1968 = vmatpush.bf16.msra.mxu0 %v1708
  %1969 = vmatpush.bf16.msra.mxu0 %v1700
  %1970 = vmatpush.bf16.msra.mxu0 %v1692
  %1971 = vmatpush.bf16.msra.mxu0 %v1684
  %1972 = vmatmul.bf16.gmra.mxu0 %v1104
  %v1973 = vpop.f32.mrf.mxu0
  %v1974 = vadd.f32 %v1961, %v1973
  %v1975 = vpop.f32.mrf.mxu0
  %1976 = vdwg.mxu0
  %1977 = vmatpush.bf16.msra.mxu0 %v1677
  %1978 = vmatpush.bf16.msra.mxu0 %v1669
  %1979 = vmatpush.bf16.msra.mxu0 %v1661
  %1980 = vmatpush.bf16.msra.mxu0 %v1653
  %1981 = vmatpush.bf16.msra.mxu0 %v1645
  %1982 = vmatpush.bf16.msra.mxu0 %v1637
  %1983 = vmatpush.bf16.msra.mxu0 %v1629
  %1984 = vmatpush.bf16.msra.mxu0 %v1621
  %1985 = vmatmul.bf16.gmra.mxu0 %v1103
  %v1986 = vpop.f32.mrf.mxu0
  %v1987 = vadd.f32 0.0, %v1986
  %v1988 = vpop.f32.mrf.mxu0
  %1989 = vdwg.mxu0
  %1990 = vmatpush.bf16.msra.mxu0 %v1741
  %1991 = vmatpush.bf16.msra.mxu0 %v1733
  %1992 = vmatpush.bf16.msra.mxu0 %v1725
  %1993 = vmatpush.bf16.msra.mxu0 %v1717
  %1994 = vmatpush.bf16.msra.mxu0 %v1709
  %1995 = vmatpush.bf16.msra.mxu0 %v1701
  %1996 = vmatpush.bf16.msra.mxu0 %v1693
  %1997 = vmatpush.bf16.msra.mxu0 %v1685
  %1998 = vmatmul.bf16.gmra.mxu0 %v1104
  %v1999 = vpop.f32.mrf.mxu0
  %v2000 = vadd.f32 %v1987, %v1999
  %v2001 = vpop.f32.mrf.mxu0
  %2002 = vdwg.mxu0
  %2003 = vmatpush.bf16.msra.mxu0 %v1678
  %2004 = vmatpush.bf16.msra.mxu0 %v1670
  %2005 = vmatpush.bf16.msra.mxu0 %v1662
  %2006 = vmatpush.bf16.msra.mxu0 %v1654
  %2007 = vmatpush.bf16.msra.mxu0 %v1646
  %2008 = vmatpush.bf16.msra.mxu0 %v1638
  %2009 = vmatpush.bf16.msra.mxu0 %v1630
  %2010 = vmatpush.bf16.msra.mxu0 %v1622
  %2011 = vmatmul.bf16.gmra.mxu0 %v1103
  %v2012 = vpop.f32.mrf.mxu0
  %v2013 = vadd.f32 0.0, %v2012
  %v2014 = vpop.f32.mrf.mxu0
  %2015 = vdwg.mxu0
  %2016 = vmatpush.bf16.msra.mxu0 %v1742
  %2017 = vmatpush.bf16.msra.mxu0 %v1734
  %2018 = vmatpush.bf16.msra.mxu0 %v1726
  %2019 = vmatpush.bf16.msra.mxu0 %v1718
  %2020 = vmatpush.bf16.msra.mxu0 %v1710
  %2021 = vmatpush.bf16.msra.mxu0 %v1702
  %2022 = vmatpush.bf16.msra.mxu0 %v1694
  %2023 = vmatpush.bf16.msra.mxu0 %v1686
  %2024 = vmatmul.bf16.gmra.mxu0 %v1104
  %v2025 = vpop.f32.mrf.mxu0
  %v2026 = vadd.f32 %v2013, %v2025
  %v2027 = vpop.f32.mrf.mxu0
  %2028 = vdwg.mxu0
  %2029 = vmatpush.bf16.msra.mxu0 %v1679
  %2030 = vmatpush.bf16.msra.mxu0 %v1671
  %2031 = vmatpush.bf16.msra.mxu0 %v1663
  %2032 = vmatpush.bf16.msra.mxu0 %v1655
  %2033 = vmatpush.bf16.msra.mxu0 %v1647
  %2034 = vmatpush.bf16.msra.mxu0 %v1639
  %2035 = vmatpush.bf16.msra.mxu0 %v1631
  %2036 = vmatpush.bf16.msra.mxu0 %v1623
  %2037 = vmatmul.bf16.gmra.mxu0 %v1103
  %v2038 = vpop.f32.mrf.mxu0
  %v2039 = vadd.f32 0.0, %v2038
  %v2040 = vpop.f32.mrf.mxu0
  %2041 = vdwg.mxu0
  %2042 = vmatpush.bf16.msra.mxu0 %v1743
  %2043 = vmatpush.bf16.msra.mxu0 %v1735
  %2044 = vmatpush.bf16.msra.mxu0 %v1727
  %2045 = vmatpush.bf16.msra.mxu0 %v1719
  %2046 = vmatpush.bf16.msra.mxu0 %v1711
  %2047 = vmatpush.bf16.msra.mxu0 %v1703
  %2048 = vmatpush.bf16.msra.mxu0 %v1695
  %2049 = vmatpush.bf16.msra.mxu0 %v1687
  %2050 = vmatmul.bf16.gmra.mxu0 %v1104
  %v2051 = vpop.f32.mrf.mxu0
  %v2052 = vadd.f32 %v2039, %v2051
  %v2053 = vpop.f32.mrf.mxu0
  %2054 = vdwg.mxu0
  %2055 = vmatpush.bf16.msra.mxu0 %v1680
  %2056 = vmatpush.bf16.msra.mxu0 %v1672
  %2057 = vmatpush.bf16.msra.mxu0 %v1664
  %2058 = vmatpush.bf16.msra.mxu0 %v1656
  %2059 = vmatpush.bf16.msra.mxu0 %v1648
  %2060 = vmatpush.bf16.msra.mxu0 %v1640
  %2061 = vmatpush.bf16.msra.mxu0 %v1632
  %2062 = vmatpush.bf16.msra.mxu0 %v1624
  %2063 = vmatmul.bf16.gmra.mxu0 %v1103
  %v2064 = vpop.f32.mrf.mxu0
  %v2065 = vadd.f32 0.0, %v2064
  %v2066 = vpop.f32.mrf.mxu0
  %2067 = vdwg.mxu0
  %2068 = vmatpush.bf16.msra.mxu0 %v1744
  %2069 = vmatpush.bf16.msra.mxu0 %v1736
  %2070 = vmatpush.bf16.msra.mxu0 %v1728
  %2071 = vmatpush.bf16.msra.mxu0 %v1720
  %2072 = vmatpush.bf16.msra.mxu0 %v1712
  %2073 = vmatpush.bf16.msra.mxu0 %v1704
  %2074 = vmatpush.bf16.msra.mxu0 %v1696
  %2075 = vmatpush.bf16.msra.mxu0 %v1688
  %2076 = vmatmul.bf16.gmra.mxu0 %v1104
  %v2077 = vpop.f32.mrf.mxu0
  %v2078 = vadd.f32 %v2065, %v2077
  %v2079 = vpop.f32.mrf.mxu0
  %2080 = vdwg.mxu0
  %v2089 = vrot.slane %v1922, 4
  %v2090 = vrot.slane %v1974, 4
  %v2091 = vrot.slane %v2026, 4
  %v2092 = vrot.slane %v2078, 4
  %v2093 = vsel %vm1007, %v1896, %v2089
  %v2094 = vsel %vm1007, %v1948, %v2090
  %v2095 = vsel %vm1007, %v2000, %v2091
  %v2096 = vsel %vm1007, %v2052, %v2092
  %v2101 = vadd.f32 %v1094, %v2093
  %v2102 = vadd.f32 %v1095, %v2094
  %v2103 = vadd.f32 %v1096, %v2095
  %v2104 = vadd.f32 %v1097, %v2096
  %v2105 = vxor.u32 %v2101, 2147483648
  %v2106 = vmul.f32 %v2105, 1.442695
  %v2107 = vpow.pop %v2106
  %v2108 = vadd.f32 %v2107, 1.0
  %v2109 = vrcp.pop %v2108
  %v2110 = vmul.f32 %v2108, %v2109
  %v2111 = vsub.f32 1.0, %v2110
  %v2112 = vmul.f32 %v2109, %v2111
  %v2113 = vadd.f32 %v2109, %v2112
  %vm2114 = vweird.f32 %v2108
  %vm2115 = vweird.f32 %v2109
  %vm2116 = vmor %vm2114, %vm2115
  %v2117 = vsel %vm2116, %v2109, %v2113
  %v2118 = vand.u32 2147483647, %v2108
  %vm2119 = vcmp.eq.f32.partialorder %v2118, 8.507059e+37
  %v2120 = vand.u32 %v2108, 2147483648
  %v2121 = vor.u32 1.1754944e-38, %v2120
  %v2122 = vsel %vm2119, %v2121, %v2117
  %v2123 = vmul.f32 1.0, %v2122
  %v2124 = vxor.u32 %v2102, 2147483648
  %v2125 = vmul.f32 %v2124, 1.442695
  %v2126 = vpow.pop %v2125
  %v2127 = vadd.f32 %v2126, 1.0
  %v2128 = vrcp.pop %v2127
  %v2129 = vmul.f32 %v2127, %v2128
  %v2130 = vsub.f32 1.0, %v2129
  %v2131 = vmul.f32 %v2128, %v2130
  %v2132 = vadd.f32 %v2128, %v2131
  %vm2133 = vweird.f32 %v2127
  %vm2134 = vweird.f32 %v2128
  %vm2135 = vmor %vm2133, %vm2134
  %v2136 = vsel %vm2135, %v2128, %v2132
  %v2137 = vand.u32 2147483647, %v2127
  %vm2138 = vcmp.eq.f32.partialorder %v2137, 8.507059e+37
  %v2139 = vand.u32 %v2127, 2147483648
  %v2140 = vor.u32 1.1754944e-38, %v2139
  %v2141 = vsel %vm2138, %v2140, %v2136
  %v2142 = vmul.f32 1.0, %v2141
  %v2143 = vtanh.pop %v2103
  %v2144 = vxor.u32 %v2104, 2147483648
  %v2145 = vmul.f32 %v2144, 1.442695
  %v2146 = vpow.pop %v2145
  %v2147 = vadd.f32 %v2146, 1.0
  %v2148 = vrcp.pop %v2147
  %v2149 = vmul.f32 %v2147, %v2148
  %v2150 = vsub.f32 1.0, %v2149
  %v2151 = vmul.f32 %v2148, %v2150
  %v2152 = vadd.f32 %v2148, %v2151
  %vm2153 = vweird.f32 %v2147
  %vm2154 = vweird.f32 %v2148
  %vm2155 = vmor %vm2153, %vm2154
  %v2156 = vsel %vm2155, %v2148, %v2152
  %v2157 = vand.u32 2147483647, %v2147
  %vm2158 = vcmp.eq.f32.partialorder %v2157, 8.507059e+37
  %v2159 = vand.u32 %v2147, 2147483648
  %v2160 = vor.u32 1.1754944e-38, %v2159
  %v2161 = vsel %vm2158, %v2160, %v2156
  %v2162 = vmul.f32 1.0, %v2161
  %v2163 = vmul.f32 %v2142, %v1085
  %v2164 = vmul.f32 %v2123, %v2143
  %v2165 = vadd.f32 %v2163, %v2164
  %v2166 = vtanh.pop %v2165
  %v2167 = vmul.f32 %v2162, %v2166
  %s2168 = scalar_lea.vmem %s2, 8
  %v2169 = vld [vmem:[%s2168] sm:$0xff]
  %vm2170 = vcmp.gt.f32.partialorder %v2169, 0.0
  %v2171 = vsel %vm2170, %v2165, %v1085
  %v2172 = vsel %vm2170, %v2167, %v1086
  %v2173 = vsel %vm2170, %v2167, 0.0
  %s2174 = scalar_lea.vmem %s3, 8
  %2175 = vst [vmem:[%s2174] sm:$0xf] %v2173
  %v2177 = vrot.slane %v2173, 4
  %s2179 = scalar_lea.vmem %s3, 48
  %2180 = vst [vmem:[%s2179 + $0x4] sm:$0xf] %v2177
  %s2181 = scalar_lea.vmem %s0, 64
  %v2182 = vld [vmem:[%s2181] sm:$0xff]
  %v2183 = vld [vmem:[%s2181 + $0x8] sm:$0xff]
  %v2184 = vld [vmem:[%s2181 + $0x10] sm:$0xff]
  %v2185 = vld [vmem:[%s2181 + $0x18] sm:$0xff]
  %2187 = vst [vmem:[#allocation1] ss:$2 sm:$0xff] %v2172
  %v2188 = vld.sshfl [vmem:[#allocation1] sm:$0xff pattern:$0x75316420]
  %v2189 = vld.sshfl [vmem:[#allocation1 + $0x8] sm:$0xff pattern:$0x75316420]
  %v2192 = vpack.c.bf16 %v2188, %v2188
  %v2193 = vpack.c.bf16 %v2189, %v2189
  %v2194 = vld [vmem:[%s1] sm:$0xff]
  %v2195 = vld [vmem:[%s1 + $0x8] sm:$0xff]
  %v2196 = vld [vmem:[%s1 + $0x10] sm:$0xff]
  %v2197 = vld [vmem:[%s1 + $0x18] sm:$0xff]
  %v2198 = vld [vmem:[%s1 + $0x20] sm:$0xff]
  %v2199 = vld [vmem:[%s1 + $0x28] sm:$0xff]
  %v2200 = vld [vmem:[%s1 + $0x30] sm:$0xff]
  %v2201 = vld [vmem:[%s1 + $0x38] sm:$0xff]
  %v2202 = vld [vmem:[%s1 + $0x40] sm:$0xff]
  %v2203 = vld [vmem:[%s1 + $0x48] sm:$0xff]
  %v2204 = vld [vmem:[%s1 + $0x50] sm:$0xff]
  %v2205 = vld [vmem:[%s1 + $0x58] sm:$0xff]
  %v2206 = vld [vmem:[%s1 + $0x60] sm:$0xff]
  %v2207 = vld [vmem:[%s1 + $0x68] sm:$0xff]
  %v2208 = vld [vmem:[%s1 + $0x70] sm:$0xff]
  %v2209 = vld [vmem:[%s1 + $0x78] sm:$0xff]
  %v2210 = vld [vmem:[%s1 + $0x80] sm:$0xff]
  %v2211 = vld [vmem:[%s1 + $0x88] sm:$0xff]
  %v2212 = vld [vmem:[%s1 + $0x90] sm:$0xff]
  %v2213 = vld [vmem:[%s1 + $0x98] sm:$0xff]
  %v2214 = vld [vmem:[%s1 + $0xa0] sm:$0xff]
  %v2215 = vld [vmem:[%s1 + $0xa8] sm:$0xff]
  %v2216 = vld [vmem:[%s1 + $0xb0] sm:$0xff]
  %v2217 = vld [vmem:[%s1 + $0xb8] sm:$0xff]
  %v2218 = vld [vmem:[%s1 + $0xc0] sm:$0xff]
  %v2219 = vld [vmem:[%s1 + $0xc8] sm:$0xff]
  %v2220 = vld [vmem:[%s1 + $0xd0] sm:$0xff]
  %v2221 = vld [vmem:[%s1 + $0xd8] sm:$0xff]
  %v2222 = vld [vmem:[%s1 + $0xe0] sm:$0xff]
  %v2223 = vld [vmem:[%s1 + $0xe8] sm:$0xff]
  %v2224 = vld [vmem:[%s1 + $0xf0] sm:$0xff]
  %v2225 = vld [vmem:[%s1 + $0xf8] sm:$0xff]
  %v2226 = vld [vmem:[%s1 + $0x100] sm:$0xff]
  %v2227 = vld [vmem:[%s1 + $0x108] sm:$0xff]
  %v2228 = vld [vmem:[%s1 + $0x110] sm:$0xff]
  %v2229 = vld [vmem:[%s1 + $0x118] sm:$0xff]
  %v2230 = vld [vmem:[%s1 + $0x120] sm:$0xff]
  %v2231 = vld [vmem:[%s1 + $0x128] sm:$0xff]
  %v2232 = vld [vmem:[%s1 + $0x130] sm:$0xff]
  %v2233 = vld [vmem:[%s1 + $0x138] sm:$0xff]
  %v2234 = vld [vmem:[%s1 + $0x140] sm:$0xff]
  %v2235 = vld [vmem:[%s1 + $0x148] sm:$0xff]
  %v2236 = vld [vmem:[%s1 + $0x150] sm:$0xff]
  %v2237 = vld [vmem:[%s1 + $0x158] sm:$0xff]
  %v2238 = vld [vmem:[%s1 + $0x160] sm:$0xff]
  %v2239 = vld [vmem:[%s1 + $0x168] sm:$0xff]
  %v2240 = vld [vmem:[%s1 + $0x170] sm:$0xff]
  %v2241 = vld [vmem:[%s1 + $0x178] sm:$0xff]
  %v2242 = vld [vmem:[%s1 + $0x180] sm:$0xff]
  %v2243 = vld [vmem:[%s1 + $0x188] sm:$0xff]
  %v2244 = vld [vmem:[%s1 + $0x190] sm:$0xff]
  %v2245 = vld [vmem:[%s1 + $0x198] sm:$0xff]
  %v2246 = vld [vmem:[%s1 + $0x1a0] sm:$0xff]
  %v2247 = vld [vmem:[%s1 + $0x1a8] sm:$0xff]
  %v2248 = vld [vmem:[%s1 + $0x1b0] sm:$0xff]
  %v2249 = vld [vmem:[%s1 + $0x1b8] sm:$0xff]
  %v2250 = vld [vmem:[%s1 + $0x1c0] sm:$0xff]
  %v2251 = vld [vmem:[%s1 + $0x1c8] sm:$0xff]
  %v2252 = vld [vmem:[%s1 + $0x1d0] sm:$0xff]
  %v2253 = vld [vmem:[%s1 + $0x1d8] sm:$0xff]
  %v2254 = vld [vmem:[%s1 + $0x1e0] sm:$0xff]
  %v2255 = vld [vmem:[%s1 + $0x1e8] sm:$0xff]
  %v2256 = vld [vmem:[%s1 + $0x1f0] sm:$0xff]
  %v2257 = vld [vmem:[%s1 + $0x1f8] sm:$0xff]
  %v2258 = vld [vmem:[%s1 + $0x200] sm:$0xff]
  %v2259 = vld [vmem:[%s1 + $0x208] sm:$0xff]
  %v2260 = vld [vmem:[%s1 + $0x210] sm:$0xff]
  %v2261 = vld [vmem:[%s1 + $0x218] sm:$0xff]
  %v2262 = vld [vmem:[%s1 + $0x220] sm:$0xff]
  %v2263 = vld [vmem:[%s1 + $0x228] sm:$0xff]
  %v2264 = vld [vmem:[%s1 + $0x230] sm:$0xff]
  %v2265 = vld [vmem:[%s1 + $0x238] sm:$0xff]
  %v2266 = vld [vmem:[%s1 + $0x240] sm:$0xff]
  %v2267 = vld [vmem:[%s1 + $0x248] sm:$0xff]
  %v2268 = vld [vmem:[%s1 + $0x250] sm:$0xff]
  %v2269 = vld [vmem:[%s1 + $0x258] sm:$0xff]
  %v2270 = vld [vmem:[%s1 + $0x260] sm:$0xff]
  %v2271 = vld [vmem:[%s1 + $0x268] sm:$0xff]
  %v2272 = vld [vmem:[%s1 + $0x270] sm:$0xff]
  %v2273 = vld [vmem:[%s1 + $0x278] sm:$0xff]
  %v2274 = vld [vmem:[%s1 + $0x280] sm:$0xff]
  %v2275 = vld [vmem:[%s1 + $0x288] sm:$0xff]
  %v2276 = vld [vmem:[%s1 + $0x290] sm:$0xff]
  %v2277 = vld [vmem:[%s1 + $0x298] sm:$0xff]
  %v2278 = vld [vmem:[%s1 + $0x2a0] sm:$0xff]
  %v2279 = vld [vmem:[%s1 + $0x2a8] sm:$0xff]
  %v2280 = vld [vmem:[%s1 + $0x2b0] sm:$0xff]
  %v2281 = vld [vmem:[%s1 + $0x2b8] sm:$0xff]
  %v2282 = vld [vmem:[%s1 + $0x2c0] sm:$0xff]
  %v2283 = vld [vmem:[%s1 + $0x2c8] sm:$0xff]
  %v2284 = vld [vmem:[%s1 + $0x2d0] sm:$0xff]
  %v2285 = vld [vmem:[%s1 + $0x2d8] sm:$0xff]
  %v2286 = vld [vmem:[%s1 + $0x2e0] sm:$0xff]
  %v2287 = vld [vmem:[%s1 + $0x2e8] sm:$0xff]
  %v2288 = vld [vmem:[%s1 + $0x2f0] sm:$0xff]
  %v2289 = vld [vmem:[%s1 + $0x2f8] sm:$0xff]
  %v2290 = vld [vmem:[%s1 + $0x300] sm:$0xff]
  %v2291 = vld [vmem:[%s1 + $0x308] sm:$0xff]
  %v2292 = vld [vmem:[%s1 + $0x310] sm:$0xff]
  %v2293 = vld [vmem:[%s1 + $0x318] sm:$0xff]
  %v2294 = vld [vmem:[%s1 + $0x320] sm:$0xff]
  %v2295 = vld [vmem:[%s1 + $0x328] sm:$0xff]
  %v2296 = vld [vmem:[%s1 + $0x330] sm:$0xff]
  %v2297 = vld [vmem:[%s1 + $0x338] sm:$0xff]
  %v2298 = vld [vmem:[%s1 + $0x340] sm:$0xff]
  %v2299 = vld [vmem:[%s1 + $0x348] sm:$0xff]
  %v2300 = vld [vmem:[%s1 + $0x350] sm:$0xff]
  %v2301 = vld [vmem:[%s1 + $0x358] sm:$0xff]
  %v2302 = vld [vmem:[%s1 + $0x360] sm:$0xff]
  %v2303 = vld [vmem:[%s1 + $0x368] sm:$0xff]
  %v2304 = vld [vmem:[%s1 + $0x370] sm:$0xff]
  %v2305 = vld [vmem:[%s1 + $0x378] sm:$0xff]
  %v2306 = vld [vmem:[%s1 + $0x380] sm:$0xff]
  %v2307 = vld [vmem:[%s1 + $0x388] sm:$0xff]
  %v2308 = vld [vmem:[%s1 + $0x390] sm:$0xff]
  %v2309 = vld [vmem:[%s1 + $0x398] sm:$0xff]
  %v2310 = vld [vmem:[%s1 + $0x3a0] sm:$0xff]
  %v2311 = vld [vmem:[%s1 + $0x3a8] sm:$0xff]
  %v2312 = vld [vmem:[%s1 + $0x3b0] sm:$0xff]
  %v2313 = vld [vmem:[%s1 + $0x3b8] sm:$0xff]
  %v2314 = vld [vmem:[%s1 + $0x3c0] sm:$0xff]
  %v2315 = vld [vmem:[%s1 + $0x3c8] sm:$0xff]
  %v2316 = vld [vmem:[%s1 + $0x3d0] sm:$0xff]
  %v2317 = vld [vmem:[%s1 + $0x3d8] sm:$0xff]
  %v2318 = vld [vmem:[%s1 + $0x3e0] sm:$0xff]
  %v2319 = vld [vmem:[%s1 + $0x3e8] sm:$0xff]
  %v2320 = vld [vmem:[%s1 + $0x3f0] sm:$0xff]
  %v2321 = vld [vmem:[%s1 + $0x3f8] sm:$0xff]
  %v2450 = vunpack.c.l.b16 %v2194
  %v2451 = vunpack.c.h.b16 %v2194
  %v2452 = vunpack.c.l.b16 %v2195
  %v2453 = vunpack.c.h.b16 %v2195
  %v2454 = vunpack.c.l.b16 %v2196
  %v2455 = vunpack.c.h.b16 %v2196
  %v2456 = vunpack.c.l.b16 %v2197
  %v2457 = vunpack.c.h.b16 %v2197
  %v2458 = vunpack.c.l.b16 %v2198
  %v2459 = vunpack.c.h.b16 %v2198
  %v2460 = vunpack.c.l.b16 %v2199
  %v2461 = vunpack.c.h.b16 %v2199
  %v2462 = vunpack.c.l.b16 %v2200
  %v2463 = vunpack.c.h.b16 %v2200
  %v2464 = vunpack.c.l.b16 %v2201
  %v2465 = vunpack.c.h.b16 %v2201
  %v2466 = vunpack.c.l.b16 %v2202
  %v2467 = vunpack.c.h.b16 %v2202
  %v2468 = vunpack.c.l.b16 %v2203
  %v2469 = vunpack.c.h.b16 %v2203
  %v2470 = vunpack.c.l.b16 %v2204
  %v2471 = vunpack.c.h.b16 %v2204
  %v2472 = vunpack.c.l.b16 %v2205
  %v2473 = vunpack.c.h.b16 %v2205
  %v2474 = vunpack.c.l.b16 %v2206
  %v2475 = vunpack.c.h.b16 %v2206
  %v2476 = vunpack.c.l.b16 %v2207
  %v2477 = vunpack.c.h.b16 %v2207
  %v2478 = vunpack.c.l.b16 %v2208
  %v2479 = vunpack.c.h.b16 %v2208
  %v2480 = vunpack.c.l.b16 %v2209
  %v2481 = vunpack.c.h.b16 %v2209
  %v2482 = vunpack.c.l.b16 %v2210
  %v2483 = vunpack.c.h.b16 %v2210
  %v2484 = vunpack.c.l.b16 %v2211
  %v2485 = vunpack.c.h.b16 %v2211
  %v2486 = vunpack.c.l.b16 %v2212
  %v2487 = vunpack.c.h.b16 %v2212
  %v2488 = vunpack.c.l.b16 %v2213
  %v2489 = vunpack.c.h.b16 %v2213
  %v2490 = vunpack.c.l.b16 %v2214
  %v2491 = vunpack.c.h.b16 %v2214
  %v2492 = vunpack.c.l.b16 %v2215
  %v2493 = vunpack.c.h.b16 %v2215
  %v2494 = vunpack.c.l.b16 %v2216
  %v2495 = vunpack.c.h.b16 %v2216
  %v2496 = vunpack.c.l.b16 %v2217
  %v2497 = vunpack.c.h.b16 %v2217
  %v2498 = vunpack.c.l.b16 %v2218
  %v2499 = vunpack.c.h.b16 %v2218
  %v2500 = vunpack.c.l.b16 %v2219
  %v2501 = vunpack.c.h.b16 %v2219
  %v2502 = vunpack.c.l.b16 %v2220
  %v2503 = vunpack.c.h.b16 %v2220
  %v2504 = vunpack.c.l.b16 %v2221
  %v2505 = vunpack.c.h.b16 %v2221
  %v2506 = vunpack.c.l.b16 %v2222
  %v2507 = vunpack.c.h.b16 %v2222
  %v2508 = vunpack.c.l.b16 %v2223
  %v2509 = vunpack.c.h.b16 %v2223
  %v2510 = vunpack.c.l.b16 %v2224
  %v2511 = vunpack.c.h.b16 %v2224
  %v2512 = vunpack.c.l.b16 %v2225
  %v2513 = vunpack.c.h.b16 %v2225
  %v2514 = vunpack.c.l.b16 %v2226
  %v2515 = vunpack.c.h.b16 %v2226
  %v2516 = vunpack.c.l.b16 %v2227
  %v2517 = vunpack.c.h.b16 %v2227
  %v2518 = vunpack.c.l.b16 %v2228
  %v2519 = vunpack.c.h.b16 %v2228
  %v2520 = vunpack.c.l.b16 %v2229
  %v2521 = vunpack.c.h.b16 %v2229
  %v2522 = vunpack.c.l.b16 %v2230
  %v2523 = vunpack.c.h.b16 %v2230
  %v2524 = vunpack.c.l.b16 %v2231
  %v2525 = vunpack.c.h.b16 %v2231
  %v2526 = vunpack.c.l.b16 %v2232
  %v2527 = vunpack.c.h.b16 %v2232
  %v2528 = vunpack.c.l.b16 %v2233
  %v2529 = vunpack.c.h.b16 %v2233
  %v2530 = vunpack.c.l.b16 %v2234
  %v2531 = vunpack.c.h.b16 %v2234
  %v2532 = vunpack.c.l.b16 %v2235
  %v2533 = vunpack.c.h.b16 %v2235
  %v2534 = vunpack.c.l.b16 %v2236
  %v2535 = vunpack.c.h.b16 %v2236
  %v2536 = vunpack.c.l.b16 %v2237
  %v2537 = vunpack.c.h.b16 %v2237
  %v2538 = vunpack.c.l.b16 %v2238
  %v2539 = vunpack.c.h.b16 %v2238
  %v2540 = vunpack.c.l.b16 %v2239
  %v2541 = vunpack.c.h.b16 %v2239
  %v2542 = vunpack.c.l.b16 %v2240
  %v2543 = vunpack.c.h.b16 %v2240
  %v2544 = vunpack.c.l.b16 %v2241
  %v2545 = vunpack.c.h.b16 %v2241
  %v2546 = vunpack.c.l.b16 %v2242
  %v2547 = vunpack.c.h.b16 %v2242
  %v2548 = vunpack.c.l.b16 %v2243
  %v2549 = vunpack.c.h.b16 %v2243
  %v2550 = vunpack.c.l.b16 %v2244
  %v2551 = vunpack.c.h.b16 %v2244
  %v2552 = vunpack.c.l.b16 %v2245
  %v2553 = vunpack.c.h.b16 %v2245
  %v2554 = vunpack.c.l.b16 %v2246
  %v2555 = vunpack.c.h.b16 %v2246
  %v2556 = vunpack.c.l.b16 %v2247
  %v2557 = vunpack.c.h.b16 %v2247
  %v2558 = vunpack.c.l.b16 %v2248
  %v2559 = vunpack.c.h.b16 %v2248
  %v2560 = vunpack.c.l.b16 %v2249
  %v2561 = vunpack.c.h.b16 %v2249
  %v2562 = vunpack.c.l.b16 %v2250
  %v2563 = vunpack.c.h.b16 %v2250
  %v2564 = vunpack.c.l.b16 %v2251
  %v2565 = vunpack.c.h.b16 %v2251
  %v2566 = vunpack.c.l.b16 %v2252
  %v2567 = vunpack.c.h.b16 %v2252
  %v2568 = vunpack.c.l.b16 %v2253
  %v2569 = vunpack.c.h.b16 %v2253
  %v2570 = vunpack.c.l.b16 %v2254
  %v2571 = vunpack.c.h.b16 %v2254
  %v2572 = vunpack.c.l.b16 %v2255
  %v2573 = vunpack.c.h.b16 %v2255
  %v2574 = vunpack.c.l.b16 %v2256
  %v2575 = vunpack.c.h.b16 %v2256
  %v2576 = vunpack.c.l.b16 %v2257
  %v2577 = vunpack.c.h.b16 %v2257
  %v2578 = vunpack.c.l.b16 %v2258
  %v2579 = vunpack.c.h.b16 %v2258
  %v2580 = vunpack.c.l.b16 %v2259
  %v2581 = vunpack.c.h.b16 %v2259
  %v2582 = vunpack.c.l.b16 %v2260
  %v2583 = vunpack.c.h.b16 %v2260
  %v2584 = vunpack.c.l.b16 %v2261
  %v2585 = vunpack.c.h.b16 %v2261
  %v2586 = vunpack.c.l.b16 %v2262
  %v2587 = vunpack.c.h.b16 %v2262
  %v2588 = vunpack.c.l.b16 %v2263
  %v2589 = vunpack.c.h.b16 %v2263
  %v2590 = vunpack.c.l.b16 %v2264
  %v2591 = vunpack.c.h.b16 %v2264
  %v2592 = vunpack.c.l.b16 %v2265
  %v2593 = vunpack.c.h.b16 %v2265
  %v2594 = vunpack.c.l.b16 %v2266
  %v2595 = vunpack.c.h.b16 %v2266
  %v2596 = vunpack.c.l.b16 %v2267
  %v2597 = vunpack.c.h.b16 %v2267
  %v2598 = vunpack.c.l.b16 %v2268
  %v2599 = vunpack.c.h.b16 %v2268
  %v2600 = vunpack.c.l.b16 %v2269
  %v2601 = vunpack.c.h.b16 %v2269
  %v2602 = vunpack.c.l.b16 %v2270
  %v2603 = vunpack.c.h.b16 %v2270
  %v2604 = vunpack.c.l.b16 %v2271
  %v2605 = vunpack.c.h.b16 %v2271
  %v2606 = vunpack.c.l.b16 %v2272
  %v2607 = vunpack.c.h.b16 %v2272
  %v2608 = vunpack.c.l.b16 %v2273
  %v2609 = vunpack.c.h.b16 %v2273
  %v2610 = vunpack.c.l.b16 %v2274
  %v2611 = vunpack.c.h.b16 %v2274
  %v2612 = vunpack.c.l.b16 %v2275
  %v2613 = vunpack.c.h.b16 %v2275
  %v2614 = vunpack.c.l.b16 %v2276
  %v2615 = vunpack.c.h.b16 %v2276
  %v2616 = vunpack.c.l.b16 %v2277
  %v2617 = vunpack.c.h.b16 %v2277
  %v2618 = vunpack.c.l.b16 %v2278
  %v2619 = vunpack.c.h.b16 %v2278
  %v2620 = vunpack.c.l.b16 %v2279
  %v2621 = vunpack.c.h.b16 %v2279
  %v2622 = vunpack.c.l.b16 %v2280
  %v2623 = vunpack.c.h.b16 %v2280
  %v2624 = vunpack.c.l.b16 %v2281
  %v2625 = vunpack.c.h.b16 %v2281
  %v2626 = vunpack.c.l.b16 %v2282
  %v2627 = vunpack.c.h.b16 %v2282
  %v2628 = vunpack.c.l.b16 %v2283
  %v2629 = vunpack.c.h.b16 %v2283
  %v2630 = vunpack.c.l.b16 %v2284
  %v2631 = vunpack.c.h.b16 %v2284
  %v2632 = vunpack.c.l.b16 %v2285
  %v2633 = vunpack.c.h.b16 %v2285
  %v2634 = vunpack.c.l.b16 %v2286
  %v2635 = vunpack.c.h.b16 %v2286
  %v2636 = vunpack.c.l.b16 %v2287
  %v2637 = vunpack.c.h.b16 %v2287
  %v2638 = vunpack.c.l.b16 %v2288
  %v2639 = vunpack.c.h.b16 %v2288
  %v2640 = vunpack.c.l.b16 %v2289
  %v2641 = vunpack.c.h.b16 %v2289
  %v2642 = vunpack.c.l.b16 %v2290
  %v2643 = vunpack.c.h.b16 %v2290
  %v2644 = vunpack.c.l.b16 %v2291
  %v2645 = vunpack.c.h.b16 %v2291
  %v2646 = vunpack.c.l.b16 %v2292
  %v2647 = vunpack.c.h.b16 %v2292
  %v2648 = vunpack.c.l.b16 %v2293
  %v2649 = vunpack.c.h.b16 %v2293
  %v2650 = vunpack.c.l.b16 %v2294
  %v2651 = vunpack.c.h.b16 %v2294
  %v2652 = vunpack.c.l.b16 %v2295
  %v2653 = vunpack.c.h.b16 %v2295
  %v2654 = vunpack.c.l.b16 %v2296
  %v2655 = vunpack.c.h.b16 %v2296
  %v2656 = vunpack.c.l.b16 %v2297
  %v2657 = vunpack.c.h.b16 %v2297
  %v2658 = vunpack.c.l.b16 %v2298
  %v2659 = vunpack.c.h.b16 %v2298
  %v2660 = vunpack.c.l.b16 %v2299
  %v2661 = vunpack.c.h.b16 %v2299
  %v2662 = vunpack.c.l.b16 %v2300
  %v2663 = vunpack.c.h.b16 %v2300
  %v2664 = vunpack.c.l.b16 %v2301
  %v2665 = vunpack.c.h.b16 %v2301
  %v2666 = vunpack.c.l.b16 %v2302
  %v2667 = vunpack.c.h.b16 %v2302
  %v2668 = vunpack.c.l.b16 %v2303
  %v2669 = vunpack.c.h.b16 %v2303
  %v2670 = vunpack.c.l.b16 %v2304
  %v2671 = vunpack.c.h.b16 %v2304
  %v2672 = vunpack.c.l.b16 %v2305
  %v2673 = vunpack.c.h.b16 %v2305
  %v2674 = vunpack.c.l.b16 %v2306
  %v2675 = vunpack.c.h.b16 %v2306
  %v2676 = vunpack.c.l.b16 %v2307
  %v2677 = vunpack.c.h.b16 %v2307
  %v2678 = vunpack.c.l.b16 %v2308
  %v2679 = vunpack.c.h.b16 %v2308
  %v2680 = vunpack.c.l.b16 %v2309
  %v2681 = vunpack.c.h.b16 %v2309
  %v2682 = vunpack.c.l.b16 %v2310
  %v2683 = vunpack.c.h.b16 %v2310
  %v2684 = vunpack.c.l.b16 %v2311
  %v2685 = vunpack.c.h.b16 %v2311
  %v2686 = vunpack.c.l.b16 %v2312
  %v2687 = vunpack.c.h.b16 %v2312
  %v2688 = vunpack.c.l.b16 %v2313
  %v2689 = vunpack.c.h.b16 %v2313
  %v2690 = vunpack.c.l.b16 %v2314
  %v2691 = vunpack.c.h.b16 %v2314
  %v2692 = vunpack.c.l.b16 %v2315
  %v2693 = vunpack.c.h.b16 %v2315
  %v2694 = vunpack.c.l.b16 %v2316
  %v2695 = vunpack.c.h.b16 %v2316
  %v2696 = vunpack.c.l.b16 %v2317
  %v2697 = vunpack.c.h.b16 %v2317
  %v2698 = vunpack.c.l.b16 %v2318
  %v2699 = vunpack.c.h.b16 %v2318
  %v2700 = vunpack.c.l.b16 %v2319
  %v2701 = vunpack.c.h.b16 %v2319
  %v2702 = vunpack.c.l.b16 %v2320
  %v2703 = vunpack.c.h.b16 %v2320
  %v2704 = vunpack.c.l.b16 %v2321
  %v2705 = vunpack.c.h.b16 %v2321
  %v2706 = vpack.c.b16 %v2458, %v2450
  %v2707 = vpack.c.b16 %v2459, %v2451
  %v2708 = vpack.c.b16 %v2460, %v2452
  %v2709 = vpack.c.b16 %v2461, %v2453
  %v2710 = vpack.c.b16 %v2462, %v2454
  %v2711 = vpack.c.b16 %v2463, %v2455
  %v2712 = vpack.c.b16 %v2464, %v2456
  %v2713 = vpack.c.b16 %v2465, %v2457
  %v2714 = vpack.c.b16 %v2474, %v2466
  %v2715 = vpack.c.b16 %v2475, %v2467
  %v2716 = vpack.c.b16 %v2476, %v2468
  %v2717 = vpack.c.b16 %v2477, %v2469
  %v2718 = vpack.c.b16 %v2478, %v2470
  %v2719 = vpack.c.b16 %v2479, %v2471
  %v2720 = vpack.c.b16 %v2480, %v2472
  %v2721 = vpack.c.b16 %v2481, %v2473
  %v2722 = vpack.c.b16 %v2490, %v2482
  %v2723 = vpack.c.b16 %v2491, %v2483
  %v2724 = vpack.c.b16 %v2492, %v2484
  %v2725 = vpack.c.b16 %v2493, %v2485
  %v2726 = vpack.c.b16 %v2494, %v2486
  %v2727 = vpack.c.b16 %v2495, %v2487
  %v2728 = vpack.c.b16 %v2496, %v2488
  %v2729 = vpack.c.b16 %v2497, %v2489
  %v2730 = vpack.c.b16 %v2506, %v2498
  %v2731 = vpack.c.b16 %v2507, %v2499
  %v2732 = vpack.c.b16 %v2508, %v2500
  %v2733 = vpack.c.b16 %v2509, %v2501
  %v2734 = vpack.c.b16 %v2510, %v2502
  %v2735 = vpack.c.b16 %v2511, %v2503
  %v2736 = vpack.c.b16 %v2512, %v2504
  %v2737 = vpack.c.b16 %v2513, %v2505
  %v2738 = vpack.c.b16 %v2522, %v2514
  %v2739 = vpack.c.b16 %v2523, %v2515
  %v2740 = vpack.c.b16 %v2524, %v2516
  %v2741 = vpack.c.b16 %v2525, %v2517
  %v2742 = vpack.c.b16 %v2526, %v2518
  %v2743 = vpack.c.b16 %v2527, %v2519
  %v2744 = vpack.c.b16 %v2528, %v2520
  %v2745 = vpack.c.b16 %v2529, %v2521
  %v2746 = vpack.c.b16 %v2538, %v2530
  %v2747 = vpack.c.b16 %v2539, %v2531
  %v2748 = vpack.c.b16 %v2540, %v2532
  %v2749 = vpack.c.b16 %v2541, %v2533
  %v2750 = vpack.c.b16 %v2542, %v2534
  %v2751 = vpack.c.b16 %v2543, %v2535
  %v2752 = vpack.c.b16 %v2544, %v2536
  %v2753 = vpack.c.b16 %v2545, %v2537
  %v2754 = vpack.c.b16 %v2554, %v2546
  %v2755 = vpack.c.b16 %v2555, %v2547
  %v2756 = vpack.c.b16 %v2556, %v2548
  %v2757 = vpack.c.b16 %v2557, %v2549
  %v2758 = vpack.c.b16 %v2558, %v2550
  %v2759 = vpack.c.b16 %v2559, %v2551
  %v2760 = vpack.c.b16 %v2560, %v2552
  %v2761 = vpack.c.b16 %v2561, %v2553
  %v2762 = vpack.c.b16 %v2570, %v2562
  %v2763 = vpack.c.b16 %v2571, %v2563
  %v2764 = vpack.c.b16 %v2572, %v2564
  %v2765 = vpack.c.b16 %v2573, %v2565
  %v2766 = vpack.c.b16 %v2574, %v2566
  %v2767 = vpack.c.b16 %v2575, %v2567
  %v2768 = vpack.c.b16 %v2576, %v2568
  %v2769 = vpack.c.b16 %v2577, %v2569
  %v2770 = vpack.c.b16 %v2586, %v2578
  %v2771 = vpack.c.b16 %v2587, %v2579
  %v2772 = vpack.c.b16 %v2588, %v2580
  %v2773 = vpack.c.b16 %v2589, %v2581
  %v2774 = vpack.c.b16 %v2590, %v2582
  %v2775 = vpack.c.b16 %v2591, %v2583
  %v2776 = vpack.c.b16 %v2592, %v2584
  %v2777 = vpack.c.b16 %v2593, %v2585
  %v2778 = vpack.c.b16 %v2602, %v2594
  %v2779 = vpack.c.b16 %v2603, %v2595
  %v2780 = vpack.c.b16 %v2604, %v2596
  %v2781 = vpack.c.b16 %v2605, %v2597
  %v2782 = vpack.c.b16 %v2606, %v2598
  %v2783 = vpack.c.b16 %v2607, %v2599
  %v2784 = vpack.c.b16 %v2608, %v2600
  %v2785 = vpack.c.b16 %v2609, %v2601
  %v2786 = vpack.c.b16 %v2618, %v2610
  %v2787 = vpack.c.b16 %v2619, %v2611
  %v2788 = vpack.c.b16 %v2620, %v2612
  %v2789 = vpack.c.b16 %v2621, %v2613
  %v2790 = vpack.c.b16 %v2622, %v2614
  %v2791 = vpack.c.b16 %v2623, %v2615
  %v2792 = vpack.c.b16 %v2624, %v2616
  %v2793 = vpack.c.b16 %v2625, %v2617
  %v2794 = vpack.c.b16 %v2634, %v2626
  %v2795 = vpack.c.b16 %v2635, %v2627
  %v2796 = vpack.c.b16 %v2636, %v2628
  %v2797 = vpack.c.b16 %v2637, %v2629
  %v2798 = vpack.c.b16 %v2638, %v2630
  %v2799 = vpack.c.b16 %v2639, %v2631
  %v2800 = vpack.c.b16 %v2640, %v2632
  %v2801 = vpack.c.b16 %v2641, %v2633
  %v2802 = vpack.c.b16 %v2650, %v2642
  %v2803 = vpack.c.b16 %v2651, %v2643
  %v2804 = vpack.c.b16 %v2652, %v2644
  %v2805 = vpack.c.b16 %v2653, %v2645
  %v2806 = vpack.c.b16 %v2654, %v2646
  %v2807 = vpack.c.b16 %v2655, %v2647
  %v2808 = vpack.c.b16 %v2656, %v2648
  %v2809 = vpack.c.b16 %v2657, %v2649
  %v2810 = vpack.c.b16 %v2666, %v2658
  %v2811 = vpack.c.b16 %v2667, %v2659
  %v2812 = vpack.c.b16 %v2668, %v2660
  %v2813 = vpack.c.b16 %v2669, %v2661
  %v2814 = vpack.c.b16 %v2670, %v2662
  %v2815 = vpack.c.b16 %v2671, %v2663
  %v2816 = vpack.c.b16 %v2672, %v2664
  %v2817 = vpack.c.b16 %v2673, %v2665
  %v2818 = vpack.c.b16 %v2682, %v2674
  %v2819 = vpack.c.b16 %v2683, %v2675
  %v2820 = vpack.c.b16 %v2684, %v2676
  %v2821 = vpack.c.b16 %v2685, %v2677
  %v2822 = vpack.c.b16 %v2686, %v2678
  %v2823 = vpack.c.b16 %v2687, %v2679
  %v2824 = vpack.c.b16 %v2688, %v2680
  %v2825 = vpack.c.b16 %v2689, %v2681
  %v2826 = vpack.c.b16 %v2698, %v2690
  %v2827 = vpack.c.b16 %v2699, %v2691
  %v2828 = vpack.c.b16 %v2700, %v2692
  %v2829 = vpack.c.b16 %v2701, %v2693
  %v2830 = vpack.c.b16 %v2702, %v2694
  %v2831 = vpack.c.b16 %v2703, %v2695
  %v2832 = vpack.c.b16 %v2704, %v2696
  %v2833 = vpack.c.b16 %v2705, %v2697
  %2962 = vmatpush.bf16.msra.mxu0 %v2762
  %2963 = vmatpush.bf16.msra.mxu0 %v2754
  %2964 = vmatpush.bf16.msra.mxu0 %v2746
  %2965 = vmatpush.bf16.msra.mxu0 %v2738
  %2966 = vmatpush.bf16.msra.mxu0 %v2730
  %2967 = vmatpush.bf16.msra.mxu0 %v2722
  %2968 = vmatpush.bf16.msra.mxu0 %v2714
  %2969 = vmatpush.bf16.msra.mxu0 %v2706
  %2970 = vmatmul.bf16.gmra.mxu0 %v2192
  %v2971 = vpop.f32.mrf.mxu0
  %v2972 = vadd.f32 0.0, %v2971
  %v2973 = vpop.f32.mrf.mxu0
  %2974 = vdwg.mxu0
  %2975 = vmatpush.bf16.msra.mxu0 %v2826
  %2976 = vmatpush.bf16.msra.mxu0 %v2818
  %2977 = vmatpush.bf16.msra.mxu0 %v2810
  %2978 = vmatpush.bf16.msra.mxu0 %v2802
  %2979 = vmatpush.bf16.msra.mxu0 %v2794
  %2980 = vmatpush.bf16.msra.mxu0 %v2786
  %2981 = vmatpush.bf16.msra.mxu0 %v2778
  %2982 = vmatpush.bf16.msra.mxu0 %v2770
  %2983 = vmatmul.bf16.gmra.mxu0 %v2193
  %v2984 = vpop.f32.mrf.mxu0
  %v2985 = vadd.f32 %v2972, %v2984
  %v2986 = vpop.f32.mrf.mxu0
  %2987 = vdwg.mxu0
  %2988 = vmatpush.bf16.msra.mxu0 %v2763
  %2989 = vmatpush.bf16.msra.mxu0 %v2755
  %2990 = vmatpush.bf16.msra.mxu0 %v2747
  %2991 = vmatpush.bf16.msra.mxu0 %v2739
  %2992 = vmatpush.bf16.msra.mxu0 %v2731
  %2993 = vmatpush.bf16.msra.mxu0 %v2723
  %2994 = vmatpush.bf16.msra.mxu0 %v2715
  %2995 = vmatpush.bf16.msra.mxu0 %v2707
  %2996 = vmatmul.bf16.gmra.mxu0 %v2192
  %v2997 = vpop.f32.mrf.mxu0
  %v2998 = vadd.f32 0.0, %v2997
  %v2999 = vpop.f32.mrf.mxu0
  %3000 = vdwg.mxu0
  %3001 = vmatpush.bf16.msra.mxu0 %v2827
  %3002 = vmatpush.bf16.msra.mxu0 %v2819
  %3003 = vmatpush.bf16.msra.mxu0 %v2811
  %3004 = vmatpush.bf16.msra.mxu0 %v2803
  %3005 = vmatpush.bf16.msra.mxu0 %v2795
  %3006 = vmatpush.bf16.msra.mxu0 %v2787
  %3007 = vmatpush.bf16.msra.mxu0 %v2779
  %3008 = vmatpush.bf16.msra.mxu0 %v2771
  %3009 = vmatmul.bf16.gmra.mxu0 %v2193
  %v3010 = vpop.f32.mrf.mxu0
  %v3011 = vadd.f32 %v2998, %v3010
  %v3012 = vpop.f32.mrf.mxu0
  %3013 = vdwg.mxu0
  %3014 = vmatpush.bf16.msra.mxu0 %v2764
  %3015 = vmatpush.bf16.msra.mxu0 %v2756
  %3016 = vmatpush.bf16.msra.mxu0 %v2748
  %3017 = vmatpush.bf16.msra.mxu0 %v2740
  %3018 = vmatpush.bf16.msra.mxu0 %v2732
  %3019 = vmatpush.bf16.msra.mxu0 %v2724
  %3020 = vmatpush.bf16.msra.mxu0 %v2716
  %3021 = vmatpush.bf16.msra.mxu0 %v2708
  %3022 = vmatmul.bf16.gmra.mxu0 %v2192
  %v3023 = vpop.f32.mrf.mxu0
  %v3024 = vadd.f32 0.0, %v3023
  %v3025 = vpop.f32.mrf.mxu0
  %3026 = vdwg.mxu0
  %3027 = vmatpush.bf16.msra.mxu0 %v2828
  %3028 = vmatpush.bf16.msra.mxu0 %v2820
  %3029 = vmatpush.bf16.msra.mxu0 %v2812
  %3030 = vmatpush.bf16.msra.mxu0 %v2804
  %3031 = vmatpush.bf16.msra.mxu0 %v2796
  %3032 = vmatpush.bf16.msra.mxu0 %v2788
  %3033 = vmatpush.bf16.msra.mxu0 %v2780
  %3034 = vmatpush.bf16.msra.mxu0 %v2772
  %3035 = vmatmul.bf16.gmra.mxu0 %v2193
  %v3036 = vpop.f32.mrf.mxu0
  %v3037 = vadd.f32 %v3024, %v3036
  %v3038 = vpop.f32.mrf.mxu0
  %3039 = vdwg.mxu0
  %3040 = vmatpush.bf16.msra.mxu0 %v2765
  %3041 = vmatpush.bf16.msra.mxu0 %v2757
  %3042 = vmatpush.bf16.msra.mxu0 %v2749
  %3043 = vmatpush.bf16.msra.mxu0 %v2741
  %3044 = vmatpush.bf16.msra.mxu0 %v2733
  %3045 = vmatpush.bf16.msra.mxu0 %v2725
  %3046 = vmatpush.bf16.msra.mxu0 %v2717
  %3047 = vmatpush.bf16.msra.mxu0 %v2709
  %3048 = vmatmul.bf16.gmra.mxu0 %v2192
  %v3049 = vpop.f32.mrf.mxu0
  %v3050 = vadd.f32 0.0, %v3049
  %v3051 = vpop.f32.mrf.mxu0
  %3052 = vdwg.mxu0
  %3053 = vmatpush.bf16.msra.mxu0 %v2829
  %3054 = vmatpush.bf16.msra.mxu0 %v2821
  %3055 = vmatpush.bf16.msra.mxu0 %v2813
  %3056 = vmatpush.bf16.msra.mxu0 %v2805
  %3057 = vmatpush.bf16.msra.mxu0 %v2797
  %3058 = vmatpush.bf16.msra.mxu0 %v2789
  %3059 = vmatpush.bf16.msra.mxu0 %v2781
  %3060 = vmatpush.bf16.msra.mxu0 %v2773
  %3061 = vmatmul.bf16.gmra.mxu0 %v2193
  %v3062 = vpop.f32.mrf.mxu0
  %v3063 = vadd.f32 %v3050, %v3062
  %v3064 = vpop.f32.mrf.mxu0
  %3065 = vdwg.mxu0
  %3066 = vmatpush.bf16.msra.mxu0 %v2766
  %3067 = vmatpush.bf16.msra.mxu0 %v2758
  %3068 = vmatpush.bf16.msra.mxu0 %v2750
  %3069 = vmatpush.bf16.msra.mxu0 %v2742
  %3070 = vmatpush.bf16.msra.mxu0 %v2734
  %3071 = vmatpush.bf16.msra.mxu0 %v2726
  %3072 = vmatpush.bf16.msra.mxu0 %v2718
  %3073 = vmatpush.bf16.msra.mxu0 %v2710
  %3074 = vmatmul.bf16.gmra.mxu0 %v2192
  %v3075 = vpop.f32.mrf.mxu0
  %v3076 = vadd.f32 0.0, %v3075
  %v3077 = vpop.f32.mrf.mxu0
  %3078 = vdwg.mxu0
  %3079 = vmatpush.bf16.msra.mxu0 %v2830
  %3080 = vmatpush.bf16.msra.mxu0 %v2822
  %3081 = vmatpush.bf16.msra.mxu0 %v2814
  %3082 = vmatpush.bf16.msra.mxu0 %v2806
  %3083 = vmatpush.bf16.msra.mxu0 %v2798
  %3084 = vmatpush.bf16.msra.mxu0 %v2790
  %3085 = vmatpush.bf16.msra.mxu0 %v2782
  %3086 = vmatpush.bf16.msra.mxu0 %v2774
  %3087 = vmatmul.bf16.gmra.mxu0 %v2193
  %v3088 = vpop.f32.mrf.mxu0
  %v3089 = vadd.f32 %v3076, %v3088
  %v3090 = vpop.f32.mrf.mxu0
  %3091 = vdwg.mxu0
  %3092 = vmatpush.bf16.msra.mxu0 %v2767
  %3093 = vmatpush.bf16.msra.mxu0 %v2759
  %3094 = vmatpush.bf16.msra.mxu0 %v2751
  %3095 = vmatpush.bf16.msra.mxu0 %v2743
  %3096 = vmatpush.bf16.msra.mxu0 %v2735
  %3097 = vmatpush.bf16.msra.mxu0 %v2727
  %3098 = vmatpush.bf16.msra.mxu0 %v2719
  %3099 = vmatpush.bf16.msra.mxu0 %v2711
  %3100 = vmatmul.bf16.gmra.mxu0 %v2192
  %v3101 = vpop.f32.mrf.mxu0
  %v3102 = vadd.f32 0.0, %v3101
  %v3103 = vpop.f32.mrf.mxu0
  %3104 = vdwg.mxu0
  %3105 = vmatpush.bf16.msra.mxu0 %v2831
  %3106 = vmatpush.bf16.msra.mxu0 %v2823
  %3107 = vmatpush.bf16.msra.mxu0 %v2815
  %3108 = vmatpush.bf16.msra.mxu0 %v2807
  %3109 = vmatpush.bf16.msra.mxu0 %v2799
  %3110 = vmatpush.bf16.msra.mxu0 %v2791
  %3111 = vmatpush.bf16.msra.mxu0 %v2783
  %3112 = vmatpush.bf16.msra.mxu0 %v2775
  %3113 = vmatmul.bf16.gmra.mxu0 %v2193
  %v3114 = vpop.f32.mrf.mxu0
  %v3115 = vadd.f32 %v3102, %v3114
  %v3116 = vpop.f32.mrf.mxu0
  %3117 = vdwg.mxu0
  %3118 = vmatpush.bf16.msra.mxu0 %v2768
  %3119 = vmatpush.bf16.msra.mxu0 %v2760
  %3120 = vmatpush.bf16.msra.mxu0 %v2752
  %3121 = vmatpush.bf16.msra.mxu0 %v2744
  %3122 = vmatpush.bf16.msra.mxu0 %v2736
  %3123 = vmatpush.bf16.msra.mxu0 %v2728
  %3124 = vmatpush.bf16.msra.mxu0 %v2720
  %3125 = vmatpush.bf16.msra.mxu0 %v2712
  %3126 = vmatmul.bf16.gmra.mxu0 %v2192
  %v3127 = vpop.f32.mrf.mxu0
  %v3128 = vadd.f32 0.0, %v3127
  %v3129 = vpop.f32.mrf.mxu0
  %3130 = vdwg.mxu0
  %3131 = vmatpush.bf16.msra.mxu0 %v2832
  %3132 = vmatpush.bf16.msra.mxu0 %v2824
  %3133 = vmatpush.bf16.msra.mxu0 %v2816
  %3134 = vmatpush.bf16.msra.mxu0 %v2808
  %3135 = vmatpush.bf16.msra.mxu0 %v2800
  %3136 = vmatpush.bf16.msra.mxu0 %v2792
  %3137 = vmatpush.bf16.msra.mxu0 %v2784
  %3138 = vmatpush.bf16.msra.mxu0 %v2776
  %3139 = vmatmul.bf16.gmra.mxu0 %v2193
  %v3140 = vpop.f32.mrf.mxu0
  %v3141 = vadd.f32 %v3128, %v3140
  %v3142 = vpop.f32.mrf.mxu0
  %3143 = vdwg.mxu0
  %3144 = vmatpush.bf16.msra.mxu0 %v2769
  %3145 = vmatpush.bf16.msra.mxu0 %v2761
  %3146 = vmatpush.bf16.msra.mxu0 %v2753
  %3147 = vmatpush.bf16.msra.mxu0 %v2745
  %3148 = vmatpush.bf16.msra.mxu0 %v2737
  %3149 = vmatpush.bf16.msra.mxu0 %v2729
  %3150 = vmatpush.bf16.msra.mxu0 %v2721
  %3151 = vmatpush.bf16.msra.mxu0 %v2713
  %3152 = vmatmul.bf16.gmra.mxu0 %v2192
  %v3153 = vpop.f32.mrf.mxu0
  %v3154 = vadd.f32 0.0, %v3153
  %v3155 = vpop.f32.mrf.mxu0
  %3156 = vdwg.mxu0
  %3157 = vmatpush.bf16.msra.mxu0 %v2833
  %3158 = vmatpush.bf16.msra.mxu0 %v2825
  %3159 = vmatpush.bf16.msra.mxu0 %v2817
  %3160 = vmatpush.bf16.msra.mxu0 %v2809
  %3161 = vmatpush.bf16.msra.mxu0 %v2801
  %3162 = vmatpush.bf16.msra.mxu0 %v2793
  %3163 = vmatpush.bf16.msra.mxu0 %v2785
  %3164 = vmatpush.bf16.msra.mxu0 %v2777
  %3165 = vmatmul.bf16.gmra.mxu0 %v2193
  %v3166 = vpop.f32.mrf.mxu0
  %v3167 = vadd.f32 %v3154, %v3166
  %v3168 = vpop.f32.mrf.mxu0
  %3169 = vdwg.mxu0
  %v3178 = vrot.slane %v3011, 4
  %v3179 = vrot.slane %v3063, 4
  %v3180 = vrot.slane %v3115, 4
  %v3181 = vrot.slane %v3167, 4
  %v3182 = vsel %vm1007, %v2985, %v3178
  %v3183 = vsel %vm1007, %v3037, %v3179
  %v3184 = vsel %vm1007, %v3089, %v3180
  %v3185 = vsel %vm1007, %v3141, %v3181
  %v3190 = vadd.f32 %v2182, %v3182
  %v3191 = vadd.f32 %v2183, %v3183
  %v3192 = vadd.f32 %v2184, %v3184
  %v3193 = vadd.f32 %v2185, %v3185
  %v3194 = vxor.u32 %v3190, 2147483648
  %v3195 = vmul.f32 %v3194, 1.442695
  %v3196 = vpow.pop %v3195
  %v3197 = vadd.f32 %v3196, 1.0
  %v3198 = vrcp.pop %v3197
  %v3199 = vmul.f32 %v3197, %v3198
  %v3200 = vsub.f32 1.0, %v3199
  %v3201 = vmul.f32 %v3198, %v3200
  %v3202 = vadd.f32 %v3198, %v3201
  %vm3203 = vweird.f32 %v3197
  %vm3204 = vweird.f32 %v3198
  %vm3205 = vmor %vm3203, %vm3204
  %v3206 = vsel %vm3205, %v3198, %v3202
  %v3207 = vand.u32 2147483647, %v3197
  %vm3208 = vcmp.eq.f32.partialorder %v3207, 8.507059e+37
  %v3209 = vand.u32 %v3197, 2147483648
  %v3210 = vor.u32 1.1754944e-38, %v3209
  %v3211 = vsel %vm3208, %v3210, %v3206
  %v3212 = vmul.f32 1.0, %v3211
  %v3213 = vxor.u32 %v3191, 2147483648
  %v3214 = vmul.f32 %v3213, 1.442695
  %v3215 = vpow.pop %v3214
  %v3216 = vadd.f32 %v3215, 1.0
  %v3217 = vrcp.pop %v3216
  %v3218 = vmul.f32 %v3216, %v3217
  %v3219 = vsub.f32 1.0, %v3218
  %v3220 = vmul.f32 %v3217, %v3219
  %v3221 = vadd.f32 %v3217, %v3220
  %vm3222 = vweird.f32 %v3216
  %vm3223 = vweird.f32 %v3217
  %vm3224 = vmor %vm3222, %vm3223
  %v3225 = vsel %vm3224, %v3217, %v3221
  %v3226 = vand.u32 2147483647, %v3216
  %vm3227 = vcmp.eq.f32.partialorder %v3226, 8.507059e+37
  %v3228 = vand.u32 %v3216, 2147483648
  %v3229 = vor.u32 1.1754944e-38, %v3228
  %v3230 = vsel %vm3227, %v3229, %v3225
  %v3231 = vmul.f32 1.0, %v3230
  %v3232 = vtanh.pop %v3192
  %v3233 = vxor.u32 %v3193, 2147483648
  %v3234 = vmul.f32 %v3233, 1.442695
  %v3235 = vpow.pop %v3234
  %v3236 = vadd.f32 %v3235, 1.0
  %v3237 = vrcp.pop %v3236
  %v3238 = vmul.f32 %v3236, %v3237
  %v3239 = vsub.f32 1.0, %v3238
  %v3240 = vmul.f32 %v3237, %v3239
  %v3241 = vadd.f32 %v3237, %v3240
  %vm3242 = vweird.f32 %v3236
  %vm3243 = vweird.f32 %v3237
  %vm3244 = vmor %vm3242, %vm3243
  %v3245 = vsel %vm3244, %v3237, %v3241
  %v3246 = vand.u32 2147483647, %v3236
  %vm3247 = vcmp.eq.f32.partialorder %v3246, 8.507059e+37
  %v3248 = vand.u32 %v3236, 2147483648
  %v3249 = vor.u32 1.1754944e-38, %v3248
  %v3250 = vsel %vm3247, %v3249, %v3245
  %v3251 = vmul.f32 1.0, %v3250
  %v3252 = vmul.f32 %v3231, %v2171
  %v3253 = vmul.f32 %v3212, %v3232
  %v3254 = vadd.f32 %v3252, %v3253
  %v3255 = vtanh.pop %v3254
  %v3256 = vmul.f32 %v3251, %v3255
  %s3257 = scalar_lea.vmem %s2, 16
  %v3258 = vld [vmem:[%s3257] sm:$0xff]
  %vm3259 = vcmp.gt.f32.partialorder %v3258, 0.0
  %v3260 = vsel %vm3259, %v3254, %v2171
  %v3261 = vsel %vm3259, %v3256, %v2172
  %v3262 = vsel %vm3259, %v3256, 0.0
  %s3263 = scalar_lea.vmem %s3, 16
  %3264 = vst [vmem:[%s3263] sm:$0xf] %v3262
  %v3266 = vrot.slane %v3262, 4
  %s3268 = scalar_lea.vmem %s3, 40
  %3269 = vst [vmem:[%s3268 + $0x4] sm:$0xf] %v3266
  %s3270 = scalar_lea.vmem %s0, 96
  %v3271 = vld [vmem:[%s3270] sm:$0xff]
  %v3272 = vld [vmem:[%s3270 + $0x8] sm:$0xff]
  %v3273 = vld [vmem:[%s3270 + $0x10] sm:$0xff]
  %v3274 = vld [vmem:[%s3270 + $0x18] sm:$0xff]
  %3276 = vst [vmem:[#allocation1] ss:$2 sm:$0xff] %v3261
  %v3277 = vld.sshfl [vmem:[#allocation1] sm:$0xff pattern:$0x75316420]
  %v3278 = vld.sshfl [vmem:[#allocation1 + $0x8] sm:$0xff pattern:$0x75316420]
  %v3281 = vpack.c.bf16 %v3277, %v3277
  %v3282 = vpack.c.bf16 %v3278, %v3278
  %v3283 = vld [vmem:[%s1] sm:$0xff]
  %v3284 = vld [vmem:[%s1 + $0x8] sm:$0xff]
  %v3285 = vld [vmem:[%s1 + $0x10] sm:$0xff]
  %v3286 = vld [vmem:[%s1 + $0x18] sm:$0xff]
  %v3287 = vld [vmem:[%s1 + $0x20] sm:$0xff]
  %v3288 = vld [vmem:[%s1 + $0x28] sm:$0xff]
  %v3289 = vld [vmem:[%s1 + $0x30] sm:$0xff]
  %v3290 = vld [vmem:[%s1 + $0x38] sm:$0xff]
  %v3291 = vld [vmem:[%s1 + $0x40] sm:$0xff]
  %v3292 = vld [vmem:[%s1 + $0x48] sm:$0xff]
  %v3293 = vld [vmem:[%s1 + $0x50] sm:$0xff]
  %v3294 = vld [vmem:[%s1 + $0x58] sm:$0xff]
  %v3295 = vld [vmem:[%s1 + $0x60] sm:$0xff]
  %v3296 = vld [vmem:[%s1 + $0x68] sm:$0xff]
  %v3297 = vld [vmem:[%s1 + $0x70] sm:$0xff]
  %v3298 = vld [vmem:[%s1 + $0x78] sm:$0xff]
  %v3299 = vld [vmem:[%s1 + $0x80] sm:$0xff]
  %v3300 = vld [vmem:[%s1 + $0x88] sm:$0xff]
  %v3301 = vld [vmem:[%s1 + $0x90] sm:$0xff]
  %v3302 = vld [vmem:[%s1 + $0x98] sm:$0xff]
  %v3303 = vld [vmem:[%s1 + $0xa0] sm:$0xff]
  %v3304 = vld [vmem:[%s1 + $0xa8] sm:$0xff]
  %v3305 = vld [vmem:[%s1 + $0xb0] sm:$0xff]
  %v3306 = vld [vmem:[%s1 + $0xb8] sm:$0xff]
  %v3307 = vld [vmem:[%s1 + $0xc0] sm:$0xff]
  %v3308 = vld [vmem:[%s1 + $0xc8] sm:$0xff]
  %v3309 = vld [vmem:[%s1 + $0xd0] sm:$0xff]
  %v3310 = vld [vmem:[%s1 + $0xd8] sm:$0xff]
  %v3311 = vld [vmem:[%s1 + $0xe0] sm:$0xff]
  %v3312 = vld [vmem:[%s1 + $0xe8] sm:$0xff]
  %v3313 = vld [vmem:[%s1 + $0xf0] sm:$0xff]
  %v3314 = vld [vmem:[%s1 + $0xf8] sm:$0xff]
  %v3315 = vld [vmem:[%s1 + $0x100] sm:$0xff]
  %v3316 = vld [vmem:[%s1 + $0x108] sm:$0xff]
  %v3317 = vld [vmem:[%s1 + $0x110] sm:$0xff]
  %v3318 = vld [vmem:[%s1 + $0x118] sm:$0xff]
  %v3319 = vld [vmem:[%s1 + $0x120] sm:$0xff]
  %v3320 = vld [vmem:[%s1 + $0x128] sm:$0xff]
  %v3321 = vld [vmem:[%s1 + $0x130] sm:$0xff]
  %v3322 = vld [vmem:[%s1 + $0x138] sm:$0xff]
  %v3323 = vld [vmem:[%s1 + $0x140] sm:$0xff]
  %v3324 = vld [vmem:[%s1 + $0x148] sm:$0xff]
  %v3325 = vld [vmem:[%s1 + $0x150] sm:$0xff]
  %v3326 = vld [vmem:[%s1 + $0x158] sm:$0xff]
  %v3327 = vld [vmem:[%s1 + $0x160] sm:$0xff]
  %v3328 = vld [vmem:[%s1 + $0x168] sm:$0xff]
  %v3329 = vld [vmem:[%s1 + $0x170] sm:$0xff]
  %v3330 = vld [vmem:[%s1 + $0x178] sm:$0xff]
  %v3331 = vld [vmem:[%s1 + $0x180] sm:$0xff]
  %v3332 = vld [vmem:[%s1 + $0x188] sm:$0xff]
  %v3333 = vld [vmem:[%s1 + $0x190] sm:$0xff]
  %v3334 = vld [vmem:[%s1 + $0x198] sm:$0xff]
  %v3335 = vld [vmem:[%s1 + $0x1a0] sm:$0xff]
  %v3336 = vld [vmem:[%s1 + $0x1a8] sm:$0xff]
  %v3337 = vld [vmem:[%s1 + $0x1b0] sm:$0xff]
  %v3338 = vld [vmem:[%s1 + $0x1b8] sm:$0xff]
  %v3339 = vld [vmem:[%s1 + $0x1c0] sm:$0xff]
  %v3340 = vld [vmem:[%s1 + $0x1c8] sm:$0xff]
  %v3341 = vld [vmem:[%s1 + $0x1d0] sm:$0xff]
  %v3342 = vld [vmem:[%s1 + $0x1d8] sm:$0xff]
  %v3343 = vld [vmem:[%s1 + $0x1e0] sm:$0xff]
  %v3344 = vld [vmem:[%s1 + $0x1e8] sm:$0xff]
  %v3345 = vld [vmem:[%s1 + $0x1f0] sm:$0xff]
  %v3346 = vld [vmem:[%s1 + $0x1f8] sm:$0xff]
  %v3347 = vld [vmem:[%s1 + $0x200] sm:$0xff]
  %v3348 = vld [vmem:[%s1 + $0x208] sm:$0xff]
  %v3349 = vld [vmem:[%s1 + $0x210] sm:$0xff]
  %v3350 = vld [vmem:[%s1 + $0x218] sm:$0xff]
  %v3351 = vld [vmem:[%s1 + $0x220] sm:$0xff]
  %v3352 = vld [vmem:[%s1 + $0x228] sm:$0xff]
  %v3353 = vld [vmem:[%s1 + $0x230] sm:$0xff]
  %v3354 = vld [vmem:[%s1 + $0x238] sm:$0xff]
  %v3355 = vld [vmem:[%s1 + $0x240] sm:$0xff]
  %v3356 = vld [vmem:[%s1 + $0x248] sm:$0xff]
  %v3357 = vld [vmem:[%s1 + $0x250] sm:$0xff]
  %v3358 = vld [vmem:[%s1 + $0x258] sm:$0xff]
  %v3359 = vld [vmem:[%s1 + $0x260] sm:$0xff]
  %v3360 = vld [vmem:[%s1 + $0x268] sm:$0xff]
  %v3361 = vld [vmem:[%s1 + $0x270] sm:$0xff]
  %v3362 = vld [vmem:[%s1 + $0x278] sm:$0xff]
  %v3363 = vld [vmem:[%s1 + $0x280] sm:$0xff]
  %v3364 = vld [vmem:[%s1 + $0x288] sm:$0xff]
  %v3365 = vld [vmem:[%s1 + $0x290] sm:$0xff]
  %v3366 = vld [vmem:[%s1 + $0x298] sm:$0xff]
  %v3367 = vld [vmem:[%s1 + $0x2a0] sm:$0xff]
  %v3368 = vld [vmem:[%s1 + $0x2a8] sm:$0xff]
  %v3369 = vld [vmem:[%s1 + $0x2b0] sm:$0xff]
  %v3370 = vld [vmem:[%s1 + $0x2b8] sm:$0xff]
  %v3371 = vld [vmem:[%s1 + $0x2c0] sm:$0xff]
  %v3372 = vld [vmem:[%s1 + $0x2c8] sm:$0xff]
  %v3373 = vld [vmem:[%s1 + $0x2d0] sm:$0xff]
  %v3374 = vld [vmem:[%s1 + $0x2d8] sm:$0xff]
  %v3375 = vld [vmem:[%s1 + $0x2e0] sm:$0xff]
  %v3376 = vld [vmem:[%s1 + $0x2e8] sm:$0xff]
  %v3377 = vld [vmem:[%s1 + $0x2f0] sm:$0xff]
  %v3378 = vld [vmem:[%s1 + $0x2f8] sm:$0xff]
  %v3379 = vld [vmem:[%s1 + $0x300] sm:$0xff]
  %v3380 = vld [vmem:[%s1 + $0x308] sm:$0xff]
  %v3381 = vld [vmem:[%s1 + $0x310] sm:$0xff]
  %v3382 = vld [vmem:[%s1 + $0x318] sm:$0xff]
  %v3383 = vld [vmem:[%s1 + $0x320] sm:$0xff]
  %v3384 = vld [vmem:[%s1 + $0x328] sm:$0xff]
  %v3385 = vld [vmem:[%s1 + $0x330] sm:$0xff]
  %v3386 = vld [vmem:[%s1 + $0x338] sm:$0xff]
  %v3387 = vld [vmem:[%s1 + $0x340] sm:$0xff]
  %v3388 = vld [vmem:[%s1 + $0x348] sm:$0xff]
  %v3389 = vld [vmem:[%s1 + $0x350] sm:$0xff]
  %v3390 = vld [vmem:[%s1 + $0x358] sm:$0xff]
  %v3391 = vld [vmem:[%s1 + $0x360] sm:$0xff]
  %v3392 = vld [vmem:[%s1 + $0x368] sm:$0xff]
  %v3393 = vld [vmem:[%s1 + $0x370] sm:$0xff]
  %v3394 = vld [vmem:[%s1 + $0x378] sm:$0xff]
  %v3395 = vld [vmem:[%s1 + $0x380] sm:$0xff]
  %v3396 = vld [vmem:[%s1 + $0x388] sm:$0xff]
  %v3397 = vld [vmem:[%s1 + $0x390] sm:$0xff]
  %v3398 = vld [vmem:[%s1 + $0x398] sm:$0xff]
  %v3399 = vld [vmem:[%s1 + $0x3a0] sm:$0xff]
  %v3400 = vld [vmem:[%s1 + $0x3a8] sm:$0xff]
  %v3401 = vld [vmem:[%s1 + $0x3b0] sm:$0xff]
  %v3402 = vld [vmem:[%s1 + $0x3b8] sm:$0xff]
  %v3403 = vld [vmem:[%s1 + $0x3c0] sm:$0xff]
  %v3404 = vld [vmem:[%s1 + $0x3c8] sm:$0xff]
  %v3405 = vld [vmem:[%s1 + $0x3d0] sm:$0xff]
  %v3406 = vld [vmem:[%s1 + $0x3d8] sm:$0xff]
  %v3407 = vld [vmem:[%s1 + $0x3e0] sm:$0xff]
  %v3408 = vld [vmem:[%s1 + $0x3e8] sm:$0xff]
  %v3409 = vld [vmem:[%s1 + $0x3f0] sm:$0xff]
  %v3410 = vld [vmem:[%s1 + $0x3f8] sm:$0xff]
  %v3539 = vunpack.c.l.b16 %v3283
  %v3540 = vunpack.c.h.b16 %v3283
  %v3541 = vunpack.c.l.b16 %v3284
  %v3542 = vunpack.c.h.b16 %v3284
  %v3543 = vunpack.c.l.b16 %v3285
  %v3544 = vunpack.c.h.b16 %v3285
  %v3545 = vunpack.c.l.b16 %v3286
  %v3546 = vunpack.c.h.b16 %v3286
  %v3547 = vunpack.c.l.b16 %v3287
  %v3548 = vunpack.c.h.b16 %v3287
  %v3549 = vunpack.c.l.b16 %v3288
  %v3550 = vunpack.c.h.b16 %v3288
  %v3551 = vunpack.c.l.b16 %v3289
  %v3552 = vunpack.c.h.b16 %v3289
  %v3553 = vunpack.c.l.b16 %v3290
  %v3554 = vunpack.c.h.b16 %v3290
  %v3555 = vunpack.c.l.b16 %v3291
  %v3556 = vunpack.c.h.b16 %v3291
  %v3557 = vunpack.c.l.b16 %v3292
  %v3558 = vunpack.c.h.b16 %v3292
  %v3559 = vunpack.c.l.b16 %v3293
  %v3560 = vunpack.c.h.b16 %v3293
  %v3561 = vunpack.c.l.b16 %v3294
  %v3562 = vunpack.c.h.b16 %v3294
  %v3563 = vunpack.c.l.b16 %v3295
  %v3564 = vunpack.c.h.b16 %v3295
  %v3565 = vunpack.c.l.b16 %v3296
  %v3566 = vunpack.c.h.b16 %v3296
  %v3567 = vunpack.c.l.b16 %v3297
  %v3568 = vunpack.c.h.b16 %v3297
  %v3569 = vunpack.c.l.b16 %v3298
  %v3570 = vunpack.c.h.b16 %v3298
  %v3571 = vunpack.c.l.b16 %v3299
  %v3572 = vunpack.c.h.b16 %v3299
  %v3573 = vunpack.c.l.b16 %v3300
  %v3574 = vunpack.c.h.b16 %v3300
  %v3575 = vunpack.c.l.b16 %v3301
  %v3576 = vunpack.c.h.b16 %v3301
  %v3577 = vunpack.c.l.b16 %v3302
  %v3578 = vunpack.c.h.b16 %v3302
  %v3579 = vunpack.c.l.b16 %v3303
  %v3580 = vunpack.c.h.b16 %v3303
  %v3581 = vunpack.c.l.b16 %v3304
  %v3582 = vunpack.c.h.b16 %v3304
  %v3583 = vunpack.c.l.b16 %v3305
  %v3584 = vunpack.c.h.b16 %v3305
  %v3585 = vunpack.c.l.b16 %v3306
  %v3586 = vunpack.c.h.b16 %v3306
  %v3587 = vunpack.c.l.b16 %v3307
  %v3588 = vunpack.c.h.b16 %v3307
  %v3589 = vunpack.c.l.b16 %v3308
  %v3590 = vunpack.c.h.b16 %v3308
  %v3591 = vunpack.c.l.b16 %v3309
  %v3592 = vunpack.c.h.b16 %v3309
  %v3593 = vunpack.c.l.b16 %v3310
  %v3594 = vunpack.c.h.b16 %v3310
  %v3595 = vunpack.c.l.b16 %v3311
  %v3596 = vunpack.c.h.b16 %v3311
  %v3597 = vunpack.c.l.b16 %v3312
  %v3598 = vunpack.c.h.b16 %v3312
  %v3599 = vunpack.c.l.b16 %v3313
  %v3600 = vunpack.c.h.b16 %v3313
  %v3601 = vunpack.c.l.b16 %v3314
  %v3602 = vunpack.c.h.b16 %v3314
  %v3603 = vunpack.c.l.b16 %v3315
  %v3604 = vunpack.c.h.b16 %v3315
  %v3605 = vunpack.c.l.b16 %v3316
  %v3606 = vunpack.c.h.b16 %v3316
  %v3607 = vunpack.c.l.b16 %v3317
  %v3608 = vunpack.c.h.b16 %v3317
  %v3609 = vunpack.c.l.b16 %v3318
  %v3610 = vunpack.c.h.b16 %v3318
  %v3611 = vunpack.c.l.b16 %v3319
  %v3612 = vunpack.c.h.b16 %v3319
  %v3613 = vunpack.c.l.b16 %v3320
  %v3614 = vunpack.c.h.b16 %v3320
  %v3615 = vunpack.c.l.b16 %v3321
  %v3616 = vunpack.c.h.b16 %v3321
  %v3617 = vunpack.c.l.b16 %v3322
  %v3618 = vunpack.c.h.b16 %v3322
  %v3619 = vunpack.c.l.b16 %v3323
  %v3620 = vunpack.c.h.b16 %v3323
  %v3621 = vunpack.c.l.b16 %v3324
  %v3622 = vunpack.c.h.b16 %v3324
  %v3623 = vunpack.c.l.b16 %v3325
  %v3624 = vunpack.c.h.b16 %v3325
  %v3625 = vunpack.c.l.b16 %v3326
  %v3626 = vunpack.c.h.b16 %v3326
  %v3627 = vunpack.c.l.b16 %v3327
  %v3628 = vunpack.c.h.b16 %v3327
  %v3629 = vunpack.c.l.b16 %v3328
  %v3630 = vunpack.c.h.b16 %v3328
  %v3631 = vunpack.c.l.b16 %v3329
  %v3632 = vunpack.c.h.b16 %v3329
  %v3633 = vunpack.c.l.b16 %v3330
  %v3634 = vunpack.c.h.b16 %v3330
  %v3635 = vunpack.c.l.b16 %v3331
  %v3636 = vunpack.c.h.b16 %v3331
  %v3637 = vunpack.c.l.b16 %v3332
  %v3638 = vunpack.c.h.b16 %v3332
  %v3639 = vunpack.c.l.b16 %v3333
  %v3640 = vunpack.c.h.b16 %v3333
  %v3641 = vunpack.c.l.b16 %v3334
  %v3642 = vunpack.c.h.b16 %v3334
  %v3643 = vunpack.c.l.b16 %v3335
  %v3644 = vunpack.c.h.b16 %v3335
  %v3645 = vunpack.c.l.b16 %v3336
  %v3646 = vunpack.c.h.b16 %v3336
  %v3647 = vunpack.c.l.b16 %v3337
  %v3648 = vunpack.c.h.b16 %v3337
  %v3649 = vunpack.c.l.b16 %v3338
  %v3650 = vunpack.c.h.b16 %v3338
  %v3651 = vunpack.c.l.b16 %v3339
  %v3652 = vunpack.c.h.b16 %v3339
  %v3653 = vunpack.c.l.b16 %v3340
  %v3654 = vunpack.c.h.b16 %v3340
  %v3655 = vunpack.c.l.b16 %v3341
  %v3656 = vunpack.c.h.b16 %v3341
  %v3657 = vunpack.c.l.b16 %v3342
  %v3658 = vunpack.c.h.b16 %v3342
  %v3659 = vunpack.c.l.b16 %v3343
  %v3660 = vunpack.c.h.b16 %v3343
  %v3661 = vunpack.c.l.b16 %v3344
  %v3662 = vunpack.c.h.b16 %v3344
  %v3663 = vunpack.c.l.b16 %v3345
  %v3664 = vunpack.c.h.b16 %v3345
  %v3665 = vunpack.c.l.b16 %v3346
  %v3666 = vunpack.c.h.b16 %v3346
  %v3667 = vunpack.c.l.b16 %v3347
  %v3668 = vunpack.c.h.b16 %v3347
  %v3669 = vunpack.c.l.b16 %v3348
  %v3670 = vunpack.c.h.b16 %v3348
  %v3671 = vunpack.c.l.b16 %v3349
  %v3672 = vunpack.c.h.b16 %v3349
  %v3673 = vunpack.c.l.b16 %v3350
  %v3674 = vunpack.c.h.b16 %v3350
  %v3675 = vunpack.c.l.b16 %v3351
  %v3676 = vunpack.c.h.b16 %v3351
  %v3677 = vunpack.c.l.b16 %v3352
  %v3678 = vunpack.c.h.b16 %v3352
  %v3679 = vunpack.c.l.b16 %v3353
  %v3680 = vunpack.c.h.b16 %v3353
  %v3681 = vunpack.c.l.b16 %v3354
  %v3682 = vunpack.c.h.b16 %v3354
  %v3683 = vunpack.c.l.b16 %v3355
  %v3684 = vunpack.c.h.b16 %v3355
  %v3685 = vunpack.c.l.b16 %v3356
  %v3686 = vunpack.c.h.b16 %v3356
  %v3687 = vunpack.c.l.b16 %v3357
  %v3688 = vunpack.c.h.b16 %v3357
  %v3689 = vunpack.c.l.b16 %v3358
  %v3690 = vunpack.c.h.b16 %v3358
  %v3691 = vunpack.c.l.b16 %v3359
  %v3692 = vunpack.c.h.b16 %v3359
  %v3693 = vunpack.c.l.b16 %v3360
  %v3694 = vunpack.c.h.b16 %v3360
  %v3695 = vunpack.c.l.b16 %v3361
  %v3696 = vunpack.c.h.b16 %v3361
  %v3697 = vunpack.c.l.b16 %v3362
  %v3698 = vunpack.c.h.b16 %v3362
  %v3699 = vunpack.c.l.b16 %v3363
  %v3700 = vunpack.c.h.b16 %v3363
  %v3701 = vunpack.c.l.b16 %v3364
  %v3702 = vunpack.c.h.b16 %v3364
  %v3703 = vunpack.c.l.b16 %v3365
  %v3704 = vunpack.c.h.b16 %v3365
  %v3705 = vunpack.c.l.b16 %v3366
  %v3706 = vunpack.c.h.b16 %v3366
  %v3707 = vunpack.c.l.b16 %v3367
  %v3708 = vunpack.c.h.b16 %v3367
  %v3709 = vunpack.c.l.b16 %v3368
  %v3710 = vunpack.c.h.b16 %v3368
  %v3711 = vunpack.c.l.b16 %v3369
  %v3712 = vunpack.c.h.b16 %v3369
  %v3713 = vunpack.c.l.b16 %v3370
  %v3714 = vunpack.c.h.b16 %v3370
  %v3715 = vunpack.c.l.b16 %v3371
  %v3716 = vunpack.c.h.b16 %v3371
  %v3717 = vunpack.c.l.b16 %v3372
  %v3718 = vunpack.c.h.b16 %v3372
  %v3719 = vunpack.c.l.b16 %v3373
  %v3720 = vunpack.c.h.b16 %v3373
  %v3721 = vunpack.c.l.b16 %v3374
  %v3722 = vunpack.c.h.b16 %v3374
  %v3723 = vunpack.c.l.b16 %v3375
  %v3724 = vunpack.c.h.b16 %v3375
  %v3725 = vunpack.c.l.b16 %v3376
  %v3726 = vunpack.c.h.b16 %v3376
  %v3727 = vunpack.c.l.b16 %v3377
  %v3728 = vunpack.c.h.b16 %v3377
  %v3729 = vunpack.c.l.b16 %v3378
  %v3730 = vunpack.c.h.b16 %v3378
  %v3731 = vunpack.c.l.b16 %v3379
  %v3732 = vunpack.c.h.b16 %v3379
  %v3733 = vunpack.c.l.b16 %v3380
  %v3734 = vunpack.c.h.b16 %v3380
  %v3735 = vunpack.c.l.b16 %v3381
  %v3736 = vunpack.c.h.b16 %v3381
  %v3737 = vunpack.c.l.b16 %v3382
  %v3738 = vunpack.c.h.b16 %v3382
  %v3739 = vunpack.c.l.b16 %v3383
  %v3740 = vunpack.c.h.b16 %v3383
  %v3741 = vunpack.c.l.b16 %v3384
  %v3742 = vunpack.c.h.b16 %v3384
  %v3743 = vunpack.c.l.b16 %v3385
  %v3744 = vunpack.c.h.b16 %v3385
  %v3745 = vunpack.c.l.b16 %v3386
  %v3746 = vunpack.c.h.b16 %v3386
  %v3747 = vunpack.c.l.b16 %v3387
  %v3748 = vunpack.c.h.b16 %v3387
  %v3749 = vunpack.c.l.b16 %v3388
  %v3750 = vunpack.c.h.b16 %v3388
  %v3751 = vunpack.c.l.b16 %v3389
  %v3752 = vunpack.c.h.b16 %v3389
  %v3753 = vunpack.c.l.b16 %v3390
  %v3754 = vunpack.c.h.b16 %v3390
  %v3755 = vunpack.c.l.b16 %v3391
  %v3756 = vunpack.c.h.b16 %v3391
  %v3757 = vunpack.c.l.b16 %v3392
  %v3758 = vunpack.c.h.b16 %v3392
  %v3759 = vunpack.c.l.b16 %v3393
  %v3760 = vunpack.c.h.b16 %v3393
  %v3761 = vunpack.c.l.b16 %v3394
  %v3762 = vunpack.c.h.b16 %v3394
  %v3763 = vunpack.c.l.b16 %v3395
  %v3764 = vunpack.c.h.b16 %v3395
  %v3765 = vunpack.c.l.b16 %v3396
  %v3766 = vunpack.c.h.b16 %v3396
  %v3767 = vunpack.c.l.b16 %v3397
  %v3768 = vunpack.c.h.b16 %v3397
  %v3769 = vunpack.c.l.b16 %v3398
  %v3770 = vunpack.c.h.b16 %v3398
  %v3771 = vunpack.c.l.b16 %v3399
  %v3772 = vunpack.c.h.b16 %v3399
  %v3773 = vunpack.c.l.b16 %v3400
  %v3774 = vunpack.c.h.b16 %v3400
  %v3775 = vunpack.c.l.b16 %v3401
  %v3776 = vunpack.c.h.b16 %v3401
  %v3777 = vunpack.c.l.b16 %v3402
  %v3778 = vunpack.c.h.b16 %v3402
  %v3779 = vunpack.c.l.b16 %v3403
  %v3780 = vunpack.c.h.b16 %v3403
  %v3781 = vunpack.c.l.b16 %v3404
  %v3782 = vunpack.c.h.b16 %v3404
  %v3783 = vunpack.c.l.b16 %v3405
  %v3784 = vunpack.c.h.b16 %v3405
  %v3785 = vunpack.c.l.b16 %v3406
  %v3786 = vunpack.c.h.b16 %v3406
  %v3787 = vunpack.c.l.b16 %v3407
  %v3788 = vunpack.c.h.b16 %v3407
  %v3789 = vunpack.c.l.b16 %v3408
  %v3790 = vunpack.c.h.b16 %v3408
  %v3791 = vunpack.c.l.b16 %v3409
  %v3792 = vunpack.c.h.b16 %v3409
  %v3793 = vunpack.c.l.b16 %v3410
  %v3794 = vunpack.c.h.b16 %v3410
  %v3795 = vpack.c.b16 %v3547, %v3539
  %v3796 = vpack.c.b16 %v3548, %v3540
  %v3797 = vpack.c.b16 %v3549, %v3541
  %v3798 = vpack.c.b16 %v3550, %v3542
  %v3799 = vpack.c.b16 %v3551, %v3543
  %v3800 = vpack.c.b16 %v3552, %v3544
  %v3801 = vpack.c.b16 %v3553, %v3545
  %v3802 = vpack.c.b16 %v3554, %v3546
  %v3803 = vpack.c.b16 %v3563, %v3555
  %v3804 = vpack.c.b16 %v3564, %v3556
  %v3805 = vpack.c.b16 %v3565, %v3557
  %v3806 = vpack.c.b16 %v3566, %v3558
  %v3807 = vpack.c.b16 %v3567, %v3559
  %v3808 = vpack.c.b16 %v3568, %v3560
  %v3809 = vpack.c.b16 %v3569, %v3561
  %v3810 = vpack.c.b16 %v3570, %v3562
  %v3811 = vpack.c.b16 %v3579, %v3571
  %v3812 = vpack.c.b16 %v3580, %v3572
  %v3813 = vpack.c.b16 %v3581, %v3573
  %v3814 = vpack.c.b16 %v3582, %v3574
  %v3815 = vpack.c.b16 %v3583, %v3575
  %v3816 = vpack.c.b16 %v3584, %v3576
  %v3817 = vpack.c.b16 %v3585, %v3577
  %v3818 = vpack.c.b16 %v3586, %v3578
  %v3819 = vpack.c.b16 %v3595, %v3587
  %v3820 = vpack.c.b16 %v3596, %v3588
  %v3821 = vpack.c.b16 %v3597, %v3589
  %v3822 = vpack.c.b16 %v3598, %v3590
  %v3823 = vpack.c.b16 %v3599, %v3591
  %v3824 = vpack.c.b16 %v3600, %v3592
  %v3825 = vpack.c.b16 %v3601, %v3593
  %v3826 = vpack.c.b16 %v3602, %v3594
  %v3827 = vpack.c.b16 %v3611, %v3603
  %v3828 = vpack.c.b16 %v3612, %v3604
  %v3829 = vpack.c.b16 %v3613, %v3605
  %v3830 = vpack.c.b16 %v3614, %v3606
  %v3831 = vpack.c.b16 %v3615, %v3607
  %v3832 = vpack.c.b16 %v3616, %v3608
  %v3833 = vpack.c.b16 %v3617, %v3609
  %v3834 = vpack.c.b16 %v3618, %v3610
  %v3835 = vpack.c.b16 %v3627, %v3619
  %v3836 = vpack.c.b16 %v3628, %v3620
  %v3837 = vpack.c.b16 %v3629, %v3621
  %v3838 = vpack.c.b16 %v3630, %v3622
  %v3839 = vpack.c.b16 %v3631, %v3623
  %v3840 = vpack.c.b16 %v3632, %v3624
  %v3841 = vpack.c.b16 %v3633, %v3625
  %v3842 = vpack.c.b16 %v3634, %v3626
  %v3843 = vpack.c.b16 %v3643, %v3635
  %v3844 = vpack.c.b16 %v3644, %v3636
  %v3845 = vpack.c.b16 %v3645, %v3637
  %v3846 = vpack.c.b16 %v3646, %v3638
  %v3847 = vpack.c.b16 %v3647, %v3639
  %v3848 = vpack.c.b16 %v3648, %v3640
  %v3849 = vpack.c.b16 %v3649, %v3641
  %v3850 = vpack.c.b16 %v3650, %v3642
  %v3851 = vpack.c.b16 %v3659, %v3651
  %v3852 = vpack.c.b16 %v3660, %v3652
  %v3853 = vpack.c.b16 %v3661, %v3653
  %v3854 = vpack.c.b16 %v3662, %v3654
  %v3855 = vpack.c.b16 %v3663, %v3655
  %v3856 = vpack.c.b16 %v3664, %v3656
  %v3857 = vpack.c.b16 %v3665, %v3657
  %v3858 = vpack.c.b16 %v3666, %v3658
  %v3859 = vpack.c.b16 %v3675, %v3667
  %v3860 = vpack.c.b16 %v3676, %v3668
  %v3861 = vpack.c.b16 %v3677, %v3669
  %v3862 = vpack.c.b16 %v3678, %v3670
  %v3863 = vpack.c.b16 %v3679, %v3671
  %v3864 = vpack.c.b16 %v3680, %v3672
  %v3865 = vpack.c.b16 %v3681, %v3673
  %v3866 = vpack.c.b16 %v3682, %v3674
  %v3867 = vpack.c.b16 %v3691, %v3683
  %v3868 = vpack.c.b16 %v3692, %v3684
  %v3869 = vpack.c.b16 %v3693, %v3685
  %v3870 = vpack.c.b16 %v3694, %v3686
  %v3871 = vpack.c.b16 %v3695, %v3687
  %v3872 = vpack.c.b16 %v3696, %v3688
  %v3873 = vpack.c.b16 %v3697, %v3689
  %v3874 = vpack.c.b16 %v3698, %v3690
  %v3875 = vpack.c.b16 %v3707, %v3699
  %v3876 = vpack.c.b16 %v3708, %v3700
  %v3877 = vpack.c.b16 %v3709, %v3701
  %v3878 = vpack.c.b16 %v3710, %v3702
  %v3879 = vpack.c.b16 %v3711, %v3703
  %v3880 = vpack.c.b16 %v3712, %v3704
  %v3881 = vpack.c.b16 %v3713, %v3705
  %v3882 = vpack.c.b16 %v3714, %v3706
  %v3883 = vpack.c.b16 %v3723, %v3715
  %v3884 = vpack.c.b16 %v3724, %v3716
  %v3885 = vpack.c.b16 %v3725, %v3717
  %v3886 = vpack.c.b16 %v3726, %v3718
  %v3887 = vpack.c.b16 %v3727, %v3719
  %v3888 = vpack.c.b16 %v3728, %v3720
  %v3889 = vpack.c.b16 %v3729, %v3721
  %v3890 = vpack.c.b16 %v3730, %v3722
  %v3891 = vpack.c.b16 %v3739, %v3731
  %v3892 = vpack.c.b16 %v3740, %v3732
  %v3893 = vpack.c.b16 %v3741, %v3733
  %v3894 = vpack.c.b16 %v3742, %v3734
  %v3895 = vpack.c.b16 %v3743, %v3735
  %v3896 = vpack.c.b16 %v3744, %v3736
  %v3897 = vpack.c.b16 %v3745, %v3737
  %v3898 = vpack.c.b16 %v3746, %v3738
  %v3899 = vpack.c.b16 %v3755, %v3747
  %v3900 = vpack.c.b16 %v3756, %v3748
  %v3901 = vpack.c.b16 %v3757, %v3749
  %v3902 = vpack.c.b16 %v3758, %v3750
  %v3903 = vpack.c.b16 %v3759, %v3751
  %v3904 = vpack.c.b16 %v3760, %v3752
  %v3905 = vpack.c.b16 %v3761, %v3753
  %v3906 = vpack.c.b16 %v3762, %v3754
  %v3907 = vpack.c.b16 %v3771, %v3763
  %v3908 = vpack.c.b16 %v3772, %v3764
  %v3909 = vpack.c.b16 %v3773, %v3765
  %v3910 = vpack.c.b16 %v3774, %v3766
  %v3911 = vpack.c.b16 %v3775, %v3767
  %v3912 = vpack.c.b16 %v3776, %v3768
  %v3913 = vpack.c.b16 %v3777, %v3769
  %v3914 = vpack.c.b16 %v3778, %v3770
  %v3915 = vpack.c.b16 %v3787, %v3779
  %v3916 = vpack.c.b16 %v3788, %v3780
  %v3917 = vpack.c.b16 %v3789, %v3781
  %v3918 = vpack.c.b16 %v3790, %v3782
  %v3919 = vpack.c.b16 %v3791, %v3783
  %v3920 = vpack.c.b16 %v3792, %v3784
  %v3921 = vpack.c.b16 %v3793, %v3785
  %v3922 = vpack.c.b16 %v3794, %v3786
  %4051 = vmatpush.bf16.msra.mxu0 %v3851
  %4052 = vmatpush.bf16.msra.mxu0 %v3843
  %4053 = vmatpush.bf16.msra.mxu0 %v3835
  %4054 = vmatpush.bf16.msra.mxu0 %v3827
  %4055 = vmatpush.bf16.msra.mxu0 %v3819
  %4056 = vmatpush.bf16.msra.mxu0 %v3811
  %4057 = vmatpush.bf16.msra.mxu0 %v3803
  %4058 = vmatpush.bf16.msra.mxu0 %v3795
  %4059 = vmatmul.bf16.gmra.mxu0 %v3281
  %v4060 = vpop.f32.mrf.mxu0
  %v4061 = vadd.f32 0.0, %v4060
  %v4062 = vpop.f32.mrf.mxu0
  %4063 = vdwg.mxu0
  %4064 = vmatpush.bf16.msra.mxu0 %v3915
  %4065 = vmatpush.bf16.msra.mxu0 %v3907
  %4066 = vmatpush.bf16.msra.mxu0 %v3899
  %4067 = vmatpush.bf16.msra.mxu0 %v3891
  %4068 = vmatpush.bf16.msra.mxu0 %v3883
  %4069 = vmatpush.bf16.msra.mxu0 %v3875
  %4070 = vmatpush.bf16.msra.mxu0 %v3867
  %4071 = vmatpush.bf16.msra.mxu0 %v3859
  %4072 = vmatmul.bf16.gmra.mxu0 %v3282
  %v4073 = vpop.f32.mrf.mxu0
  %v4074 = vadd.f32 %v4061, %v4073
  %v4075 = vpop.f32.mrf.mxu0
  %4076 = vdwg.mxu0
  %4077 = vmatpush.bf16.msra.mxu0 %v3852
  %4078 = vmatpush.bf16.msra.mxu0 %v3844
  %4079 = vmatpush.bf16.msra.mxu0 %v3836
  %4080 = vmatpush.bf16.msra.mxu0 %v3828
  %4081 = vmatpush.bf16.msra.mxu0 %v3820
  %4082 = vmatpush.bf16.msra.mxu0 %v3812
  %4083 = vmatpush.bf16.msra.mxu0 %v3804
  %4084 = vmatpush.bf16.msra.mxu0 %v3796
  %4085 = vmatmul.bf16.gmra.mxu0 %v3281
  %v4086 = vpop.f32.mrf.mxu0
  %v4087 = vadd.f32 0.0, %v4086
  %v4088 = vpop.f32.mrf.mxu0
  %4089 = vdwg.mxu0
  %4090 = vmatpush.bf16.msra.mxu0 %v3916
  %4091 = vmatpush.bf16.msra.mxu0 %v3908
  %4092 = vmatpush.bf16.msra.mxu0 %v3900
  %4093 = vmatpush.bf16.msra.mxu0 %v3892
  %4094 = vmatpush.bf16.msra.mxu0 %v3884
  %4095 = vmatpush.bf16.msra.mxu0 %v3876
  %4096 = vmatpush.bf16.msra.mxu0 %v3868
  %4097 = vmatpush.bf16.msra.mxu0 %v3860
  %4098 = vmatmul.bf16.gmra.mxu0 %v3282
  %v4099 = vpop.f32.mrf.mxu0
  %v4100 = vadd.f32 %v4087, %v4099
  %v4101 = vpop.f32.mrf.mxu0
  %4102 = vdwg.mxu0
  %4103 = vmatpush.bf16.msra.mxu0 %v3853
  %4104 = vmatpush.bf16.msra.mxu0 %v3845
  %4105 = vmatpush.bf16.msra.mxu0 %v3837
  %4106 = vmatpush.bf16.msra.mxu0 %v3829
  %4107 = vmatpush.bf16.msra.mxu0 %v3821
  %4108 = vmatpush.bf16.msra.mxu0 %v3813
  %4109 = vmatpush.bf16.msra.mxu0 %v3805
  %4110 = vmatpush.bf16.msra.mxu0 %v3797
  %4111 = vmatmul.bf16.gmra.mxu0 %v3281
  %v4112 = vpop.f32.mrf.mxu0
  %v4113 = vadd.f32 0.0, %v4112
  %v4114 = vpop.f32.mrf.mxu0
  %4115 = vdwg.mxu0
  %4116 = vmatpush.bf16.msra.mxu0 %v3917
  %4117 = vmatpush.bf16.msra.mxu0 %v3909
  %4118 = vmatpush.bf16.msra.mxu0 %v3901
  %4119 = vmatpush.bf16.msra.mxu0 %v3893
  %4120 = vmatpush.bf16.msra.mxu0 %v3885
  %4121 = vmatpush.bf16.msra.mxu0 %v3877
  %4122 = vmatpush.bf16.msra.mxu0 %v3869
  %4123 = vmatpush.bf16.msra.mxu0 %v3861
  %4124 = vmatmul.bf16.gmra.mxu0 %v3282
  %v4125 = vpop.f32.mrf.mxu0
  %v4126 = vadd.f32 %v4113, %v4125
  %v4127 = vpop.f32.mrf.mxu0
  %4128 = vdwg.mxu0
  %4129 = vmatpush.bf16.msra.mxu0 %v3854
  %4130 = vmatpush.bf16.msra.mxu0 %v3846
  %4131 = vmatpush.bf16.msra.mxu0 %v3838
  %4132 = vmatpush.bf16.msra.mxu0 %v3830
  %4133 = vmatpush.bf16.msra.mxu0 %v3822
  %4134 = vmatpush.bf16.msra.mxu0 %v3814
  %4135 = vmatpush.bf16.msra.mxu0 %v3806
  %4136 = vmatpush.bf16.msra.mxu0 %v3798
  %4137 = vmatmul.bf16.gmra.mxu0 %v3281
  %v4138 = vpop.f32.mrf.mxu0
  %v4139 = vadd.f32 0.0, %v4138
  %v4140 = vpop.f32.mrf.mxu0
  %4141 = vdwg.mxu0
  %4142 = vmatpush.bf16.msra.mxu0 %v3918
  %4143 = vmatpush.bf16.msra.mxu0 %v3910
  %4144 = vmatpush.bf16.msra.mxu0 %v3902
  %4145 = vmatpush.bf16.msra.mxu0 %v3894
  %4146 = vmatpush.bf16.msra.mxu0 %v3886
  %4147 = vmatpush.bf16.msra.mxu0 %v3878
  %4148 = vmatpush.bf16.msra.mxu0 %v3870
  %4149 = vmatpush.bf16.msra.mxu0 %v3862
  %4150 = vmatmul.bf16.gmra.mxu0 %v3282
  %v4151 = vpop.f32.mrf.mxu0
  %v4152 = vadd.f32 %v4139, %v4151
  %v4153 = vpop.f32.mrf.mxu0
  %4154 = vdwg.mxu0
  %4155 = vmatpush.bf16.msra.mxu0 %v3855
  %4156 = vmatpush.bf16.msra.mxu0 %v3847
  %4157 = vmatpush.bf16.msra.mxu0 %v3839
  %4158 = vmatpush.bf16.msra.mxu0 %v3831
  %4159 = vmatpush.bf16.msra.mxu0 %v3823
  %4160 = vmatpush.bf16.msra.mxu0 %v3815
  %4161 = vmatpush.bf16.msra.mxu0 %v3807
  %4162 = vmatpush.bf16.msra.mxu0 %v3799
  %4163 = vmatmul.bf16.gmra.mxu0 %v3281
  %v4164 = vpop.f32.mrf.mxu0
  %v4165 = vadd.f32 0.0, %v4164
  %v4166 = vpop.f32.mrf.mxu0
  %4167 = vdwg.mxu0
  %4168 = vmatpush.bf16.msra.mxu0 %v3919
  %4169 = vmatpush.bf16.msra.mxu0 %v3911
  %4170 = vmatpush.bf16.msra.mxu0 %v3903
  %4171 = vmatpush.bf16.msra.mxu0 %v3895
  %4172 = vmatpush.bf16.msra.mxu0 %v3887
  %4173 = vmatpush.bf16.msra.mxu0 %v3879
  %4174 = vmatpush.bf16.msra.mxu0 %v3871
  %4175 = vmatpush.bf16.msra.mxu0 %v3863
  %4176 = vmatmul.bf16.gmra.mxu0 %v3282
  %v4177 = vpop.f32.mrf.mxu0
  %v4178 = vadd.f32 %v4165, %v4177
  %v4179 = vpop.f32.mrf.mxu0
  %4180 = vdwg.mxu0
  %4181 = vmatpush.bf16.msra.mxu0 %v3856
  %4182 = vmatpush.bf16.msra.mxu0 %v3848
  %4183 = vmatpush.bf16.msra.mxu0 %v3840
  %4184 = vmatpush.bf16.msra.mxu0 %v3832
  %4185 = vmatpush.bf16.msra.mxu0 %v3824
  %4186 = vmatpush.bf16.msra.mxu0 %v3816
  %4187 = vmatpush.bf16.msra.mxu0 %v3808
  %4188 = vmatpush.bf16.msra.mxu0 %v3800
  %4189 = vmatmul.bf16.gmra.mxu0 %v3281
  %v4190 = vpop.f32.mrf.mxu0
  %v4191 = vadd.f32 0.0, %v4190
  %v4192 = vpop.f32.mrf.mxu0
  %4193 = vdwg.mxu0
  %4194 = vmatpush.bf16.msra.mxu0 %v3920
  %4195 = vmatpush.bf16.msra.mxu0 %v3912
  %4196 = vmatpush.bf16.msra.mxu0 %v3904
  %4197 = vmatpush.bf16.msra.mxu0 %v3896
  %4198 = vmatpush.bf16.msra.mxu0 %v3888
  %4199 = vmatpush.bf16.msra.mxu0 %v3880
  %4200 = vmatpush.bf16.msra.mxu0 %v3872
  %4201 = vmatpush.bf16.msra.mxu0 %v3864
  %4202 = vmatmul.bf16.gmra.mxu0 %v3282
  %v4203 = vpop.f32.mrf.mxu0
  %v4204 = vadd.f32 %v4191, %v4203
  %v4205 = vpop.f32.mrf.mxu0
  %4206 = vdwg.mxu0
  %4207 = vmatpush.bf16.msra.mxu0 %v3857
  %4208 = vmatpush.bf16.msra.mxu0 %v3849
  %4209 = vmatpush.bf16.msra.mxu0 %v3841
  %4210 = vmatpush.bf16.msra.mxu0 %v3833
  %4211 = vmatpush.bf16.msra.mxu0 %v3825
  %4212 = vmatpush.bf16.msra.mxu0 %v3817
  %4213 = vmatpush.bf16.msra.mxu0 %v3809
  %4214 = vmatpush.bf16.msra.mxu0 %v3801
  %4215 = vmatmul.bf16.gmra.mxu0 %v3281
  %v4216 = vpop.f32.mrf.mxu0
  %v4217 = vadd.f32 0.0, %v4216
  %v4218 = vpop.f32.mrf.mxu0
  %4219 = vdwg.mxu0
  %4220 = vmatpush.bf16.msra.mxu0 %v3921
  %4221 = vmatpush.bf16.msra.mxu0 %v3913
  %4222 = vmatpush.bf16.msra.mxu0 %v3905
  %4223 = vmatpush.bf16.msra.mxu0 %v3897
  %4224 = vmatpush.bf16.msra.mxu0 %v3889
  %4225 = vmatpush.bf16.msra.mxu0 %v3881
  %4226 = vmatpush.bf16.msra.mxu0 %v3873
  %4227 = vmatpush.bf16.msra.mxu0 %v3865
  %4228 = vmatmul.bf16.gmra.mxu0 %v3282
  %v4229 = vpop.f32.mrf.mxu0
  %v4230 = vadd.f32 %v4217, %v4229
  %v4231 = vpop.f32.mrf.mxu0
  %4232 = vdwg.mxu0
  %4233 = vmatpush.bf16.msra.mxu0 %v3858
  %4234 = vmatpush.bf16.msra.mxu0 %v3850
  %4235 = vmatpush.bf16.msra.mxu0 %v3842
  %4236 = vmatpush.bf16.msra.mxu0 %v3834
  %4237 = vmatpush.bf16.msra.mxu0 %v3826
  %4238 = vmatpush.bf16.msra.mxu0 %v3818
  %4239 = vmatpush.bf16.msra.mxu0 %v3810
  %4240 = vmatpush.bf16.msra.mxu0 %v3802
  %4241 = vmatmul.bf16.gmra.mxu0 %v3281
  %v4242 = vpop.f32.mrf.mxu0
  %v4243 = vadd.f32 0.0, %v4242
  %v4244 = vpop.f32.mrf.mxu0
  %4245 = vdwg.mxu0
  %4246 = vmatpush.bf16.msra.mxu0 %v3922
  %4247 = vmatpush.bf16.msra.mxu0 %v3914
  %4248 = vmatpush.bf16.msra.mxu0 %v3906
  %4249 = vmatpush.bf16.msra.mxu0 %v3898
  %4250 = vmatpush.bf16.msra.mxu0 %v3890
  %4251 = vmatpush.bf16.msra.mxu0 %v3882
  %4252 = vmatpush.bf16.msra.mxu0 %v3874
  %4253 = vmatpush.bf16.msra.mxu0 %v3866
  %4254 = vmatmul.bf16.gmra.mxu0 %v3282
  %v4255 = vpop.f32.mrf.mxu0
  %v4256 = vadd.f32 %v4243, %v4255
  %v4257 = vpop.f32.mrf.mxu0
  %4258 = vdwg.mxu0
  %v4267 = vrot.slane %v4100, 4
  %v4268 = vrot.slane %v4152, 4
  %v4269 = vrot.slane %v4204, 4
  %v4270 = vrot.slane %v4256, 4
  %v4271 = vsel %vm1007, %v4074, %v4267
  %v4272 = vsel %vm1007, %v4126, %v4268
  %v4273 = vsel %vm1007, %v4178, %v4269
  %v4274 = vsel %vm1007, %v4230, %v4270
  %v4279 = vadd.f32 %v3271, %v4271
  %v4280 = vadd.f32 %v3272, %v4272
  %v4281 = vadd.f32 %v3273, %v4273
  %v4282 = vadd.f32 %v3274, %v4274
  %v4283 = vxor.u32 %v4279, 2147483648
  %v4284 = vmul.f32 %v4283, 1.442695
  %v4285 = vpow.pop %v4284
  %v4286 = vadd.f32 %v4285, 1.0
  %v4287 = vrcp.pop %v4286
  %v4288 = vmul.f32 %v4286, %v4287
  %v4289 = vsub.f32 1.0, %v4288
  %v4290 = vmul.f32 %v4287, %v4289
  %v4291 = vadd.f32 %v4287, %v4290
  %vm4292 = vweird.f32 %v4286
  %vm4293 = vweird.f32 %v4287
  %vm4294 = vmor %vm4292, %vm4293
  %v4295 = vsel %vm4294, %v4287, %v4291
  %v4296 = vand.u32 2147483647, %v4286
  %vm4297 = vcmp.eq.f32.partialorder %v4296, 8.507059e+37
  %v4298 = vand.u32 %v4286, 2147483648
  %v4299 = vor.u32 1.1754944e-38, %v4298
  %v4300 = vsel %vm4297, %v4299, %v4295
  %v4301 = vmul.f32 1.0, %v4300
  %v4302 = vxor.u32 %v4280, 2147483648
  %v4303 = vmul.f32 %v4302, 1.442695
  %v4304 = vpow.pop %v4303
  %v4305 = vadd.f32 %v4304, 1.0
  %v4306 = vrcp.pop %v4305
  %v4307 = vmul.f32 %v4305, %v4306
  %v4308 = vsub.f32 1.0, %v4307
  %v4309 = vmul.f32 %v4306, %v4308
  %v4310 = vadd.f32 %v4306, %v4309
  %vm4311 = vweird.f32 %v4305
  %vm4312 = vweird.f32 %v4306
  %vm4313 = vmor %vm4311, %vm4312
  %v4314 = vsel %vm4313, %v4306, %v4310
  %v4315 = vand.u32 2147483647, %v4305
  %vm4316 = vcmp.eq.f32.partialorder %v4315, 8.507059e+37
  %v4317 = vand.u32 %v4305, 2147483648
  %v4318 = vor.u32 1.1754944e-38, %v4317
  %v4319 = vsel %vm4316, %v4318, %v4314
  %v4320 = vmul.f32 1.0, %v4319
  %v4321 = vtanh.pop %v4281
  %v4322 = vxor.u32 %v4282, 2147483648
  %v4323 = vmul.f32 %v4322, 1.442695
  %v4324 = vpow.pop %v4323
  %v4325 = vadd.f32 %v4324, 1.0
  %v4326 = vrcp.pop %v4325
  %v4327 = vmul.f32 %v4325, %v4326
  %v4328 = vsub.f32 1.0, %v4327
  %v4329 = vmul.f32 %v4326, %v4328
  %v4330 = vadd.f32 %v4326, %v4329
  %vm4331 = vweird.f32 %v4325
  %vm4332 = vweird.f32 %v4326
  %vm4333 = vmor %vm4331, %vm4332
  %v4334 = vsel %vm4333, %v4326, %v4330
  %v4335 = vand.u32 2147483647, %v4325
  %vm4336 = vcmp.eq.f32.partialorder %v4335, 8.507059e+37
  %v4337 = vand.u32 %v4325, 2147483648
  %v4338 = vor.u32 1.1754944e-38, %v4337
  %v4339 = vsel %vm4336, %v4338, %v4334
  %v4340 = vmul.f32 1.0, %v4339
  %v4341 = vmul.f32 %v4320, %v3260
  %v4342 = vmul.f32 %v4301, %v4321
  %v4343 = vadd.f32 %v4341, %v4342
  %v4344 = vtanh.pop %v4343
  %v4345 = vmul.f32 %v4340, %v4344
  %s4346 = scalar_lea.vmem %s2, 24
  %v4347 = vld [vmem:[%s4346] sm:$0xff]
  %vm4348 = vcmp.gt.f32.partialorder %v4347, 0.0
  %v4349 = vsel %vm4348, %v4343, %v3260
  %v4350 = vsel %vm4348, %v4345, %v3261
  %v4351 = vsel %vm4348, %v4345, 0.0
  %s4352 = scalar_lea.vmem %s3, 24
  %4353 = vst [vmem:[%s4352] sm:$0xf] %v4351
  %v4355 = vrot.slane %v4351, 4
  %s4357 = scalar_lea.vmem %s3, 32
  %4358 = vst [vmem:[%s4357 + $0x4] sm:$0xf] %v4355
  %s4359 = scalar_lea.vmem %s0, 128
  %v4360 = vld [vmem:[%s4359] sm:$0xff]
  %v4361 = vld [vmem:[%s4359 + $0x8] sm:$0xff]
  %v4362 = vld [vmem:[%s4359 + $0x10] sm:$0xff]
  %v4363 = vld [vmem:[%s4359 + $0x18] sm:$0xff]
  %4365 = vst [vmem:[#allocation1] ss:$2 sm:$0xff] %v4350
  %v4366 = vld.sshfl [vmem:[#allocation1] sm:$0xff pattern:$0x75316420]
  %v4367 = vld.sshfl [vmem:[#allocation1 + $0x8] sm:$0xff pattern:$0x75316420]
  %v4370 = vpack.c.bf16 %v4366, %v4366
  %v4371 = vpack.c.bf16 %v4367, %v4367
  %v4372 = vld [vmem:[%s1] sm:$0xff]
  %v4373 = vld [vmem:[%s1 + $0x8] sm:$0xff]
  %v4374 = vld [vmem:[%s1 + $0x10] sm:$0xff]
  %v4375 = vld [vmem:[%s1 + $0x18] sm:$0xff]
  %v4376 = vld [vmem:[%s1 + $0x20] sm:$0xff]
  %v4377 = vld [vmem:[%s1 + $0x28] sm:$0xff]
  %v4378 = vld [vmem:[%s1 + $0x30] sm:$0xff]
  %v4379 = vld [vmem:[%s1 + $0x38] sm:$0xff]
  %v4380 = vld [vmem:[%s1 + $0x40] sm:$0xff]
  %v4381 = vld [vmem:[%s1 + $0x48] sm:$0xff]
  %v4382 = vld [vmem:[%s1 + $0x50] sm:$0xff]
  %v4383 = vld [vmem:[%s1 + $0x58] sm:$0xff]
  %v4384 = vld [vmem:[%s1 + $0x60] sm:$0xff]
  %v4385 = vld [vmem:[%s1 + $0x68] sm:$0xff]
  %v4386 = vld [vmem:[%s1 + $0x70] sm:$0xff]
  %v4387 = vld [vmem:[%s1 + $0x78] sm:$0xff]
  %v4388 = vld [vmem:[%s1 + $0x80] sm:$0xff]
  %v4389 = vld [vmem:[%s1 + $0x88] sm:$0xff]
  %v4390 = vld [vmem:[%s1 + $0x90] sm:$0xff]
  %v4391 = vld [vmem:[%s1 + $0x98] sm:$0xff]
  %v4392 = vld [vmem:[%s1 + $0xa0] sm:$0xff]
  %v4393 = vld [vmem:[%s1 + $0xa8] sm:$0xff]
  %v4394 = vld [vmem:[%s1 + $0xb0] sm:$0xff]
  %v4395 = vld [vmem:[%s1 + $0xb8] sm:$0xff]
  %v4396 = vld [vmem:[%s1 + $0xc0] sm:$0xff]
  %v4397 = vld [vmem:[%s1 + $0xc8] sm:$0xff]
  %v4398 = vld [vmem:[%s1 + $0xd0] sm:$0xff]
  %v4399 = vld [vmem:[%s1 + $0xd8] sm:$0xff]
  %v4400 = vld [vmem:[%s1 + $0xe0] sm:$0xff]
  %v4401 = vld [vmem:[%s1 + $0xe8] sm:$0xff]
  %v4402 = vld [vmem:[%s1 + $0xf0] sm:$0xff]
  %v4403 = vld [vmem:[%s1 + $0xf8] sm:$0xff]
  %v4404 = vld [vmem:[%s1 + $0x100] sm:$0xff]
  %v4405 = vld [vmem:[%s1 + $0x108] sm:$0xff]
  %v4406 = vld [vmem:[%s1 + $0x110] sm:$0xff]
  %v4407 = vld [vmem:[%s1 + $0x118] sm:$0xff]
  %v4408 = vld [vmem:[%s1 + $0x120] sm:$0xff]
  %v4409 = vld [vmem:[%s1 + $0x128] sm:$0xff]
  %v4410 = vld [vmem:[%s1 + $0x130] sm:$0xff]
  %v4411 = vld [vmem:[%s1 + $0x138] sm:$0xff]
  %v4412 = vld [vmem:[%s1 + $0x140] sm:$0xff]
  %v4413 = vld [vmem:[%s1 + $0x148] sm:$0xff]
  %v4414 = vld [vmem:[%s1 + $0x150] sm:$0xff]
  %v4415 = vld [vmem:[%s1 + $0x158] sm:$0xff]
  %v4416 = vld [vmem:[%s1 + $0x160] sm:$0xff]
  %v4417 = vld [vmem:[%s1 + $0x168] sm:$0xff]
  %v4418 = vld [vmem:[%s1 + $0x170] sm:$0xff]
  %v4419 = vld [vmem:[%s1 + $0x178] sm:$0xff]
  %v4420 = vld [vmem:[%s1 + $0x180] sm:$0xff]
  %v4421 = vld [vmem:[%s1 + $0x188] sm:$0xff]
  %v4422 = vld [vmem:[%s1 + $0x190] sm:$0xff]
  %v4423 = vld [vmem:[%s1 + $0x198] sm:$0xff]
  %v4424 = vld [vmem:[%s1 + $0x1a0] sm:$0xff]
  %v4425 = vld [vmem:[%s1 + $0x1a8] sm:$0xff]
  %v4426 = vld [vmem:[%s1 + $0x1b0] sm:$0xff]
  %v4427 = vld [vmem:[%s1 + $0x1b8] sm:$0xff]
  %v4428 = vld [vmem:[%s1 + $0x1c0] sm:$0xff]
  %v4429 = vld [vmem:[%s1 + $0x1c8] sm:$0xff]
  %v4430 = vld [vmem:[%s1 + $0x1d0] sm:$0xff]
  %v4431 = vld [vmem:[%s1 + $0x1d8] sm:$0xff]
  %v4432 = vld [vmem:[%s1 + $0x1e0] sm:$0xff]
  %v4433 = vld [vmem:[%s1 + $0x1e8] sm:$0xff]
  %v4434 = vld [vmem:[%s1 + $0x1f0] sm:$0xff]
  %v4435 = vld [vmem:[%s1 + $0x1f8] sm:$0xff]
  %v4436 = vld [vmem:[%s1 + $0x200] sm:$0xff]
  %v4437 = vld [vmem:[%s1 + $0x208] sm:$0xff]
  %v4438 = vld [vmem:[%s1 + $0x210] sm:$0xff]
  %v4439 = vld [vmem:[%s1 + $0x218] sm:$0xff]
  %v4440 = vld [vmem:[%s1 + $0x220] sm:$0xff]
  %v4441 = vld [vmem:[%s1 + $0x228] sm:$0xff]
  %v4442 = vld [vmem:[%s1 + $0x230] sm:$0xff]
  %v4443 = vld [vmem:[%s1 + $0x238] sm:$0xff]
  %v4444 = vld [vmem:[%s1 + $0x240] sm:$0xff]
  %v4445 = vld [vmem:[%s1 + $0x248] sm:$0xff]
  %v4446 = vld [vmem:[%s1 + $0x250] sm:$0xff]
  %v4447 = vld [vmem:[%s1 + $0x258] sm:$0xff]
  %v4448 = vld [vmem:[%s1 + $0x260] sm:$0xff]
  %v4449 = vld [vmem:[%s1 + $0x268] sm:$0xff]
  %v4450 = vld [vmem:[%s1 + $0x270] sm:$0xff]
  %v4451 = vld [vmem:[%s1 + $0x278] sm:$0xff]
  %v4452 = vld [vmem:[%s1 + $0x280] sm:$0xff]
  %v4453 = vld [vmem:[%s1 + $0x288] sm:$0xff]
  %v4454 = vld [vmem:[%s1 + $0x290] sm:$0xff]
  %v4455 = vld [vmem:[%s1 + $0x298] sm:$0xff]
  %v4456 = vld [vmem:[%s1 + $0x2a0] sm:$0xff]
  %v4457 = vld [vmem:[%s1 + $0x2a8] sm:$0xff]
  %v4458 = vld [vmem:[%s1 + $0x2b0] sm:$0xff]
  %v4459 = vld [vmem:[%s1 + $0x2b8] sm:$0xff]
  %v4460 = vld [vmem:[%s1 + $0x2c0] sm:$0xff]
  %v4461 = vld [vmem:[%s1 + $0x2c8] sm:$0xff]
  %v4462 = vld [vmem:[%s1 + $0x2d0] sm:$0xff]
  %v4463 = vld [vmem:[%s1 + $0x2d8] sm:$0xff]
  %v4464 = vld [vmem:[%s1 + $0x2e0] sm:$0xff]
  %v4465 = vld [vmem:[%s1 + $0x2e8] sm:$0xff]
  %v4466 = vld [vmem:[%s1 + $0x2f0] sm:$0xff]
  %v4467 = vld [vmem:[%s1 + $0x2f8] sm:$0xff]
  %v4468 = vld [vmem:[%s1 + $0x300] sm:$0xff]
  %v4469 = vld [vmem:[%s1 + $0x308] sm:$0xff]
  %v4470 = vld [vmem:[%s1 + $0x310] sm:$0xff]
  %v4471 = vld [vmem:[%s1 + $0x318] sm:$0xff]
  %v4472 = vld [vmem:[%s1 + $0x320] sm:$0xff]
  %v4473 = vld [vmem:[%s1 + $0x328] sm:$0xff]
  %v4474 = vld [vmem:[%s1 + $0x330] sm:$0xff]
  %v4475 = vld [vmem:[%s1 + $0x338] sm:$0xff]
  %v4476 = vld [vmem:[%s1 + $0x340] sm:$0xff]
  %v4477 = vld [vmem:[%s1 + $0x348] sm:$0xff]
  %v4478 = vld [vmem:[%s1 + $0x350] sm:$0xff]
  %v4479 = vld [vmem:[%s1 + $0x358] sm:$0xff]
  %v4480 = vld [vmem:[%s1 + $0x360] sm:$0xff]
  %v4481 = vld [vmem:[%s1 + $0x368] sm:$0xff]
  %v4482 = vld [vmem:[%s1 + $0x370] sm:$0xff]
  %v4483 = vld [vmem:[%s1 + $0x378] sm:$0xff]
  %v4484 = vld [vmem:[%s1 + $0x380] sm:$0xff]
  %v4485 = vld [vmem:[%s1 + $0x388] sm:$0xff]
  %v4486 = vld [vmem:[%s1 + $0x390] sm:$0xff]
  %v4487 = vld [vmem:[%s1 + $0x398] sm:$0xff]
  %v4488 = vld [vmem:[%s1 + $0x3a0] sm:$0xff]
  %v4489 = vld [vmem:[%s1 + $0x3a8] sm:$0xff]
  %v4490 = vld [vmem:[%s1 + $0x3b0] sm:$0xff]
  %v4491 = vld [vmem:[%s1 + $0x3b8] sm:$0xff]
  %v4492 = vld [vmem:[%s1 + $0x3c0] sm:$0xff]
  %v4493 = vld [vmem:[%s1 + $0x3c8] sm:$0xff]
  %v4494 = vld [vmem:[%s1 + $0x3d0] sm:$0xff]
  %v4495 = vld [vmem:[%s1 + $0x3d8] sm:$0xff]
  %v4496 = vld [vmem:[%s1 + $0x3e0] sm:$0xff]
  %v4497 = vld [vmem:[%s1 + $0x3e8] sm:$0xff]
  %v4498 = vld [vmem:[%s1 + $0x3f0] sm:$0xff]
  %v4499 = vld [vmem:[%s1 + $0x3f8] sm:$0xff]
  %v4628 = vunpack.c.l.b16 %v4372
  %v4629 = vunpack.c.h.b16 %v4372
  %v4630 = vunpack.c.l.b16 %v4373
  %v4631 = vunpack.c.h.b16 %v4373
  %v4632 = vunpack.c.l.b16 %v4374
  %v4633 = vunpack.c.h.b16 %v4374
  %v4634 = vunpack.c.l.b16 %v4375
  %v4635 = vunpack.c.h.b16 %v4375
  %v4636 = vunpack.c.l.b16 %v4376
  %v4637 = vunpack.c.h.b16 %v4376
  %v4638 = vunpack.c.l.b16 %v4377
  %v4639 = vunpack.c.h.b16 %v4377
  %v4640 = vunpack.c.l.b16 %v4378
  %v4641 = vunpack.c.h.b16 %v4378
  %v4642 = vunpack.c.l.b16 %v4379
  %v4643 = vunpack.c.h.b16 %v4379
  %v4644 = vunpack.c.l.b16 %v4380
  %v4645 = vunpack.c.h.b16 %v4380
  %v4646 = vunpack.c.l.b16 %v4381
  %v4647 = vunpack.c.h.b16 %v4381
  %v4648 = vunpack.c.l.b16 %v4382
  %v4649 = vunpack.c.h.b16 %v4382
  %v4650 = vunpack.c.l.b16 %v4383
  %v4651 = vunpack.c.h.b16 %v4383
  %v4652 = vunpack.c.l.b16 %v4384
  %v4653 = vunpack.c.h.b16 %v4384
  %v4654 = vunpack.c.l.b16 %v4385
  %v4655 = vunpack.c.h.b16 %v4385
  %v4656 = vunpack.c.l.b16 %v4386
  %v4657 = vunpack.c.h.b16 %v4386
  %v4658 = vunpack.c.l.b16 %v4387
  %v4659 = vunpack.c.h.b16 %v4387
  %v4660 = vunpack.c.l.b16 %v4388
  %v4661 = vunpack.c.h.b16 %v4388
  %v4662 = vunpack.c.l.b16 %v4389
  %v4663 = vunpack.c.h.b16 %v4389
  %v4664 = vunpack.c.l.b16 %v4390
  %v4665 = vunpack.c.h.b16 %v4390
  %v4666 = vunpack.c.l.b16 %v4391
  %v4667 = vunpack.c.h.b16 %v4391
  %v4668 = vunpack.c.l.b16 %v4392
  %v4669 = vunpack.c.h.b16 %v4392
  %v4670 = vunpack.c.l.b16 %v4393
  %v4671 = vunpack.c.h.b16 %v4393
  %v4672 = vunpack.c.l.b16 %v4394
  %v4673 = vunpack.c.h.b16 %v4394
  %v4674 = vunpack.c.l.b16 %v4395
  %v4675 = vunpack.c.h.b16 %v4395
  %v4676 = vunpack.c.l.b16 %v4396
  %v4677 = vunpack.c.h.b16 %v4396
  %v4678 = vunpack.c.l.b16 %v4397
  %v4679 = vunpack.c.h.b16 %v4397
  %v4680 = vunpack.c.l.b16 %v4398
  %v4681 = vunpack.c.h.b16 %v4398
  %v4682 = vunpack.c.l.b16 %v4399
  %v4683 = vunpack.c.h.b16 %v4399
  %v4684 = vunpack.c.l.b16 %v4400
  %v4685 = vunpack.c.h.b16 %v4400
  %v4686 = vunpack.c.l.b16 %v4401
  %v4687 = vunpack.c.h.b16 %v4401
  %v4688 = vunpack.c.l.b16 %v4402
  %v4689 = vunpack.c.h.b16 %v4402
  %v4690 = vunpack.c.l.b16 %v4403
  %v4691 = vunpack.c.h.b16 %v4403
  %v4692 = vunpack.c.l.b16 %v4404
  %v4693 = vunpack.c.h.b16 %v4404
  %v4694 = vunpack.c.l.b16 %v4405
  %v4695 = vunpack.c.h.b16 %v4405
  %v4696 = vunpack.c.l.b16 %v4406
  %v4697 = vunpack.c.h.b16 %v4406
  %v4698 = vunpack.c.l.b16 %v4407
  %v4699 = vunpack.c.h.b16 %v4407
  %v4700 = vunpack.c.l.b16 %v4408
  %v4701 = vunpack.c.h.b16 %v4408
  %v4702 = vunpack.c.l.b16 %v4409
  %v4703 = vunpack.c.h.b16 %v4409
  %v4704 = vunpack.c.l.b16 %v4410
  %v4705 = vunpack.c.h.b16 %v4410
  %v4706 = vunpack.c.l.b16 %v4411
  %v4707 = vunpack.c.h.b16 %v4411
  %v4708 = vunpack.c.l.b16 %v4412
  %v4709 = vunpack.c.h.b16 %v4412
  %v4710 = vunpack.c.l.b16 %v4413
  %v4711 = vunpack.c.h.b16 %v4413
  %v4712 = vunpack.c.l.b16 %v4414
  %v4713 = vunpack.c.h.b16 %v4414
  %v4714 = vunpack.c.l.b16 %v4415
  %v4715 = vunpack.c.h.b16 %v4415
  %v4716 = vunpack.c.l.b16 %v4416
  %v4717 = vunpack.c.h.b16 %v4416
  %v4718 = vunpack.c.l.b16 %v4417
  %v4719 = vunpack.c.h.b16 %v4417
  %v4720 = vunpack.c.l.b16 %v4418
  %v4721 = vunpack.c.h.b16 %v4418
  %v4722 = vunpack.c.l.b16 %v4419
  %v4723 = vunpack.c.h.b16 %v4419
  %v4724 = vunpack.c.l.b16 %v4420
  %v4725 = vunpack.c.h.b16 %v4420
  %v4726 = vunpack.c.l.b16 %v4421
  %v4727 = vunpack.c.h.b16 %v4421
  %v4728 = vunpack.c.l.b16 %v4422
  %v4729 = vunpack.c.h.b16 %v4422
  %v4730 = vunpack.c.l.b16 %v4423
  %v4731 = vunpack.c.h.b16 %v4423
  %v4732 = vunpack.c.l.b16 %v4424
  %v4733 = vunpack.c.h.b16 %v4424
  %v4734 = vunpack.c.l.b16 %v4425
  %v4735 = vunpack.c.h.b16 %v4425
  %v4736 = vunpack.c.l.b16 %v4426
  %v4737 = vunpack.c.h.b16 %v4426
  %v4738 = vunpack.c.l.b16 %v4427
  %v4739 = vunpack.c.h.b16 %v4427
  %v4740 = vunpack.c.l.b16 %v4428
  %v4741 = vunpack.c.h.b16 %v4428
  %v4742 = vunpack.c.l.b16 %v4429
  %v4743 = vunpack.c.h.b16 %v4429
  %v4744 = vunpack.c.l.b16 %v4430
  %v4745 = vunpack.c.h.b16 %v4430
  %v4746 = vunpack.c.l.b16 %v4431
  %v4747 = vunpack.c.h.b16 %v4431
  %v4748 = vunpack.c.l.b16 %v4432
  %v4749 = vunpack.c.h.b16 %v4432
  %v4750 = vunpack.c.l.b16 %v4433
  %v4751 = vunpack.c.h.b16 %v4433
  %v4752 = vunpack.c.l.b16 %v4434
  %v4753 = vunpack.c.h.b16 %v4434
  %v4754 = vunpack.c.l.b16 %v4435
  %v4755 = vunpack.c.h.b16 %v4435
  %v4756 = vunpack.c.l.b16 %v4436
  %v4757 = vunpack.c.h.b16 %v4436
  %v4758 = vunpack.c.l.b16 %v4437
  %v4759 = vunpack.c.h.b16 %v4437
  %v4760 = vunpack.c.l.b16 %v4438
  %v4761 = vunpack.c.h.b16 %v4438
  %v4762 = vunpack.c.l.b16 %v4439
  %v4763 = vunpack.c.h.b16 %v4439
  %v4764 = vunpack.c.l.b16 %v4440
  %v4765 = vunpack.c.h.b16 %v4440
  %v4766 = vunpack.c.l.b16 %v4441
  %v4767 = vunpack.c.h.b16 %v4441
  %v4768 = vunpack.c.l.b16 %v4442
  %v4769 = vunpack.c.h.b16 %v4442
  %v4770 = vunpack.c.l.b16 %v4443
  %v4771 = vunpack.c.h.b16 %v4443
  %v4772 = vunpack.c.l.b16 %v4444
  %v4773 = vunpack.c.h.b16 %v4444
  %v4774 = vunpack.c.l.b16 %v4445
  %v4775 = vunpack.c.h.b16 %v4445
  %v4776 = vunpack.c.l.b16 %v4446
  %v4777 = vunpack.c.h.b16 %v4446
  %v4778 = vunpack.c.l.b16 %v4447
  %v4779 = vunpack.c.h.b16 %v4447
  %v4780 = vunpack.c.l.b16 %v4448
  %v4781 = vunpack.c.h.b16 %v4448
  %v4782 = vunpack.c.l.b16 %v4449
  %v4783 = vunpack.c.h.b16 %v4449
  %v4784 = vunpack.c.l.b16 %v4450
  %v4785 = vunpack.c.h.b16 %v4450
  %v4786 = vunpack.c.l.b16 %v4451
  %v4787 = vunpack.c.h.b16 %v4451
  %v4788 = vunpack.c.l.b16 %v4452
  %v4789 = vunpack.c.h.b16 %v4452
  %v4790 = vunpack.c.l.b16 %v4453
  %v4791 = vunpack.c.h.b16 %v4453
  %v4792 = vunpack.c.l.b16 %v4454
  %v4793 = vunpack.c.h.b16 %v4454
  %v4794 = vunpack.c.l.b16 %v4455
  %v4795 = vunpack.c.h.b16 %v4455
  %v4796 = vunpack.c.l.b16 %v4456
  %v4797 = vunpack.c.h.b16 %v4456
  %v4798 = vunpack.c.l.b16 %v4457
  %v4799 = vunpack.c.h.b16 %v4457
  %v4800 = vunpack.c.l.b16 %v4458
  %v4801 = vunpack.c.h.b16 %v4458
  %v4802 = vunpack.c.l.b16 %v4459
  %v4803 = vunpack.c.h.b16 %v4459
  %v4804 = vunpack.c.l.b16 %v4460
  %v4805 = vunpack.c.h.b16 %v4460
  %v4806 = vunpack.c.l.b16 %v4461
  %v4807 = vunpack.c.h.b16 %v4461
  %v4808 = vunpack.c.l.b16 %v4462
  %v4809 = vunpack.c.h.b16 %v4462
  %v4810 = vunpack.c.l.b16 %v4463
  %v4811 = vunpack.c.h.b16 %v4463
  %v4812 = vunpack.c.l.b16 %v4464
  %v4813 = vunpack.c.h.b16 %v4464
  %v4814 = vunpack.c.l.b16 %v4465
  %v4815 = vunpack.c.h.b16 %v4465
  %v4816 = vunpack.c.l.b16 %v4466
  %v4817 = vunpack.c.h.b16 %v4466
  %v4818 = vunpack.c.l.b16 %v4467
  %v4819 = vunpack.c.h.b16 %v4467
  %v4820 = vunpack.c.l.b16 %v4468
  %v4821 = vunpack.c.h.b16 %v4468
  %v4822 = vunpack.c.l.b16 %v4469
  %v4823 = vunpack.c.h.b16 %v4469
  %v4824 = vunpack.c.l.b16 %v4470
  %v4825 = vunpack.c.h.b16 %v4470
  %v4826 = vunpack.c.l.b16 %v4471
  %v4827 = vunpack.c.h.b16 %v4471
  %v4828 = vunpack.c.l.b16 %v4472
  %v4829 = vunpack.c.h.b16 %v4472
  %v4830 = vunpack.c.l.b16 %v4473
  %v4831 = vunpack.c.h.b16 %v4473
  %v4832 = vunpack.c.l.b16 %v4474
  %v4833 = vunpack.c.h.b16 %v4474
  %v4834 = vunpack.c.l.b16 %v4475
  %v4835 = vunpack.c.h.b16 %v4475
  %v4836 = vunpack.c.l.b16 %v4476
  %v4837 = vunpack.c.h.b16 %v4476
  %v4838 = vunpack.c.l.b16 %v4477
  %v4839 = vunpack.c.h.b16 %v4477
  %v4840 = vunpack.c.l.b16 %v4478
  %v4841 = vunpack.c.h.b16 %v4478
  %v4842 = vunpack.c.l.b16 %v4479
  %v4843 = vunpack.c.h.b16 %v4479
  %v4844 = vunpack.c.l.b16 %v4480
  %v4845 = vunpack.c.h.b16 %v4480
  %v4846 = vunpack.c.l.b16 %v4481
  %v4847 = vunpack.c.h.b16 %v4481
  %v4848 = vunpack.c.l.b16 %v4482
  %v4849 = vunpack.c.h.b16 %v4482
  %v4850 = vunpack.c.l.b16 %v4483
  %v4851 = vunpack.c.h.b16 %v4483
  %v4852 = vunpack.c.l.b16 %v4484
  %v4853 = vunpack.c.h.b16 %v4484
  %v4854 = vunpack.c.l.b16 %v4485
  %v4855 = vunpack.c.h.b16 %v4485
  %v4856 = vunpack.c.l.b16 %v4486
  %v4857 = vunpack.c.h.b16 %v4486
  %v4858 = vunpack.c.l.b16 %v4487
  %v4859 = vunpack.c.h.b16 %v4487
  %v4860 = vunpack.c.l.b16 %v4488
  %v4861 = vunpack.c.h.b16 %v4488
  %v4862 = vunpack.c.l.b16 %v4489
  %v4863 = vunpack.c.h.b16 %v4489
  %v4864 = vunpack.c.l.b16 %v4490
  %v4865 = vunpack.c.h.b16 %v4490
  %v4866 = vunpack.c.l.b16 %v4491
  %v4867 = vunpack.c.h.b16 %v4491
  %v4868 = vunpack.c.l.b16 %v4492
  %v4869 = vunpack.c.h.b16 %v4492
  %v4870 = vunpack.c.l.b16 %v4493
  %v4871 = vunpack.c.h.b16 %v4493
  %v4872 = vunpack.c.l.b16 %v4494
  %v4873 = vunpack.c.h.b16 %v4494
  %v4874 = vunpack.c.l.b16 %v4495
  %v4875 = vunpack.c.h.b16 %v4495
  %v4876 = vunpack.c.l.b16 %v4496
  %v4877 = vunpack.c.h.b16 %v4496
  %v4878 = vunpack.c.l.b16 %v4497
  %v4879 = vunpack.c.h.b16 %v4497
  %v4880 = vunpack.c.l.b16 %v4498
  %v4881 = vunpack.c.h.b16 %v4498
  %v4882 = vunpack.c.l.b16 %v4499
  %v4883 = vunpack.c.h.b16 %v4499
  %v4884 = vpack.c.b16 %v4636, %v4628
  %v4885 = vpack.c.b16 %v4637, %v4629
  %v4886 = vpack.c.b16 %v4638, %v4630
  %v4887 = vpack.c.b16 %v4639, %v4631
  %v4888 = vpack.c.b16 %v4640, %v4632
  %v4889 = vpack.c.b16 %v4641, %v4633
  %v4890 = vpack.c.b16 %v4642, %v4634
  %v4891 = vpack.c.b16 %v4643, %v4635
  %v4892 = vpack.c.b16 %v4652, %v4644
  %v4893 = vpack.c.b16 %v4653, %v4645
  %v4894 = vpack.c.b16 %v4654, %v4646
  %v4895 = vpack.c.b16 %v4655, %v4647
  %v4896 = vpack.c.b16 %v4656, %v4648
  %v4897 = vpack.c.b16 %v4657, %v4649
  %v4898 = vpack.c.b16 %v4658, %v4650
  %v4899 = vpack.c.b16 %v4659, %v4651
  %v4900 = vpack.c.b16 %v4668, %v4660
  %v4901 = vpack.c.b16 %v4669, %v4661
  %v4902 = vpack.c.b16 %v4670, %v4662
  %v4903 = vpack.c.b16 %v4671, %v4663
  %v4904 = vpack.c.b16 %v4672, %v4664
  %v4905 = vpack.c.b16 %v4673, %v4665
  %v4906 = vpack.c.b16 %v4674, %v4666
  %v4907 = vpack.c.b16 %v4675, %v4667
  %v4908 = vpack.c.b16 %v4684, %v4676
  %v4909 = vpack.c.b16 %v4685, %v4677
  %v4910 = vpack.c.b16 %v4686, %v4678
  %v4911 = vpack.c.b16 %v4687, %v4679
  %v4912 = vpack.c.b16 %v4688, %v4680
  %v4913 = vpack.c.b16 %v4689, %v4681
  %v4914 = vpack.c.b16 %v4690, %v4682
  %v4915 = vpack.c.b16 %v4691, %v4683
  %v4916 = vpack.c.b16 %v4700, %v4692
  %v4917 = vpack.c.b16 %v4701, %v4693
  %v4918 = vpack.c.b16 %v4702, %v4694
  %v4919 = vpack.c.b16 %v4703, %v4695
  %v4920 = vpack.c.b16 %v4704, %v4696
  %v4921 = vpack.c.b16 %v4705, %v4697
  %v4922 = vpack.c.b16 %v4706, %v4698
  %v4923 = vpack.c.b16 %v4707, %v4699
  %v4924 = vpack.c.b16 %v4716, %v4708
  %v4925 = vpack.c.b16 %v4717, %v4709
  %v4926 = vpack.c.b16 %v4718, %v4710
  %v4927 = vpack.c.b16 %v4719, %v4711
  %v4928 = vpack.c.b16 %v4720, %v4712
  %v4929 = vpack.c.b16 %v4721, %v4713
  %v4930 = vpack.c.b16 %v4722, %v4714
  %v4931 = vpack.c.b16 %v4723, %v4715
  %v4932 = vpack.c.b16 %v4732, %v4724
  %v4933 = vpack.c.b16 %v4733, %v4725
  %v4934 = vpack.c.b16 %v4734, %v4726
  %v4935 = vpack.c.b16 %v4735, %v4727
  %v4936 = vpack.c.b16 %v4736, %v4728
  %v4937 = vpack.c.b16 %v4737, %v4729
  %v4938 = vpack.c.b16 %v4738, %v4730
  %v4939 = vpack.c.b16 %v4739, %v4731
  %v4940 = vpack.c.b16 %v4748, %v4740
  %v4941 = vpack.c.b16 %v4749, %v4741
  %v4942 = vpack.c.b16 %v4750, %v4742
  %v4943 = vpack.c.b16 %v4751, %v4743
  %v4944 = vpack.c.b16 %v4752, %v4744
  %v4945 = vpack.c.b16 %v4753, %v4745
  %v4946 = vpack.c.b16 %v4754, %v4746
  %v4947 = vpack.c.b16 %v4755, %v4747
  %v4948 = vpack.c.b16 %v4764, %v4756
  %v4949 = vpack.c.b16 %v4765, %v4757
  %v4950 = vpack.c.b16 %v4766, %v4758
  %v4951 = vpack.c.b16 %v4767, %v4759
  %v4952 = vpack.c.b16 %v4768, %v4760
  %v4953 = vpack.c.b16 %v4769, %v4761
  %v4954 = vpack.c.b16 %v4770, %v4762
  %v4955 = vpack.c.b16 %v4771, %v4763
  %v4956 = vpack.c.b16 %v4780, %v4772
  %v4957 = vpack.c.b16 %v4781, %v4773
  %v4958 = vpack.c.b16 %v4782, %v4774
  %v4959 = vpack.c.b16 %v4783, %v4775
  %v4960 = vpack.c.b16 %v4784, %v4776
  %v4961 = vpack.c.b16 %v4785, %v4777
  %v4962 = vpack.c.b16 %v4786, %v4778
  %v4963 = vpack.c.b16 %v4787, %v4779
  %v4964 = vpack.c.b16 %v4796, %v4788
  %v4965 = vpack.c.b16 %v4797, %v4789
  %v4966 = vpack.c.b16 %v4798, %v4790
  %v4967 = vpack.c.b16 %v4799, %v4791
  %v4968 = vpack.c.b16 %v4800, %v4792
  %v4969 = vpack.c.b16 %v4801, %v4793
  %v4970 = vpack.c.b16 %v4802, %v4794
  %v4971 = vpack.c.b16 %v4803, %v4795
  %v4972 = vpack.c.b16 %v4812, %v4804
  %v4973 = vpack.c.b16 %v4813, %v4805
  %v4974 = vpack.c.b16 %v4814, %v4806
  %v4975 = vpack.c.b16 %v4815, %v4807
  %v4976 = vpack.c.b16 %v4816, %v4808
  %v4977 = vpack.c.b16 %v4817, %v4809
  %v4978 = vpack.c.b16 %v4818, %v4810
  %v4979 = vpack.c.b16 %v4819, %v4811
  %v4980 = vpack.c.b16 %v4828, %v4820
  %v4981 = vpack.c.b16 %v4829, %v4821
  %v4982 = vpack.c.b16 %v4830, %v4822
  %v4983 = vpack.c.b16 %v4831, %v4823
  %v4984 = vpack.c.b16 %v4832, %v4824
  %v4985 = vpack.c.b16 %v4833, %v4825
  %v4986 = vpack.c.b16 %v4834, %v4826
  %v4987 = vpack.c.b16 %v4835, %v4827
  %v4988 = vpack.c.b16 %v4844, %v4836
  %v4989 = vpack.c.b16 %v4845, %v4837
  %v4990 = vpack.c.b16 %v4846, %v4838
  %v4991 = vpack.c.b16 %v4847, %v4839
  %v4992 = vpack.c.b16 %v4848, %v4840
  %v4993 = vpack.c.b16 %v4849, %v4841
  %v4994 = vpack.c.b16 %v4850, %v4842
  %v4995 = vpack.c.b16 %v4851, %v4843
  %v4996 = vpack.c.b16 %v4860, %v4852
  %v4997 = vpack.c.b16 %v4861, %v4853
  %v4998 = vpack.c.b16 %v4862, %v4854
  %v4999 = vpack.c.b16 %v4863, %v4855
  %v5000 = vpack.c.b16 %v4864, %v4856
  %v5001 = vpack.c.b16 %v4865, %v4857
  %v5002 = vpack.c.b16 %v4866, %v4858
  %v5003 = vpack.c.b16 %v4867, %v4859
  %v5004 = vpack.c.b16 %v4876, %v4868
  %v5005 = vpack.c.b16 %v4877, %v4869
  %v5006 = vpack.c.b16 %v4878, %v4870
  %v5007 = vpack.c.b16 %v4879, %v4871
  %v5008 = vpack.c.b16 %v4880, %v4872
  %v5009 = vpack.c.b16 %v4881, %v4873
  %v5010 = vpack.c.b16 %v4882, %v4874
  %v5011 = vpack.c.b16 %v4883, %v4875
  %5140 = vmatpush.bf16.msra.mxu0 %v4940
  %5141 = vmatpush.bf16.msra.mxu0 %v4932
  %5142 = vmatpush.bf16.msra.mxu0 %v4924
  %5143 = vmatpush.bf16.msra.mxu0 %v4916
  %5144 = vmatpush.bf16.msra.mxu0 %v4908
  %5145 = vmatpush.bf16.msra.mxu0 %v4900
  %5146 = vmatpush.bf16.msra.mxu0 %v4892
  %5147 = vmatpush.bf16.msra.mxu0 %v4884
  %5148 = vmatmul.bf16.gmra.mxu0 %v4370
  %v5149 = vpop.f32.mrf.mxu0
  %v5150 = vadd.f32 0.0, %v5149
  %v5151 = vpop.f32.mrf.mxu0
  %5152 = vdwg.mxu0
  %5153 = vmatpush.bf16.msra.mxu0 %v5004
  %5154 = vmatpush.bf16.msra.mxu0 %v4996
  %5155 = vmatpush.bf16.msra.mxu0 %v4988
  %5156 = vmatpush.bf16.msra.mxu0 %v4980
  %5157 = vmatpush.bf16.msra.mxu0 %v4972
  %5158 = vmatpush.bf16.msra.mxu0 %v4964
  %5159 = vmatpush.bf16.msra.mxu0 %v4956
  %5160 = vmatpush.bf16.msra.mxu0 %v4948
  %5161 = vmatmul.bf16.gmra.mxu0 %v4371
  %v5162 = vpop.f32.mrf.mxu0
  %v5163 = vadd.f32 %v5150, %v5162
  %v5164 = vpop.f32.mrf.mxu0
  %5165 = vdwg.mxu0
  %5166 = vmatpush.bf16.msra.mxu0 %v4941
  %5167 = vmatpush.bf16.msra.mxu0 %v4933
  %5168 = vmatpush.bf16.msra.mxu0 %v4925
  %5169 = vmatpush.bf16.msra.mxu0 %v4917
  %5170 = vmatpush.bf16.msra.mxu0 %v4909
  %5171 = vmatpush.bf16.msra.mxu0 %v4901
  %5172 = vmatpush.bf16.msra.mxu0 %v4893
  %5173 = vmatpush.bf16.msra.mxu0 %v4885
  %5174 = vmatmul.bf16.gmra.mxu0 %v4370
  %v5175 = vpop.f32.mrf.mxu0
  %v5176 = vadd.f32 0.0, %v5175
  %v5177 = vpop.f32.mrf.mxu0
  %5178 = vdwg.mxu0
  %5179 = vmatpush.bf16.msra.mxu0 %v5005
  %5180 = vmatpush.bf16.msra.mxu0 %v4997
  %5181 = vmatpush.bf16.msra.mxu0 %v4989
  %5182 = vmatpush.bf16.msra.mxu0 %v4981
  %5183 = vmatpush.bf16.msra.mxu0 %v4973
  %5184 = vmatpush.bf16.msra.mxu0 %v4965
  %5185 = vmatpush.bf16.msra.mxu0 %v4957
  %5186 = vmatpush.bf16.msra.mxu0 %v4949
  %5187 = vmatmul.bf16.gmra.mxu0 %v4371
  %v5188 = vpop.f32.mrf.mxu0
  %v5189 = vadd.f32 %v5176, %v5188
  %v5190 = vpop.f32.mrf.mxu0
  %5191 = vdwg.mxu0
  %5192 = vmatpush.bf16.msra.mxu0 %v4942
  %5193 = vmatpush.bf16.msra.mxu0 %v4934
  %5194 = vmatpush.bf16.msra.mxu0 %v4926
  %5195 = vmatpush.bf16.msra.mxu0 %v4918
  %5196 = vmatpush.bf16.msra.mxu0 %v4910
  %5197 = vmatpush.bf16.msra.mxu0 %v4902
  %5198 = vmatpush.bf16.msra.mxu0 %v4894
  %5199 = vmatpush.bf16.msra.mxu0 %v4886
  %5200 = vmatmul.bf16.gmra.mxu0 %v4370
  %v5201 = vpop.f32.mrf.mxu0
  %v5202 = vadd.f32 0.0, %v5201
  %v5203 = vpop.f32.mrf.mxu0
  %5204 = vdwg.mxu0
  %5205 = vmatpush.bf16.msra.mxu0 %v5006
  %5206 = vmatpush.bf16.msra.mxu0 %v4998
  %5207 = vmatpush.bf16.msra.mxu0 %v4990
  %5208 = vmatpush.bf16.msra.mxu0 %v4982
  %5209 = vmatpush.bf16.msra.mxu0 %v4974
  %5210 = vmatpush.bf16.msra.mxu0 %v4966
  %5211 = vmatpush.bf16.msra.mxu0 %v4958
  %5212 = vmatpush.bf16.msra.mxu0 %v4950
  %5213 = vmatmul.bf16.gmra.mxu0 %v4371
  %v5214 = vpop.f32.mrf.mxu0
  %v5215 = vadd.f32 %v5202, %v5214
  %v5216 = vpop.f32.mrf.mxu0
  %5217 = vdwg.mxu0
  %5218 = vmatpush.bf16.msra.mxu0 %v4943
  %5219 = vmatpush.bf16.msra.mxu0 %v4935
  %5220 = vmatpush.bf16.msra.mxu0 %v4927
  %5221 = vmatpush.bf16.msra.mxu0 %v4919
  %5222 = vmatpush.bf16.msra.mxu0 %v4911
  %5223 = vmatpush.bf16.msra.mxu0 %v4903
  %5224 = vmatpush.bf16.msra.mxu0 %v4895
  %5225 = vmatpush.bf16.msra.mxu0 %v4887
  %5226 = vmatmul.bf16.gmra.mxu0 %v4370
  %v5227 = vpop.f32.mrf.mxu0
  %v5228 = vadd.f32 0.0, %v5227
  %v5229 = vpop.f32.mrf.mxu0
  %5230 = vdwg.mxu0
  %5231 = vmatpush.bf16.msra.mxu0 %v5007
  %5232 = vmatpush.bf16.msra.mxu0 %v4999
  %5233 = vmatpush.bf16.msra.mxu0 %v4991
  %5234 = vmatpush.bf16.msra.mxu0 %v4983
  %5235 = vmatpush.bf16.msra.mxu0 %v4975
  %5236 = vmatpush.bf16.msra.mxu0 %v4967
  %5237 = vmatpush.bf16.msra.mxu0 %v4959
  %5238 = vmatpush.bf16.msra.mxu0 %v4951
  %5239 = vmatmul.bf16.gmra.mxu0 %v4371
  %v5240 = vpop.f32.mrf.mxu0
  %v5241 = vadd.f32 %v5228, %v5240
  %v5242 = vpop.f32.mrf.mxu0
  %5243 = vdwg.mxu0
  %5244 = vmatpush.bf16.msra.mxu0 %v4944
  %5245 = vmatpush.bf16.msra.mxu0 %v4936
  %5246 = vmatpush.bf16.msra.mxu0 %v4928
  %5247 = vmatpush.bf16.msra.mxu0 %v4920
  %5248 = vmatpush.bf16.msra.mxu0 %v4912
  %5249 = vmatpush.bf16.msra.mxu0 %v4904
  %5250 = vmatpush.bf16.msra.mxu0 %v4896
  %5251 = vmatpush.bf16.msra.mxu0 %v4888
  %5252 = vmatmul.bf16.gmra.mxu0 %v4370
  %v5253 = vpop.f32.mrf.mxu0
  %v5254 = vadd.f32 0.0, %v5253
  %v5255 = vpop.f32.mrf.mxu0
  %5256 = vdwg.mxu0
  %5257 = vmatpush.bf16.msra.mxu0 %v5008
  %5258 = vmatpush.bf16.msra.mxu0 %v5000
  %5259 = vmatpush.bf16.msra.mxu0 %v4992
  %5260 = vmatpush.bf16.msra.mxu0 %v4984
  %5261 = vmatpush.bf16.msra.mxu0 %v4976
  %5262 = vmatpush.bf16.msra.mxu0 %v4968
  %5263 = vmatpush.bf16.msra.mxu0 %v4960
  %5264 = vmatpush.bf16.msra.mxu0 %v4952
  %5265 = vmatmul.bf16.gmra.mxu0 %v4371
  %v5266 = vpop.f32.mrf.mxu0
  %v5267 = vadd.f32 %v5254, %v5266
  %v5268 = vpop.f32.mrf.mxu0
  %5269 = vdwg.mxu0
  %5270 = vmatpush.bf16.msra.mxu0 %v4945
  %5271 = vmatpush.bf16.msra.mxu0 %v4937
  %5272 = vmatpush.bf16.msra.mxu0 %v4929
  %5273 = vmatpush.bf16.msra.mxu0 %v4921
  %5274 = vmatpush.bf16.msra.mxu0 %v4913
  %5275 = vmatpush.bf16.msra.mxu0 %v4905
  %5276 = vmatpush.bf16.msra.mxu0 %v4897
  %5277 = vmatpush.bf16.msra.mxu0 %v4889
  %5278 = vmatmul.bf16.gmra.mxu0 %v4370
  %v5279 = vpop.f32.mrf.mxu0
  %v5280 = vadd.f32 0.0, %v5279
  %v5281 = vpop.f32.mrf.mxu0
  %5282 = vdwg.mxu0
  %5283 = vmatpush.bf16.msra.mxu0 %v5009
  %5284 = vmatpush.bf16.msra.mxu0 %v5001
  %5285 = vmatpush.bf16.msra.mxu0 %v4993
  %5286 = vmatpush.bf16.msra.mxu0 %v4985
  %5287 = vmatpush.bf16.msra.mxu0 %v4977
  %5288 = vmatpush.bf16.msra.mxu0 %v4969
  %5289 = vmatpush.bf16.msra.mxu0 %v4961
  %5290 = vmatpush.bf16.msra.mxu0 %v4953
  %5291 = vmatmul.bf16.gmra.mxu0 %v4371
  %v5292 = vpop.f32.mrf.mxu0
  %v5293 = vadd.f32 %v5280, %v5292
  %v5294 = vpop.f32.mrf.mxu0
  %5295 = vdwg.mxu0
  %5296 = vmatpush.bf16.msra.mxu0 %v4946
  %5297 = vmatpush.bf16.msra.mxu0 %v4938
  %5298 = vmatpush.bf16.msra.mxu0 %v4930
  %5299 = vmatpush.bf16.msra.mxu0 %v4922
  %5300 = vmatpush.bf16.msra.mxu0 %v4914
  %5301 = vmatpush.bf16.msra.mxu0 %v4906
  %5302 = vmatpush.bf16.msra.mxu0 %v4898
  %5303 = vmatpush.bf16.msra.mxu0 %v4890
  %5304 = vmatmul.bf16.gmra.mxu0 %v4370
  %v5305 = vpop.f32.mrf.mxu0
  %v5306 = vadd.f32 0.0, %v5305
  %v5307 = vpop.f32.mrf.mxu0
  %5308 = vdwg.mxu0
  %5309 = vmatpush.bf16.msra.mxu0 %v5010
  %5310 = vmatpush.bf16.msra.mxu0 %v5002
  %5311 = vmatpush.bf16.msra.mxu0 %v4994
  %5312 = vmatpush.bf16.msra.mxu0 %v4986
  %5313 = vmatpush.bf16.msra.mxu0 %v4978
  %5314 = vmatpush.bf16.msra.mxu0 %v4970
  %5315 = vmatpush.bf16.msra.mxu0 %v4962
  %5316 = vmatpush.bf16.msra.mxu0 %v4954
  %5317 = vmatmul.bf16.gmra.mxu0 %v4371
  %v5318 = vpop.f32.mrf.mxu0
  %v5319 = vadd.f32 %v5306, %v5318
  %v5320 = vpop.f32.mrf.mxu0
  %5321 = vdwg.mxu0
  %5322 = vmatpush.bf16.msra.mxu0 %v4947
  %5323 = vmatpush.bf16.msra.mxu0 %v4939
  %5324 = vmatpush.bf16.msra.mxu0 %v4931
  %5325 = vmatpush.bf16.msra.mxu0 %v4923
  %5326 = vmatpush.bf16.msra.mxu0 %v4915
  %5327 = vmatpush.bf16.msra.mxu0 %v4907
  %5328 = vmatpush.bf16.msra.mxu0 %v4899
  %5329 = vmatpush.bf16.msra.mxu0 %v4891
  %5330 = vmatmul.bf16.gmra.mxu0 %v4370
  %v5331 = vpop.f32.mrf.mxu0
  %v5332 = vadd.f32 0.0, %v5331
  %v5333 = vpop.f32.mrf.mxu0
  %5334 = vdwg.mxu0
  %5335 = vmatpush.bf16.msra.mxu0 %v5011
  %5336 = vmatpush.bf16.msra.mxu0 %v5003
  %5337 = vmatpush.bf16.msra.mxu0 %v4995
  %5338 = vmatpush.bf16.msra.mxu0 %v4987
  %5339 = vmatpush.bf16.msra.mxu0 %v4979
  %5340 = vmatpush.bf16.msra.mxu0 %v4971
  %5341 = vmatpush.bf16.msra.mxu0 %v4963
  %5342 = vmatpush.bf16.msra.mxu0 %v4955
  %5343 = vmatmul.bf16.gmra.mxu0 %v4371
  %v5344 = vpop.f32.mrf.mxu0
  %v5345 = vadd.f32 %v5332, %v5344
  %v5346 = vpop.f32.mrf.mxu0
  %5347 = vdwg.mxu0
  %v5356 = vrot.slane %v5189, 4
  %v5357 = vrot.slane %v5241, 4
  %v5358 = vrot.slane %v5293, 4
  %v5359 = vrot.slane %v5345, 4
  %v5360 = vsel %vm1007, %v5163, %v5356
  %v5361 = vsel %vm1007, %v5215, %v5357
  %v5362 = vsel %vm1007, %v5267, %v5358
  %v5363 = vsel %vm1007, %v5319, %v5359
  %v5368 = vadd.f32 %v4360, %v5360
  %v5369 = vadd.f32 %v4361, %v5361
  %v5370 = vadd.f32 %v4362, %v5362
  %v5371 = vadd.f32 %v4363, %v5363
  %v5372 = vxor.u32 %v5368, 2147483648
  %v5373 = vmul.f32 %v5372, 1.442695
  %v5374 = vpow.pop %v5373
  %v5375 = vadd.f32 %v5374, 1.0
  %v5376 = vrcp.pop %v5375
  %v5377 = vmul.f32 %v5375, %v5376
  %v5378 = vsub.f32 1.0, %v5377
  %v5379 = vmul.f32 %v5376, %v5378
  %v5380 = vadd.f32 %v5376, %v5379
  %vm5381 = vweird.f32 %v5375
  %vm5382 = vweird.f32 %v5376
  %vm5383 = vmor %vm5381, %vm5382
  %v5384 = vsel %vm5383, %v5376, %v5380
  %v5385 = vand.u32 2147483647, %v5375
  %vm5386 = vcmp.eq.f32.partialorder %v5385, 8.507059e+37
  %v5387 = vand.u32 %v5375, 2147483648
  %v5388 = vor.u32 1.1754944e-38, %v5387
  %v5389 = vsel %vm5386, %v5388, %v5384
  %v5390 = vmul.f32 1.0, %v5389
  %v5391 = vxor.u32 %v5369, 2147483648
  %v5392 = vmul.f32 %v5391, 1.442695
  %v5393 = vpow.pop %v5392
  %v5394 = vadd.f32 %v5393, 1.0
  %v5395 = vrcp.pop %v5394
  %v5396 = vmul.f32 %v5394, %v5395
  %v5397 = vsub.f32 1.0, %v5396
  %v5398 = vmul.f32 %v5395, %v5397
  %v5399 = vadd.f32 %v5395, %v5398
  %vm5400 = vweird.f32 %v5394
  %vm5401 = vweird.f32 %v5395
  %vm5402 = vmor %vm5400, %vm5401
  %v5403 = vsel %vm5402, %v5395, %v5399
  %v5404 = vand.u32 2147483647, %v5394
  %vm5405 = vcmp.eq.f32.partialorder %v5404, 8.507059e+37
  %v5406 = vand.u32 %v5394, 2147483648
  %v5407 = vor.u32 1.1754944e-38, %v5406
  %v5408 = vsel %vm5405, %v5407, %v5403
  %v5409 = vmul.f32 1.0, %v5408
  %v5410 = vtanh.pop %v5370
  %v5411 = vxor.u32 %v5371, 2147483648
  %v5412 = vmul.f32 %v5411, 1.442695
  %v5413 = vpow.pop %v5412
  %v5414 = vadd.f32 %v5413, 1.0
  %v5415 = vrcp.pop %v5414
  %v5416 = vmul.f32 %v5414, %v5415
  %v5417 = vsub.f32 1.0, %v5416
  %v5418 = vmul.f32 %v5415, %v5417
  %v5419 = vadd.f32 %v5415, %v5418
  %vm5420 = vweird.f32 %v5414
  %vm5421 = vweird.f32 %v5415
  %vm5422 = vmor %vm5420, %vm5421
  %v5423 = vsel %vm5422, %v5415, %v5419
  %v5424 = vand.u32 2147483647, %v5414
  %vm5425 = vcmp.eq.f32.partialorder %v5424, 8.507059e+37
  %v5426 = vand.u32 %v5414, 2147483648
  %v5427 = vor.u32 1.1754944e-38, %v5426
  %v5428 = vsel %vm5425, %v5427, %v5423
  %v5429 = vmul.f32 1.0, %v5428
  %v5430 = vmul.f32 %v5409, %v4349
  %v5431 = vmul.f32 %v5390, %v5410
  %v5432 = vadd.f32 %v5430, %v5431
  %v5433 = vtanh.pop %v5432
  %v5434 = vmul.f32 %v5429, %v5433
  %s5435 = scalar_lea.vmem %s2, 32
  %v5436 = vld [vmem:[%s5435] sm:$0xff]
  %vm5437 = vcmp.gt.f32.partialorder %v5436, 0.0
  %v5438 = vsel %vm5437, %v5432, %v4349
  %v5439 = vsel %vm5437, %v5434, %v4350
  %v5440 = vsel %vm5437, %v5434, 0.0
  %5441 = vst [vmem:[%s4357] sm:$0xf] %v5440
  %v5443 = vrot.slane %v5440, 4
  %5445 = vst [vmem:[%s4352 + $0x4] sm:$0xf] %v5443
  %s5446 = scalar_lea.vmem %s0, 160
  %v5447 = vld [vmem:[%s5446] sm:$0xff]
  %v5448 = vld [vmem:[%s5446 + $0x8] sm:$0xff]
  %v5449 = vld [vmem:[%s5446 + $0x10] sm:$0xff]
  %v5450 = vld [vmem:[%s5446 + $0x18] sm:$0xff]
  %5452 = vst [vmem:[#allocation1] ss:$2 sm:$0xff] %v5439
  %v5453 = vld.sshfl [vmem:[#allocation1] sm:$0xff pattern:$0x75316420]
  %v5454 = vld.sshfl [vmem:[#allocation1 + $0x8] sm:$0xff pattern:$0x75316420]
  %v5457 = vpack.c.bf16 %v5453, %v5453
  %v5458 = vpack.c.bf16 %v5454, %v5454
  %v5459 = vld [vmem:[%s1] sm:$0xff]
  %v5460 = vld [vmem:[%s1 + $0x8] sm:$0xff]
  %v5461 = vld [vmem:[%s1 + $0x10] sm:$0xff]
  %v5462 = vld [vmem:[%s1 + $0x18] sm:$0xff]
  %v5463 = vld [vmem:[%s1 + $0x20] sm:$0xff]
  %v5464 = vld [vmem:[%s1 + $0x28] sm:$0xff]
  %v5465 = vld [vmem:[%s1 + $0x30] sm:$0xff]
  %v5466 = vld [vmem:[%s1 + $0x38] sm:$0xff]
  %v5467 = vld [vmem:[%s1 + $0x40] sm:$0xff]
  %v5468 = vld [vmem:[%s1 + $0x48] sm:$0xff]
  %v5469 = vld [vmem:[%s1 + $0x50] sm:$0xff]
  %v5470 = vld [vmem:[%s1 + $0x58] sm:$0xff]
  %v5471 = vld [vmem:[%s1 + $0x60] sm:$0xff]
  %v5472 = vld [vmem:[%s1 + $0x68] sm:$0xff]
  %v5473 = vld [vmem:[%s1 + $0x70] sm:$0xff]
  %v5474 = vld [vmem:[%s1 + $0x78] sm:$0xff]
  %v5475 = vld [vmem:[%s1 + $0x80] sm:$0xff]
  %v5476 = vld [vmem:[%s1 + $0x88] sm:$0xff]
  %v5477 = vld [vmem:[%s1 + $0x90] sm:$0xff]
  %v5478 = vld [vmem:[%s1 + $0x98] sm:$0xff]
  %v5479 = vld [vmem:[%s1 + $0xa0] sm:$0xff]
  %v5480 = vld [vmem:[%s1 + $0xa8] sm:$0xff]
  %v5481 = vld [vmem:[%s1 + $0xb0] sm:$0xff]
  %v5482 = vld [vmem:[%s1 + $0xb8] sm:$0xff]
  %v5483 = vld [vmem:[%s1 + $0xc0] sm:$0xff]
  %v5484 = vld [vmem:[%s1 + $0xc8] sm:$0xff]
  %v5485 = vld [vmem:[%s1 + $0xd0] sm:$0xff]
  %v5486 = vld [vmem:[%s1 + $0xd8] sm:$0xff]
  %v5487 = vld [vmem:[%s1 + $0xe0] sm:$0xff]
  %v5488 = vld [vmem:[%s1 + $0xe8] sm:$0xff]
  %v5489 = vld [vmem:[%s1 + $0xf0] sm:$0xff]
  %v5490 = vld [vmem:[%s1 + $0xf8] sm:$0xff]
  %v5491 = vld [vmem:[%s1 + $0x100] sm:$0xff]
  %v5492 = vld [vmem:[%s1 + $0x108] sm:$0xff]
  %v5493 = vld [vmem:[%s1 + $0x110] sm:$0xff]
  %v5494 = vld [vmem:[%s1 + $0x118] sm:$0xff]
  %v5495 = vld [vmem:[%s1 + $0x120] sm:$0xff]
  %v5496 = vld [vmem:[%s1 + $0x128] sm:$0xff]
  %v5497 = vld [vmem:[%s1 + $0x130] sm:$0xff]
  %v5498 = vld [vmem:[%s1 + $0x138] sm:$0xff]
  %v5499 = vld [vmem:[%s1 + $0x140] sm:$0xff]
  %v5500 = vld [vmem:[%s1 + $0x148] sm:$0xff]
  %v5501 = vld [vmem:[%s1 + $0x150] sm:$0xff]
  %v5502 = vld [vmem:[%s1 + $0x158] sm:$0xff]
  %v5503 = vld [vmem:[%s1 + $0x160] sm:$0xff]
  %v5504 = vld [vmem:[%s1 + $0x168] sm:$0xff]
  %v5505 = vld [vmem:[%s1 + $0x170] sm:$0xff]
  %v5506 = vld [vmem:[%s1 + $0x178] sm:$0xff]
  %v5507 = vld [vmem:[%s1 + $0x180] sm:$0xff]
  %v5508 = vld [vmem:[%s1 + $0x188] sm:$0xff]
  %v5509 = vld [vmem:[%s1 + $0x190] sm:$0xff]
  %v5510 = vld [vmem:[%s1 + $0x198] sm:$0xff]
  %v5511 = vld [vmem:[%s1 + $0x1a0] sm:$0xff]
  %v5512 = vld [vmem:[%s1 + $0x1a8] sm:$0xff]
  %v5513 = vld [vmem:[%s1 + $0x1b0] sm:$0xff]
  %v5514 = vld [vmem:[%s1 + $0x1b8] sm:$0xff]
  %v5515 = vld [vmem:[%s1 + $0x1c0] sm:$0xff]
  %v5516 = vld [vmem:[%s1 + $0x1c8] sm:$0xff]
  %v5517 = vld [vmem:[%s1 + $0x1d0] sm:$0xff]
  %v5518 = vld [vmem:[%s1 + $0x1d8] sm:$0xff]
  %v5519 = vld [vmem:[%s1 + $0x1e0] sm:$0xff]
  %v5520 = vld [vmem:[%s1 + $0x1e8] sm:$0xff]
  %v5521 = vld [vmem:[%s1 + $0x1f0] sm:$0xff]
  %v5522 = vld [vmem:[%s1 + $0x1f8] sm:$0xff]
  %v5523 = vld [vmem:[%s1 + $0x200] sm:$0xff]
  %v5524 = vld [vmem:[%s1 + $0x208] sm:$0xff]
  %v5525 = vld [vmem:[%s1 + $0x210] sm:$0xff]
  %v5526 = vld [vmem:[%s1 + $0x218] sm:$0xff]
  %v5527 = vld [vmem:[%s1 + $0x220] sm:$0xff]
  %v5528 = vld [vmem:[%s1 + $0x228] sm:$0xff]
  %v5529 = vld [vmem:[%s1 + $0x230] sm:$0xff]
  %v5530 = vld [vmem:[%s1 + $0x238] sm:$0xff]
  %v5531 = vld [vmem:[%s1 + $0x240] sm:$0xff]
  %v5532 = vld [vmem:[%s1 + $0x248] sm:$0xff]
  %v5533 = vld [vmem:[%s1 + $0x250] sm:$0xff]
  %v5534 = vld [vmem:[%s1 + $0x258] sm:$0xff]
  %v5535 = vld [vmem:[%s1 + $0x260] sm:$0xff]
  %v5536 = vld [vmem:[%s1 + $0x268] sm:$0xff]
  %v5537 = vld [vmem:[%s1 + $0x270] sm:$0xff]
  %v5538 = vld [vmem:[%s1 + $0x278] sm:$0xff]
  %v5539 = vld [vmem:[%s1 + $0x280] sm:$0xff]
  %v5540 = vld [vmem:[%s1 + $0x288] sm:$0xff]
  %v5541 = vld [vmem:[%s1 + $0x290] sm:$0xff]
  %v5542 = vld [vmem:[%s1 + $0x298] sm:$0xff]
  %v5543 = vld [vmem:[%s1 + $0x2a0] sm:$0xff]
  %v5544 = vld [vmem:[%s1 + $0x2a8] sm:$0xff]
  %v5545 = vld [vmem:[%s1 + $0x2b0] sm:$0xff]
  %v5546 = vld [vmem:[%s1 + $0x2b8] sm:$0xff]
  %v5547 = vld [vmem:[%s1 + $0x2c0] sm:$0xff]
  %v5548 = vld [vmem:[%s1 + $0x2c8] sm:$0xff]
  %v5549 = vld [vmem:[%s1 + $0x2d0] sm:$0xff]
  %v5550 = vld [vmem:[%s1 + $0x2d8] sm:$0xff]
  %v5551 = vld [vmem:[%s1 + $0x2e0] sm:$0xff]
  %v5552 = vld [vmem:[%s1 + $0x2e8] sm:$0xff]
  %v5553 = vld [vmem:[%s1 + $0x2f0] sm:$0xff]
  %v5554 = vld [vmem:[%s1 + $0x2f8] sm:$0xff]
  %v5555 = vld [vmem:[%s1 + $0x300] sm:$0xff]
  %v5556 = vld [vmem:[%s1 + $0x308] sm:$0xff]
  %v5557 = vld [vmem:[%s1 + $0x310] sm:$0xff]
  %v5558 = vld [vmem:[%s1 + $0x318] sm:$0xff]
  %v5559 = vld [vmem:[%s1 + $0x320] sm:$0xff]
  %v5560 = vld [vmem:[%s1 + $0x328] sm:$0xff]
  %v5561 = vld [vmem:[%s1 + $0x330] sm:$0xff]
  %v5562 = vld [vmem:[%s1 + $0x338] sm:$0xff]
  %v5563 = vld [vmem:[%s1 + $0x340] sm:$0xff]
  %v5564 = vld [vmem:[%s1 + $0x348] sm:$0xff]
  %v5565 = vld [vmem:[%s1 + $0x350] sm:$0xff]
  %v5566 = vld [vmem:[%s1 + $0x358] sm:$0xff]
  %v5567 = vld [vmem:[%s1 + $0x360] sm:$0xff]
  %v5568 = vld [vmem:[%s1 + $0x368] sm:$0xff]
  %v5569 = vld [vmem:[%s1 + $0x370] sm:$0xff]
  %v5570 = vld [vmem:[%s1 + $0x378] sm:$0xff]
  %v5571 = vld [vmem:[%s1 + $0x380] sm:$0xff]
  %v5572 = vld [vmem:[%s1 + $0x388] sm:$0xff]
  %v5573 = vld [vmem:[%s1 + $0x390] sm:$0xff]
  %v5574 = vld [vmem:[%s1 + $0x398] sm:$0xff]
  %v5575 = vld [vmem:[%s1 + $0x3a0] sm:$0xff]
  %v5576 = vld [vmem:[%s1 + $0x3a8] sm:$0xff]
  %v5577 = vld [vmem:[%s1 + $0x3b0] sm:$0xff]
  %v5578 = vld [vmem:[%s1 + $0x3b8] sm:$0xff]
  %v5579 = vld [vmem:[%s1 + $0x3c0] sm:$0xff]
  %v5580 = vld [vmem:[%s1 + $0x3c8] sm:$0xff]
  %v5581 = vld [vmem:[%s1 + $0x3d0] sm:$0xff]
  %v5582 = vld [vmem:[%s1 + $0x3d8] sm:$0xff]
  %v5583 = vld [vmem:[%s1 + $0x3e0] sm:$0xff]
  %v5584 = vld [vmem:[%s1 + $0x3e8] sm:$0xff]
  %v5585 = vld [vmem:[%s1 + $0x3f0] sm:$0xff]
  %v5586 = vld [vmem:[%s1 + $0x3f8] sm:$0xff]
  %v5715 = vunpack.c.l.b16 %v5459
  %v5716 = vunpack.c.h.b16 %v5459
  %v5717 = vunpack.c.l.b16 %v5460
  %v5718 = vunpack.c.h.b16 %v5460
  %v5719 = vunpack.c.l.b16 %v5461
  %v5720 = vunpack.c.h.b16 %v5461
  %v5721 = vunpack.c.l.b16 %v5462
  %v5722 = vunpack.c.h.b16 %v5462
  %v5723 = vunpack.c.l.b16 %v5463
  %v5724 = vunpack.c.h.b16 %v5463
  %v5725 = vunpack.c.l.b16 %v5464
  %v5726 = vunpack.c.h.b16 %v5464
  %v5727 = vunpack.c.l.b16 %v5465
  %v5728 = vunpack.c.h.b16 %v5465
  %v5729 = vunpack.c.l.b16 %v5466
  %v5730 = vunpack.c.h.b16 %v5466
  %v5731 = vunpack.c.l.b16 %v5467
  %v5732 = vunpack.c.h.b16 %v5467
  %v5733 = vunpack.c.l.b16 %v5468
  %v5734 = vunpack.c.h.b16 %v5468
  %v5735 = vunpack.c.l.b16 %v5469
  %v5736 = vunpack.c.h.b16 %v5469
  %v5737 = vunpack.c.l.b16 %v5470
  %v5738 = vunpack.c.h.b16 %v5470
  %v5739 = vunpack.c.l.b16 %v5471
  %v5740 = vunpack.c.h.b16 %v5471
  %v5741 = vunpack.c.l.b16 %v5472
  %v5742 = vunpack.c.h.b16 %v5472
  %v5743 = vunpack.c.l.b16 %v5473
  %v5744 = vunpack.c.h.b16 %v5473
  %v5745 = vunpack.c.l.b16 %v5474
  %v5746 = vunpack.c.h.b16 %v5474
  %v5747 = vunpack.c.l.b16 %v5475
  %v5748 = vunpack.c.h.b16 %v5475
  %v5749 = vunpack.c.l.b16 %v5476
  %v5750 = vunpack.c.h.b16 %v5476
  %v5751 = vunpack.c.l.b16 %v5477
  %v5752 = vunpack.c.h.b16 %v5477
  %v5753 = vunpack.c.l.b16 %v5478
  %v5754 = vunpack.c.h.b16 %v5478
  %v5755 = vunpack.c.l.b16 %v5479
  %v5756 = vunpack.c.h.b16 %v5479
  %v5757 = vunpack.c.l.b16 %v5480
  %v5758 = vunpack.c.h.b16 %v5480
  %v5759 = vunpack.c.l.b16 %v5481
  %v5760 = vunpack.c.h.b16 %v5481
  %v5761 = vunpack.c.l.b16 %v5482
  %v5762 = vunpack.c.h.b16 %v5482
  %v5763 = vunpack.c.l.b16 %v5483
  %v5764 = vunpack.c.h.b16 %v5483
  %v5765 = vunpack.c.l.b16 %v5484
  %v5766 = vunpack.c.h.b16 %v5484
  %v5767 = vunpack.c.l.b16 %v5485
  %v5768 = vunpack.c.h.b16 %v5485
  %v5769 = vunpack.c.l.b16 %v5486
  %v5770 = vunpack.c.h.b16 %v5486
  %v5771 = vunpack.c.l.b16 %v5487
  %v5772 = vunpack.c.h.b16 %v5487
  %v5773 = vunpack.c.l.b16 %v5488
  %v5774 = vunpack.c.h.b16 %v5488
  %v5775 = vunpack.c.l.b16 %v5489
  %v5776 = vunpack.c.h.b16 %v5489
  %v5777 = vunpack.c.l.b16 %v5490
  %v5778 = vunpack.c.h.b16 %v5490
  %v5779 = vunpack.c.l.b16 %v5491
  %v5780 = vunpack.c.h.b16 %v5491
  %v5781 = vunpack.c.l.b16 %v5492
  %v5782 = vunpack.c.h.b16 %v5492
  %v5783 = vunpack.c.l.b16 %v5493
  %v5784 = vunpack.c.h.b16 %v5493
  %v5785 = vunpack.c.l.b16 %v5494
  %v5786 = vunpack.c.h.b16 %v5494
  %v5787 = vunpack.c.l.b16 %v5495
  %v5788 = vunpack.c.h.b16 %v5495
  %v5789 = vunpack.c.l.b16 %v5496
  %v5790 = vunpack.c.h.b16 %v5496
  %v5791 = vunpack.c.l.b16 %v5497
  %v5792 = vunpack.c.h.b16 %v5497
  %v5793 = vunpack.c.l.b16 %v5498
  %v5794 = vunpack.c.h.b16 %v5498
  %v5795 = vunpack.c.l.b16 %v5499
  %v5796 = vunpack.c.h.b16 %v5499
  %v5797 = vunpack.c.l.b16 %v5500
  %v5798 = vunpack.c.h.b16 %v5500
  %v5799 = vunpack.c.l.b16 %v5501
  %v5800 = vunpack.c.h.b16 %v5501
  %v5801 = vunpack.c.l.b16 %v5502
  %v5802 = vunpack.c.h.b16 %v5502
  %v5803 = vunpack.c.l.b16 %v5503
  %v5804 = vunpack.c.h.b16 %v5503
  %v5805 = vunpack.c.l.b16 %v5504
  %v5806 = vunpack.c.h.b16 %v5504
  %v5807 = vunpack.c.l.b16 %v5505
  %v5808 = vunpack.c.h.b16 %v5505
  %v5809 = vunpack.c.l.b16 %v5506
  %v5810 = vunpack.c.h.b16 %v5506
  %v5811 = vunpack.c.l.b16 %v5507
  %v5812 = vunpack.c.h.b16 %v5507
  %v5813 = vunpack.c.l.b16 %v5508
  %v5814 = vunpack.c.h.b16 %v5508
  %v5815 = vunpack.c.l.b16 %v5509
  %v5816 = vunpack.c.h.b16 %v5509
  %v5817 = vunpack.c.l.b16 %v5510
  %v5818 = vunpack.c.h.b16 %v5510
  %v5819 = vunpack.c.l.b16 %v5511
  %v5820 = vunpack.c.h.b16 %v5511
  %v5821 = vunpack.c.l.b16 %v5512
  %v5822 = vunpack.c.h.b16 %v5512
  %v5823 = vunpack.c.l.b16 %v5513
  %v5824 = vunpack.c.h.b16 %v5513
  %v5825 = vunpack.c.l.b16 %v5514
  %v5826 = vunpack.c.h.b16 %v5514
  %v5827 = vunpack.c.l.b16 %v5515
  %v5828 = vunpack.c.h.b16 %v5515
  %v5829 = vunpack.c.l.b16 %v5516
  %v5830 = vunpack.c.h.b16 %v5516
  %v5831 = vunpack.c.l.b16 %v5517
  %v5832 = vunpack.c.h.b16 %v5517
  %v5833 = vunpack.c.l.b16 %v5518
  %v5834 = vunpack.c.h.b16 %v5518
  %v5835 = vunpack.c.l.b16 %v5519
  %v5836 = vunpack.c.h.b16 %v5519
  %v5837 = vunpack.c.l.b16 %v5520
  %v5838 = vunpack.c.h.b16 %v5520
  %v5839 = vunpack.c.l.b16 %v5521
  %v5840 = vunpack.c.h.b16 %v5521
  %v5841 = vunpack.c.l.b16 %v5522
  %v5842 = vunpack.c.h.b16 %v5522
  %v5843 = vunpack.c.l.b16 %v5523
  %v5844 = vunpack.c.h.b16 %v5523
  %v5845 = vunpack.c.l.b16 %v5524
  %v5846 = vunpack.c.h.b16 %v5524
  %v5847 = vunpack.c.l.b16 %v5525
  %v5848 = vunpack.c.h.b16 %v5525
  %v5849 = vunpack.c.l.b16 %v5526
  %v5850 = vunpack.c.h.b16 %v5526
  %v5851 = vunpack.c.l.b16 %v5527
  %v5852 = vunpack.c.h.b16 %v5527
  %v5853 = vunpack.c.l.b16 %v5528
  %v5854 = vunpack.c.h.b16 %v5528
  %v5855 = vunpack.c.l.b16 %v5529
  %v5856 = vunpack.c.h.b16 %v5529
  %v5857 = vunpack.c.l.b16 %v5530
  %v5858 = vunpack.c.h.b16 %v5530
  %v5859 = vunpack.c.l.b16 %v5531
  %v5860 = vunpack.c.h.b16 %v5531
  %v5861 = vunpack.c.l.b16 %v5532
  %v5862 = vunpack.c.h.b16 %v5532
  %v5863 = vunpack.c.l.b16 %v5533
  %v5864 = vunpack.c.h.b16 %v5533
  %v5865 = vunpack.c.l.b16 %v5534
  %v5866 = vunpack.c.h.b16 %v5534
  %v5867 = vunpack.c.l.b16 %v5535
  %v5868 = vunpack.c.h.b16 %v5535
  %v5869 = vunpack.c.l.b16 %v5536
  %v5870 = vunpack.c.h.b16 %v5536
  %v5871 = vunpack.c.l.b16 %v5537
  %v5872 = vunpack.c.h.b16 %v5537
  %v5873 = vunpack.c.l.b16 %v5538
  %v5874 = vunpack.c.h.b16 %v5538
  %v5875 = vunpack.c.l.b16 %v5539
  %v5876 = vunpack.c.h.b16 %v5539
  %v5877 = vunpack.c.l.b16 %v5540
  %v5878 = vunpack.c.h.b16 %v5540
  %v5879 = vunpack.c.l.b16 %v5541
  %v5880 = vunpack.c.h.b16 %v5541
  %v5881 = vunpack.c.l.b16 %v5542
  %v5882 = vunpack.c.h.b16 %v5542
  %v5883 = vunpack.c.l.b16 %v5543
  %v5884 = vunpack.c.h.b16 %v5543
  %v5885 = vunpack.c.l.b16 %v5544
  %v5886 = vunpack.c.h.b16 %v5544
  %v5887 = vunpack.c.l.b16 %v5545
  %v5888 = vunpack.c.h.b16 %v5545
  %v5889 = vunpack.c.l.b16 %v5546
  %v5890 = vunpack.c.h.b16 %v5546
  %v5891 = vunpack.c.l.b16 %v5547
  %v5892 = vunpack.c.h.b16 %v5547
  %v5893 = vunpack.c.l.b16 %v5548
  %v5894 = vunpack.c.h.b16 %v5548
  %v5895 = vunpack.c.l.b16 %v5549
  %v5896 = vunpack.c.h.b16 %v5549
  %v5897 = vunpack.c.l.b16 %v5550
  %v5898 = vunpack.c.h.b16 %v5550
  %v5899 = vunpack.c.l.b16 %v5551
  %v5900 = vunpack.c.h.b16 %v5551
  %v5901 = vunpack.c.l.b16 %v5552
  %v5902 = vunpack.c.h.b16 %v5552
  %v5903 = vunpack.c.l.b16 %v5553
  %v5904 = vunpack.c.h.b16 %v5553
  %v5905 = vunpack.c.l.b16 %v5554
  %v5906 = vunpack.c.h.b16 %v5554
  %v5907 = vunpack.c.l.b16 %v5555
  %v5908 = vunpack.c.h.b16 %v5555
  %v5909 = vunpack.c.l.b16 %v5556
  %v5910 = vunpack.c.h.b16 %v5556
  %v5911 = vunpack.c.l.b16 %v5557
  %v5912 = vunpack.c.h.b16 %v5557
  %v5913 = vunpack.c.l.b16 %v5558
  %v5914 = vunpack.c.h.b16 %v5558
  %v5915 = vunpack.c.l.b16 %v5559
  %v5916 = vunpack.c.h.b16 %v5559
  %v5917 = vunpack.c.l.b16 %v5560
  %v5918 = vunpack.c.h.b16 %v5560
  %v5919 = vunpack.c.l.b16 %v5561
  %v5920 = vunpack.c.h.b16 %v5561
  %v5921 = vunpack.c.l.b16 %v5562
  %v5922 = vunpack.c.h.b16 %v5562
  %v5923 = vunpack.c.l.b16 %v5563
  %v5924 = vunpack.c.h.b16 %v5563
  %v5925 = vunpack.c.l.b16 %v5564
  %v5926 = vunpack.c.h.b16 %v5564
  %v5927 = vunpack.c.l.b16 %v5565
  %v5928 = vunpack.c.h.b16 %v5565
  %v5929 = vunpack.c.l.b16 %v5566
  %v5930 = vunpack.c.h.b16 %v5566
  %v5931 = vunpack.c.l.b16 %v5567
  %v5932 = vunpack.c.h.b16 %v5567
  %v5933 = vunpack.c.l.b16 %v5568
  %v5934 = vunpack.c.h.b16 %v5568
  %v5935 = vunpack.c.l.b16 %v5569
  %v5936 = vunpack.c.h.b16 %v5569
  %v5937 = vunpack.c.l.b16 %v5570
  %v5938 = vunpack.c.h.b16 %v5570
  %v5939 = vunpack.c.l.b16 %v5571
  %v5940 = vunpack.c.h.b16 %v5571
  %v5941 = vunpack.c.l.b16 %v5572
  %v5942 = vunpack.c.h.b16 %v5572
  %v5943 = vunpack.c.l.b16 %v5573
  %v5944 = vunpack.c.h.b16 %v5573
  %v5945 = vunpack.c.l.b16 %v5574
  %v5946 = vunpack.c.h.b16 %v5574
  %v5947 = vunpack.c.l.b16 %v5575
  %v5948 = vunpack.c.h.b16 %v5575
  %v5949 = vunpack.c.l.b16 %v5576
  %v5950 = vunpack.c.h.b16 %v5576
  %v5951 = vunpack.c.l.b16 %v5577
  %v5952 = vunpack.c.h.b16 %v5577
  %v5953 = vunpack.c.l.b16 %v5578
  %v5954 = vunpack.c.h.b16 %v5578
  %v5955 = vunpack.c.l.b16 %v5579
  %v5956 = vunpack.c.h.b16 %v5579
  %v5957 = vunpack.c.l.b16 %v5580
  %v5958 = vunpack.c.h.b16 %v5580
  %v5959 = vunpack.c.l.b16 %v5581
  %v5960 = vunpack.c.h.b16 %v5581
  %v5961 = vunpack.c.l.b16 %v5582
  %v5962 = vunpack.c.h.b16 %v5582
  %v5963 = vunpack.c.l.b16 %v5583
  %v5964 = vunpack.c.h.b16 %v5583
  %v5965 = vunpack.c.l.b16 %v5584
  %v5966 = vunpack.c.h.b16 %v5584
  %v5967 = vunpack.c.l.b16 %v5585
  %v5968 = vunpack.c.h.b16 %v5585
  %v5969 = vunpack.c.l.b16 %v5586
  %v5970 = vunpack.c.h.b16 %v5586
  %v5971 = vpack.c.b16 %v5723, %v5715
  %v5972 = vpack.c.b16 %v5724, %v5716
  %v5973 = vpack.c.b16 %v5725, %v5717
  %v5974 = vpack.c.b16 %v5726, %v5718
  %v5975 = vpack.c.b16 %v5727, %v5719
  %v5976 = vpack.c.b16 %v5728, %v5720
  %v5977 = vpack.c.b16 %v5729, %v5721
  %v5978 = vpack.c.b16 %v5730, %v5722
  %v5979 = vpack.c.b16 %v5739, %v5731
  %v5980 = vpack.c.b16 %v5740, %v5732
  %v5981 = vpack.c.b16 %v5741, %v5733
  %v5982 = vpack.c.b16 %v5742, %v5734
  %v5983 = vpack.c.b16 %v5743, %v5735
  %v5984 = vpack.c.b16 %v5744, %v5736
  %v5985 = vpack.c.b16 %v5745, %v5737
  %v5986 = vpack.c.b16 %v5746, %v5738
  %v5987 = vpack.c.b16 %v5755, %v5747
  %v5988 = vpack.c.b16 %v5756, %v5748
  %v5989 = vpack.c.b16 %v5757, %v5749
  %v5990 = vpack.c.b16 %v5758, %v5750
  %v5991 = vpack.c.b16 %v5759, %v5751
  %v5992 = vpack.c.b16 %v5760, %v5752
  %v5993 = vpack.c.b16 %v5761, %v5753
  %v5994 = vpack.c.b16 %v5762, %v5754
  %v5995 = vpack.c.b16 %v5771, %v5763
  %v5996 = vpack.c.b16 %v5772, %v5764
  %v5997 = vpack.c.b16 %v5773, %v5765
  %v5998 = vpack.c.b16 %v5774, %v5766
  %v5999 = vpack.c.b16 %v5775, %v5767
  %v6000 = vpack.c.b16 %v5776, %v5768
  %v6001 = vpack.c.b16 %v5777, %v5769
  %v6002 = vpack.c.b16 %v5778, %v5770
  %v6003 = vpack.c.b16 %v5787, %v5779
  %v6004 = vpack.c.b16 %v5788, %v5780
  %v6005 = vpack.c.b16 %v5789, %v5781
  %v6006 = vpack.c.b16 %v5790, %v5782
  %v6007 = vpack.c.b16 %v5791, %v5783
  %v6008 = vpack.c.b16 %v5792, %v5784
  %v6009 = vpack.c.b16 %v5793, %v5785
  %v6010 = vpack.c.b16 %v5794, %v5786
  %v6011 = vpack.c.b16 %v5803, %v5795
  %v6012 = vpack.c.b16 %v5804, %v5796
  %v6013 = vpack.c.b16 %v5805, %v5797
  %v6014 = vpack.c.b16 %v5806, %v5798
  %v6015 = vpack.c.b16 %v5807, %v5799
  %v6016 = vpack.c.b16 %v5808, %v5800
  %v6017 = vpack.c.b16 %v5809, %v5801
  %v6018 = vpack.c.b16 %v5810, %v5802
  %v6019 = vpack.c.b16 %v5819, %v5811
  %v6020 = vpack.c.b16 %v5820, %v5812
  %v6021 = vpack.c.b16 %v5821, %v5813
  %v6022 = vpack.c.b16 %v5822, %v5814
  %v6023 = vpack.c.b16 %v5823, %v5815
  %v6024 = vpack.c.b16 %v5824, %v5816
  %v6025 = vpack.c.b16 %v5825, %v5817
  %v6026 = vpack.c.b16 %v5826, %v5818
  %v6027 = vpack.c.b16 %v5835, %v5827
  %v6028 = vpack.c.b16 %v5836, %v5828
  %v6029 = vpack.c.b16 %v5837, %v5829
  %v6030 = vpack.c.b16 %v5838, %v5830
  %v6031 = vpack.c.b16 %v5839, %v5831
  %v6032 = vpack.c.b16 %v5840, %v5832
  %v6033 = vpack.c.b16 %v5841, %v5833
  %v6034 = vpack.c.b16 %v5842, %v5834
  %v6035 = vpack.c.b16 %v5851, %v5843
  %v6036 = vpack.c.b16 %v5852, %v5844
  %v6037 = vpack.c.b16 %v5853, %v5845
  %v6038 = vpack.c.b16 %v5854, %v5846
  %v6039 = vpack.c.b16 %v5855, %v5847
  %v6040 = vpack.c.b16 %v5856, %v5848
  %v6041 = vpack.c.b16 %v5857, %v5849
  %v6042 = vpack.c.b16 %v5858, %v5850
  %v6043 = vpack.c.b16 %v5867, %v5859
  %v6044 = vpack.c.b16 %v5868, %v5860
  %v6045 = vpack.c.b16 %v5869, %v5861
  %v6046 = vpack.c.b16 %v5870, %v5862
  %v6047 = vpack.c.b16 %v5871, %v5863
  %v6048 = vpack.c.b16 %v5872, %v5864
  %v6049 = vpack.c.b16 %v5873, %v5865
  %v6050 = vpack.c.b16 %v5874, %v5866
  %v6051 = vpack.c.b16 %v5883, %v5875
  %v6052 = vpack.c.b16 %v5884, %v5876
  %v6053 = vpack.c.b16 %v5885, %v5877
  %v6054 = vpack.c.b16 %v5886, %v5878
  %v6055 = vpack.c.b16 %v5887, %v5879
  %v6056 = vpack.c.b16 %v5888, %v5880
  %v6057 = vpack.c.b16 %v5889, %v5881
  %v6058 = vpack.c.b16 %v5890, %v5882
  %v6059 = vpack.c.b16 %v5899, %v5891
  %v6060 = vpack.c.b16 %v5900, %v5892
  %v6061 = vpack.c.b16 %v5901, %v5893
  %v6062 = vpack.c.b16 %v5902, %v5894
  %v6063 = vpack.c.b16 %v5903, %v5895
  %v6064 = vpack.c.b16 %v5904, %v5896
  %v6065 = vpack.c.b16 %v5905, %v5897
  %v6066 = vpack.c.b16 %v5906, %v5898
  %v6067 = vpack.c.b16 %v5915, %v5907
  %v6068 = vpack.c.b16 %v5916, %v5908
  %v6069 = vpack.c.b16 %v5917, %v5909
  %v6070 = vpack.c.b16 %v5918, %v5910
  %v6071 = vpack.c.b16 %v5919, %v5911
  %v6072 = vpack.c.b16 %v5920, %v5912
  %v6073 = vpack.c.b16 %v5921, %v5913
  %v6074 = vpack.c.b16 %v5922, %v5914
  %v6075 = vpack.c.b16 %v5931, %v5923
  %v6076 = vpack.c.b16 %v5932, %v5924
  %v6077 = vpack.c.b16 %v5933, %v5925
  %v6078 = vpack.c.b16 %v5934, %v5926
  %v6079 = vpack.c.b16 %v5935, %v5927
  %v6080 = vpack.c.b16 %v5936, %v5928
  %v6081 = vpack.c.b16 %v5937, %v5929
  %v6082 = vpack.c.b16 %v5938, %v5930
  %v6083 = vpack.c.b16 %v5947, %v5939
  %v6084 = vpack.c.b16 %v5948, %v5940
  %v6085 = vpack.c.b16 %v5949, %v5941
  %v6086 = vpack.c.b16 %v5950, %v5942
  %v6087 = vpack.c.b16 %v5951, %v5943
  %v6088 = vpack.c.b16 %v5952, %v5944
  %v6089 = vpack.c.b16 %v5953, %v5945
  %v6090 = vpack.c.b16 %v5954, %v5946
  %v6091 = vpack.c.b16 %v5963, %v5955
  %v6092 = vpack.c.b16 %v5964, %v5956
  %v6093 = vpack.c.b16 %v5965, %v5957
  %v6094 = vpack.c.b16 %v5966, %v5958
  %v6095 = vpack.c.b16 %v5967, %v5959
  %v6096 = vpack.c.b16 %v5968, %v5960
  %v6097 = vpack.c.b16 %v5969, %v5961
  %v6098 = vpack.c.b16 %v5970, %v5962
  %6227 = vmatpush.bf16.msra.mxu0 %v6027
  %6228 = vmatpush.bf16.msra.mxu0 %v6019
  %6229 = vmatpush.bf16.msra.mxu0 %v6011
  %6230 = vmatpush.bf16.msra.mxu0 %v6003
  %6231 = vmatpush.bf16.msra.mxu0 %v5995
  %6232 = vmatpush.bf16.msra.mxu0 %v5987
  %6233 = vmatpush.bf16.msra.mxu0 %v5979
  %6234 = vmatpush.bf16.msra.mxu0 %v5971
  %6235 = vmatmul.bf16.gmra.mxu0 %v5457
  %v6236 = vpop.f32.mrf.mxu0
  %v6237 = vadd.f32 0.0, %v6236
  %v6238 = vpop.f32.mrf.mxu0
  %6239 = vdwg.mxu0
  %6240 = vmatpush.bf16.msra.mxu0 %v6091
  %6241 = vmatpush.bf16.msra.mxu0 %v6083
  %6242 = vmatpush.bf16.msra.mxu0 %v6075
  %6243 = vmatpush.bf16.msra.mxu0 %v6067
  %6244 = vmatpush.bf16.msra.mxu0 %v6059
  %6245 = vmatpush.bf16.msra.mxu0 %v6051
  %6246 = vmatpush.bf16.msra.mxu0 %v6043
  %6247 = vmatpush.bf16.msra.mxu0 %v6035
  %6248 = vmatmul.bf16.gmra.mxu0 %v5458
  %v6249 = vpop.f32.mrf.mxu0
  %v6250 = vadd.f32 %v6237, %v6249
  %v6251 = vpop.f32.mrf.mxu0
  %6252 = vdwg.mxu0
  %6253 = vmatpush.bf16.msra.mxu0 %v6028
  %6254 = vmatpush.bf16.msra.mxu0 %v6020
  %6255 = vmatpush.bf16.msra.mxu0 %v6012
  %6256 = vmatpush.bf16.msra.mxu0 %v6004
  %6257 = vmatpush.bf16.msra.mxu0 %v5996
  %6258 = vmatpush.bf16.msra.mxu0 %v5988
  %6259 = vmatpush.bf16.msra.mxu0 %v5980
  %6260 = vmatpush.bf16.msra.mxu0 %v5972
  %6261 = vmatmul.bf16.gmra.mxu0 %v5457
  %v6262 = vpop.f32.mrf.mxu0
  %v6263 = vadd.f32 0.0, %v6262
  %v6264 = vpop.f32.mrf.mxu0
  %6265 = vdwg.mxu0
  %6266 = vmatpush.bf16.msra.mxu0 %v6092
  %6267 = vmatpush.bf16.msra.mxu0 %v6084
  %6268 = vmatpush.bf16.msra.mxu0 %v6076
  %6269 = vmatpush.bf16.msra.mxu0 %v6068
  %6270 = vmatpush.bf16.msra.mxu0 %v6060
  %6271 = vmatpush.bf16.msra.mxu0 %v6052
  %6272 = vmatpush.bf16.msra.mxu0 %v6044
  %6273 = vmatpush.bf16.msra.mxu0 %v6036
  %6274 = vmatmul.bf16.gmra.mxu0 %v5458
  %v6275 = vpop.f32.mrf.mxu0
  %v6276 = vadd.f32 %v6263, %v6275
  %v6277 = vpop.f32.mrf.mxu0
  %6278 = vdwg.mxu0
  %6279 = vmatpush.bf16.msra.mxu0 %v6029
  %6280 = vmatpush.bf16.msra.mxu0 %v6021
  %6281 = vmatpush.bf16.msra.mxu0 %v6013
  %6282 = vmatpush.bf16.msra.mxu0 %v6005
  %6283 = vmatpush.bf16.msra.mxu0 %v5997
  %6284 = vmatpush.bf16.msra.mxu0 %v5989
  %6285 = vmatpush.bf16.msra.mxu0 %v5981
  %6286 = vmatpush.bf16.msra.mxu0 %v5973
  %6287 = vmatmul.bf16.gmra.mxu0 %v5457
  %v6288 = vpop.f32.mrf.mxu0
  %v6289 = vadd.f32 0.0, %v6288
  %v6290 = vpop.f32.mrf.mxu0
  %6291 = vdwg.mxu0
  %6292 = vmatpush.bf16.msra.mxu0 %v6093
  %6293 = vmatpush.bf16.msra.mxu0 %v6085
  %6294 = vmatpush.bf16.msra.mxu0 %v6077
  %6295 = vmatpush.bf16.msra.mxu0 %v6069
  %6296 = vmatpush.bf16.msra.mxu0 %v6061
  %6297 = vmatpush.bf16.msra.mxu0 %v6053
  %6298 = vmatpush.bf16.msra.mxu0 %v6045
  %6299 = vmatpush.bf16.msra.mxu0 %v6037
  %6300 = vmatmul.bf16.gmra.mxu0 %v5458
  %v6301 = vpop.f32.mrf.mxu0
  %v6302 = vadd.f32 %v6289, %v6301
  %v6303 = vpop.f32.mrf.mxu0
  %6304 = vdwg.mxu0
  %6305 = vmatpush.bf16.msra.mxu0 %v6030
  %6306 = vmatpush.bf16.msra.mxu0 %v6022
  %6307 = vmatpush.bf16.msra.mxu0 %v6014
  %6308 = vmatpush.bf16.msra.mxu0 %v6006
  %6309 = vmatpush.bf16.msra.mxu0 %v5998
  %6310 = vmatpush.bf16.msra.mxu0 %v5990
  %6311 = vmatpush.bf16.msra.mxu0 %v5982
  %6312 = vmatpush.bf16.msra.mxu0 %v5974
  %6313 = vmatmul.bf16.gmra.mxu0 %v5457
  %v6314 = vpop.f32.mrf.mxu0
  %v6315 = vadd.f32 0.0, %v6314
  %v6316 = vpop.f32.mrf.mxu0
  %6317 = vdwg.mxu0
  %6318 = vmatpush.bf16.msra.mxu0 %v6094
  %6319 = vmatpush.bf16.msra.mxu0 %v6086
  %6320 = vmatpush.bf16.msra.mxu0 %v6078
  %6321 = vmatpush.bf16.msra.mxu0 %v6070
  %6322 = vmatpush.bf16.msra.mxu0 %v6062
  %6323 = vmatpush.bf16.msra.mxu0 %v6054
  %6324 = vmatpush.bf16.msra.mxu0 %v6046
  %6325 = vmatpush.bf16.msra.mxu0 %v6038
  %6326 = vmatmul.bf16.gmra.mxu0 %v5458
  %v6327 = vpop.f32.mrf.mxu0
  %v6328 = vadd.f32 %v6315, %v6327
  %v6329 = vpop.f32.mrf.mxu0
  %6330 = vdwg.mxu0
  %6331 = vmatpush.bf16.msra.mxu0 %v6031
  %6332 = vmatpush.bf16.msra.mxu0 %v6023
  %6333 = vmatpush.bf16.msra.mxu0 %v6015
  %6334 = vmatpush.bf16.msra.mxu0 %v6007
  %6335 = vmatpush.bf16.msra.mxu0 %v5999
  %6336 = vmatpush.bf16.msra.mxu0 %v5991
  %6337 = vmatpush.bf16.msra.mxu0 %v5983
  %6338 = vmatpush.bf16.msra.mxu0 %v5975
  %6339 = vmatmul.bf16.gmra.mxu0 %v5457
  %v6340 = vpop.f32.mrf.mxu0
  %v6341 = vadd.f32 0.0, %v6340
  %v6342 = vpop.f32.mrf.mxu0
  %6343 = vdwg.mxu0
  %6344 = vmatpush.bf16.msra.mxu0 %v6095
  %6345 = vmatpush.bf16.msra.mxu0 %v6087
  %6346 = vmatpush.bf16.msra.mxu0 %v6079
  %6347 = vmatpush.bf16.msra.mxu0 %v6071
  %6348 = vmatpush.bf16.msra.mxu0 %v6063
  %6349 = vmatpush.bf16.msra.mxu0 %v6055
  %6350 = vmatpush.bf16.msra.mxu0 %v6047
  %6351 = vmatpush.bf16.msra.mxu0 %v6039
  %6352 = vmatmul.bf16.gmra.mxu0 %v5458
  %v6353 = vpop.f32.mrf.mxu0
  %v6354 = vadd.f32 %v6341, %v6353
  %v6355 = vpop.f32.mrf.mxu0
  %6356 = vdwg.mxu0
  %6357 = vmatpush.bf16.msra.mxu0 %v6032
  %6358 = vmatpush.bf16.msra.mxu0 %v6024
  %6359 = vmatpush.bf16.msra.mxu0 %v6016
  %6360 = vmatpush.bf16.msra.mxu0 %v6008
  %6361 = vmatpush.bf16.msra.mxu0 %v6000
  %6362 = vmatpush.bf16.msra.mxu0 %v5992
  %6363 = vmatpush.bf16.msra.mxu0 %v5984
  %6364 = vmatpush.bf16.msra.mxu0 %v5976
  %6365 = vmatmul.bf16.gmra.mxu0 %v5457
  %v6366 = vpop.f32.mrf.mxu0
  %v6367 = vadd.f32 0.0, %v6366
  %v6368 = vpop.f32.mrf.mxu0
  %6369 = vdwg.mxu0
  %6370 = vmatpush.bf16.msra.mxu0 %v6096
  %6371 = vmatpush.bf16.msra.mxu0 %v6088
  %6372 = vmatpush.bf16.msra.mxu0 %v6080
  %6373 = vmatpush.bf16.msra.mxu0 %v6072
  %6374 = vmatpush.bf16.msra.mxu0 %v6064
  %6375 = vmatpush.bf16.msra.mxu0 %v6056
  %6376 = vmatpush.bf16.msra.mxu0 %v6048
  %6377 = vmatpush.bf16.msra.mxu0 %v6040
  %6378 = vmatmul.bf16.gmra.mxu0 %v5458
  %v6379 = vpop.f32.mrf.mxu0
  %v6380 = vadd.f32 %v6367, %v6379
  %v6381 = vpop.f32.mrf.mxu0
  %6382 = vdwg.mxu0
  %6383 = vmatpush.bf16.msra.mxu0 %v6033
  %6384 = vmatpush.bf16.msra.mxu0 %v6025
  %6385 = vmatpush.bf16.msra.mxu0 %v6017
  %6386 = vmatpush.bf16.msra.mxu0 %v6009
  %6387 = vmatpush.bf16.msra.mxu0 %v6001
  %6388 = vmatpush.bf16.msra.mxu0 %v5993
  %6389 = vmatpush.bf16.msra.mxu0 %v5985
  %6390 = vmatpush.bf16.msra.mxu0 %v5977
  %6391 = vmatmul.bf16.gmra.mxu0 %v5457
  %v6392 = vpop.f32.mrf.mxu0
  %v6393 = vadd.f32 0.0, %v6392
  %v6394 = vpop.f32.mrf.mxu0
  %6395 = vdwg.mxu0
  %6396 = vmatpush.bf16.msra.mxu0 %v6097
  %6397 = vmatpush.bf16.msra.mxu0 %v6089
  %6398 = vmatpush.bf16.msra.mxu0 %v6081
  %6399 = vmatpush.bf16.msra.mxu0 %v6073
  %6400 = vmatpush.bf16.msra.mxu0 %v6065
  %6401 = vmatpush.bf16.msra.mxu0 %v6057
  %6402 = vmatpush.bf16.msra.mxu0 %v6049
  %6403 = vmatpush.bf16.msra.mxu0 %v6041
  %6404 = vmatmul.bf16.gmra.mxu0 %v5458
  %v6405 = vpop.f32.mrf.mxu0
  %v6406 = vadd.f32 %v6393, %v6405
  %v6407 = vpop.f32.mrf.mxu0
  %6408 = vdwg.mxu0
  %6409 = vmatpush.bf16.msra.mxu0 %v6034
  %6410 = vmatpush.bf16.msra.mxu0 %v6026
  %6411 = vmatpush.bf16.msra.mxu0 %v6018
  %6412 = vmatpush.bf16.msra.mxu0 %v6010
  %6413 = vmatpush.bf16.msra.mxu0 %v6002
  %6414 = vmatpush.bf16.msra.mxu0 %v5994
  %6415 = vmatpush.bf16.msra.mxu0 %v5986
  %6416 = vmatpush.bf16.msra.mxu0 %v5978
  %6417 = vmatmul.bf16.gmra.mxu0 %v5457
  %v6418 = vpop.f32.mrf.mxu0
  %v6419 = vadd.f32 0.0, %v6418
  %v6420 = vpop.f32.mrf.mxu0
  %6421 = vdwg.mxu0
  %6422 = vmatpush.bf16.msra.mxu0 %v6098
  %6423 = vmatpush.bf16.msra.mxu0 %v6090
  %6424 = vmatpush.bf16.msra.mxu0 %v6082
  %6425 = vmatpush.bf16.msra.mxu0 %v6074
  %6426 = vmatpush.bf16.msra.mxu0 %v6066
  %6427 = vmatpush.bf16.msra.mxu0 %v6058
  %6428 = vmatpush.bf16.msra.mxu0 %v6050
  %6429 = vmatpush.bf16.msra.mxu0 %v6042
  %6430 = vmatmul.bf16.gmra.mxu0 %v5458
  %v6431 = vpop.f32.mrf.mxu0
  %v6432 = vadd.f32 %v6419, %v6431
  %v6433 = vpop.f32.mrf.mxu0
  %6434 = vdwg.mxu0
  %v6443 = vrot.slane %v6276, 4
  %v6444 = vrot.slane %v6328, 4
  %v6445 = vrot.slane %v6380, 4
  %v6446 = vrot.slane %v6432, 4
  %v6447 = vsel %vm1007, %v6250, %v6443
  %v6448 = vsel %vm1007, %v6302, %v6444
  %v6449 = vsel %vm1007, %v6354, %v6445
  %v6450 = vsel %vm1007, %v6406, %v6446
  %v6455 = vadd.f32 %v5447, %v6447
  %v6456 = vadd.f32 %v5448, %v6448
  %v6457 = vadd.f32 %v5449, %v6449
  %v6458 = vadd.f32 %v5450, %v6450
  %v6459 = vxor.u32 %v6455, 2147483648
  %v6460 = vmul.f32 %v6459, 1.442695
  %v6461 = vpow.pop %v6460
  %v6462 = vadd.f32 %v6461, 1.0
  %v6463 = vrcp.pop %v6462
  %v6464 = vmul.f32 %v6462, %v6463
  %v6465 = vsub.f32 1.0, %v6464
  %v6466 = vmul.f32 %v6463, %v6465
  %v6467 = vadd.f32 %v6463, %v6466
  %vm6468 = vweird.f32 %v6462
  %vm6469 = vweird.f32 %v6463
  %vm6470 = vmor %vm6468, %vm6469
  %v6471 = vsel %vm6470, %v6463, %v6467
  %v6472 = vand.u32 2147483647, %v6462
  %vm6473 = vcmp.eq.f32.partialorder %v6472, 8.507059e+37
  %v6474 = vand.u32 %v6462, 2147483648
  %v6475 = vor.u32 1.1754944e-38, %v6474
  %v6476 = vsel %vm6473, %v6475, %v6471
  %v6477 = vmul.f32 1.0, %v6476
  %v6478 = vxor.u32 %v6456, 2147483648
  %v6479 = vmul.f32 %v6478, 1.442695
  %v6480 = vpow.pop %v6479
  %v6481 = vadd.f32 %v6480, 1.0
  %v6482 = vrcp.pop %v6481
  %v6483 = vmul.f32 %v6481, %v6482
  %v6484 = vsub.f32 1.0, %v6483
  %v6485 = vmul.f32 %v6482, %v6484
  %v6486 = vadd.f32 %v6482, %v6485
  %vm6487 = vweird.f32 %v6481
  %vm6488 = vweird.f32 %v6482
  %vm6489 = vmor %vm6487, %vm6488
  %v6490 = vsel %vm6489, %v6482, %v6486
  %v6491 = vand.u32 2147483647, %v6481
  %vm6492 = vcmp.eq.f32.partialorder %v6491, 8.507059e+37
  %v6493 = vand.u32 %v6481, 2147483648
  %v6494 = vor.u32 1.1754944e-38, %v6493
  %v6495 = vsel %vm6492, %v6494, %v6490
  %v6496 = vmul.f32 1.0, %v6495
  %v6497 = vtanh.pop %v6457
  %v6498 = vxor.u32 %v6458, 2147483648
  %v6499 = vmul.f32 %v6498, 1.442695
  %v6500 = vpow.pop %v6499
  %v6501 = vadd.f32 %v6500, 1.0
  %v6502 = vrcp.pop %v6501
  %v6503 = vmul.f32 %v6501, %v6502
  %v6504 = vsub.f32 1.0, %v6503
  %v6505 = vmul.f32 %v6502, %v6504
  %v6506 = vadd.f32 %v6502, %v6505
  %vm6507 = vweird.f32 %v6501
  %vm6508 = vweird.f32 %v6502
  %vm6509 = vmor %vm6507, %vm6508
  %v6510 = vsel %vm6509, %v6502, %v6506
  %v6511 = vand.u32 2147483647, %v6501
  %vm6512 = vcmp.eq.f32.partialorder %v6511, 8.507059e+37
  %v6513 = vand.u32 %v6501, 2147483648
  %v6514 = vor.u32 1.1754944e-38, %v6513
  %v6515 = vsel %vm6512, %v6514, %v6510
  %v6516 = vmul.f32 1.0, %v6515
  %v6517 = vmul.f32 %v6496, %v5438
  %v6518 = vmul.f32 %v6477, %v6497
  %v6519 = vadd.f32 %v6517, %v6518
  %v6520 = vtanh.pop %v6519
  %v6521 = vmul.f32 %v6516, %v6520
  %s6522 = scalar_lea.vmem %s2, 40
  %v6523 = vld [vmem:[%s6522] sm:$0xff]
  %vm6524 = vcmp.gt.f32.partialorder %v6523, 0.0
  %v6525 = vsel %vm6524, %v6519, %v5438
  %v6526 = vsel %vm6524, %v6521, %v5439
  %v6527 = vsel %vm6524, %v6521, 0.0
  %6528 = vst [vmem:[%s3268] sm:$0xf] %v6527
  %v6530 = vrot.slane %v6527, 4
  %6532 = vst [vmem:[%s3263 + $0x4] sm:$0xf] %v6530
  %s6533 = scalar_lea.vmem %s0, 192
  %v6534 = vld [vmem:[%s6533] sm:$0xff]
  %v6535 = vld [vmem:[%s6533 + $0x8] sm:$0xff]
  %v6536 = vld [vmem:[%s6533 + $0x10] sm:$0xff]
  %v6537 = vld [vmem:[%s6533 + $0x18] sm:$0xff]
  %6539 = vst [vmem:[#allocation1] ss:$2 sm:$0xff] %v6526
  %v6540 = vld.sshfl [vmem:[#allocation1] sm:$0xff pattern:$0x75316420]
  %v6541 = vld.sshfl [vmem:[#allocation1 + $0x8] sm:$0xff pattern:$0x75316420]
  %v6544 = vpack.c.bf16 %v6540, %v6540
  %v6545 = vpack.c.bf16 %v6541, %v6541
  %v6546 = vld [vmem:[%s1] sm:$0xff]
  %v6547 = vld [vmem:[%s1 + $0x8] sm:$0xff]
  %v6548 = vld [vmem:[%s1 + $0x10] sm:$0xff]
  %v6549 = vld [vmem:[%s1 + $0x18] sm:$0xff]
  %v6550 = vld [vmem:[%s1 + $0x20] sm:$0xff]
  %v6551 = vld [vmem:[%s1 + $0x28] sm:$0xff]
  %v6552 = vld [vmem:[%s1 + $0x30] sm:$0xff]
  %v6553 = vld [vmem:[%s1 + $0x38] sm:$0xff]
  %v6554 = vld [vmem:[%s1 + $0x40] sm:$0xff]
  %v6555 = vld [vmem:[%s1 + $0x48] sm:$0xff]
  %v6556 = vld [vmem:[%s1 + $0x50] sm:$0xff]
  %v6557 = vld [vmem:[%s1 + $0x58] sm:$0xff]
  %v6558 = vld [vmem:[%s1 + $0x60] sm:$0xff]
  %v6559 = vld [vmem:[%s1 + $0x68] sm:$0xff]
  %v6560 = vld [vmem:[%s1 + $0x70] sm:$0xff]
  %v6561 = vld [vmem:[%s1 + $0x78] sm:$0xff]
  %v6562 = vld [vmem:[%s1 + $0x80] sm:$0xff]
  %v6563 = vld [vmem:[%s1 + $0x88] sm:$0xff]
  %v6564 = vld [vmem:[%s1 + $0x90] sm:$0xff]
  %v6565 = vld [vmem:[%s1 + $0x98] sm:$0xff]
  %v6566 = vld [vmem:[%s1 + $0xa0] sm:$0xff]
  %v6567 = vld [vmem:[%s1 + $0xa8] sm:$0xff]
  %v6568 = vld [vmem:[%s1 + $0xb0] sm:$0xff]
  %v6569 = vld [vmem:[%s1 + $0xb8] sm:$0xff]
  %v6570 = vld [vmem:[%s1 + $0xc0] sm:$0xff]
  %v6571 = vld [vmem:[%s1 + $0xc8] sm:$0xff]
  %v6572 = vld [vmem:[%s1 + $0xd0] sm:$0xff]
  %v6573 = vld [vmem:[%s1 + $0xd8] sm:$0xff]
  %v6574 = vld [vmem:[%s1 + $0xe0] sm:$0xff]
  %v6575 = vld [vmem:[%s1 + $0xe8] sm:$0xff]
  %v6576 = vld [vmem:[%s1 + $0xf0] sm:$0xff]
  %v6577 = vld [vmem:[%s1 + $0xf8] sm:$0xff]
  %v6578 = vld [vmem:[%s1 + $0x100] sm:$0xff]
  %v6579 = vld [vmem:[%s1 + $0x108] sm:$0xff]
  %v6580 = vld [vmem:[%s1 + $0x110] sm:$0xff]
  %v6581 = vld [vmem:[%s1 + $0x118] sm:$0xff]
  %v6582 = vld [vmem:[%s1 + $0x120] sm:$0xff]
  %v6583 = vld [vmem:[%s1 + $0x128] sm:$0xff]
  %v6584 = vld [vmem:[%s1 + $0x130] sm:$0xff]
  %v6585 = vld [vmem:[%s1 + $0x138] sm:$0xff]
  %v6586 = vld [vmem:[%s1 + $0x140] sm:$0xff]
  %v6587 = vld [vmem:[%s1 + $0x148] sm:$0xff]
  %v6588 = vld [vmem:[%s1 + $0x150] sm:$0xff]
  %v6589 = vld [vmem:[%s1 + $0x158] sm:$0xff]
  %v6590 = vld [vmem:[%s1 + $0x160] sm:$0xff]
  %v6591 = vld [vmem:[%s1 + $0x168] sm:$0xff]
  %v6592 = vld [vmem:[%s1 + $0x170] sm:$0xff]
  %v6593 = vld [vmem:[%s1 + $0x178] sm:$0xff]
  %v6594 = vld [vmem:[%s1 + $0x180] sm:$0xff]
  %v6595 = vld [vmem:[%s1 + $0x188] sm:$0xff]
  %v6596 = vld [vmem:[%s1 + $0x190] sm:$0xff]
  %v6597 = vld [vmem:[%s1 + $0x198] sm:$0xff]
  %v6598 = vld [vmem:[%s1 + $0x1a0] sm:$0xff]
  %v6599 = vld [vmem:[%s1 + $0x1a8] sm:$0xff]
  %v6600 = vld [vmem:[%s1 + $0x1b0] sm:$0xff]
  %v6601 = vld [vmem:[%s1 + $0x1b8] sm:$0xff]
  %v6602 = vld [vmem:[%s1 + $0x1c0] sm:$0xff]
  %v6603 = vld [vmem:[%s1 + $0x1c8] sm:$0xff]
  %v6604 = vld [vmem:[%s1 + $0x1d0] sm:$0xff]
  %v6605 = vld [vmem:[%s1 + $0x1d8] sm:$0xff]
  %v6606 = vld [vmem:[%s1 + $0x1e0] sm:$0xff]
  %v6607 = vld [vmem:[%s1 + $0x1e8] sm:$0xff]
  %v6608 = vld [vmem:[%s1 + $0x1f0] sm:$0xff]
  %v6609 = vld [vmem:[%s1 + $0x1f8] sm:$0xff]
  %v6610 = vld [vmem:[%s1 + $0x200] sm:$0xff]
  %v6611 = vld [vmem:[%s1 + $0x208] sm:$0xff]
  %v6612 = vld [vmem:[%s1 + $0x210] sm:$0xff]
  %v6613 = vld [vmem:[%s1 + $0x218] sm:$0xff]
  %v6614 = vld [vmem:[%s1 + $0x220] sm:$0xff]
  %v6615 = vld [vmem:[%s1 + $0x228] sm:$0xff]
  %v6616 = vld [vmem:[%s1 + $0x230] sm:$0xff]
  %v6617 = vld [vmem:[%s1 + $0x238] sm:$0xff]
  %v6618 = vld [vmem:[%s1 + $0x240] sm:$0xff]
  %v6619 = vld [vmem:[%s1 + $0x248] sm:$0xff]
  %v6620 = vld [vmem:[%s1 + $0x250] sm:$0xff]
  %v6621 = vld [vmem:[%s1 + $0x258] sm:$0xff]
  %v6622 = vld [vmem:[%s1 + $0x260] sm:$0xff]
  %v6623 = vld [vmem:[%s1 + $0x268] sm:$0xff]
  %v6624 = vld [vmem:[%s1 + $0x270] sm:$0xff]
  %v6625 = vld [vmem:[%s1 + $0x278] sm:$0xff]
  %v6626 = vld [vmem:[%s1 + $0x280] sm:$0xff]
  %v6627 = vld [vmem:[%s1 + $0x288] sm:$0xff]
  %v6628 = vld [vmem:[%s1 + $0x290] sm:$0xff]
  %v6629 = vld [vmem:[%s1 + $0x298] sm:$0xff]
  %v6630 = vld [vmem:[%s1 + $0x2a0] sm:$0xff]
  %v6631 = vld [vmem:[%s1 + $0x2a8] sm:$0xff]
  %v6632 = vld [vmem:[%s1 + $0x2b0] sm:$0xff]
  %v6633 = vld [vmem:[%s1 + $0x2b8] sm:$0xff]
  %v6634 = vld [vmem:[%s1 + $0x2c0] sm:$0xff]
  %v6635 = vld [vmem:[%s1 + $0x2c8] sm:$0xff]
  %v6636 = vld [vmem:[%s1 + $0x2d0] sm:$0xff]
  %v6637 = vld [vmem:[%s1 + $0x2d8] sm:$0xff]
  %v6638 = vld [vmem:[%s1 + $0x2e0] sm:$0xff]
  %v6639 = vld [vmem:[%s1 + $0x2e8] sm:$0xff]
  %v6640 = vld [vmem:[%s1 + $0x2f0] sm:$0xff]
  %v6641 = vld [vmem:[%s1 + $0x2f8] sm:$0xff]
  %v6642 = vld [vmem:[%s1 + $0x300] sm:$0xff]
  %v6643 = vld [vmem:[%s1 + $0x308] sm:$0xff]
  %v6644 = vld [vmem:[%s1 + $0x310] sm:$0xff]
  %v6645 = vld [vmem:[%s1 + $0x318] sm:$0xff]
  %v6646 = vld [vmem:[%s1 + $0x320] sm:$0xff]
  %v6647 = vld [vmem:[%s1 + $0x328] sm:$0xff]
  %v6648 = vld [vmem:[%s1 + $0x330] sm:$0xff]
  %v6649 = vld [vmem:[%s1 + $0x338] sm:$0xff]
  %v6650 = vld [vmem:[%s1 + $0x340] sm:$0xff]
  %v6651 = vld [vmem:[%s1 + $0x348] sm:$0xff]
  %v6652 = vld [vmem:[%s1 + $0x350] sm:$0xff]
  %v6653 = vld [vmem:[%s1 + $0x358] sm:$0xff]
  %v6654 = vld [vmem:[%s1 + $0x360] sm:$0xff]
  %v6655 = vld [vmem:[%s1 + $0x368] sm:$0xff]
  %v6656 = vld [vmem:[%s1 + $0x370] sm:$0xff]
  %v6657 = vld [vmem:[%s1 + $0x378] sm:$0xff]
  %v6658 = vld [vmem:[%s1 + $0x380] sm:$0xff]
  %v6659 = vld [vmem:[%s1 + $0x388] sm:$0xff]
  %v6660 = vld [vmem:[%s1 + $0x390] sm:$0xff]
  %v6661 = vld [vmem:[%s1 + $0x398] sm:$0xff]
  %v6662 = vld [vmem:[%s1 + $0x3a0] sm:$0xff]
  %v6663 = vld [vmem:[%s1 + $0x3a8] sm:$0xff]
  %v6664 = vld [vmem:[%s1 + $0x3b0] sm:$0xff]
  %v6665 = vld [vmem:[%s1 + $0x3b8] sm:$0xff]
  %v6666 = vld [vmem:[%s1 + $0x3c0] sm:$0xff]
  %v6667 = vld [vmem:[%s1 + $0x3c8] sm:$0xff]
  %v6668 = vld [vmem:[%s1 + $0x3d0] sm:$0xff]
  %v6669 = vld [vmem:[%s1 + $0x3d8] sm:$0xff]
  %v6670 = vld [vmem:[%s1 + $0x3e0] sm:$0xff]
  %v6671 = vld [vmem:[%s1 + $0x3e8] sm:$0xff]
  %v6672 = vld [vmem:[%s1 + $0x3f0] sm:$0xff]
  %v6673 = vld [vmem:[%s1 + $0x3f8] sm:$0xff]
  %v6802 = vunpack.c.l.b16 %v6546
  %v6803 = vunpack.c.h.b16 %v6546
  %v6804 = vunpack.c.l.b16 %v6547
  %v6805 = vunpack.c.h.b16 %v6547
  %v6806 = vunpack.c.l.b16 %v6548
  %v6807 = vunpack.c.h.b16 %v6548
  %v6808 = vunpack.c.l.b16 %v6549
  %v6809 = vunpack.c.h.b16 %v6549
  %v6810 = vunpack.c.l.b16 %v6550
  %v6811 = vunpack.c.h.b16 %v6550
  %v6812 = vunpack.c.l.b16 %v6551
  %v6813 = vunpack.c.h.b16 %v6551
  %v6814 = vunpack.c.l.b16 %v6552
  %v6815 = vunpack.c.h.b16 %v6552
  %v6816 = vunpack.c.l.b16 %v6553
  %v6817 = vunpack.c.h.b16 %v6553
  %v6818 = vunpack.c.l.b16 %v6554
  %v6819 = vunpack.c.h.b16 %v6554
  %v6820 = vunpack.c.l.b16 %v6555
  %v6821 = vunpack.c.h.b16 %v6555
  %v6822 = vunpack.c.l.b16 %v6556
  %v6823 = vunpack.c.h.b16 %v6556
  %v6824 = vunpack.c.l.b16 %v6557
  %v6825 = vunpack.c.h.b16 %v6557
  %v6826 = vunpack.c.l.b16 %v6558
  %v6827 = vunpack.c.h.b16 %v6558
  %v6828 = vunpack.c.l.b16 %v6559
  %v6829 = vunpack.c.h.b16 %v6559
  %v6830 = vunpack.c.l.b16 %v6560
  %v6831 = vunpack.c.h.b16 %v6560
  %v6832 = vunpack.c.l.b16 %v6561
  %v6833 = vunpack.c.h.b16 %v6561
  %v6834 = vunpack.c.l.b16 %v6562
  %v6835 = vunpack.c.h.b16 %v6562
  %v6836 = vunpack.c.l.b16 %v6563
  %v6837 = vunpack.c.h.b16 %v6563
  %v6838 = vunpack.c.l.b16 %v6564
  %v6839 = vunpack.c.h.b16 %v6564
  %v6840 = vunpack.c.l.b16 %v6565
  %v6841 = vunpack.c.h.b16 %v6565
  %v6842 = vunpack.c.l.b16 %v6566
  %v6843 = vunpack.c.h.b16 %v6566
  %v6844 = vunpack.c.l.b16 %v6567
  %v6845 = vunpack.c.h.b16 %v6567
  %v6846 = vunpack.c.l.b16 %v6568
  %v6847 = vunpack.c.h.b16 %v6568
  %v6848 = vunpack.c.l.b16 %v6569
  %v6849 = vunpack.c.h.b16 %v6569
  %v6850 = vunpack.c.l.b16 %v6570
  %v6851 = vunpack.c.h.b16 %v6570
  %v6852 = vunpack.c.l.b16 %v6571
  %v6853 = vunpack.c.h.b16 %v6571
  %v6854 = vunpack.c.l.b16 %v6572
  %v6855 = vunpack.c.h.b16 %v6572
  %v6856 = vunpack.c.l.b16 %v6573
  %v6857 = vunpack.c.h.b16 %v6573
  %v6858 = vunpack.c.l.b16 %v6574
  %v6859 = vunpack.c.h.b16 %v6574
  %v6860 = vunpack.c.l.b16 %v6575
  %v6861 = vunpack.c.h.b16 %v6575
  %v6862 = vunpack.c.l.b16 %v6576
  %v6863 = vunpack.c.h.b16 %v6576
  %v6864 = vunpack.c.l.b16 %v6577
  %v6865 = vunpack.c.h.b16 %v6577
  %v6866 = vunpack.c.l.b16 %v6578
  %v6867 = vunpack.c.h.b16 %v6578
  %v6868 = vunpack.c.l.b16 %v6579
  %v6869 = vunpack.c.h.b16 %v6579
  %v6870 = vunpack.c.l.b16 %v6580
  %v6871 = vunpack.c.h.b16 %v6580
  %v6872 = vunpack.c.l.b16 %v6581
  %v6873 = vunpack.c.h.b16 %v6581
  %v6874 = vunpack.c.l.b16 %v6582
  %v6875 = vunpack.c.h.b16 %v6582
  %v6876 = vunpack.c.l.b16 %v6583
  %v6877 = vunpack.c.h.b16 %v6583
  %v6878 = vunpack.c.l.b16 %v6584
  %v6879 = vunpack.c.h.b16 %v6584
  %v6880 = vunpack.c.l.b16 %v6585
  %v6881 = vunpack.c.h.b16 %v6585
  %v6882 = vunpack.c.l.b16 %v6586
  %v6883 = vunpack.c.h.b16 %v6586
  %v6884 = vunpack.c.l.b16 %v6587
  %v6885 = vunpack.c.h.b16 %v6587
  %v6886 = vunpack.c.l.b16 %v6588
  %v6887 = vunpack.c.h.b16 %v6588
  %v6888 = vunpack.c.l.b16 %v6589
  %v6889 = vunpack.c.h.b16 %v6589
  %v6890 = vunpack.c.l.b16 %v6590
  %v6891 = vunpack.c.h.b16 %v6590
  %v6892 = vunpack.c.l.b16 %v6591
  %v6893 = vunpack.c.h.b16 %v6591
  %v6894 = vunpack.c.l.b16 %v6592
  %v6895 = vunpack.c.h.b16 %v6592
  %v6896 = vunpack.c.l.b16 %v6593
  %v6897 = vunpack.c.h.b16 %v6593
  %v6898 = vunpack.c.l.b16 %v6594
  %v6899 = vunpack.c.h.b16 %v6594
  %v6900 = vunpack.c.l.b16 %v6595
  %v6901 = vunpack.c.h.b16 %v6595
  %v6902 = vunpack.c.l.b16 %v6596
  %v6903 = vunpack.c.h.b16 %v6596
  %v6904 = vunpack.c.l.b16 %v6597
  %v6905 = vunpack.c.h.b16 %v6597
  %v6906 = vunpack.c.l.b16 %v6598
  %v6907 = vunpack.c.h.b16 %v6598
  %v6908 = vunpack.c.l.b16 %v6599
  %v6909 = vunpack.c.h.b16 %v6599
  %v6910 = vunpack.c.l.b16 %v6600
  %v6911 = vunpack.c.h.b16 %v6600
  %v6912 = vunpack.c.l.b16 %v6601
  %v6913 = vunpack.c.h.b16 %v6601
  %v6914 = vunpack.c.l.b16 %v6602
  %v6915 = vunpack.c.h.b16 %v6602
  %v6916 = vunpack.c.l.b16 %v6603
  %v6917 = vunpack.c.h.b16 %v6603
  %v6918 = vunpack.c.l.b16 %v6604
  %v6919 = vunpack.c.h.b16 %v6604
  %v6920 = vunpack.c.l.b16 %v6605
  %v6921 = vunpack.c.h.b16 %v6605
  %v6922 = vunpack.c.l.b16 %v6606
  %v6923 = vunpack.c.h.b16 %v6606
  %v6924 = vunpack.c.l.b16 %v6607
  %v6925 = vunpack.c.h.b16 %v6607
  %v6926 = vunpack.c.l.b16 %v6608
  %v6927 = vunpack.c.h.b16 %v6608
  %v6928 = vunpack.c.l.b16 %v6609
  %v6929 = vunpack.c.h.b16 %v6609
  %v6930 = vunpack.c.l.b16 %v6610
  %v6931 = vunpack.c.h.b16 %v6610
  %v6932 = vunpack.c.l.b16 %v6611
  %v6933 = vunpack.c.h.b16 %v6611
  %v6934 = vunpack.c.l.b16 %v6612
  %v6935 = vunpack.c.h.b16 %v6612
  %v6936 = vunpack.c.l.b16 %v6613
  %v6937 = vunpack.c.h.b16 %v6613
  %v6938 = vunpack.c.l.b16 %v6614
  %v6939 = vunpack.c.h.b16 %v6614
  %v6940 = vunpack.c.l.b16 %v6615
  %v6941 = vunpack.c.h.b16 %v6615
  %v6942 = vunpack.c.l.b16 %v6616
  %v6943 = vunpack.c.h.b16 %v6616
  %v6944 = vunpack.c.l.b16 %v6617
  %v6945 = vunpack.c.h.b16 %v6617
  %v6946 = vunpack.c.l.b16 %v6618
  %v6947 = vunpack.c.h.b16 %v6618
  %v6948 = vunpack.c.l.b16 %v6619
  %v6949 = vunpack.c.h.b16 %v6619
  %v6950 = vunpack.c.l.b16 %v6620
  %v6951 = vunpack.c.h.b16 %v6620
  %v6952 = vunpack.c.l.b16 %v6621
  %v6953 = vunpack.c.h.b16 %v6621
  %v6954 = vunpack.c.l.b16 %v6622
  %v6955 = vunpack.c.h.b16 %v6622
  %v6956 = vunpack.c.l.b16 %v6623
  %v6957 = vunpack.c.h.b16 %v6623
  %v6958 = vunpack.c.l.b16 %v6624
  %v6959 = vunpack.c.h.b16 %v6624
  %v6960 = vunpack.c.l.b16 %v6625
  %v6961 = vunpack.c.h.b16 %v6625
  %v6962 = vunpack.c.l.b16 %v6626
  %v6963 = vunpack.c.h.b16 %v6626
  %v6964 = vunpack.c.l.b16 %v6627
  %v6965 = vunpack.c.h.b16 %v6627
  %v6966 = vunpack.c.l.b16 %v6628
  %v6967 = vunpack.c.h.b16 %v6628
  %v6968 = vunpack.c.l.b16 %v6629
  %v6969 = vunpack.c.h.b16 %v6629
  %v6970 = vunpack.c.l.b16 %v6630
  %v6971 = vunpack.c.h.b16 %v6630
  %v6972 = vunpack.c.l.b16 %v6631
  %v6973 = vunpack.c.h.b16 %v6631
  %v6974 = vunpack.c.l.b16 %v6632
  %v6975 = vunpack.c.h.b16 %v6632
  %v6976 = vunpack.c.l.b16 %v6633
  %v6977 = vunpack.c.h.b16 %v6633
  %v6978 = vunpack.c.l.b16 %v6634
  %v6979 = vunpack.c.h.b16 %v6634
  %v6980 = vunpack.c.l.b16 %v6635
  %v6981 = vunpack.c.h.b16 %v6635
  %v6982 = vunpack.c.l.b16 %v6636
  %v6983 = vunpack.c.h.b16 %v6636
  %v6984 = vunpack.c.l.b16 %v6637
  %v6985 = vunpack.c.h.b16 %v6637
  %v6986 = vunpack.c.l.b16 %v6638
  %v6987 = vunpack.c.h.b16 %v6638
  %v6988 = vunpack.c.l.b16 %v6639
  %v6989 = vunpack.c.h.b16 %v6639
  %v6990 = vunpack.c.l.b16 %v6640
  %v6991 = vunpack.c.h.b16 %v6640
  %v6992 = vunpack.c.l.b16 %v6641
  %v6993 = vunpack.c.h.b16 %v6641
  %v6994 = vunpack.c.l.b16 %v6642
  %v6995 = vunpack.c.h.b16 %v6642
  %v6996 = vunpack.c.l.b16 %v6643
  %v6997 = vunpack.c.h.b16 %v6643
  %v6998 = vunpack.c.l.b16 %v6644
  %v6999 = vunpack.c.h.b16 %v6644
  %v7000 = vunpack.c.l.b16 %v6645
  %v7001 = vunpack.c.h.b16 %v6645
  %v7002 = vunpack.c.l.b16 %v6646
  %v7003 = vunpack.c.h.b16 %v6646
  %v7004 = vunpack.c.l.b16 %v6647
  %v7005 = vunpack.c.h.b16 %v6647
  %v7006 = vunpack.c.l.b16 %v6648
  %v7007 = vunpack.c.h.b16 %v6648
  %v7008 = vunpack.c.l.b16 %v6649
  %v7009 = vunpack.c.h.b16 %v6649
  %v7010 = vunpack.c.l.b16 %v6650
  %v7011 = vunpack.c.h.b16 %v6650
  %v7012 = vunpack.c.l.b16 %v6651
  %v7013 = vunpack.c.h.b16 %v6651
  %v7014 = vunpack.c.l.b16 %v6652
  %v7015 = vunpack.c.h.b16 %v6652
  %v7016 = vunpack.c.l.b16 %v6653
  %v7017 = vunpack.c.h.b16 %v6653
  %v7018 = vunpack.c.l.b16 %v6654
  %v7019 = vunpack.c.h.b16 %v6654
  %v7020 = vunpack.c.l.b16 %v6655
  %v7021 = vunpack.c.h.b16 %v6655
  %v7022 = vunpack.c.l.b16 %v6656
  %v7023 = vunpack.c.h.b16 %v6656
  %v7024 = vunpack.c.l.b16 %v6657
  %v7025 = vunpack.c.h.b16 %v6657
  %v7026 = vunpack.c.l.b16 %v6658
  %v7027 = vunpack.c.h.b16 %v6658
  %v7028 = vunpack.c.l.b16 %v6659
  %v7029 = vunpack.c.h.b16 %v6659
  %v7030 = vunpack.c.l.b16 %v6660
  %v7031 = vunpack.c.h.b16 %v6660
  %v7032 = vunpack.c.l.b16 %v6661
  %v7033 = vunpack.c.h.b16 %v6661
  %v7034 = vunpack.c.l.b16 %v6662
  %v7035 = vunpack.c.h.b16 %v6662
  %v7036 = vunpack.c.l.b16 %v6663
  %v7037 = vunpack.c.h.b16 %v6663
  %v7038 = vunpack.c.l.b16 %v6664
  %v7039 = vunpack.c.h.b16 %v6664
  %v7040 = vunpack.c.l.b16 %v6665
  %v7041 = vunpack.c.h.b16 %v6665
  %v7042 = vunpack.c.l.b16 %v6666
  %v7043 = vunpack.c.h.b16 %v6666
  %v7044 = vunpack.c.l.b16 %v6667
  %v7045 = vunpack.c.h.b16 %v6667
  %v7046 = vunpack.c.l.b16 %v6668
  %v7047 = vunpack.c.h.b16 %v6668
  %v7048 = vunpack.c.l.b16 %v6669
  %v7049 = vunpack.c.h.b16 %v6669
  %v7050 = vunpack.c.l.b16 %v6670
  %v7051 = vunpack.c.h.b16 %v6670
  %v7052 = vunpack.c.l.b16 %v6671
  %v7053 = vunpack.c.h.b16 %v6671
  %v7054 = vunpack.c.l.b16 %v6672
  %v7055 = vunpack.c.h.b16 %v6672
  %v7056 = vunpack.c.l.b16 %v6673
  %v7057 = vunpack.c.h.b16 %v6673
  %v7058 = vpack.c.b16 %v6810, %v6802
  %v7059 = vpack.c.b16 %v6811, %v6803
  %v7060 = vpack.c.b16 %v6812, %v6804
  %v7061 = vpack.c.b16 %v6813, %v6805
  %v7062 = vpack.c.b16 %v6814, %v6806
  %v7063 = vpack.c.b16 %v6815, %v6807
  %v7064 = vpack.c.b16 %v6816, %v6808
  %v7065 = vpack.c.b16 %v6817, %v6809
  %v7066 = vpack.c.b16 %v6826, %v6818
  %v7067 = vpack.c.b16 %v6827, %v6819
  %v7068 = vpack.c.b16 %v6828, %v6820
  %v7069 = vpack.c.b16 %v6829, %v6821
  %v7070 = vpack.c.b16 %v6830, %v6822
  %v7071 = vpack.c.b16 %v6831, %v6823
  %v7072 = vpack.c.b16 %v6832, %v6824
  %v7073 = vpack.c.b16 %v6833, %v6825
  %v7074 = vpack.c.b16 %v6842, %v6834
  %v7075 = vpack.c.b16 %v6843, %v6835
  %v7076 = vpack.c.b16 %v6844, %v6836
  %v7077 = vpack.c.b16 %v6845, %v6837
  %v7078 = vpack.c.b16 %v6846, %v6838
  %v7079 = vpack.c.b16 %v6847, %v6839
  %v7080 = vpack.c.b16 %v6848, %v6840
  %v7081 = vpack.c.b16 %v6849, %v6841
  %v7082 = vpack.c.b16 %v6858, %v6850
  %v7083 = vpack.c.b16 %v6859, %v6851
  %v7084 = vpack.c.b16 %v6860, %v6852
  %v7085 = vpack.c.b16 %v6861, %v6853
  %v7086 = vpack.c.b16 %v6862, %v6854
  %v7087 = vpack.c.b16 %v6863, %v6855
  %v7088 = vpack.c.b16 %v6864, %v6856
  %v7089 = vpack.c.b16 %v6865, %v6857
  %v7090 = vpack.c.b16 %v6874, %v6866
  %v7091 = vpack.c.b16 %v6875, %v6867
  %v7092 = vpack.c.b16 %v6876, %v6868
  %v7093 = vpack.c.b16 %v6877, %v6869
  %v7094 = vpack.c.b16 %v6878, %v6870
  %v7095 = vpack.c.b16 %v6879, %v6871
  %v7096 = vpack.c.b16 %v6880, %v6872
  %v7097 = vpack.c.b16 %v6881, %v6873
  %v7098 = vpack.c.b16 %v6890, %v6882
  %v7099 = vpack.c.b16 %v6891, %v6883
  %v7100 = vpack.c.b16 %v6892, %v6884
  %v7101 = vpack.c.b16 %v6893, %v6885
  %v7102 = vpack.c.b16 %v6894, %v6886
  %v7103 = vpack.c.b16 %v6895, %v6887
  %v7104 = vpack.c.b16 %v6896, %v6888
  %v7105 = vpack.c.b16 %v6897, %v6889
  %v7106 = vpack.c.b16 %v6906, %v6898
  %v7107 = vpack.c.b16 %v6907, %v6899
  %v7108 = vpack.c.b16 %v6908, %v6900
  %v7109 = vpack.c.b16 %v6909, %v6901
  %v7110 = vpack.c.b16 %v6910, %v6902
  %v7111 = vpack.c.b16 %v6911, %v6903
  %v7112 = vpack.c.b16 %v6912, %v6904
  %v7113 = vpack.c.b16 %v6913, %v6905
  %v7114 = vpack.c.b16 %v6922, %v6914
  %v7115 = vpack.c.b16 %v6923, %v6915
  %v7116 = vpack.c.b16 %v6924, %v6916
  %v7117 = vpack.c.b16 %v6925, %v6917
  %v7118 = vpack.c.b16 %v6926, %v6918
  %v7119 = vpack.c.b16 %v6927, %v6919
  %v7120 = vpack.c.b16 %v6928, %v6920
  %v7121 = vpack.c.b16 %v6929, %v6921
  %v7122 = vpack.c.b16 %v6938, %v6930
  %v7123 = vpack.c.b16 %v6939, %v6931
  %v7124 = vpack.c.b16 %v6940, %v6932
  %v7125 = vpack.c.b16 %v6941, %v6933
  %v7126 = vpack.c.b16 %v6942, %v6934
  %v7127 = vpack.c.b16 %v6943, %v6935
  %v7128 = vpack.c.b16 %v6944, %v6936
  %v7129 = vpack.c.b16 %v6945, %v6937
  %v7130 = vpack.c.b16 %v6954, %v6946
  %v7131 = vpack.c.b16 %v6955, %v6947
  %v7132 = vpack.c.b16 %v6956, %v6948
  %v7133 = vpack.c.b16 %v6957, %v6949
  %v7134 = vpack.c.b16 %v6958, %v6950
  %v7135 = vpack.c.b16 %v6959, %v6951
  %v7136 = vpack.c.b16 %v6960, %v6952
  %v7137 = vpack.c.b16 %v6961, %v6953
  %v7138 = vpack.c.b16 %v6970, %v6962
  %v7139 = vpack.c.b16 %v6971, %v6963
  %v7140 = vpack.c.b16 %v6972, %v6964
  %v7141 = vpack.c.b16 %v6973, %v6965
  %v7142 = vpack.c.b16 %v6974, %v6966
  %v7143 = vpack.c.b16 %v6975, %v6967
  %v7144 = vpack.c.b16 %v6976, %v6968
  %v7145 = vpack.c.b16 %v6977, %v6969
  %v7146 = vpack.c.b16 %v6986, %v6978
  %v7147 = vpack.c.b16 %v6987, %v6979
  %v7148 = vpack.c.b16 %v6988, %v6980
  %v7149 = vpack.c.b16 %v6989, %v6981
  %v7150 = vpack.c.b16 %v6990, %v6982
  %v7151 = vpack.c.b16 %v6991, %v6983
  %v7152 = vpack.c.b16 %v6992, %v6984
  %v7153 = vpack.c.b16 %v6993, %v6985
  %v7154 = vpack.c.b16 %v7002, %v6994
  %v7155 = vpack.c.b16 %v7003, %v6995
  %v7156 = vpack.c.b16 %v7004, %v6996
  %v7157 = vpack.c.b16 %v7005, %v6997
  %v7158 = vpack.c.b16 %v7006, %v6998
  %v7159 = vpack.c.b16 %v7007, %v6999
  %v7160 = vpack.c.b16 %v7008, %v7000
  %v7161 = vpack.c.b16 %v7009, %v7001
  %v7162 = vpack.c.b16 %v7018, %v7010
  %v7163 = vpack.c.b16 %v7019, %v7011
  %v7164 = vpack.c.b16 %v7020, %v7012
  %v7165 = vpack.c.b16 %v7021, %v7013
  %v7166 = vpack.c.b16 %v7022, %v7014
  %v7167 = vpack.c.b16 %v7023, %v7015
  %v7168 = vpack.c.b16 %v7024, %v7016
  %v7169 = vpack.c.b16 %v7025, %v7017
  %v7170 = vpack.c.b16 %v7034, %v7026
  %v7171 = vpack.c.b16 %v7035, %v7027
  %v7172 = vpack.c.b16 %v7036, %v7028
  %v7173 = vpack.c.b16 %v7037, %v7029
  %v7174 = vpack.c.b16 %v7038, %v7030
  %v7175 = vpack.c.b16 %v7039, %v7031
  %v7176 = vpack.c.b16 %v7040, %v7032
  %v7177 = vpack.c.b16 %v7041, %v7033
  %v7178 = vpack.c.b16 %v7050, %v7042
  %v7179 = vpack.c.b16 %v7051, %v7043
  %v7180 = vpack.c.b16 %v7052, %v7044
  %v7181 = vpack.c.b16 %v7053, %v7045
  %v7182 = vpack.c.b16 %v7054, %v7046
  %v7183 = vpack.c.b16 %v7055, %v7047
  %v7184 = vpack.c.b16 %v7056, %v7048
  %v7185 = vpack.c.b16 %v7057, %v7049
  %7314 = vmatpush.bf16.msra.mxu0 %v7114
  %7315 = vmatpush.bf16.msra.mxu0 %v7106
  %7316 = vmatpush.bf16.msra.mxu0 %v7098
  %7317 = vmatpush.bf16.msra.mxu0 %v7090
  %7318 = vmatpush.bf16.msra.mxu0 %v7082
  %7319 = vmatpush.bf16.msra.mxu0 %v7074
  %7320 = vmatpush.bf16.msra.mxu0 %v7066
  %7321 = vmatpush.bf16.msra.mxu0 %v7058
  %7322 = vmatmul.bf16.gmra.mxu0 %v6544
  %v7323 = vpop.f32.mrf.mxu0
  %v7324 = vadd.f32 0.0, %v7323
  %v7325 = vpop.f32.mrf.mxu0
  %7326 = vdwg.mxu0
  %7327 = vmatpush.bf16.msra.mxu0 %v7178
  %7328 = vmatpush.bf16.msra.mxu0 %v7170
  %7329 = vmatpush.bf16.msra.mxu0 %v7162
  %7330 = vmatpush.bf16.msra.mxu0 %v7154
  %7331 = vmatpush.bf16.msra.mxu0 %v7146
  %7332 = vmatpush.bf16.msra.mxu0 %v7138
  %7333 = vmatpush.bf16.msra.mxu0 %v7130
  %7334 = vmatpush.bf16.msra.mxu0 %v7122
  %7335 = vmatmul.bf16.gmra.mxu0 %v6545
  %v7336 = vpop.f32.mrf.mxu0
  %v7337 = vadd.f32 %v7324, %v7336
  %v7338 = vpop.f32.mrf.mxu0
  %7339 = vdwg.mxu0
  %7340 = vmatpush.bf16.msra.mxu0 %v7115
  %7341 = vmatpush.bf16.msra.mxu0 %v7107
  %7342 = vmatpush.bf16.msra.mxu0 %v7099
  %7343 = vmatpush.bf16.msra.mxu0 %v7091
  %7344 = vmatpush.bf16.msra.mxu0 %v7083
  %7345 = vmatpush.bf16.msra.mxu0 %v7075
  %7346 = vmatpush.bf16.msra.mxu0 %v7067
  %7347 = vmatpush.bf16.msra.mxu0 %v7059
  %7348 = vmatmul.bf16.gmra.mxu0 %v6544
  %v7349 = vpop.f32.mrf.mxu0
  %v7350 = vadd.f32 0.0, %v7349
  %v7351 = vpop.f32.mrf.mxu0
  %7352 = vdwg.mxu0
  %7353 = vmatpush.bf16.msra.mxu0 %v7179
  %7354 = vmatpush.bf16.msra.mxu0 %v7171
  %7355 = vmatpush.bf16.msra.mxu0 %v7163
  %7356 = vmatpush.bf16.msra.mxu0 %v7155
  %7357 = vmatpush.bf16.msra.mxu0 %v7147
  %7358 = vmatpush.bf16.msra.mxu0 %v7139
  %7359 = vmatpush.bf16.msra.mxu0 %v7131
  %7360 = vmatpush.bf16.msra.mxu0 %v7123
  %7361 = vmatmul.bf16.gmra.mxu0 %v6545
  %v7362 = vpop.f32.mrf.mxu0
  %v7363 = vadd.f32 %v7350, %v7362
  %v7364 = vpop.f32.mrf.mxu0
  %7365 = vdwg.mxu0
  %7366 = vmatpush.bf16.msra.mxu0 %v7116
  %7367 = vmatpush.bf16.msra.mxu0 %v7108
  %7368 = vmatpush.bf16.msra.mxu0 %v7100
  %7369 = vmatpush.bf16.msra.mxu0 %v7092
  %7370 = vmatpush.bf16.msra.mxu0 %v7084
  %7371 = vmatpush.bf16.msra.mxu0 %v7076
  %7372 = vmatpush.bf16.msra.mxu0 %v7068
  %7373 = vmatpush.bf16.msra.mxu0 %v7060
  %7374 = vmatmul.bf16.gmra.mxu0 %v6544
  %v7375 = vpop.f32.mrf.mxu0
  %v7376 = vadd.f32 0.0, %v7375
  %v7377 = vpop.f32.mrf.mxu0
  %7378 = vdwg.mxu0
  %7379 = vmatpush.bf16.msra.mxu0 %v7180
  %7380 = vmatpush.bf16.msra.mxu0 %v7172
  %7381 = vmatpush.bf16.msra.mxu0 %v7164
  %7382 = vmatpush.bf16.msra.mxu0 %v7156
  %7383 = vmatpush.bf16.msra.mxu0 %v7148
  %7384 = vmatpush.bf16.msra.mxu0 %v7140
  %7385 = vmatpush.bf16.msra.mxu0 %v7132
  %7386 = vmatpush.bf16.msra.mxu0 %v7124
  %7387 = vmatmul.bf16.gmra.mxu0 %v6545
  %v7388 = vpop.f32.mrf.mxu0
  %v7389 = vadd.f32 %v7376, %v7388
  %v7390 = vpop.f32.mrf.mxu0
  %7391 = vdwg.mxu0
  %7392 = vmatpush.bf16.msra.mxu0 %v7117
  %7393 = vmatpush.bf16.msra.mxu0 %v7109
  %7394 = vmatpush.bf16.msra.mxu0 %v7101
  %7395 = vmatpush.bf16.msra.mxu0 %v7093
  %7396 = vmatpush.bf16.msra.mxu0 %v7085
  %7397 = vmatpush.bf16.msra.mxu0 %v7077
  %7398 = vmatpush.bf16.msra.mxu0 %v7069
  %7399 = vmatpush.bf16.msra.mxu0 %v7061
  %7400 = vmatmul.bf16.gmra.mxu0 %v6544
  %v7401 = vpop.f32.mrf.mxu0
  %v7402 = vadd.f32 0.0, %v7401
  %v7403 = vpop.f32.mrf.mxu0
  %7404 = vdwg.mxu0
  %7405 = vmatpush.bf16.msra.mxu0 %v7181
  %7406 = vmatpush.bf16.msra.mxu0 %v7173
  %7407 = vmatpush.bf16.msra.mxu0 %v7165
  %7408 = vmatpush.bf16.msra.mxu0 %v7157
  %7409 = vmatpush.bf16.msra.mxu0 %v7149
  %7410 = vmatpush.bf16.msra.mxu0 %v7141
  %7411 = vmatpush.bf16.msra.mxu0 %v7133
  %7412 = vmatpush.bf16.msra.mxu0 %v7125
  %7413 = vmatmul.bf16.gmra.mxu0 %v6545
  %v7414 = vpop.f32.mrf.mxu0
  %v7415 = vadd.f32 %v7402, %v7414
  %v7416 = vpop.f32.mrf.mxu0
  %7417 = vdwg.mxu0
  %7418 = vmatpush.bf16.msra.mxu0 %v7118
  %7419 = vmatpush.bf16.msra.mxu0 %v7110
  %7420 = vmatpush.bf16.msra.mxu0 %v7102
  %7421 = vmatpush.bf16.msra.mxu0 %v7094
  %7422 = vmatpush.bf16.msra.mxu0 %v7086
  %7423 = vmatpush.bf16.msra.mxu0 %v7078
  %7424 = vmatpush.bf16.msra.mxu0 %v7070
  %7425 = vmatpush.bf16.msra.mxu0 %v7062
  %7426 = vmatmul.bf16.gmra.mxu0 %v6544
  %v7427 = vpop.f32.mrf.mxu0
  %v7428 = vadd.f32 0.0, %v7427
  %v7429 = vpop.f32.mrf.mxu0
  %7430 = vdwg.mxu0
  %7431 = vmatpush.bf16.msra.mxu0 %v7182
  %7432 = vmatpush.bf16.msra.mxu0 %v7174
  %7433 = vmatpush.bf16.msra.mxu0 %v7166
  %7434 = vmatpush.bf16.msra.mxu0 %v7158
  %7435 = vmatpush.bf16.msra.mxu0 %v7150
  %7436 = vmatpush.bf16.msra.mxu0 %v7142
  %7437 = vmatpush.bf16.msra.mxu0 %v7134
  %7438 = vmatpush.bf16.msra.mxu0 %v7126
  %7439 = vmatmul.bf16.gmra.mxu0 %v6545
  %v7440 = vpop.f32.mrf.mxu0
  %v7441 = vadd.f32 %v7428, %v7440
  %v7442 = vpop.f32.mrf.mxu0
  %7443 = vdwg.mxu0
  %7444 = vmatpush.bf16.msra.mxu0 %v7119
  %7445 = vmatpush.bf16.msra.mxu0 %v7111
  %7446 = vmatpush.bf16.msra.mxu0 %v7103
  %7447 = vmatpush.bf16.msra.mxu0 %v7095
  %7448 = vmatpush.bf16.msra.mxu0 %v7087
  %7449 = vmatpush.bf16.msra.mxu0 %v7079
  %7450 = vmatpush.bf16.msra.mxu0 %v7071
  %7451 = vmatpush.bf16.msra.mxu0 %v7063
  %7452 = vmatmul.bf16.gmra.mxu0 %v6544
  %v7453 = vpop.f32.mrf.mxu0
  %v7454 = vadd.f32 0.0, %v7453
  %v7455 = vpop.f32.mrf.mxu0
  %7456 = vdwg.mxu0
  %7457 = vmatpush.bf16.msra.mxu0 %v7183
  %7458 = vmatpush.bf16.msra.mxu0 %v7175
  %7459 = vmatpush.bf16.msra.mxu0 %v7167
  %7460 = vmatpush.bf16.msra.mxu0 %v7159
  %7461 = vmatpush.bf16.msra.mxu0 %v7151
  %7462 = vmatpush.bf16.msra.mxu0 %v7143
  %7463 = vmatpush.bf16.msra.mxu0 %v7135
  %7464 = vmatpush.bf16.msra.mxu0 %v7127
  %7465 = vmatmul.bf16.gmra.mxu0 %v6545
  %v7466 = vpop.f32.mrf.mxu0
  %v7467 = vadd.f32 %v7454, %v7466
  %v7468 = vpop.f32.mrf.mxu0
  %7469 = vdwg.mxu0
  %7470 = vmatpush.bf16.msra.mxu0 %v7120
  %7471 = vmatpush.bf16.msra.mxu0 %v7112
  %7472 = vmatpush.bf16.msra.mxu0 %v7104
  %7473 = vmatpush.bf16.msra.mxu0 %v7096
  %7474 = vmatpush.bf16.msra.mxu0 %v7088
  %7475 = vmatpush.bf16.msra.mxu0 %v7080
  %7476 = vmatpush.bf16.msra.mxu0 %v7072
  %7477 = vmatpush.bf16.msra.mxu0 %v7064
  %7478 = vmatmul.bf16.gmra.mxu0 %v6544
  %v7479 = vpop.f32.mrf.mxu0
  %v7480 = vadd.f32 0.0, %v7479
  %v7481 = vpop.f32.mrf.mxu0
  %7482 = vdwg.mxu0
  %7483 = vmatpush.bf16.msra.mxu0 %v7184
  %7484 = vmatpush.bf16.msra.mxu0 %v7176
  %7485 = vmatpush.bf16.msra.mxu0 %v7168
  %7486 = vmatpush.bf16.msra.mxu0 %v7160
  %7487 = vmatpush.bf16.msra.mxu0 %v7152
  %7488 = vmatpush.bf16.msra.mxu0 %v7144
  %7489 = vmatpush.bf16.msra.mxu0 %v7136
  %7490 = vmatpush.bf16.msra.mxu0 %v7128
  %7491 = vmatmul.bf16.gmra.mxu0 %v6545
  %v7492 = vpop.f32.mrf.mxu0
  %v7493 = vadd.f32 %v7480, %v7492
  %v7494 = vpop.f32.mrf.mxu0
  %7495 = vdwg.mxu0
  %7496 = vmatpush.bf16.msra.mxu0 %v7121
  %7497 = vmatpush.bf16.msra.mxu0 %v7113
  %7498 = vmatpush.bf16.msra.mxu0 %v7105
  %7499 = vmatpush.bf16.msra.mxu0 %v7097
  %7500 = vmatpush.bf16.msra.mxu0 %v7089
  %7501 = vmatpush.bf16.msra.mxu0 %v7081
  %7502 = vmatpush.bf16.msra.mxu0 %v7073
  %7503 = vmatpush.bf16.msra.mxu0 %v7065
  %7504 = vmatmul.bf16.gmra.mxu0 %v6544
  %v7505 = vpop.f32.mrf.mxu0
  %v7506 = vadd.f32 0.0, %v7505
  %v7507 = vpop.f32.mrf.mxu0
  %7508 = vdwg.mxu0
  %7509 = vmatpush.bf16.msra.mxu0 %v7185
  %7510 = vmatpush.bf16.msra.mxu0 %v7177
  %7511 = vmatpush.bf16.msra.mxu0 %v7169
  %7512 = vmatpush.bf16.msra.mxu0 %v7161
  %7513 = vmatpush.bf16.msra.mxu0 %v7153
  %7514 = vmatpush.bf16.msra.mxu0 %v7145
  %7515 = vmatpush.bf16.msra.mxu0 %v7137
  %7516 = vmatpush.bf16.msra.mxu0 %v7129
  %7517 = vmatmul.bf16.gmra.mxu0 %v6545
  %v7518 = vpop.f32.mrf.mxu0
  %v7519 = vadd.f32 %v7506, %v7518
  %v7520 = vpop.f32.mrf.mxu0
  %7521 = vdwg.mxu0
  %v7530 = vrot.slane %v7363, 4
  %v7531 = vrot.slane %v7415, 4
  %v7532 = vrot.slane %v7467, 4
  %v7533 = vrot.slane %v7519, 4
  %v7534 = vsel %vm1007, %v7337, %v7530
  %v7535 = vsel %vm1007, %v7389, %v7531
  %v7536 = vsel %vm1007, %v7441, %v7532
  %v7537 = vsel %vm1007, %v7493, %v7533
  %v7542 = vadd.f32 %v6534, %v7534
  %v7543 = vadd.f32 %v6535, %v7535
  %v7544 = vadd.f32 %v6536, %v7536
  %v7545 = vadd.f32 %v6537, %v7537
  %v7546 = vxor.u32 %v7542, 2147483648
  %v7547 = vmul.f32 %v7546, 1.442695
  %v7548 = vpow.pop %v7547
  %v7549 = vadd.f32 %v7548, 1.0
  %v7550 = vrcp.pop %v7549
  %v7551 = vmul.f32 %v7549, %v7550
  %v7552 = vsub.f32 1.0, %v7551
  %v7553 = vmul.f32 %v7550, %v7552
  %v7554 = vadd.f32 %v7550, %v7553
  %vm7555 = vweird.f32 %v7549
  %vm7556 = vweird.f32 %v7550
  %vm7557 = vmor %vm7555, %vm7556
  %v7558 = vsel %vm7557, %v7550, %v7554
  %v7559 = vand.u32 2147483647, %v7549
  %vm7560 = vcmp.eq.f32.partialorder %v7559, 8.507059e+37
  %v7561 = vand.u32 %v7549, 2147483648
  %v7562 = vor.u32 1.1754944e-38, %v7561
  %v7563 = vsel %vm7560, %v7562, %v7558
  %v7564 = vmul.f32 1.0, %v7563
  %v7565 = vxor.u32 %v7543, 2147483648
  %v7566 = vmul.f32 %v7565, 1.442695
  %v7567 = vpow.pop %v7566
  %v7568 = vadd.f32 %v7567, 1.0
  %v7569 = vrcp.pop %v7568
  %v7570 = vmul.f32 %v7568, %v7569
  %v7571 = vsub.f32 1.0, %v7570
  %v7572 = vmul.f32 %v7569, %v7571
  %v7573 = vadd.f32 %v7569, %v7572
  %vm7574 = vweird.f32 %v7568
  %vm7575 = vweird.f32 %v7569
  %vm7576 = vmor %vm7574, %vm7575
  %v7577 = vsel %vm7576, %v7569, %v7573
  %v7578 = vand.u32 2147483647, %v7568
  %vm7579 = vcmp.eq.f32.partialorder %v7578, 8.507059e+37
  %v7580 = vand.u32 %v7568, 2147483648
  %v7581 = vor.u32 1.1754944e-38, %v7580
  %v7582 = vsel %vm7579, %v7581, %v7577
  %v7583 = vmul.f32 1.0, %v7582
  %v7584 = vtanh.pop %v7544
  %v7585 = vxor.u32 %v7545, 2147483648
  %v7586 = vmul.f32 %v7585, 1.442695
  %v7587 = vpow.pop %v7586
  %v7588 = vadd.f32 %v7587, 1.0
  %v7589 = vrcp.pop %v7588
  %v7590 = vmul.f32 %v7588, %v7589
  %v7591 = vsub.f32 1.0, %v7590
  %v7592 = vmul.f32 %v7589, %v7591
  %v7593 = vadd.f32 %v7589, %v7592
  %vm7594 = vweird.f32 %v7588
  %vm7595 = vweird.f32 %v7589
  %vm7596 = vmor %vm7594, %vm7595
  %v7597 = vsel %vm7596, %v7589, %v7593
  %v7598 = vand.u32 2147483647, %v7588
  %vm7599 = vcmp.eq.f32.partialorder %v7598, 8.507059e+37
  %v7600 = vand.u32 %v7588, 2147483648
  %v7601 = vor.u32 1.1754944e-38, %v7600
  %v7602 = vsel %vm7599, %v7601, %v7597
  %v7603 = vmul.f32 1.0, %v7602
  %v7604 = vmul.f32 %v7583, %v6525
  %v7605 = vmul.f32 %v7564, %v7584
  %v7606 = vadd.f32 %v7604, %v7605
  %v7607 = vtanh.pop %v7606
  %v7608 = vmul.f32 %v7603, %v7607
  %s7609 = scalar_lea.vmem %s2, 48
  %v7610 = vld [vmem:[%s7609] sm:$0xff]
  %vm7611 = vcmp.gt.f32.partialorder %v7610, 0.0
  %v7612 = vsel %vm7611, %v7606, %v6525
  %v7613 = vsel %vm7611, %v7608, %v6526
  %v7614 = vsel %vm7611, %v7608, 0.0
  %7615 = vst [vmem:[%s2179] sm:$0xf] %v7614
  %v7617 = vrot.slane %v7614, 4
  %7619 = vst [vmem:[%s2174 + $0x4] sm:$0xf] %v7617
  %s7620 = scalar_lea.vmem %s0, 224
  %v7621 = vld [vmem:[%s7620] sm:$0xff]
  %v7622 = vld [vmem:[%s7620 + $0x8] sm:$0xff]
  %v7623 = vld [vmem:[%s7620 + $0x10] sm:$0xff]
  %v7624 = vld [vmem:[%s7620 + $0x18] sm:$0xff]
  %7626 = vst [vmem:[#allocation1] ss:$2 sm:$0xff] %v7613
  %v7627 = vld.sshfl [vmem:[#allocation1] sm:$0xff pattern:$0x75316420]
  %v7628 = vld.sshfl [vmem:[#allocation1 + $0x8] sm:$0xff pattern:$0x75316420]
  %v7631 = vpack.c.bf16 %v7627, %v7627
  %v7632 = vpack.c.bf16 %v7628, %v7628
  %v7633 = vld [vmem:[%s1] sm:$0xff]
  %v7634 = vld [vmem:[%s1 + $0x8] sm:$0xff]
  %v7635 = vld [vmem:[%s1 + $0x10] sm:$0xff]
  %v7636 = vld [vmem:[%s1 + $0x18] sm:$0xff]
  %v7637 = vld [vmem:[%s1 + $0x20] sm:$0xff]
  %v7638 = vld [vmem:[%s1 + $0x28] sm:$0xff]
  %v7639 = vld [vmem:[%s1 + $0x30] sm:$0xff]
  %v7640 = vld [vmem:[%s1 + $0x38] sm:$0xff]
  %v7641 = vld [vmem:[%s1 + $0x40] sm:$0xff]
  %v7642 = vld [vmem:[%s1 + $0x48] sm:$0xff]
  %v7643 = vld [vmem:[%s1 + $0x50] sm:$0xff]
  %v7644 = vld [vmem:[%s1 + $0x58] sm:$0xff]
  %v7645 = vld [vmem:[%s1 + $0x60] sm:$0xff]
  %v7646 = vld [vmem:[%s1 + $0x68] sm:$0xff]
  %v7647 = vld [vmem:[%s1 + $0x70] sm:$0xff]
  %v7648 = vld [vmem:[%s1 + $0x78] sm:$0xff]
  %v7649 = vld [vmem:[%s1 + $0x80] sm:$0xff]
  %v7650 = vld [vmem:[%s1 + $0x88] sm:$0xff]
  %v7651 = vld [vmem:[%s1 + $0x90] sm:$0xff]
  %v7652 = vld [vmem:[%s1 + $0x98] sm:$0xff]
  %v7653 = vld [vmem:[%s1 + $0xa0] sm:$0xff]
  %v7654 = vld [vmem:[%s1 + $0xa8] sm:$0xff]
  %v7655 = vld [vmem:[%s1 + $0xb0] sm:$0xff]
  %v7656 = vld [vmem:[%s1 + $0xb8] sm:$0xff]
  %v7657 = vld [vmem:[%s1 + $0xc0] sm:$0xff]
  %v7658 = vld [vmem:[%s1 + $0xc8] sm:$0xff]
  %v7659 = vld [vmem:[%s1 + $0xd0] sm:$0xff]
  %v7660 = vld [vmem:[%s1 + $0xd8] sm:$0xff]
  %v7661 = vld [vmem:[%s1 + $0xe0] sm:$0xff]
  %v7662 = vld [vmem:[%s1 + $0xe8] sm:$0xff]
  %v7663 = vld [vmem:[%s1 + $0xf0] sm:$0xff]
  %v7664 = vld [vmem:[%s1 + $0xf8] sm:$0xff]
  %v7665 = vld [vmem:[%s1 + $0x100] sm:$0xff]
  %v7666 = vld [vmem:[%s1 + $0x108] sm:$0xff]
  %v7667 = vld [vmem:[%s1 + $0x110] sm:$0xff]
  %v7668 = vld [vmem:[%s1 + $0x118] sm:$0xff]
  %v7669 = vld [vmem:[%s1 + $0x120] sm:$0xff]
  %v7670 = vld [vmem:[%s1 + $0x128] sm:$0xff]
  %v7671 = vld [vmem:[%s1 + $0x130] sm:$0xff]
  %v7672 = vld [vmem:[%s1 + $0x138] sm:$0xff]
  %v7673 = vld [vmem:[%s1 + $0x140] sm:$0xff]
  %v7674 = vld [vmem:[%s1 + $0x148] sm:$0xff]
  %v7675 = vld [vmem:[%s1 + $0x150] sm:$0xff]
  %v7676 = vld [vmem:[%s1 + $0x158] sm:$0xff]
  %v7677 = vld [vmem:[%s1 + $0x160] sm:$0xff]
  %v7678 = vld [vmem:[%s1 + $0x168] sm:$0xff]
  %v7679 = vld [vmem:[%s1 + $0x170] sm:$0xff]
  %v7680 = vld [vmem:[%s1 + $0x178] sm:$0xff]
  %v7681 = vld [vmem:[%s1 + $0x180] sm:$0xff]
  %v7682 = vld [vmem:[%s1 + $0x188] sm:$0xff]
  %v7683 = vld [vmem:[%s1 + $0x190] sm:$0xff]
  %v7684 = vld [vmem:[%s1 + $0x198] sm:$0xff]
  %v7685 = vld [vmem:[%s1 + $0x1a0] sm:$0xff]
  %v7686 = vld [vmem:[%s1 + $0x1a8] sm:$0xff]
  %v7687 = vld [vmem:[%s1 + $0x1b0] sm:$0xff]
  %v7688 = vld [vmem:[%s1 + $0x1b8] sm:$0xff]
  %v7689 = vld [vmem:[%s1 + $0x1c0] sm:$0xff]
  %v7690 = vld [vmem:[%s1 + $0x1c8] sm:$0xff]
  %v7691 = vld [vmem:[%s1 + $0x1d0] sm:$0xff]
  %v7692 = vld [vmem:[%s1 + $0x1d8] sm:$0xff]
  %v7693 = vld [vmem:[%s1 + $0x1e0] sm:$0xff]
  %v7694 = vld [vmem:[%s1 + $0x1e8] sm:$0xff]
  %v7695 = vld [vmem:[%s1 + $0x1f0] sm:$0xff]
  %v7696 = vld [vmem:[%s1 + $0x1f8] sm:$0xff]
  %v7697 = vld [vmem:[%s1 + $0x200] sm:$0xff]
  %v7698 = vld [vmem:[%s1 + $0x208] sm:$0xff]
  %v7699 = vld [vmem:[%s1 + $0x210] sm:$0xff]
  %v7700 = vld [vmem:[%s1 + $0x218] sm:$0xff]
  %v7701 = vld [vmem:[%s1 + $0x220] sm:$0xff]
  %v7702 = vld [vmem:[%s1 + $0x228] sm:$0xff]
  %v7703 = vld [vmem:[%s1 + $0x230] sm:$0xff]
  %v7704 = vld [vmem:[%s1 + $0x238] sm:$0xff]
  %v7705 = vld [vmem:[%s1 + $0x240] sm:$0xff]
  %v7706 = vld [vmem:[%s1 + $0x248] sm:$0xff]
  %v7707 = vld [vmem:[%s1 + $0x250] sm:$0xff]
  %v7708 = vld [vmem:[%s1 + $0x258] sm:$0xff]
  %v7709 = vld [vmem:[%s1 + $0x260] sm:$0xff]
  %v7710 = vld [vmem:[%s1 + $0x268] sm:$0xff]
  %v7711 = vld [vmem:[%s1 + $0x270] sm:$0xff]
  %v7712 = vld [vmem:[%s1 + $0x278] sm:$0xff]
  %v7713 = vld [vmem:[%s1 + $0x280] sm:$0xff]
  %v7714 = vld [vmem:[%s1 + $0x288] sm:$0xff]
  %v7715 = vld [vmem:[%s1 + $0x290] sm:$0xff]
  %v7716 = vld [vmem:[%s1 + $0x298] sm:$0xff]
  %v7717 = vld [vmem:[%s1 + $0x2a0] sm:$0xff]
  %v7718 = vld [vmem:[%s1 + $0x2a8] sm:$0xff]
  %v7719 = vld [vmem:[%s1 + $0x2b0] sm:$0xff]
  %v7720 = vld [vmem:[%s1 + $0x2b8] sm:$0xff]
  %v7721 = vld [vmem:[%s1 + $0x2c0] sm:$0xff]
  %v7722 = vld [vmem:[%s1 + $0x2c8] sm:$0xff]
  %v7723 = vld [vmem:[%s1 + $0x2d0] sm:$0xff]
  %v7724 = vld [vmem:[%s1 + $0x2d8] sm:$0xff]
  %v7725 = vld [vmem:[%s1 + $0x2e0] sm:$0xff]
  %v7726 = vld [vmem:[%s1 + $0x2e8] sm:$0xff]
  %v7727 = vld [vmem:[%s1 + $0x2f0] sm:$0xff]
  %v7728 = vld [vmem:[%s1 + $0x2f8] sm:$0xff]
  %v7729 = vld [vmem:[%s1 + $0x300] sm:$0xff]
  %v7730 = vld [vmem:[%s1 + $0x308] sm:$0xff]
  %v7731 = vld [vmem:[%s1 + $0x310] sm:$0xff]
  %v7732 = vld [vmem:[%s1 + $0x318] sm:$0xff]
  %v7733 = vld [vmem:[%s1 + $0x320] sm:$0xff]
  %v7734 = vld [vmem:[%s1 + $0x328] sm:$0xff]
  %v7735 = vld [vmem:[%s1 + $0x330] sm:$0xff]
  %v7736 = vld [vmem:[%s1 + $0x338] sm:$0xff]
  %v7737 = vld [vmem:[%s1 + $0x340] sm:$0xff]
  %v7738 = vld [vmem:[%s1 + $0x348] sm:$0xff]
  %v7739 = vld [vmem:[%s1 + $0x350] sm:$0xff]
  %v7740 = vld [vmem:[%s1 + $0x358] sm:$0xff]
  %v7741 = vld [vmem:[%s1 + $0x360] sm:$0xff]
  %v7742 = vld [vmem:[%s1 + $0x368] sm:$0xff]
  %v7743 = vld [vmem:[%s1 + $0x370] sm:$0xff]
  %v7744 = vld [vmem:[%s1 + $0x378] sm:$0xff]
  %v7745 = vld [vmem:[%s1 + $0x380] sm:$0xff]
  %v7746 = vld [vmem:[%s1 + $0x388] sm:$0xff]
  %v7747 = vld [vmem:[%s1 + $0x390] sm:$0xff]
  %v7748 = vld [vmem:[%s1 + $0x398] sm:$0xff]
  %v7749 = vld [vmem:[%s1 + $0x3a0] sm:$0xff]
  %v7750 = vld [vmem:[%s1 + $0x3a8] sm:$0xff]
  %v7751 = vld [vmem:[%s1 + $0x3b0] sm:$0xff]
  %v7752 = vld [vmem:[%s1 + $0x3b8] sm:$0xff]
  %v7753 = vld [vmem:[%s1 + $0x3c0] sm:$0xff]
  %v7754 = vld [vmem:[%s1 + $0x3c8] sm:$0xff]
  %v7755 = vld [vmem:[%s1 + $0x3d0] sm:$0xff]
  %v7756 = vld [vmem:[%s1 + $0x3d8] sm:$0xff]
  %v7757 = vld [vmem:[%s1 + $0x3e0] sm:$0xff]
  %v7758 = vld [vmem:[%s1 + $0x3e8] sm:$0xff]
  %v7759 = vld [vmem:[%s1 + $0x3f0] sm:$0xff]
  %v7760 = vld [vmem:[%s1 + $0x3f8] sm:$0xff]
  %v7889 = vunpack.c.l.b16 %v7633
  %v7890 = vunpack.c.h.b16 %v7633
  %v7891 = vunpack.c.l.b16 %v7634
  %v7892 = vunpack.c.h.b16 %v7634
  %v7893 = vunpack.c.l.b16 %v7635
  %v7894 = vunpack.c.h.b16 %v7635
  %v7895 = vunpack.c.l.b16 %v7636
  %v7896 = vunpack.c.h.b16 %v7636
  %v7897 = vunpack.c.l.b16 %v7637
  %v7898 = vunpack.c.h.b16 %v7637
  %v7899 = vunpack.c.l.b16 %v7638
  %v7900 = vunpack.c.h.b16 %v7638
  %v7901 = vunpack.c.l.b16 %v7639
  %v7902 = vunpack.c.h.b16 %v7639
  %v7903 = vunpack.c.l.b16 %v7640
  %v7904 = vunpack.c.h.b16 %v7640
  %v7905 = vunpack.c.l.b16 %v7641
  %v7906 = vunpack.c.h.b16 %v7641
  %v7907 = vunpack.c.l.b16 %v7642
  %v7908 = vunpack.c.h.b16 %v7642
  %v7909 = vunpack.c.l.b16 %v7643
  %v7910 = vunpack.c.h.b16 %v7643
  %v7911 = vunpack.c.l.b16 %v7644
  %v7912 = vunpack.c.h.b16 %v7644
  %v7913 = vunpack.c.l.b16 %v7645
  %v7914 = vunpack.c.h.b16 %v7645
  %v7915 = vunpack.c.l.b16 %v7646
  %v7916 = vunpack.c.h.b16 %v7646
  %v7917 = vunpack.c.l.b16 %v7647
  %v7918 = vunpack.c.h.b16 %v7647
  %v7919 = vunpack.c.l.b16 %v7648
  %v7920 = vunpack.c.h.b16 %v7648
  %v7921 = vunpack.c.l.b16 %v7649
  %v7922 = vunpack.c.h.b16 %v7649
  %v7923 = vunpack.c.l.b16 %v7650
  %v7924 = vunpack.c.h.b16 %v7650
  %v7925 = vunpack.c.l.b16 %v7651
  %v7926 = vunpack.c.h.b16 %v7651
  %v7927 = vunpack.c.l.b16 %v7652
  %v7928 = vunpack.c.h.b16 %v7652
  %v7929 = vunpack.c.l.b16 %v7653
  %v7930 = vunpack.c.h.b16 %v7653
  %v7931 = vunpack.c.l.b16 %v7654
  %v7932 = vunpack.c.h.b16 %v7654
  %v7933 = vunpack.c.l.b16 %v7655
  %v7934 = vunpack.c.h.b16 %v7655
  %v7935 = vunpack.c.l.b16 %v7656
  %v7936 = vunpack.c.h.b16 %v7656
  %v7937 = vunpack.c.l.b16 %v7657
  %v7938 = vunpack.c.h.b16 %v7657
  %v7939 = vunpack.c.l.b16 %v7658
  %v7940 = vunpack.c.h.b16 %v7658
  %v7941 = vunpack.c.l.b16 %v7659
  %v7942 = vunpack.c.h.b16 %v7659
  %v7943 = vunpack.c.l.b16 %v7660
  %v7944 = vunpack.c.h.b16 %v7660
  %v7945 = vunpack.c.l.b16 %v7661
  %v7946 = vunpack.c.h.b16 %v7661
  %v7947 = vunpack.c.l.b16 %v7662
  %v7948 = vunpack.c.h.b16 %v7662
  %v7949 = vunpack.c.l.b16 %v7663
  %v7950 = vunpack.c.h.b16 %v7663
  %v7951 = vunpack.c.l.b16 %v7664
  %v7952 = vunpack.c.h.b16 %v7664
  %v7953 = vunpack.c.l.b16 %v7665
  %v7954 = vunpack.c.h.b16 %v7665
  %v7955 = vunpack.c.l.b16 %v7666
  %v7956 = vunpack.c.h.b16 %v7666
  %v7957 = vunpack.c.l.b16 %v7667
  %v7958 = vunpack.c.h.b16 %v7667
  %v7959 = vunpack.c.l.b16 %v7668
  %v7960 = vunpack.c.h.b16 %v7668
  %v7961 = vunpack.c.l.b16 %v7669
  %v7962 = vunpack.c.h.b16 %v7669
  %v7963 = vunpack.c.l.b16 %v7670
  %v7964 = vunpack.c.h.b16 %v7670
  %v7965 = vunpack.c.l.b16 %v7671
  %v7966 = vunpack.c.h.b16 %v7671
  %v7967 = vunpack.c.l.b16 %v7672
  %v7968 = vunpack.c.h.b16 %v7672
  %v7969 = vunpack.c.l.b16 %v7673
  %v7970 = vunpack.c.h.b16 %v7673
  %v7971 = vunpack.c.l.b16 %v7674
  %v7972 = vunpack.c.h.b16 %v7674
  %v7973 = vunpack.c.l.b16 %v7675
  %v7974 = vunpack.c.h.b16 %v7675
  %v7975 = vunpack.c.l.b16 %v7676
  %v7976 = vunpack.c.h.b16 %v7676
  %v7977 = vunpack.c.l.b16 %v7677
  %v7978 = vunpack.c.h.b16 %v7677
  %v7979 = vunpack.c.l.b16 %v7678
  %v7980 = vunpack.c.h.b16 %v7678
  %v7981 = vunpack.c.l.b16 %v7679
  %v7982 = vunpack.c.h.b16 %v7679
  %v7983 = vunpack.c.l.b16 %v7680
  %v7984 = vunpack.c.h.b16 %v7680
  %v7985 = vunpack.c.l.b16 %v7681
  %v7986 = vunpack.c.h.b16 %v7681
  %v7987 = vunpack.c.l.b16 %v7682
  %v7988 = vunpack.c.h.b16 %v7682
  %v7989 = vunpack.c.l.b16 %v7683
  %v7990 = vunpack.c.h.b16 %v7683
  %v7991 = vunpack.c.l.b16 %v7684
  %v7992 = vunpack.c.h.b16 %v7684
  %v7993 = vunpack.c.l.b16 %v7685
  %v7994 = vunpack.c.h.b16 %v7685
  %v7995 = vunpack.c.l.b16 %v7686
  %v7996 = vunpack.c.h.b16 %v7686
  %v7997 = vunpack.c.l.b16 %v7687
  %v7998 = vunpack.c.h.b16 %v7687
  %v7999 = vunpack.c.l.b16 %v7688
  %v8000 = vunpack.c.h.b16 %v7688
  %v8001 = vunpack.c.l.b16 %v7689
  %v8002 = vunpack.c.h.b16 %v7689
  %v8003 = vunpack.c.l.b16 %v7690
  %v8004 = vunpack.c.h.b16 %v7690
  %v8005 = vunpack.c.l.b16 %v7691
  %v8006 = vunpack.c.h.b16 %v7691
  %v8007 = vunpack.c.l.b16 %v7692
  %v8008 = vunpack.c.h.b16 %v7692
  %v8009 = vunpack.c.l.b16 %v7693
  %v8010 = vunpack.c.h.b16 %v7693
  %v8011 = vunpack.c.l.b16 %v7694
  %v8012 = vunpack.c.h.b16 %v7694
  %v8013 = vunpack.c.l.b16 %v7695
  %v8014 = vunpack.c.h.b16 %v7695
  %v8015 = vunpack.c.l.b16 %v7696
  %v8016 = vunpack.c.h.b16 %v7696
  %v8017 = vunpack.c.l.b16 %v7697
  %v8018 = vunpack.c.h.b16 %v7697
  %v8019 = vunpack.c.l.b16 %v7698
  %v8020 = vunpack.c.h.b16 %v7698
  %v8021 = vunpack.c.l.b16 %v7699
  %v8022 = vunpack.c.h.b16 %v7699
  %v8023 = vunpack.c.l.b16 %v7700
  %v8024 = vunpack.c.h.b16 %v7700
  %v8025 = vunpack.c.l.b16 %v7701
  %v8026 = vunpack.c.h.b16 %v7701
  %v8027 = vunpack.c.l.b16 %v7702
  %v8028 = vunpack.c.h.b16 %v7702
  %v8029 = vunpack.c.l.b16 %v7703
  %v8030 = vunpack.c.h.b16 %v7703
  %v8031 = vunpack.c.l.b16 %v7704
  %v8032 = vunpack.c.h.b16 %v7704
  %v8033 = vunpack.c.l.b16 %v7705
  %v8034 = vunpack.c.h.b16 %v7705
  %v8035 = vunpack.c.l.b16 %v7706
  %v8036 = vunpack.c.h.b16 %v7706
  %v8037 = vunpack.c.l.b16 %v7707
  %v8038 = vunpack.c.h.b16 %v7707
  %v8039 = vunpack.c.l.b16 %v7708
  %v8040 = vunpack.c.h.b16 %v7708
  %v8041 = vunpack.c.l.b16 %v7709
  %v8042 = vunpack.c.h.b16 %v7709
  %v8043 = vunpack.c.l.b16 %v7710
  %v8044 = vunpack.c.h.b16 %v7710
  %v8045 = vunpack.c.l.b16 %v7711
  %v8046 = vunpack.c.h.b16 %v7711
  %v8047 = vunpack.c.l.b16 %v7712
  %v8048 = vunpack.c.h.b16 %v7712
  %v8049 = vunpack.c.l.b16 %v7713
  %v8050 = vunpack.c.h.b16 %v7713
  %v8051 = vunpack.c.l.b16 %v7714
  %v8052 = vunpack.c.h.b16 %v7714
  %v8053 = vunpack.c.l.b16 %v7715
  %v8054 = vunpack.c.h.b16 %v7715
  %v8055 = vunpack.c.l.b16 %v7716
  %v8056 = vunpack.c.h.b16 %v7716
  %v8057 = vunpack.c.l.b16 %v7717
  %v8058 = vunpack.c.h.b16 %v7717
  %v8059 = vunpack.c.l.b16 %v7718
  %v8060 = vunpack.c.h.b16 %v7718
  %v8061 = vunpack.c.l.b16 %v7719
  %v8062 = vunpack.c.h.b16 %v7719
  %v8063 = vunpack.c.l.b16 %v7720
  %v8064 = vunpack.c.h.b16 %v7720
  %v8065 = vunpack.c.l.b16 %v7721
  %v8066 = vunpack.c.h.b16 %v7721
  %v8067 = vunpack.c.l.b16 %v7722
  %v8068 = vunpack.c.h.b16 %v7722
  %v8069 = vunpack.c.l.b16 %v7723
  %v8070 = vunpack.c.h.b16 %v7723
  %v8071 = vunpack.c.l.b16 %v7724
  %v8072 = vunpack.c.h.b16 %v7724
  %v8073 = vunpack.c.l.b16 %v7725
  %v8074 = vunpack.c.h.b16 %v7725
  %v8075 = vunpack.c.l.b16 %v7726
  %v8076 = vunpack.c.h.b16 %v7726
  %v8077 = vunpack.c.l.b16 %v7727
  %v8078 = vunpack.c.h.b16 %v7727
  %v8079 = vunpack.c.l.b16 %v7728
  %v8080 = vunpack.c.h.b16 %v7728
  %v8081 = vunpack.c.l.b16 %v7729
  %v8082 = vunpack.c.h.b16 %v7729
  %v8083 = vunpack.c.l.b16 %v7730
  %v8084 = vunpack.c.h.b16 %v7730
  %v8085 = vunpack.c.l.b16 %v7731
  %v8086 = vunpack.c.h.b16 %v7731
  %v8087 = vunpack.c.l.b16 %v7732
  %v8088 = vunpack.c.h.b16 %v7732
  %v8089 = vunpack.c.l.b16 %v7733
  %v8090 = vunpack.c.h.b16 %v7733
  %v8091 = vunpack.c.l.b16 %v7734
  %v8092 = vunpack.c.h.b16 %v7734
  %v8093 = vunpack.c.l.b16 %v7735
  %v8094 = vunpack.c.h.b16 %v7735
  %v8095 = vunpack.c.l.b16 %v7736
  %v8096 = vunpack.c.h.b16 %v7736
  %v8097 = vunpack.c.l.b16 %v7737
  %v8098 = vunpack.c.h.b16 %v7737
  %v8099 = vunpack.c.l.b16 %v7738
  %v8100 = vunpack.c.h.b16 %v7738
  %v8101 = vunpack.c.l.b16 %v7739
  %v8102 = vunpack.c.h.b16 %v7739
  %v8103 = vunpack.c.l.b16 %v7740
  %v8104 = vunpack.c.h.b16 %v7740
  %v8105 = vunpack.c.l.b16 %v7741
  %v8106 = vunpack.c.h.b16 %v7741
  %v8107 = vunpack.c.l.b16 %v7742
  %v8108 = vunpack.c.h.b16 %v7742
  %v8109 = vunpack.c.l.b16 %v7743
  %v8110 = vunpack.c.h.b16 %v7743
  %v8111 = vunpack.c.l.b16 %v7744
  %v8112 = vunpack.c.h.b16 %v7744
  %v8113 = vunpack.c.l.b16 %v7745
  %v8114 = vunpack.c.h.b16 %v7745
  %v8115 = vunpack.c.l.b16 %v7746
  %v8116 = vunpack.c.h.b16 %v7746
  %v8117 = vunpack.c.l.b16 %v7747
  %v8118 = vunpack.c.h.b16 %v7747
  %v8119 = vunpack.c.l.b16 %v7748
  %v8120 = vunpack.c.h.b16 %v7748
  %v8121 = vunpack.c.l.b16 %v7749
  %v8122 = vunpack.c.h.b16 %v7749
  %v8123 = vunpack.c.l.b16 %v7750
  %v8124 = vunpack.c.h.b16 %v7750
  %v8125 = vunpack.c.l.b16 %v7751
  %v8126 = vunpack.c.h.b16 %v7751
  %v8127 = vunpack.c.l.b16 %v7752
  %v8128 = vunpack.c.h.b16 %v7752
  %v8129 = vunpack.c.l.b16 %v7753
  %v8130 = vunpack.c.h.b16 %v7753
  %v8131 = vunpack.c.l.b16 %v7754
  %v8132 = vunpack.c.h.b16 %v7754
  %v8133 = vunpack.c.l.b16 %v7755
  %v8134 = vunpack.c.h.b16 %v7755
  %v8135 = vunpack.c.l.b16 %v7756
  %v8136 = vunpack.c.h.b16 %v7756
  %v8137 = vunpack.c.l.b16 %v7757
  %v8138 = vunpack.c.h.b16 %v7757
  %v8139 = vunpack.c.l.b16 %v7758
  %v8140 = vunpack.c.h.b16 %v7758
  %v8141 = vunpack.c.l.b16 %v7759
  %v8142 = vunpack.c.h.b16 %v7759
  %v8143 = vunpack.c.l.b16 %v7760
  %v8144 = vunpack.c.h.b16 %v7760
  %v8145 = vpack.c.b16 %v7897, %v7889
  %v8146 = vpack.c.b16 %v7898, %v7890
  %v8147 = vpack.c.b16 %v7899, %v7891
  %v8148 = vpack.c.b16 %v7900, %v7892
  %v8149 = vpack.c.b16 %v7901, %v7893
  %v8150 = vpack.c.b16 %v7902, %v7894
  %v8151 = vpack.c.b16 %v7903, %v7895
  %v8152 = vpack.c.b16 %v7904, %v7896
  %v8153 = vpack.c.b16 %v7913, %v7905
  %v8154 = vpack.c.b16 %v7914, %v7906
  %v8155 = vpack.c.b16 %v7915, %v7907
  %v8156 = vpack.c.b16 %v7916, %v7908
  %v8157 = vpack.c.b16 %v7917, %v7909
  %v8158 = vpack.c.b16 %v7918, %v7910
  %v8159 = vpack.c.b16 %v7919, %v7911
  %v8160 = vpack.c.b16 %v7920, %v7912
  %v8161 = vpack.c.b16 %v7929, %v7921
  %v8162 = vpack.c.b16 %v7930, %v7922
  %v8163 = vpack.c.b16 %v7931, %v7923
  %v8164 = vpack.c.b16 %v7932, %v7924
  %v8165 = vpack.c.b16 %v7933, %v7925
  %v8166 = vpack.c.b16 %v7934, %v7926
  %v8167 = vpack.c.b16 %v7935, %v7927
  %v8168 = vpack.c.b16 %v7936, %v7928
  %v8169 = vpack.c.b16 %v7945, %v7937
  %v8170 = vpack.c.b16 %v7946, %v7938
  %v8171 = vpack.c.b16 %v7947, %v7939
  %v8172 = vpack.c.b16 %v7948, %v7940
  %v8173 = vpack.c.b16 %v7949, %v7941
  %v8174 = vpack.c.b16 %v7950, %v7942
  %v8175 = vpack.c.b16 %v7951, %v7943
  %v8176 = vpack.c.b16 %v7952, %v7944
  %v8177 = vpack.c.b16 %v7961, %v7953
  %v8178 = vpack.c.b16 %v7962, %v7954
  %v8179 = vpack.c.b16 %v7963, %v7955
  %v8180 = vpack.c.b16 %v7964, %v7956
  %v8181 = vpack.c.b16 %v7965, %v7957
  %v8182 = vpack.c.b16 %v7966, %v7958
  %v8183 = vpack.c.b16 %v7967, %v7959
  %v8184 = vpack.c.b16 %v7968, %v7960
  %v8185 = vpack.c.b16 %v7977, %v7969
  %v8186 = vpack.c.b16 %v7978, %v7970
  %v8187 = vpack.c.b16 %v7979, %v7971
  %v8188 = vpack.c.b16 %v7980, %v7972
  %v8189 = vpack.c.b16 %v7981, %v7973
  %v8190 = vpack.c.b16 %v7982, %v7974
  %v8191 = vpack.c.b16 %v7983, %v7975
  %v8192 = vpack.c.b16 %v7984, %v7976
  %v8193 = vpack.c.b16 %v7993, %v7985
  %v8194 = vpack.c.b16 %v7994, %v7986
  %v8195 = vpack.c.b16 %v7995, %v7987
  %v8196 = vpack.c.b16 %v7996, %v7988
  %v8197 = vpack.c.b16 %v7997, %v7989
  %v8198 = vpack.c.b16 %v7998, %v7990
  %v8199 = vpack.c.b16 %v7999, %v7991
  %v8200 = vpack.c.b16 %v8000, %v7992
  %v8201 = vpack.c.b16 %v8009, %v8001
  %v8202 = vpack.c.b16 %v8010, %v8002
  %v8203 = vpack.c.b16 %v8011, %v8003
  %v8204 = vpack.c.b16 %v8012, %v8004
  %v8205 = vpack.c.b16 %v8013, %v8005
  %v8206 = vpack.c.b16 %v8014, %v8006
  %v8207 = vpack.c.b16 %v8015, %v8007
  %v8208 = vpack.c.b16 %v8016, %v8008
  %v8209 = vpack.c.b16 %v8025, %v8017
  %v8210 = vpack.c.b16 %v8026, %v8018
  %v8211 = vpack.c.b16 %v8027, %v8019
  %v8212 = vpack.c.b16 %v8028, %v8020
  %v8213 = vpack.c.b16 %v8029, %v8021
  %v8214 = vpack.c.b16 %v8030, %v8022
  %v8215 = vpack.c.b16 %v8031, %v8023
  %v8216 = vpack.c.b16 %v8032, %v8024
  %v8217 = vpack.c.b16 %v8041, %v8033
  %v8218 = vpack.c.b16 %v8042, %v8034
  %v8219 = vpack.c.b16 %v8043, %v8035
  %v8220 = vpack.c.b16 %v8044, %v8036
  %v8221 = vpack.c.b16 %v8045, %v8037
  %v8222 = vpack.c.b16 %v8046, %v8038
  %v8223 = vpack.c.b16 %v8047, %v8039
  %v8224 = vpack.c.b16 %v8048, %v8040
  %v8225 = vpack.c.b16 %v8057, %v8049
  %v8226 = vpack.c.b16 %v8058, %v8050
  %v8227 = vpack.c.b16 %v8059, %v8051
  %v8228 = vpack.c.b16 %v8060, %v8052
  %v8229 = vpack.c.b16 %v8061, %v8053
  %v8230 = vpack.c.b16 %v8062, %v8054
  %v8231 = vpack.c.b16 %v8063, %v8055
  %v8232 = vpack.c.b16 %v8064, %v8056
  %v8233 = vpack.c.b16 %v8073, %v8065
  %v8234 = vpack.c.b16 %v8074, %v8066
  %v8235 = vpack.c.b16 %v8075, %v8067
  %v8236 = vpack.c.b16 %v8076, %v8068
  %v8237 = vpack.c.b16 %v8077, %v8069
  %v8238 = vpack.c.b16 %v8078, %v8070
  %v8239 = vpack.c.b16 %v8079, %v8071
  %v8240 = vpack.c.b16 %v8080, %v8072
  %v8241 = vpack.c.b16 %v8089, %v8081
  %v8242 = vpack.c.b16 %v8090, %v8082
  %v8243 = vpack.c.b16 %v8091, %v8083
  %v8244 = vpack.c.b16 %v8092, %v8084
  %v8245 = vpack.c.b16 %v8093, %v8085
  %v8246 = vpack.c.b16 %v8094, %v8086
  %v8247 = vpack.c.b16 %v8095, %v8087
  %v8248 = vpack.c.b16 %v8096, %v8088
  %v8249 = vpack.c.b16 %v8105, %v8097
  %v8250 = vpack.c.b16 %v8106, %v8098
  %v8251 = vpack.c.b16 %v8107, %v8099
  %v8252 = vpack.c.b16 %v8108, %v8100
  %v8253 = vpack.c.b16 %v8109, %v8101
  %v8254 = vpack.c.b16 %v8110, %v8102
  %v8255 = vpack.c.b16 %v8111, %v8103
  %v8256 = vpack.c.b16 %v8112, %v8104
  %v8257 = vpack.c.b16 %v8121, %v8113
  %v8258 = vpack.c.b16 %v8122, %v8114
  %v8259 = vpack.c.b16 %v8123, %v8115
  %v8260 = vpack.c.b16 %v8124, %v8116
  %v8261 = vpack.c.b16 %v8125, %v8117
  %v8262 = vpack.c.b16 %v8126, %v8118
  %v8263 = vpack.c.b16 %v8127, %v8119
  %v8264 = vpack.c.b16 %v8128, %v8120
  %v8265 = vpack.c.b16 %v8137, %v8129
  %v8266 = vpack.c.b16 %v8138, %v8130
  %v8267 = vpack.c.b16 %v8139, %v8131
  %v8268 = vpack.c.b16 %v8140, %v8132
  %v8269 = vpack.c.b16 %v8141, %v8133
  %v8270 = vpack.c.b16 %v8142, %v8134
  %v8271 = vpack.c.b16 %v8143, %v8135
  %v8272 = vpack.c.b16 %v8144, %v8136
  %8401 = vmatpush.bf16.msra.mxu0 %v8201
  %8402 = vmatpush.bf16.msra.mxu0 %v8193
  %8403 = vmatpush.bf16.msra.mxu0 %v8185
  %8404 = vmatpush.bf16.msra.mxu0 %v8177
  %8405 = vmatpush.bf16.msra.mxu0 %v8169
  %8406 = vmatpush.bf16.msra.mxu0 %v8161
  %8407 = vmatpush.bf16.msra.mxu0 %v8153
  %8408 = vmatpush.bf16.msra.mxu0 %v8145
  %8409 = vmatmul.bf16.gmra.mxu0 %v7631
  %v8410 = vpop.f32.mrf.mxu0
  %v8411 = vadd.f32 0.0, %v8410
  %v8412 = vpop.f32.mrf.mxu0
  %8413 = vdwg.mxu0
  %8414 = vmatpush.bf16.msra.mxu0 %v8265
  %8415 = vmatpush.bf16.msra.mxu0 %v8257
  %8416 = vmatpush.bf16.msra.mxu0 %v8249
  %8417 = vmatpush.bf16.msra.mxu0 %v8241
  %8418 = vmatpush.bf16.msra.mxu0 %v8233
  %8419 = vmatpush.bf16.msra.mxu0 %v8225
  %8420 = vmatpush.bf16.msra.mxu0 %v8217
  %8421 = vmatpush.bf16.msra.mxu0 %v8209
  %8422 = vmatmul.bf16.gmra.mxu0 %v7632
  %v8423 = vpop.f32.mrf.mxu0
  %v8424 = vadd.f32 %v8411, %v8423
  %v8425 = vpop.f32.mrf.mxu0
  %8426 = vdwg.mxu0
  %8427 = vmatpush.bf16.msra.mxu0 %v8202
  %8428 = vmatpush.bf16.msra.mxu0 %v8194
  %8429 = vmatpush.bf16.msra.mxu0 %v8186
  %8430 = vmatpush.bf16.msra.mxu0 %v8178
  %8431 = vmatpush.bf16.msra.mxu0 %v8170
  %8432 = vmatpush.bf16.msra.mxu0 %v8162
  %8433 = vmatpush.bf16.msra.mxu0 %v8154
  %8434 = vmatpush.bf16.msra.mxu0 %v8146
  %8435 = vmatmul.bf16.gmra.mxu0 %v7631
  %v8436 = vpop.f32.mrf.mxu0
  %v8437 = vadd.f32 0.0, %v8436
  %v8438 = vpop.f32.mrf.mxu0
  %8439 = vdwg.mxu0
  %8440 = vmatpush.bf16.msra.mxu0 %v8266
  %8441 = vmatpush.bf16.msra.mxu0 %v8258
  %8442 = vmatpush.bf16.msra.mxu0 %v8250
  %8443 = vmatpush.bf16.msra.mxu0 %v8242
  %8444 = vmatpush.bf16.msra.mxu0 %v8234
  %8445 = vmatpush.bf16.msra.mxu0 %v8226
  %8446 = vmatpush.bf16.msra.mxu0 %v8218
  %8447 = vmatpush.bf16.msra.mxu0 %v8210
  %8448 = vmatmul.bf16.gmra.mxu0 %v7632
  %v8449 = vpop.f32.mrf.mxu0
  %v8450 = vadd.f32 %v8437, %v8449
  %v8451 = vpop.f32.mrf.mxu0
  %8452 = vdwg.mxu0
  %8453 = vmatpush.bf16.msra.mxu0 %v8203
  %8454 = vmatpush.bf16.msra.mxu0 %v8195
  %8455 = vmatpush.bf16.msra.mxu0 %v8187
  %8456 = vmatpush.bf16.msra.mxu0 %v8179
  %8457 = vmatpush.bf16.msra.mxu0 %v8171
  %8458 = vmatpush.bf16.msra.mxu0 %v8163
  %8459 = vmatpush.bf16.msra.mxu0 %v8155
  %8460 = vmatpush.bf16.msra.mxu0 %v8147
  %8461 = vmatmul.bf16.gmra.mxu0 %v7631
  %v8462 = vpop.f32.mrf.mxu0
  %v8463 = vadd.f32 0.0, %v8462
  %v8464 = vpop.f32.mrf.mxu0
  %8465 = vdwg.mxu0
  %8466 = vmatpush.bf16.msra.mxu0 %v8267
  %8467 = vmatpush.bf16.msra.mxu0 %v8259
  %8468 = vmatpush.bf16.msra.mxu0 %v8251
  %8469 = vmatpush.bf16.msra.mxu0 %v8243
  %8470 = vmatpush.bf16.msra.mxu0 %v8235
  %8471 = vmatpush.bf16.msra.mxu0 %v8227
  %8472 = vmatpush.bf16.msra.mxu0 %v8219
  %8473 = vmatpush.bf16.msra.mxu0 %v8211
  %8474 = vmatmul.bf16.gmra.mxu0 %v7632
  %v8475 = vpop.f32.mrf.mxu0
  %v8476 = vadd.f32 %v8463, %v8475
  %v8477 = vpop.f32.mrf.mxu0
  %8478 = vdwg.mxu0
  %8479 = vmatpush.bf16.msra.mxu0 %v8204
  %8480 = vmatpush.bf16.msra.mxu0 %v8196
  %8481 = vmatpush.bf16.msra.mxu0 %v8188
  %8482 = vmatpush.bf16.msra.mxu0 %v8180
  %8483 = vmatpush.bf16.msra.mxu0 %v8172
  %8484 = vmatpush.bf16.msra.mxu0 %v8164
  %8485 = vmatpush.bf16.msra.mxu0 %v8156
  %8486 = vmatpush.bf16.msra.mxu0 %v8148
  %8487 = vmatmul.bf16.gmra.mxu0 %v7631
  %v8488 = vpop.f32.mrf.mxu0
  %v8489 = vadd.f32 0.0, %v8488
  %v8490 = vpop.f32.mrf.mxu0
  %8491 = vdwg.mxu0
  %8492 = vmatpush.bf16.msra.mxu0 %v8268
  %8493 = vmatpush.bf16.msra.mxu0 %v8260
  %8494 = vmatpush.bf16.msra.mxu0 %v8252
  %8495 = vmatpush.bf16.msra.mxu0 %v8244
  %8496 = vmatpush.bf16.msra.mxu0 %v8236
  %8497 = vmatpush.bf16.msra.mxu0 %v8228
  %8498 = vmatpush.bf16.msra.mxu0 %v8220
  %8499 = vmatpush.bf16.msra.mxu0 %v8212
  %8500 = vmatmul.bf16.gmra.mxu0 %v7632
  %v8501 = vpop.f32.mrf.mxu0
  %v8502 = vadd.f32 %v8489, %v8501
  %v8503 = vpop.f32.mrf.mxu0
  %8504 = vdwg.mxu0
  %8505 = vmatpush.bf16.msra.mxu0 %v8205
  %8506 = vmatpush.bf16.msra.mxu0 %v8197
  %8507 = vmatpush.bf16.msra.mxu0 %v8189
  %8508 = vmatpush.bf16.msra.mxu0 %v8181
  %8509 = vmatpush.bf16.msra.mxu0 %v8173
  %8510 = vmatpush.bf16.msra.mxu0 %v8165
  %8511 = vmatpush.bf16.msra.mxu0 %v8157
  %8512 = vmatpush.bf16.msra.mxu0 %v8149
  %8513 = vmatmul.bf16.gmra.mxu0 %v7631
  %v8514 = vpop.f32.mrf.mxu0
  %v8515 = vadd.f32 0.0, %v8514
  %v8516 = vpop.f32.mrf.mxu0
  %8517 = vdwg.mxu0
  %8518 = vmatpush.bf16.msra.mxu0 %v8269
  %8519 = vmatpush.bf16.msra.mxu0 %v8261
  %8520 = vmatpush.bf16.msra.mxu0 %v8253
  %8521 = vmatpush.bf16.msra.mxu0 %v8245
  %8522 = vmatpush.bf16.msra.mxu0 %v8237
  %8523 = vmatpush.bf16.msra.mxu0 %v8229
  %8524 = vmatpush.bf16.msra.mxu0 %v8221
  %8525 = vmatpush.bf16.msra.mxu0 %v8213
  %8526 = vmatmul.bf16.gmra.mxu0 %v7632
  %v8527 = vpop.f32.mrf.mxu0
  %v8528 = vadd.f32 %v8515, %v8527
  %v8529 = vpop.f32.mrf.mxu0
  %8530 = vdwg.mxu0
  %8531 = vmatpush.bf16.msra.mxu0 %v8206
  %8532 = vmatpush.bf16.msra.mxu0 %v8198
  %8533 = vmatpush.bf16.msra.mxu0 %v8190
  %8534 = vmatpush.bf16.msra.mxu0 %v8182
  %8535 = vmatpush.bf16.msra.mxu0 %v8174
  %8536 = vmatpush.bf16.msra.mxu0 %v8166
  %8537 = vmatpush.bf16.msra.mxu0 %v8158
  %8538 = vmatpush.bf16.msra.mxu0 %v8150
  %8539 = vmatmul.bf16.gmra.mxu0 %v7631
  %v8540 = vpop.f32.mrf.mxu0
  %v8541 = vadd.f32 0.0, %v8540
  %v8542 = vpop.f32.mrf.mxu0
  %8543 = vdwg.mxu0
  %8544 = vmatpush.bf16.msra.mxu0 %v8270
  %8545 = vmatpush.bf16.msra.mxu0 %v8262
  %8546 = vmatpush.bf16.msra.mxu0 %v8254
  %8547 = vmatpush.bf16.msra.mxu0 %v8246
  %8548 = vmatpush.bf16.msra.mxu0 %v8238
  %8549 = vmatpush.bf16.msra.mxu0 %v8230
  %8550 = vmatpush.bf16.msra.mxu0 %v8222
  %8551 = vmatpush.bf16.msra.mxu0 %v8214
  %8552 = vmatmul.bf16.gmra.mxu0 %v7632
  %v8553 = vpop.f32.mrf.mxu0
  %v8554 = vadd.f32 %v8541, %v8553
  %v8555 = vpop.f32.mrf.mxu0
  %8556 = vdwg.mxu0
  %8557 = vmatpush.bf16.msra.mxu0 %v8207
  %8558 = vmatpush.bf16.msra.mxu0 %v8199
  %8559 = vmatpush.bf16.msra.mxu0 %v8191
  %8560 = vmatpush.bf16.msra.mxu0 %v8183
  %8561 = vmatpush.bf16.msra.mxu0 %v8175
  %8562 = vmatpush.bf16.msra.mxu0 %v8167
  %8563 = vmatpush.bf16.msra.mxu0 %v8159
  %8564 = vmatpush.bf16.msra.mxu0 %v8151
  %8565 = vmatmul.bf16.gmra.mxu0 %v7631
  %v8566 = vpop.f32.mrf.mxu0
  %v8567 = vadd.f32 0.0, %v8566
  %v8568 = vpop.f32.mrf.mxu0
  %8569 = vdwg.mxu0
  %8570 = vmatpush.bf16.msra.mxu0 %v8271
  %8571 = vmatpush.bf16.msra.mxu0 %v8263
  %8572 = vmatpush.bf16.msra.mxu0 %v8255
  %8573 = vmatpush.bf16.msra.mxu0 %v8247
  %8574 = vmatpush.bf16.msra.mxu0 %v8239
  %8575 = vmatpush.bf16.msra.mxu0 %v8231
  %8576 = vmatpush.bf16.msra.mxu0 %v8223
  %8577 = vmatpush.bf16.msra.mxu0 %v8215
  %8578 = vmatmul.bf16.gmra.mxu0 %v7632
  %v8579 = vpop.f32.mrf.mxu0
  %v8580 = vadd.f32 %v8567, %v8579
  %v8581 = vpop.f32.mrf.mxu0
  %8582 = vdwg.mxu0
  %8583 = vmatpush.bf16.msra.mxu0 %v8208
  %8584 = vmatpush.bf16.msra.mxu0 %v8200
  %8585 = vmatpush.bf16.msra.mxu0 %v8192
  %8586 = vmatpush.bf16.msra.mxu0 %v8184
  %8587 = vmatpush.bf16.msra.mxu0 %v8176
  %8588 = vmatpush.bf16.msra.mxu0 %v8168
  %8589 = vmatpush.bf16.msra.mxu0 %v8160
  %8590 = vmatpush.bf16.msra.mxu0 %v8152
  %8591 = vmatmul.bf16.gmra.mxu0 %v7631
  %v8592 = vpop.f32.mrf.mxu0
  %v8593 = vadd.f32 0.0, %v8592
  %v8594 = vpop.f32.mrf.mxu0
  %8595 = vdwg.mxu0
  %8596 = vmatpush.bf16.msra.mxu0 %v8272
  %8597 = vmatpush.bf16.msra.mxu0 %v8264
  %8598 = vmatpush.bf16.msra.mxu0 %v8256
  %8599 = vmatpush.bf16.msra.mxu0 %v8248
  %8600 = vmatpush.bf16.msra.mxu0 %v8240
  %8601 = vmatpush.bf16.msra.mxu0 %v8232
  %8602 = vmatpush.bf16.msra.mxu0 %v8224
  %8603 = vmatpush.bf16.msra.mxu0 %v8216
  %8604 = vmatmul.bf16.gmra.mxu0 %v7632
  %v8605 = vpop.f32.mrf.mxu0
  %v8606 = vadd.f32 %v8593, %v8605
  %v8607 = vpop.f32.mrf.mxu0
  %8608 = vdwg.mxu0
  %v8617 = vrot.slane %v8450, 4
  %v8618 = vrot.slane %v8502, 4
  %v8619 = vrot.slane %v8554, 4
  %v8620 = vrot.slane %v8606, 4
  %v8621 = vsel %vm1007, %v8424, %v8617
  %v8622 = vsel %vm1007, %v8476, %v8618
  %v8623 = vsel %vm1007, %v8528, %v8619
  %v8624 = vsel %vm1007, %v8580, %v8620
  %v8629 = vadd.f32 %v7621, %v8621
  %v8630 = vadd.f32 %v7622, %v8622
  %v8631 = vadd.f32 %v7623, %v8623
  %v8632 = vadd.f32 %v7624, %v8624
  %v8633 = vxor.u32 %v8629, 2147483648
  %v8634 = vmul.f32 %v8633, 1.442695
  %v8635 = vpow.pop %v8634
  %v8636 = vadd.f32 %v8635, 1.0
  %v8637 = vrcp.pop %v8636
  %v8638 = vmul.f32 %v8636, %v8637
  %v8639 = vsub.f32 1.0, %v8638
  %v8640 = vmul.f32 %v8637, %v8639
  %v8641 = vadd.f32 %v8637, %v8640
  %vm8642 = vweird.f32 %v8636
  %vm8643 = vweird.f32 %v8637
  %vm8644 = vmor %vm8642, %vm8643
  %v8645 = vsel %vm8644, %v8637, %v8641
  %v8646 = vand.u32 2147483647, %v8636
  %vm8647 = vcmp.eq.f32.partialorder %v8646, 8.507059e+37
  %v8648 = vand.u32 %v8636, 2147483648
  %v8649 = vor.u32 1.1754944e-38, %v8648
  %v8650 = vsel %vm8647, %v8649, %v8645
  %v8651 = vmul.f32 1.0, %v8650
  %v8652 = vxor.u32 %v8630, 2147483648
  %v8653 = vmul.f32 %v8652, 1.442695
  %v8654 = vpow.pop %v8653
  %v8655 = vadd.f32 %v8654, 1.0
  %v8656 = vrcp.pop %v8655
  %v8657 = vmul.f32 %v8655, %v8656
  %v8658 = vsub.f32 1.0, %v8657
  %v8659 = vmul.f32 %v8656, %v8658
  %v8660 = vadd.f32 %v8656, %v8659
  %vm8661 = vweird.f32 %v8655
  %vm8662 = vweird.f32 %v8656
  %vm8663 = vmor %vm8661, %vm8662
  %v8664 = vsel %vm8663, %v8656, %v8660
  %v8665 = vand.u32 2147483647, %v8655
  %vm8666 = vcmp.eq.f32.partialorder %v8665, 8.507059e+37
  %v8667 = vand.u32 %v8655, 2147483648
  %v8668 = vor.u32 1.1754944e-38, %v8667
  %v8669 = vsel %vm8666, %v8668, %v8664
  %v8670 = vmul.f32 1.0, %v8669
  %v8671 = vtanh.pop %v8631
  %v8672 = vxor.u32 %v8632, 2147483648
  %v8673 = vmul.f32 %v8672, 1.442695
  %v8674 = vpow.pop %v8673
  %v8675 = vadd.f32 %v8674, 1.0
  %v8676 = vrcp.pop %v8675
  %v8677 = vmul.f32 %v8675, %v8676
  %v8678 = vsub.f32 1.0, %v8677
  %v8679 = vmul.f32 %v8676, %v8678
  %v8680 = vadd.f32 %v8676, %v8679
  %vm8681 = vweird.f32 %v8675
  %vm8682 = vweird.f32 %v8676
  %vm8683 = vmor %vm8681, %vm8682
  %v8684 = vsel %vm8683, %v8676, %v8680
  %v8685 = vand.u32 2147483647, %v8675
  %vm8686 = vcmp.eq.f32.partialorder %v8685, 8.507059e+37
  %v8687 = vand.u32 %v8675, 2147483648
  %v8688 = vor.u32 1.1754944e-38, %v8687
  %v8689 = vsel %vm8686, %v8688, %v8684
  %v8690 = vmul.f32 1.0, %v8689
  %v8691 = vmul.f32 %v8670, %v7612
  %v8692 = vmul.f32 %v8651, %v8671
  %v8693 = vadd.f32 %v8691, %v8692
  %v8694 = vtanh.pop %v8693
  %v8695 = vmul.f32 %v8690, %v8694
  %s8696 = scalar_lea.vmem %s2, 56
  %v8697 = vld [vmem:[%s8696] sm:$0xff]
  %vm8698 = vcmp.gt.f32.partialorder %v8697, 0.0
  %v8699 = vsel %vm8698, %v8695, 0.0
  %8700 = vst [vmem:[%s1091] sm:$0xf] %v8699
  %v8702 = vrot.slane %v8699, 4
  %8704 = vst [vmem:[%s3 + $0x4] sm:$0xf] %v8702
  // Predicated region
  $region14: #{_lambda_.2} parent=0 // pred_check
    _
  $region15: #{_lambda_.2} parent=0 // pred_check_branch
    %8706 = sbr.rel (0) target = $region17
  $region16: #{_lambda_.2} parent=0 // pred_region
    _
  $region17: #{_lambda_.2} parent=0 // pred_fallthru
    _
  // Predicated region
  $region18: #{_lambda_.2} parent=0 // pred_check
    _
  $region19: #{_lambda_.2} parent=0 // pred_check_branch
    %8708 = sbr.rel (0) target = $region21
  $region20: #{_lambda_.2} parent=0 // pred_region
    _
  $region21: #{_lambda_.2} parent=0 // pred_fallthru
    _

</llo_original>
